<compile_context>
chip_gen: v5e
topology: v5e:2x2
jax: 0.10.0
libtpu: 0.0.40
codegen_flags: <defaults>
</compile_context>

<pallas_src>
import jax
import jax.numpy as jnp
from jax.experimental import pallas as pl
from jax.experimental.pallas import tpu as pltpu


RESIDENT_H_BUDGET = 8 * 1024 * 1024     # keep h_cat VMEM-resident below this
VMEM_LIMIT = 32 * 1024 * 1024           # safe on v5e/v6e (128 MiB) and v7x (64 MiB)


def _round_up(x, m):
    return ((x + m - 1) // m) * m


def _pick_tile(n, preferred, align):
    """Largest tile <= preferred, multiple of align, dividing n; else n (full)."""
    t = min(preferred, n)
    t -= t % align
    while t >= align:
        if n % t == 0:
            return t
        t -= align
    return n


def _pick_row_tile(n, preferred=512, align=8):
    """Row tile for the GIN layer: big, but keep >=2 tiles so v7x's two
    TensorCores both get work on the 'parallel' axis."""
    cap = preferred
    if n >= 4 * align:
        cap = min(cap, ((n // 2) // align) * align)
    return _pick_tile(n, max(cap, align), align)


# ---------------------------------------------------------------------------
# Kernel 1: fused GIN layer on concatenated pos/neg features
#   out_cat = relu( (A_plus_I @ h_cat) @ blockdiag(W, W) + [b | b] )   (bf16 out)
#   grid = (row tiles [parallel], K tiles of A [arbitrary]); f32 accumulator.
# ---------------------------------------------------------------------------
def gin_layer_fused(a_plus_i_bf16, h_cat, w_blockdiag_bf16, b_cat):
    n, f_cat = h_cat.shape
    out_cat = w_blockdiag_bf16.shape[1]
    tm = _pick_row_tile(n, preferred=512, align=8)     # destination-node rows
    tk = _pick_tile(n, 512, 128)                       # source-node / reduction axis
    kt = n // tk
    resident = (n * f_cat * h_cat.dtype.itemsize) <= RESIDENT_H_BUDGET

    def kernel(a_ref, h_ref, w_ref, b_ref, o_ref, acc_ref):
        k = pl.program_id(1)

        @pl.when(k == 0)
        def _init():
            acc_ref[...] = jnp.zeros_like(acc_ref)

        if resident:
            start = pl.multiple_of(k * tk, tk)
            h_blk = h_ref[pl.ds(start, tk), :]          # whole h_cat lives in VMEM
        else:
            h_blk = h_ref[...]                          # streamed (tk, f_cat) block

        # agg_cat += A_plus_I[i, k] @ h_cat[k]   (bf16 x bf16 -> f32 on the MXU)
        acc_ref[...] += jnp.dot(a_ref[...], h_blk, preferred_element_type=jnp.float32)

        @pl.when(k == pl.num_programs(1) - 1)
        def _finalize():
            z = jnp.dot(acc_ref[...].astype(jnp.bfloat16), w_ref[...],
                        preferred_element_type=jnp.float32) + b_ref[...]
            o_ref[...] = jnp.maximum(z, 0.0).astype(o_ref.dtype)

    # A spec: deepen buffering only when there are enough k-steps to exploit it.
    a_kwargs = {}
    if kt >= 3:
        a_kwargs["pipeline_mode"] = pl.Buffered(3)
    a_spec = pl.BlockSpec((tm, tk), lambda i, k: (i, k), **a_kwargs)

    if resident:
        h_spec = pl.BlockSpec((n, f_cat), lambda i, k: (0, 0))   # fetched once
        h_bytes = n * f_cat * 2
    else:
        h_spec = pl.BlockSpec((tk, f_cat), lambda i, k: (k, 0))  # re-streamed per row tile
        h_bytes = (n // tm) * n * f_cat * 2

    cost = pl.CostEstimate(
        flops=2 * n * n * f_cat + 2 * n * f_cat * out_cat,
        transcendentals=0,
        bytes_accessed=n * n * 2 + h_bytes + n * out_cat * 2
        + f_cat * out_cat * 2 + out_cat * 4)

    return pl.pallas_call(
        kernel,
        out_shape=jax.ShapeDtypeStruct((n, out_cat), jnp.bfloat16),
        grid_spec=pltpu.PrefetchScalarGridSpec(
            num_scalar_prefetch=0,
            grid=(n // tm, kt),
            in_specs=[
                a_spec,                                              # A + I  (bf16)
                h_spec,                                              # h_cat  (bf16)
                pl.BlockSpec((f_cat, out_cat), lambda i, k: (0, 0)),  # blockdiag(W, W) bf16
                pl.BlockSpec((1, out_cat), lambda i, k: (0, 0)),      # [b | b] f32
            ],
            out_specs=pl.BlockSpec((tm, out_cat), lambda i, k: (i, 0)),
            scratch_shapes=[pltpu.VMEM((tm, f_cat), jnp.float32)],
        ),
        compiler_params=pltpu.CompilerParams(
            dimension_semantics=("parallel", "arbitrary"),
            vmem_limit_bytes=VMEM_LIMIT),
        cost_estimate=cost,
    )(a_plus_i_bf16, h_cat, w_blockdiag_bf16, b_cat)


# ---------------------------------------------------------------------------
# Kernel 2: weighted summary over positive features + discriminator vector
#   summary = sigmoid( w_sum_row @ pos )   (w_sum = 1/N on real rows, 0 on pad)
#   ws_row  = summary @ W_disc^T
# ---------------------------------------------------------------------------
def summary_ws(h_cat, w_sum_row, wd_t_pad):
    n, two_h = h_cat.shape
    h_pad = wd_t_pad.shape[0]
    tm = _pick_tile(n, 512, 128)
    # DMA only the positive half when it is lane-aligned; otherwise load full
    # width (block last dim must be a 128-multiple or the full array dim).
    h_block_w = h_pad if (h_pad % 128 == 0) else two_h

    def kernel(h_ref, wsum_ref, wdt_ref, ws_ref, acc_ref):
        i = pl.program_id(0)

        @pl.when(i == 0)
        def _init():
            acc_ref[...] = jnp.zeros_like(acc_ref)

        # (1, tm) @ (tm, width) -> (1, width) weighted column sum on the MXU
        acc_ref[...] += jnp.dot(wsum_ref[...], h_ref[...].astype(jnp.float32),
                                preferred_element_type=jnp.float32)

        @pl.when(i == pl.num_programs(0) - 1)
        def _finalize():
            acc = acc_ref[...]
            summary = jax.nn.sigmoid(acc[:, :h_pad])                     # (1, h_pad)
            ws_ref[...] = jnp.dot(summary, wdt_ref[...],
                                  preferred_element_type=jnp.float32)    # (1, h_pad)

    cost = pl.CostEstimate(
        flops=2 * n * h_block_w + 2 * h_pad * h_pad,
        transcendentals=h_pad,
        bytes_accessed=n * h_block_w * 2 + n * 4 + h_pad * h_pad * 4 + h_pad * 4)

    return pl.pallas_call(
        kernel,
        out_shape=jax.ShapeDtypeStruct((1, h_pad), jnp.float32),
        grid_spec=pltpu.PrefetchScalarGridSpec(
            num_scalar_prefetch=0,
            grid=(n // tm,),
            in_specs=[pl.BlockSpec((tm, h_block_w), lambda i: (i, 0)),   # h (bf16)
                      pl.BlockSpec((1, tm), lambda i: (0, i)),           # 1/N weights
                      pl.BlockSpec((h_pad, h_pad), lambda i: (0, 0))],   # W_disc^T (padded)
            out_specs=pl.BlockSpec((1, h_pad), lambda i: (0, 0)),
            scratch_shapes=[pltpu.VMEM((1, h_block_w), jnp.float32)],
        ),
        compiler_params=pltpu.CompilerParams(
            dimension_semantics=("arbitrary",),
            vmem_limit_bytes=VMEM_LIMIT),
        cost_estimate=cost,
    )(h_cat, w_sum_row, wd_t_pad)


# ---------------------------------------------------------------------------
# Kernel 3: per-node scores + weighted BCEWithLogits reduction -> scalar loss
#   pos_sc = pos . ws ; neg_sc = neg . ws
#   loss  += w_node_row @ ( softplus(-pos_sc) + softplus(neg_sc) )
# ---------------------------------------------------------------------------
def dci_loss(h_cat, ws, w_node_row):
    n, two_h = h_cat.shape
    h_pad = ws.shape[1]
    tm = _pick_tile(n, 512, 128)

    def kernel(h_ref, ws_ref, wn_ref, o_ref, acc_ref):
        i = pl.program_id(0)

        @pl.when(i == 0)
        def _init():
            acc_ref[...] = jnp.zeros_like(acc_ref)

        hcat = h_ref[...].astype(jnp.float32)                            # (tm, 2*h_pad)
        wsv = ws_ref[...]                                                # (1, h_pad)
        pos_sc = jnp.sum(hcat[:, :h_pad] * wsv, axis=-1, keepdims=True)  # (tm, 1)
        neg_sc = jnp.sum(hcat[:, h_pad:] * wsv, axis=-1, keepdims=True)  # (tm, 1)
        # BCEWithLogits: target=1 -> softplus(-x); target=0 -> softplus(x)
        per_node = jax.nn.softplus(-pos_sc) + jax.nn.softplus(neg_sc)    # (tm, 1)
        # lane-dense (1, tm) weights reduced against (tm, 1) via a tiny matmul
        acc_ref[...] += jnp.dot(wn_ref[...], per_node,
                                preferred_element_type=jnp.float32)      # (1, 1)

        @pl.when(i == pl.num_programs(0) - 1)
        def _finalize():
            o_ref[...] = acc_ref[...]

    cost = pl.CostEstimate(
        flops=4 * n * h_pad + 8 * n,
        transcendentals=4 * n,
        bytes_accessed=n * two_h * 2 + n * 4 + h_pad * 4 + 4)

    return pl.pallas_call(
        kernel,
        out_shape=jax.ShapeDtypeStruct((1, 1), jnp.float32),
        grid_spec=pltpu.PrefetchScalarGridSpec(
            num_scalar_prefetch=0,
            grid=(n // tm,),
            in_specs=[pl.BlockSpec((tm, two_h), lambda i: (i, 0)),       # h (bf16)
                      pl.BlockSpec((1, h_pad), lambda i: (0, 0)),        # ws
                      pl.BlockSpec((1, tm), lambda i: (0, i))],          # per-node weight
            out_specs=pl.BlockSpec((1, 1), lambda i: (0, 0)),
            scratch_shapes=[pltpu.VMEM((1, 1), jnp.float32)],
        ),
        compiler_params=pltpu.CompilerParams(
            dimension_semantics=("arbitrary",),
            vmem_limit_bytes=VMEM_LIMIT),
        cost_estimate=cost,
    )(h_cat, ws, w_node_row)


# ---------------------------------------------------------------------------
# Full forward (glue in plain JAX, hot path in the three kernels above)
# ---------------------------------------------------------------------------
def dci_forward(a_plus_i_bf16, x, perm, gin_params, wd_t_pad, w_sum_row, w_node_row):
    h_pad = wd_t_pad.shape[0]
    # fuse positive (x) and corrupted (x[perm]) features along the lane axis, bf16 once
    h = jnp.concatenate([x, x[perm, :]], axis=1).astype(jnp.bfloat16)   # (N, 2F)
    for w, b in gin_params:
        half_in = h.shape[1] // 2
        f_in, h_out = w.shape
        # block-diagonal weight, zero-padded to a lane-dense (.., 2*h_pad) output
        w_bd = jnp.zeros((2 * half_in, 2 * h_pad), jnp.bfloat16)
        w_bd = w_bd.at[:f_in, :h_out].set(w.astype(jnp.bfloat16))
        w_bd = w_bd.at[half_in:half_in + f_in, h_pad:h_pad + h_out].set(
            w.astype(jnp.bfloat16))
        b_cat = jnp.zeros((1, 2 * h_pad), jnp.float32)
        b_cat = b_cat.at[:, :h_out].set(b)
        b_cat = b_cat.at[:, h_pad:h_pad + h_out].set(b)
        h = gin_layer_fused(a_plus_i_bf16, h, w_bd, b_cat)              # (N, 2*h_pad) bf16
    ws = summary_ws(h, w_sum_row, wd_t_pad)                             # (1, h_pad)
    return dci_loss(h, ws, w_node_row)[0, 0]


# ---------------------------------------------------------------------------
# Pure-JAX reference (mirrors the kernel's bf16 casts) for checking
# ---------------------------------------------------------------------------
def dci_reference(a_plus_i_bf16, x, perm, gin_params, w_disc, cluster_ids, num_clusters):
    def gin(h0):
        h = h0.astype(jnp.bfloat16)
        for w, b in gin_params:
            agg = jnp.dot(a_plus_i_bf16, h, preferred_element_type=jnp.float32)
            z = jnp.dot(agg.astype(jnp.bfloat16), w.astype(jnp.bfloat16),
                        preferred_element_type=jnp.float32) + b
            h = jnp.maximum(z, 0.0).astype(jnp.bfloat16)
        return h.astype(jnp.float32)

    pos = gin(x)
    neg = gin(x[perm, :])
    summary = jax.nn.sigmoid(jnp.mean(pos, axis=0))
    wsum = w_disc @ summary
    pos_sc = pos @ wsum
    neg_sc = neg @ wsum
    loss = 0.0
    for i in range(num_clusters):
        m = (cluster_ids == i).astype(jnp.float32)
        sz = jnp.sum(m)
        loss = loss + jnp.sum(m * jax.nn.softplus(-pos_sc)) / sz
        loss = loss + jnp.sum(m * jax.nn.softplus(neg_sc)) / sz
    return loss / num_clusters


if __name__ == "__main__":
    # Small, deterministic synthetic problem.
    N_RAW, F_IN, H, C = 512, 16, 32, 4        # nodes, in_feats, h_feats, cluster_num
    key = jax.random.PRNGKey(0)
    k_x, k_adj, k_perm, k_w1, k_b1, k_w2, k_b2, k_wd = jax.random.split(key, 8)

    # lane-dense hidden padding (2*H_PAD multiple of 128) and node-count padding
    H_PAD = _round_up(H, 64)
    N = _round_up(N_RAW, 512)

    x = jax.random.normal(k_x, (N_RAW, F_IN), dtype=jnp.float32)

    # random directed graph; row-normalize for mean aggregation (zero in-degree -> 0)
    adj = jax.random.bernoulli(k_adj, 0.15, (N_RAW, N_RAW)).astype(jnp.float32)
    deg = jnp.sum(adj, axis=1, keepdims=True)
    a_norm = adj / jnp.maximum(deg, 1.0)
    # fold GIN self-term (eps=0) into the operator once
    a_plus_i = a_norm + jnp.eye(N_RAW, dtype=jnp.float32)

    # zero-pad node count (padded rows/cols of A are zero -> never touch real rows)
    a_pad_bf16 = (jnp.zeros((N, N), jnp.float32)
                  .at[:N_RAW, :N_RAW].set(a_plus_i)).astype(jnp.bfloat16)
    x_pad = jnp.zeros((N, F_IN), jnp.float32).at[:N_RAW, :].set(x)

    # corruption permutation (deterministic stand-in for torch.randperm)
    perm = jax.random.permutation(k_perm, N_RAW)
    perm_full = jnp.concatenate([perm, jnp.arange(N_RAW, N, dtype=perm.dtype)])

    # GIN parameters (2 layers): x@W + b convention, bias as (1, H)
    w1 = jax.random.uniform(k_w1, (F_IN, H), jnp.float32, -1.0, 1.0) / jnp.sqrt(F_IN)
    b1 = jax.random.uniform(k_b1, (1, H), jnp.float32, -1.0, 1.0) / jnp.sqrt(F_IN)
    w2 = jax.random.uniform(k_w2, (H, H), jnp.float32, -1.0, 1.0) / jnp.sqrt(H)
    b2 = jax.random.uniform(k_b2, (1, H), jnp.float32, -1.0, 1.0) / jnp.sqrt(H)
    gin_params = [(w1, b1), (w2, b2)]

    # discriminator weight; kernel consumes the padded transpose so
    # ws_row = summary @ W^T == (W @ summary)^T without an in-kernel transpose
    bound = 1.0 / (H ** 0.5)
    w_disc = jax.random.uniform(k_wd, (H, H), jnp.float32, -bound, bound)
    wd_t_pad = jnp.zeros((H_PAD, H_PAD), jnp.float32).at[:H, :H].set(jnp.transpose(w_disc))

    # cluster_info: node n -> cluster n % C
    cl = jnp.arange(N_RAW) % C
    sizes = jnp.bincount(cl, length=C).astype(jnp.float32)               # (C,)
    # lane-dense per-node weights; zero on padded rows
    w_node_row = jnp.zeros((1, N), jnp.float32).at[0, :N_RAW].set(1.0 / (sizes[cl] * C))
    w_sum_row = jnp.zeros((1, N), jnp.float32).at[0, :N_RAW].set(1.0 / N_RAW)

    loss = jax.jit(dci_forward)(a_pad_bf16, x_pad, perm_full, gin_params,
                                wd_t_pad, w_sum_row, w_node_row)
    loss = jax.block_until_ready(loss)

    ref = dci_reference(a_plus_i.astype(jnp.bfloat16), x, perm, gin_params,
                        w_disc, cl, C)
    assert jnp.allclose(loss, ref, rtol=1e-2, atol=1e-2), (loss, ref)

    print("KERNEL_OK")
</pallas_src>

<mosaic_0001>
module attributes {stable_mosaic.version = 11 : i64} {
  func.func @kernel(%arg0: i32, %arg1: i32, %arg2: memref<256x512xbf16, #tpu.memory_space<vmem>>, %arg3: memref<512x32xbf16, #tpu.memory_space<vmem>>, %arg4: memref<32x128xbf16, #tpu.memory_space<vmem>>, %arg5: memref<1x128xf32, #tpu.memory_space<vmem>>, %arg6: memref<256x128xbf16, #tpu.memory_space<vmem>>, %arg7: memref<256x32xf32, #tpu.memory_space<vmem>>) attributes {dimension_semantics = [#tpu.dimension_semantics<parallel>, #tpu.dimension_semantics<arbitrary>], iteration_bounds = array<i64: 2, 1>, scalar_prefetch = 0 : i64, scratch_operands = 1 : i64, tpu.core_type = #tpu.core_type<tc>, window_params = [{transform_indices = @transform_0, window_bounds = array<i64: 256, 512>}, {pipeline_mode = #tpu.pipeline_mode<synchronous>, transform_indices = @transform_1, window_bounds = array<i64: 512, 32>}, {pipeline_mode = #tpu.pipeline_mode<synchronous>, transform_indices = @transform_2, window_bounds = array<i64: 32, 128>}, {pipeline_mode = #tpu.pipeline_mode<synchronous>, transform_indices = @transform_3, window_bounds = array<i64: 1, 128>}, {transform_indices = @transform_4, window_bounds = array<i64: 256, 128>}]} {
    %c0_i32 = arith.constant 0 : i32
    %0 = arith.cmpi eq, %arg1, %c0_i32 : i32
    %1 = arith.extui %0 : i1 to i32
    %c0_i32_0 = arith.constant 0 : i32
    %2 = arith.cmpi ne, %1, %c0_i32_0 : i32
    scf.if %2 {
      %cst_9 = arith.constant 0.000000e+00 : f32
      %15 = vector.broadcast %cst_9 : f32 to vector<256x32xf32>
      %c0_10 = arith.constant 0 : index
      %c0_11 = arith.constant 0 : index
      %16 = vector.load %arg7[%c0_10, %c0_11] : memref<256x32xf32, #tpu.memory_space<vmem>>, vector<256x32xf32>
      tpu.vector_store %arg7[%c0_10, %c0_11], %15 {strides = array<i32>} : memref<256x32xf32, #tpu.memory_space<vmem>>, vector<256x32xf32>,
    } else {
    }
    %c512_i32 = arith.constant 512 : i32
    %3 = arith.muli %arg1, %c512_i32 : i32
    %4 = tpu.assume_multiple %3, 512 : i32
    %5 = arith.index_cast %4 : i32 to index
    %c0 = arith.constant 0 : index
    %6 = vector.load %arg3[%5, %c0] : memref<512x32xbf16, #tpu.memory_space<vmem>>, vector<512x32xbf16>
    %c0_1 = arith.constant 0 : index
    %c0_2 = arith.constant 0 : index
    %7 = vector.load %arg7[%c0_1, %c0_2] : memref<256x32xf32, #tpu.memory_space<vmem>>, vector<256x32xf32>
    %c0_3 = arith.constant 0 : index
    %c0_4 = arith.constant 0 : index
    %8 = vector.load %arg2[%c0_3, %c0_4] : memref<256x512xbf16, #tpu.memory_space<vmem>>, vector<256x512xbf16>
    %cst = arith.constant dense<0.000000e+00> : vector<256x32xf32>
    %9 = tpu.matmul %8, %6, %cst {dimension_numbers = #tpu.dot_dimension_numbers<[1], [0], [0], [1], [0, 0, 1, 1], [], []>} : vector<256x512xbf16>, vector<512x32xbf16>, vector<256x32xf32> -> vector<256x32xf32>
    %10 = arith.addf %7, %9 : vector<256x32xf32>
    %c0_5 = arith.constant 0 : index
    %c0_6 = arith.constant 0 : index
    %11 = vector.load %arg7[%c0_5, %c0_6] : memref<256x32xf32, #tpu.memory_space<vmem>>, vector<256x32xf32>
    tpu.vector_store %arg7[%c0_5, %c0_6], %10 {strides = array<i32>} : memref<256x32xf32, #tpu.memory_space<vmem>>, vector<256x32xf32>,
    %c0_i32_7 = arith.constant 0 : i32
    %12 = arith.cmpi eq, %arg1, %c0_i32_7 : i32
    %13 = arith.extui %12 : i1 to i32
    %c0_i32_8 = arith.constant 0 : i32
    %14 = arith.cmpi ne, %13, %c0_i32_8 : i32
    scf.if %14 {
      %c0_9 = arith.constant 0 : index
      %c0_10 = arith.constant 0 : index
      %15 = vector.load %arg7[%c0_9, %c0_10] : memref<256x32xf32, #tpu.memory_space<vmem>>, vector<256x32xf32>
      %16 = arith.truncf %15 : vector<256x32xf32> to vector<256x32xbf16>
      %c0_11 = arith.constant 0 : index
      %c0_12 = arith.constant 0 : index
      %17 = vector.load %arg4[%c0_11, %c0_12] : memref<32x128xbf16, #tpu.memory_space<vmem>>, vector<32x128xbf16>
      %cst_13 = arith.constant dense<0.000000e+00> : vector<256x128xf32>
      %18 = tpu.matmul %16, %17, %cst_13 {dimension_numbers = #tpu.dot_dimension_numbers<[1], [0], [0], [1], [0, 0, 1, 1], [], []>} : vector<256x32xbf16>, vector<32x128xbf16>, vector<256x128xf32> -> vector<256x128xf32>
      %c0_14 = arith.constant 0 : index
      %c0_15 = arith.constant 0 : index
      %19 = vector.load %arg5[%c0_14, %c0_15] : memref<1x128xf32, #tpu.memory_space<vmem>>, vector<1x128xf32>
      %20 = vector.broadcast %19 : vector<1x128xf32> to vector<256x128xf32>
      %21 = arith.addf %18, %20 : vector<256x128xf32>
      %cst_16 = arith.constant 0.000000e+00 : f32
      %22 = vector.broadcast %cst_16 : f32 to vector<256x128xf32>
      %23 = arith.maximumf %21, %22 : vector<256x128xf32>
      %24 = arith.truncf %23 : vector<256x128xf32> to vector<256x128xbf16>
      %c0_17 = arith.constant 0 : index
      %c0_18 = arith.constant 0 : index
      %25 = vector.load %arg6[%c0_17, %c0_18] : memref<256x128xbf16, #tpu.memory_space<vmem>>, vector<256x128xbf16>
      tpu.vector_store %arg6[%c0_17, %c0_18], %24 {strides = array<i32>} : memref<256x128xbf16, #tpu.memory_space<vmem>>, vector<256x128xbf16>,
    } else {
    }
    return
  }
  func.func @transform_0(%arg0: i32, %arg1: i32) -> (i32, i32) {
    %c0_i32 = arith.constant 0 : i32
    return %arg0, %arg1 : i32, i32
  }
  func.func @transform_1(%arg0: i32, %arg1: i32) -> (i32, i32) {
    %c0_i32 = arith.constant 0 : i32
    %c0_i32_0 = arith.constant 0 : i32
    %c0_i32_1 = arith.constant 0 : i32
    return %c0_i32, %c0_i32_0 : i32, i32
  }
  func.func @transform_2(%arg0: i32, %arg1: i32) -> (i32, i32) {
    %c0_i32 = arith.constant 0 : i32
    %c0_i32_0 = arith.constant 0 : i32
    %c0_i32_1 = arith.constant 0 : i32
    return %c0_i32, %c0_i32_0 : i32, i32
  }
  func.func @transform_3(%arg0: i32, %arg1: i32) -> (i32, i32) {
    %c0_i32 = arith.constant 0 : i32
    %c0_i32_0 = arith.constant 0 : i32
    %c0_i32_1 = arith.constant 0 : i32
    return %c0_i32, %c0_i32_0 : i32, i32
  }
  func.func @transform_4(%arg0: i32, %arg1: i32) -> (i32, i32) {
    %c0_i32 = arith.constant 0 : i32
    %c0_i32_0 = arith.constant 0 : i32
    return %arg0, %c0_i32 : i32, i32
  }
}

module attributes {stable_mosaic.version = 11 : i64} {
  func.func @kernel(%arg0: i32, %arg1: i32, %arg2: memref<256x512xbf16, #tpu.memory_space<vmem>>, %arg3: memref<512x128xbf16, #tpu.memory_space<vmem>>, %arg4: memref<128x128xbf16, #tpu.memory_space<vmem>>, %arg5: memref<1x128xf32, #tpu.memory_space<vmem>>, %arg6: memref<256x128xbf16, #tpu.memory_space<vmem>>, %arg7: memref<256x128xf32, #tpu.memory_space<vmem>>) attributes {dimension_semantics = [#tpu.dimension_semantics<parallel>, #tpu.dimension_semantics<arbitrary>], iteration_bounds = array<i64: 2, 1>, scalar_prefetch = 0 : i64, scratch_operands = 1 : i64, tpu.core_type = #tpu.core_type<tc>, window_params = [{transform_indices = @transform_0, window_bounds = array<i64: 256, 512>}, {pipeline_mode = #tpu.pipeline_mode<synchronous>, transform_indices = @transform_1, window_bounds = array<i64: 512, 128>}, {pipeline_mode = #tpu.pipeline_mode<synchronous>, transform_indices = @transform_2, window_bounds = array<i64: 128, 128>}, {pipeline_mode = #tpu.pipeline_mode<synchronous>, transform_indices = @transform_3, window_bounds = array<i64: 1, 128>}, {transform_indices = @transform_4, window_bounds = array<i64: 256, 128>}]} {
    %c0_i32 = arith.constant 0 : i32
    %0 = arith.cmpi eq, %arg1, %c0_i32 : i32
    %1 = arith.extui %0 : i1 to i32
    %c0_i32_0 = arith.constant 0 : i32
    %2 = arith.cmpi ne, %1, %c0_i32_0 : i32
    scf.if %2 {
      %cst_9 = arith.constant 0.000000e+00 : f32
      %15 = vector.broadcast %cst_9 : f32 to vector<256x128xf32>
      %c0_10 = arith.constant 0 : index
      %c0_11 = arith.constant 0 : index
      %16 = vector.load %arg7[%c0_10, %c0_11] : memref<256x128xf32, #tpu.memory_space<vmem>>, vector<256x128xf32>
      tpu.vector_store %arg7[%c0_10, %c0_11], %15 {strides = array<i32>} : memref<256x128xf32, #tpu.memory_space<vmem>>, vector<256x128xf32>,
    } else {
    }
    %c512_i32 = arith.constant 512 : i32
    %3 = arith.muli %arg1, %c512_i32 : i32
    %4 = tpu.assume_multiple %3, 512 : i32
    %5 = arith.index_cast %4 : i32 to index
    %c0 = arith.constant 0 : index
    %6 = vector.load %arg3[%5, %c0] : memref<512x128xbf16, #tpu.memory_space<vmem>>, vector<512x128xbf16>
    %c0_1 = arith.constant 0 : index
    %c0_2 = arith.constant 0 : index
    %7 = vector.load %arg7[%c0_1, %c0_2] : memref<256x128xf32, #tpu.memory_space<vmem>>, vector<256x128xf32>
    %c0_3 = arith.constant 0 : index
    %c0_4 = arith.constant 0 : index
    %8 = vector.load %arg2[%c0_3, %c0_4] : memref<256x512xbf16, #tpu.memory_space<vmem>>, vector<256x512xbf16>
    %cst = arith.constant dense<0.000000e+00> : vector<256x128xf32>
    %9 = tpu.matmul %8, %6, %cst {dimension_numbers = #tpu.dot_dimension_numbers<[1], [0], [0], [1], [0, 0, 1, 1], [], []>} : vector<256x512xbf16>, vector<512x128xbf16>, vector<256x128xf32> -> vector<256x128xf32>
    %10 = arith.addf %7, %9 : vector<256x128xf32>
    %c0_5 = arith.constant 0 : index
    %c0_6 = arith.constant 0 : index
    %11 = vector.load %arg7[%c0_5, %c0_6] : memref<256x128xf32, #tpu.memory_space<vmem>>, vector<256x128xf32>
    tpu.vector_store %arg7[%c0_5, %c0_6], %10 {strides = array<i32>} : memref<256x128xf32, #tpu.memory_space<vmem>>, vector<256x128xf32>,
    %c0_i32_7 = arith.constant 0 : i32
    %12 = arith.cmpi eq, %arg1, %c0_i32_7 : i32
    %13 = arith.extui %12 : i1 to i32
    %c0_i32_8 = arith.constant 0 : i32
    %14 = arith.cmpi ne, %13, %c0_i32_8 : i32
    scf.if %14 {
      %c0_9 = arith.constant 0 : index
      %c0_10 = arith.constant 0 : index
      %15 = vector.load %arg7[%c0_9, %c0_10] : memref<256x128xf32, #tpu.memory_space<vmem>>, vector<256x128xf32>
      %16 = arith.truncf %15 : vector<256x128xf32> to vector<256x128xbf16>
      %c0_11 = arith.constant 0 : index
      %c0_12 = arith.constant 0 : index
      %17 = vector.load %arg4[%c0_11, %c0_12] : memref<128x128xbf16, #tpu.memory_space<vmem>>, vector<128x128xbf16>
      %cst_13 = arith.constant dense<0.000000e+00> : vector<256x128xf32>
      %18 = tpu.matmul %16, %17, %cst_13 {dimension_numbers = #tpu.dot_dimension_numbers<[1], [0], [0], [1], [0, 0, 1, 1], [], []>} : vector<256x128xbf16>, vector<128x128xbf16>, vector<256x128xf32> -> vector<256x128xf32>
      %c0_14 = arith.constant 0 : index
      %c0_15 = arith.constant 0 : index
      %19 = vector.load %arg5[%c0_14, %c0_15] : memref<1x128xf32, #tpu.memory_space<vmem>>, vector<1x128xf32>
      %20 = vector.broadcast %19 : vector<1x128xf32> to vector<256x128xf32>
      %21 = arith.addf %18, %20 : vector<256x128xf32>
      %cst_16 = arith.constant 0.000000e+00 : f32
      %22 = vector.broadcast %cst_16 : f32 to vector<256x128xf32>
      %23 = arith.maximumf %21, %22 : vector<256x128xf32>
      %24 = arith.truncf %23 : vector<256x128xf32> to vector<256x128xbf16>
      %c0_17 = arith.constant 0 : index
      %c0_18 = arith.constant 0 : index
      %25 = vector.load %arg6[%c0_17, %c0_18] : memref<256x128xbf16, #tpu.memory_space<vmem>>, vector<256x128xbf16>
      tpu.vector_store %arg6[%c0_17, %c0_18], %24 {strides = array<i32>} : memref<256x128xbf16, #tpu.memory_space<vmem>>, vector<256x128xbf16>,
    } else {
    }
    return
  }
  func.func @transform_0(%arg0: i32, %arg1: i32) -> (i32, i32) {
    %c0_i32 = arith.constant 0 : i32
    return %arg0, %arg1 : i32, i32
  }
  func.func @transform_1(%arg0: i32, %arg1: i32) -> (i32, i32) {
    %c0_i32 = arith.constant 0 : i32
    %c0_i32_0 = arith.constant 0 : i32
    %c0_i32_1 = arith.constant 0 : i32
    return %c0_i32, %c0_i32_0 : i32, i32
  }
  func.func @transform_2(%arg0: i32, %arg1: i32) -> (i32, i32) {
    %c0_i32 = arith.constant 0 : i32
    %c0_i32_0 = arith.constant 0 : i32
    %c0_i32_1 = arith.constant 0 : i32
    return %c0_i32, %c0_i32_0 : i32, i32
  }
  func.func @transform_3(%arg0: i32, %arg1: i32) -> (i32, i32) {
    %c0_i32 = arith.constant 0 : i32
    %c0_i32_0 = arith.constant 0 : i32
    %c0_i32_1 = arith.constant 0 : i32
    return %c0_i32, %c0_i32_0 : i32, i32
  }
  func.func @transform_4(%arg0: i32, %arg1: i32) -> (i32, i32) {
    %c0_i32 = arith.constant 0 : i32
    %c0_i32_0 = arith.constant 0 : i32
    return %arg0, %c0_i32 : i32, i32
  }
}

module attributes {stable_mosaic.version = 11 : i64} {
  func.func @kernel(%arg0: i32, %arg1: memref<512x128xbf16, #tpu.memory_space<vmem>>, %arg2: memref<1x512xf32, #tpu.memory_space<vmem>>, %arg3: memref<64x64xf32, #tpu.memory_space<vmem>>, %arg4: memref<1x64xf32, #tpu.memory_space<vmem>>, %arg5: memref<1x128xf32, #tpu.memory_space<vmem>>) attributes {dimension_semantics = [#tpu.dimension_semantics<arbitrary>], iteration_bounds = array<i64: 1>, scalar_prefetch = 0 : i64, scratch_operands = 1 : i64, tpu.core_type = #tpu.core_type<tc>, window_params = [{transform_indices = @transform_0, window_bounds = array<i64: 512, 128>}, {transform_indices = @transform_1, window_bounds = array<i64: 1, 512>}, {pipeline_mode = #tpu.pipeline_mode<synchronous>, transform_indices = @transform_2, window_bounds = array<i64: 64, 64>}, {pipeline_mode = #tpu.pipeline_mode<synchronous>, transform_indices = @transform_3, window_bounds = array<i64: 1, 64>}]} {
    %c0_i32 = arith.constant 0 : i32
    %0 = arith.cmpi eq, %arg0, %c0_i32 : i32
    %1 = arith.extui %0 : i1 to i32
    %c0_i32_0 = arith.constant 0 : i32
    %2 = arith.cmpi ne, %1, %c0_i32_0 : i32
    scf.if %2 {
      %cst_10 = arith.constant 0.000000e+00 : f32
      %13 = vector.broadcast %cst_10 : f32 to vector<1x128xf32>
      %c0_11 = arith.constant 0 : index
      %c0_12 = arith.constant 0 : index
      %14 = vector.load %arg5[%c0_11, %c0_12] : memref<1x128xf32, #tpu.memory_space<vmem>>, vector<1x128xf32>
      tpu.vector_store %arg5[%c0_11, %c0_12], %13 {strides = array<i32>} : memref<1x128xf32, #tpu.memory_space<vmem>>, vector<1x128xf32>,
    } else {
    }
    %c0 = arith.constant 0 : index
    %c0_1 = arith.constant 0 : index
    %3 = vector.load %arg5[%c0, %c0_1] : memref<1x128xf32, #tpu.memory_space<vmem>>, vector<1x128xf32>
    %c0_2 = arith.constant 0 : index
    %c0_3 = arith.constant 0 : index
    %4 = vector.load %arg2[%c0_2, %c0_3] : memref<1x512xf32, #tpu.memory_space<vmem>>, vector<1x512xf32>
    %c0_4 = arith.constant 0 : index
    %c0_5 = arith.constant 0 : index
    %5 = vector.load %arg1[%c0_4, %c0_5] : memref<512x128xbf16, #tpu.memory_space<vmem>>, vector<512x128xbf16>
    %6 = arith.extf %5 : vector<512x128xbf16> to vector<512x128xf32>
    %cst = arith.constant dense<0.000000e+00> : vector<1x128xf32>
    %7 = tpu.matmul %4, %6, %cst {dimension_numbers = #tpu.dot_dimension_numbers<[1], [0], [0], [1], [0, 0, 1, 1], [], []>} : vector<1x512xf32>, vector<512x128xf32>, vector<1x128xf32> -> vector<1x128xf32>
    %8 = arith.addf %3, %7 : vector<1x128xf32>
    %c0_6 = arith.constant 0 : index
    %c0_7 = arith.constant 0 : index
    %9 = vector.load %arg5[%c0_6, %c0_7] : memref<1x128xf32, #tpu.memory_space<vmem>>, vector<1x128xf32>
    tpu.vector_store %arg5[%c0_6, %c0_7], %8 {strides = array<i32>} : memref<1x128xf32, #tpu.memory_space<vmem>>, vector<1x128xf32>,
    %c0_i32_8 = arith.constant 0 : i32
    %10 = arith.cmpi eq, %arg0, %c0_i32_8 : i32
    %11 = arith.extui %10 : i1 to i32
    %c0_i32_9 = arith.constant 0 : i32
    %12 = arith.cmpi ne, %11, %c0_i32_9 : i32
    scf.if %12 {
      %c0_10 = arith.constant 0 : index
      %c0_11 = arith.constant 0 : index
      %13 = vector.load %arg5[%c0_10, %c0_11] : memref<1x128xf32, #tpu.memory_space<vmem>>, vector<1x128xf32>
      %14 = vector.extract_strided_slice %13 {offsets = [0, 0], sizes = [1, 64], strides = [1, 1]} : vector<1x128xf32> to vector<1x64xf32>
      %15 = arith.negf %14 : vector<1x64xf32>
      %16 = math.exp %15 : vector<1x64xf32>
      %cst_12 = arith.constant 1.000000e+00 : f32
      %17 = vector.broadcast %cst_12 : f32 to vector<1x64xf32>
      %18 = arith.addf %17, %16 : vector<1x64xf32>
      %19 = arith.divf %17, %18 : vector<1x64xf32>
      %c0_13 = arith.constant 0 : index
      %c0_14 = arith.constant 0 : index
      %20 = vector.load %arg3[%c0_13, %c0_14] : memref<64x64xf32, #tpu.memory_space<vmem>>, vector<64x64xf32>
      %cst_15 = arith.constant dense<0.000000e+00> : vector<1x64xf32>
      %21 = tpu.matmul %19, %20, %cst_15 {dimension_numbers = #tpu.dot_dimension_numbers<[1], [0], [0], [1], [0, 0, 1, 1], [], []>} : vector<1x64xf32>, vector<64x64xf32>, vector<1x64xf32> -> vector<1x64xf32>
      %c0_16 = arith.constant 0 : index
      %c0_17 = arith.constant 0 : index
      %22 = vector.load %arg4[%c0_16, %c0_17] : memref<1x64xf32, #tpu.memory_space<vmem>>, vector<1x64xf32>
      tpu.vector_store %arg4[%c0_16, %c0_17], %21 {strides = array<i32>} : memref<1x64xf32, #tpu.memory_space<vmem>>, vector<1x64xf32>,
    } else {
    }
    return
  }
  func.func @transform_0(%arg0: i32) -> (i32, i32) {
    %c0_i32 = arith.constant 0 : i32
    %c0_i32_0 = arith.constant 0 : i32
    return %arg0, %c0_i32 : i32, i32
  }
  func.func @transform_1(%arg0: i32) -> (i32, i32) {
    %c0_i32 = arith.constant 0 : i32
    %c0_i32_0 = arith.constant 0 : i32
    return %c0_i32, %arg0 : i32, i32
  }
  func.func @transform_2(%arg0: i32) -> (i32, i32) {
    %c0_i32 = arith.constant 0 : i32
    %c0_i32_0 = arith.constant 0 : i32
    %c0_i32_1 = arith.constant 0 : i32
    return %c0_i32, %c0_i32_0 : i32, i32
  }
  func.func @transform_3(%arg0: i32) -> (i32, i32) {
    %c0_i32 = arith.constant 0 : i32
    %c0_i32_0 = arith.constant 0 : i32
    %c0_i32_1 = arith.constant 0 : i32
    return %c0_i32, %c0_i32_0 : i32, i32
  }
}

module attributes {stable_mosaic.version = 11 : i64} {
  func.func @kernel(%arg0: i32, %arg1: memref<512x128xbf16, #tpu.memory_space<vmem>>, %arg2: memref<1x64xf32, #tpu.memory_space<vmem>>, %arg3: memref<1x512xf32, #tpu.memory_space<vmem>>, %arg4: memref<1x1xf32, #tpu.memory_space<vmem>>, %arg5: memref<1x1xf32, #tpu.memory_space<vmem>>) attributes {dimension_semantics = [#tpu.dimension_semantics<arbitrary>], iteration_bounds = array<i64: 1>, scalar_prefetch = 0 : i64, scratch_operands = 1 : i64, tpu.core_type = #tpu.core_type<tc>, window_params = [{transform_indices = @transform_0, window_bounds = array<i64: 512, 128>}, {pipeline_mode = #tpu.pipeline_mode<synchronous>, transform_indices = @transform_1, window_bounds = array<i64: 1, 64>}, {transform_indices = @transform_2, window_bounds = array<i64: 1, 512>}, {pipeline_mode = #tpu.pipeline_mode<synchronous>, transform_indices = @transform_3, window_bounds = array<i64: 1, 1>}]} {
    %c0_i32 = arith.constant 0 : i32
    %0 = arith.cmpi eq, %arg0, %c0_i32 : i32
    %1 = arith.extui %0 : i1 to i32
    %c0_i32_0 = arith.constant 0 : i32
    %2 = arith.cmpi ne, %1, %c0_i32_0 : i32
    scf.if %2 {
      %cst_19 = arith.constant 0.000000e+00 : f32
      %55 = vector.broadcast %cst_19 : f32 to vector<1x1xf32>
      %c0_20 = arith.constant 0 : index
      %c0_21 = arith.constant 0 : index
      %56 = vector.load %arg5[%c0_20, %c0_21] : memref<1x1xf32, #tpu.memory_space<vmem>>, vector<1x1xf32>
      tpu.vector_store %arg5[%c0_20, %c0_21], %55 {strides = array<i32>} : memref<1x1xf32, #tpu.memory_space<vmem>>, vector<1x1xf32>,
    } else {
    }
    %c0 = arith.constant 0 : index
    %c0_1 = arith.constant 0 : index
    %3 = vector.load %arg1[%c0, %c0_1] : memref<512x128xbf16, #tpu.memory_space<vmem>>, vector<512x128xbf16>
    %4 = arith.extf %3 : vector<512x128xbf16> to vector<512x128xf32>
    %c0_2 = arith.constant 0 : index
    %c0_3 = arith.constant 0 : index
    %5 = vector.load %arg2[%c0_2, %c0_3] : memref<1x64xf32, #tpu.memory_space<vmem>>, vector<1x64xf32>
    %6 = vector.extract_strided_slice %4 {offsets = [0, 0], sizes = [512, 64], strides = [1, 1]} : vector<512x128xf32> to vector<512x64xf32>
    %7 = vector.broadcast %5 : vector<1x64xf32> to vector<512x64xf32>
    %8 = arith.mulf %6, %7 : vector<512x64xf32>
    %cst = arith.constant dense<0.000000e+00> : vector<512xf32>
    %9 = vector.multi_reduction <add>, %8, %cst [1] : vector<512x64xf32> to vector<512xf32>
    %10 = vector.shape_cast %9 : vector<512xf32> to vector<512x1xf32>
    %11 = vector.extract_strided_slice %4 {offsets = [0, 64], sizes = [512, 64], strides = [1, 1]} : vector<512x128xf32> to vector<512x64xf32>
    %12 = vector.broadcast %5 : vector<1x64xf32> to vector<512x64xf32>
    %13 = arith.mulf %11, %12 : vector<512x64xf32>
    %cst_4 = arith.constant dense<0.000000e+00> : vector<512xf32>
    %14 = vector.multi_reduction <add>, %13, %cst_4 [1] : vector<512x64xf32> to vector<512xf32>
    %15 = vector.shape_cast %14 : vector<512xf32> to vector<512x1xf32>
    %cst_5 = arith.constant 0.000000e+00 : f32
    %16 = vector.broadcast %cst_5 : f32 to vector<512x1xf32>
    %17 = arith.subf %16, %10 : vector<512x1xf32>
    %cst_6 = arith.constant 0.000000e+00 : f32
    %18 = vector.broadcast %cst_6 : f32 to vector<512x1xf32>
    %19 = arith.maximumf %17, %18 : vector<512x1xf32>
    %20 = vector.broadcast %cst_6 : f32 to vector<512x1xf32>
    %21 = arith.subf %17, %20 : vector<512x1xf32>
    %22 = arith.cmpf one, %21, %21 : vector<512x1xf32>
    %23 = vector.broadcast %cst_6 : f32 to vector<512x1xf32>
    %24 = arith.addf %17, %23 : vector<512x1xf32>
    %25 = math.absf %21 : vector<512x1xf32>
    %cst_7 = arith.constant 0.000000e+00 : f32
    %26 = vector.broadcast %cst_7 : f32 to vector<512x1xf32>
    %27 = arith.subf %26, %25 : vector<512x1xf32>
    %28 = math.exp %27 : vector<512x1xf32>
    %29 = math.log1p %28 : vector<512x1xf32>
    %30 = arith.addf %19, %29 : vector<512x1xf32>
    %31 = arith.select %22, %24, %30 : vector<512x1xi1>, vector<512x1xf32>
    %cst_8 = arith.constant 0.000000e+00 : f32
    %32 = vector.broadcast %cst_8 : f32 to vector<512x1xf32>
    %33 = arith.maximumf %15, %32 : vector<512x1xf32>
    %34 = vector.broadcast %cst_8 : f32 to vector<512x1xf32>
    %35 = arith.subf %15, %34 : vector<512x1xf32>
    %36 = arith.cmpf one, %35, %35 : vector<512x1xf32>
    %37 = vector.broadcast %cst_8 : f32 to vector<512x1xf32>
    %38 = arith.addf %15, %37 : vector<512x1xf32>
    %39 = math.absf %35 : vector<512x1xf32>
    %cst_9 = arith.constant 0.000000e+00 : f32
    %40 = vector.broadcast %cst_9 : f32 to vector<512x1xf32>
    %41 = arith.subf %40, %39 : vector<512x1xf32>
    %42 = math.exp %41 : vector<512x1xf32>
    %43 = math.log1p %42 : vector<512x1xf32>
    %44 = arith.addf %33, %43 : vector<512x1xf32>
    %45 = arith.select %36, %38, %44 : vector<512x1xi1>, vector<512x1xf32>
    %46 = arith.addf %31, %45 : vector<512x1xf32>
    %c0_10 = arith.constant 0 : index
    %c0_11 = arith.constant 0 : index
    %47 = vector.load %arg5[%c0_10, %c0_11] : memref<1x1xf32, #tpu.memory_space<vmem>>, vector<1x1xf32>
    %c0_12 = arith.constant 0 : index
    %c0_13 = arith.constant 0 : index
    %48 = vector.load %arg3[%c0_12, %c0_13] : memref<1x512xf32, #tpu.memory_space<vmem>>, vector<1x512xf32>
    %cst_14 = arith.constant dense<0.000000e+00> : vector<1x1xf32>
    %49 = tpu.matmul %48, %46, %cst_14 {dimension_numbers = #tpu.dot_dimension_numbers<[1], [0], [0], [1], [0, 0, 1, 1], [], []>} : vector<1x512xf32>, vector<512x1xf32>, vector<1x1xf32> -> vector<1x1xf32>
    %50 = arith.addf %47, %49 : vector<1x1xf32>
    %c0_15 = arith.constant 0 : index
    %c0_16 = arith.constant 0 : index
    %51 = vector.load %arg5[%c0_15, %c0_16] : memref<1x1xf32, #tpu.memory_space<vmem>>, vector<1x1xf32>
    tpu.vector_store %arg5[%c0_15, %c0_16], %50 {strides = array<i32>} : memref<1x1xf32, #tpu.memory_space<vmem>>, vector<1x1xf32>,
    %c0_i32_17 = arith.constant 0 : i32
    %52 = arith.cmpi eq, %arg0, %c0_i32_17 : i32
    %53 = arith.extui %52 : i1 to i32
    %c0_i32_18 = arith.constant 0 : i32
    %54 = arith.cmpi ne, %53, %c0_i32_18 : i32
    scf.if %54 {
      %c0_19 = arith.constant 0 : index
      %c0_20 = arith.constant 0 : index
      %55 = vector.load %arg5[%c0_19, %c0_20] : memref<1x1xf32, #tpu.memory_space<vmem>>, vector<1x1xf32>
      %c0_21 = arith.constant 0 : index
      %c0_22 = arith.constant 0 : index
      %56 = vector.load %arg4[%c0_21, %c0_22] : memref<1x1xf32, #tpu.memory_space<vmem>>, vector<1x1xf32>
      tpu.vector_store %arg4[%c0_21, %c0_22], %55 {strides = array<i32>} : memref<1x1xf32, #tpu.memory_space<vmem>>, vector<1x1xf32>,
    } else {
    }
    return
  }
  func.func @transform_0(%arg0: i32) -> (i32, i32) {
    %c0_i32 = arith.constant 0 : i32
    %c0_i32_0 = arith.constant 0 : i32
    return %arg0, %c0_i32 : i32, i32
  }
  func.func @transform_1(%arg0: i32) -> (i32, i32) {
    %c0_i32 = arith.constant 0 : i32
    %c0_i32_0 = arith.constant 0 : i32
    %c0_i32_1 = arith.constant 0 : i32
    return %c0_i32, %c0_i32_0 : i32, i32
  }
  func.func @transform_2(%arg0: i32) -> (i32, i32) {
    %c0_i32 = arith.constant 0 : i32
    %c0_i32_0 = arith.constant 0 : i32
    return %c0_i32, %arg0 : i32, i32
  }
  func.func @transform_3(%arg0: i32) -> (i32, i32) {
    %c0_i32 = arith.constant 0 : i32
    %c0_i32_0 = arith.constant 0 : i32
    %c0_i32_1 = arith.constant 0 : i32
    return %c0_i32, %c0_i32_0 : i32, i32
  }
}

</mosaic_0001>

<llo_original>
// kernel: dci_forward.6
$region0: #{dci_forward.6}
  #allocation0 [shape = 'u32[]', space=smem, size = 0x4, offset = 0x4, fixed_abs, tag = 'smem constant byte address 0x4 - core index']
  #allocation1 [shape = 'u32[72,128]{1,0:T(1,128)}', space=vmem, size = 0x9000, scoped, tag = 'internal scratch']
  #allocation2 [shape = 'f32[1,128]{1,0:T(1,128)}', space=vmem, size = 0x200, scoped, tag = 'scratch operand']
  %s0 = inlined_call_operand.vmem [shape: bf16[512,128], index: 0, kind: input, shape index: {}]
  %s1 = inlined_call_operand.vmem [shape: f32[1,512], index: 1, kind: input, shape index: {}]
  %s2 = inlined_call_operand.vmem [shape: f32[64,64], index: 2, kind: input, shape index: {}]
  %s3 = inlined_call_operand.vmem [shape: f32[1,64], index: 3, kind: output, shape index: {}]
  %s4 = sld [smem:[#allocation0]]
  $region30: #{dci_forward.6} parent=0
    _
  %s6 = ssub.s32 1, %s4
  %s7 = scalar_select 0, %s6, %s4
  // Predicated region
  $region2: #{dci_forward.6} parent=0 // pred_check
    _
  $region3: #{dci_forward.6} parent=0 // pred_check_branch
    %9 = sbr.rel (0) target = $region5
  $region4: #{dci_forward.6} parent=0 // pred_region
    _
  $region5: #{dci_forward.6} parent=0 // pred_fallthru
    _
  // Predicated region
  $region6: #{dci_forward.6} parent=0 // pred_check
    _
  $region7: #{dci_forward.6} parent=0 // pred_check_branch
    %11 = sbr.rel (0) target = $region9
  $region8: #{dci_forward.6} parent=0 // pred_region
    _
  $region9: #{dci_forward.6} parent=0 // pred_fallthru
    _
  // Predicated region
  $region10: #{dci_forward.6} parent=0 // pred_check
    _
  $region11: #{dci_forward.6} parent=0 // pred_check_branch
    %13 = sbr.rel (0) target = $region13
  $region12: #{dci_forward.6} parent=0 // pred_region
    _
  $region13: #{dci_forward.6} parent=0 // pred_fallthru
    _
  %p14 = scmp.eq.s32.totalorder 0, 0
  // Predicated region
  $region14: #{dci_forward.6} parent=0 // pred_check
    %p15 = pneg %p14
  $region15: #{dci_forward.6} parent=0 // pred_check_branch
    %17 = sbr.rel (%p15) target = $region17
  $region16: #{dci_forward.6} parent=0 // pred_region
    %18 = vst [vmem:[#allocation2] sm:$0x1] 0.0
  $region17: #{dci_forward.6} parent=0 // pred_fallthru
    _
  %v19 = vld [vmem:[#allocation2] sm:$0x1]
  %v20 = vld [vmem:[%s1] sm:$0xf]
  %v21 = vld [vmem:[%s0] sm:$0xf]
  %v22 = vld [vmem:[%s0 + $0x4] sm:$0xf]
  %v23 = vld [vmem:[%s0 + $0x8] sm:$0xf]
  %v24 = vld [vmem:[%s0 + $0xc] sm:$0xf]
  %v25 = vld [vmem:[%s0 + $0x10] sm:$0xf]
  %v26 = vld [vmem:[%s0 + $0x14] sm:$0xf]
  %v27 = vld [vmem:[%s0 + $0x18] sm:$0xf]
  %v28 = vld [vmem:[%s0 + $0x1c] sm:$0xf]
  %v29 = vld [vmem:[%s0 + $0x20] sm:$0xf]
  %v30 = vld [vmem:[%s0 + $0x24] sm:$0xf]
  %v31 = vld [vmem:[%s0 + $0x28] sm:$0xf]
  %v32 = vld [vmem:[%s0 + $0x2c] sm:$0xf]
  %v33 = vld [vmem:[%s0 + $0x30] sm:$0xf]
  %v34 = vld [vmem:[%s0 + $0x34] sm:$0xf]
  %v35 = vld [vmem:[%s0 + $0x38] sm:$0xf]
  %v36 = vld [vmem:[%s0 + $0x3c] sm:$0xf]
  %v37 = vld [vmem:[%s0 + $0x40] sm:$0xf]
  %v38 = vld [vmem:[%s0 + $0x44] sm:$0xf]
  %v39 = vld [vmem:[%s0 + $0x48] sm:$0xf]
  %v40 = vld [vmem:[%s0 + $0x4c] sm:$0xf]
  %v41 = vld [vmem:[%s0 + $0x50] sm:$0xf]
  %v42 = vld [vmem:[%s0 + $0x54] sm:$0xf]
  %v43 = vld [vmem:[%s0 + $0x58] sm:$0xf]
  %v44 = vld [vmem:[%s0 + $0x5c] sm:$0xf]
  %v45 = vld [vmem:[%s0 + $0x60] sm:$0xf]
  %v46 = vld [vmem:[%s0 + $0x64] sm:$0xf]
  %v47 = vld [vmem:[%s0 + $0x68] sm:$0xf]
  %v48 = vld [vmem:[%s0 + $0x6c] sm:$0xf]
  %v49 = vld [vmem:[%s0 + $0x70] sm:$0xf]
  %v50 = vld [vmem:[%s0 + $0x74] sm:$0xf]
  %v51 = vld [vmem:[%s0 + $0x78] sm:$0xf]
  %v52 = vld [vmem:[%s0 + $0x7c] sm:$0xf]
  %v53 = vld [vmem:[%s0 + $0x80] sm:$0xf]
  %v54 = vld [vmem:[%s0 + $0x84] sm:$0xf]
  %v55 = vld [vmem:[%s0 + $0x88] sm:$0xf]
  %v56 = vld [vmem:[%s0 + $0x8c] sm:$0xf]
  %v57 = vld [vmem:[%s0 + $0x90] sm:$0xf]
  %v58 = vld [vmem:[%s0 + $0x94] sm:$0xf]
  %v59 = vld [vmem:[%s0 + $0x98] sm:$0xf]
  %v60 = vld [vmem:[%s0 + $0x9c] sm:$0xf]
  %v61 = vld [vmem:[%s0 + $0xa0] sm:$0xf]
  %v62 = vld [vmem:[%s0 + $0xa4] sm:$0xf]
  %v63 = vld [vmem:[%s0 + $0xa8] sm:$0xf]
  %v64 = vld [vmem:[%s0 + $0xac] sm:$0xf]
  %v65 = vld [vmem:[%s0 + $0xb0] sm:$0xf]
  %v66 = vld [vmem:[%s0 + $0xb4] sm:$0xf]
  %v67 = vld [vmem:[%s0 + $0xb8] sm:$0xf]
  %v68 = vld [vmem:[%s0 + $0xbc] sm:$0xf]
  %v69 = vld [vmem:[%s0 + $0xc0] sm:$0xf]
  %v70 = vld [vmem:[%s0 + $0xc4] sm:$0xf]
  %v71 = vld [vmem:[%s0 + $0xc8] sm:$0xf]
  %v72 = vld [vmem:[%s0 + $0xcc] sm:$0xf]
  %v73 = vld [vmem:[%s0 + $0xd0] sm:$0xf]
  %v74 = vld [vmem:[%s0 + $0xd4] sm:$0xf]
  %v75 = vld [vmem:[%s0 + $0xd8] sm:$0xf]
  %v76 = vld [vmem:[%s0 + $0xdc] sm:$0xf]
  %v77 = vld [vmem:[%s0 + $0xe0] sm:$0xf]
  %v78 = vld [vmem:[%s0 + $0xe4] sm:$0xf]
  %v79 = vld [vmem:[%s0 + $0xe8] sm:$0xf]
  %v80 = vld [vmem:[%s0 + $0xec] sm:$0xf]
  %v81 = vld [vmem:[%s0 + $0xf0] sm:$0xf]
  %v82 = vld [vmem:[%s0 + $0xf4] sm:$0xf]
  %v83 = vld [vmem:[%s0 + $0xf8] sm:$0xf]
  %v84 = vld [vmem:[%s0 + $0xfc] sm:$0xf]
  %v85 = vunpack.c.l.bf16 %v21
  %v86 = vunpack.c.l.bf16 %v22
  %v87 = vunpack.c.l.bf16 %v23
  %v88 = vunpack.c.l.bf16 %v24
  %v89 = vunpack.c.l.bf16 %v25
  %v90 = vunpack.c.l.bf16 %v26
  %v91 = vunpack.c.l.bf16 %v27
  %v92 = vunpack.c.l.bf16 %v28
  %v93 = vunpack.c.l.bf16 %v29
  %v94 = vunpack.c.l.bf16 %v30
  %v95 = vunpack.c.l.bf16 %v31
  %v96 = vunpack.c.l.bf16 %v32
  %v97 = vunpack.c.l.bf16 %v33
  %v98 = vunpack.c.l.bf16 %v34
  %v99 = vunpack.c.l.bf16 %v35
  %v100 = vunpack.c.l.bf16 %v36
  %v101 = vunpack.c.l.bf16 %v37
  %v102 = vunpack.c.l.bf16 %v38
  %v103 = vunpack.c.l.bf16 %v39
  %v104 = vunpack.c.l.bf16 %v40
  %v105 = vunpack.c.l.bf16 %v41
  %v106 = vunpack.c.l.bf16 %v42
  %v107 = vunpack.c.l.bf16 %v43
  %v108 = vunpack.c.l.bf16 %v44
  %v109 = vunpack.c.l.bf16 %v45
  %v110 = vunpack.c.l.bf16 %v46
  %v111 = vunpack.c.l.bf16 %v47
  %v112 = vunpack.c.l.bf16 %v48
  %v113 = vunpack.c.l.bf16 %v49
  %v114 = vunpack.c.l.bf16 %v50
  %v115 = vunpack.c.l.bf16 %v51
  %v116 = vunpack.c.l.bf16 %v52
  %v117 = vunpack.c.l.bf16 %v53
  %v118 = vunpack.c.l.bf16 %v54
  %v119 = vunpack.c.l.bf16 %v55
  %v120 = vunpack.c.l.bf16 %v56
  %v121 = vunpack.c.l.bf16 %v57
  %v122 = vunpack.c.l.bf16 %v58
  %v123 = vunpack.c.l.bf16 %v59
  %v124 = vunpack.c.l.bf16 %v60
  %v125 = vunpack.c.l.bf16 %v61
  %v126 = vunpack.c.l.bf16 %v62
  %v127 = vunpack.c.l.bf16 %v63
  %v128 = vunpack.c.l.bf16 %v64
  %v129 = vunpack.c.l.bf16 %v65
  %v130 = vunpack.c.l.bf16 %v66
  %v131 = vunpack.c.l.bf16 %v67
  %v132 = vunpack.c.l.bf16 %v68
  %v133 = vunpack.c.l.bf16 %v69
  %v134 = vunpack.c.l.bf16 %v70
  %v135 = vunpack.c.l.bf16 %v71
  %v136 = vunpack.c.l.bf16 %v72
  %v137 = vunpack.c.l.bf16 %v73
  %v138 = vunpack.c.l.bf16 %v74
  %v139 = vunpack.c.l.bf16 %v75
  %v140 = vunpack.c.l.bf16 %v76
  %v141 = vunpack.c.l.bf16 %v77
  %v142 = vunpack.c.l.bf16 %v78
  %v143 = vunpack.c.l.bf16 %v79
  %v144 = vunpack.c.l.bf16 %v80
  %v145 = vunpack.c.l.bf16 %v81
  %v146 = vunpack.c.l.bf16 %v82
  %v147 = vunpack.c.l.bf16 %v83
  %v148 = vunpack.c.l.bf16 %v84
  %v150 = vperm.slane %v20, 0
  %v151 = vperm.slane %v20, 1
  %v152 = vperm.slane %v20, 2
  %v153 = vperm.slane %v20, 3
  %158 = vmatpush.msra.mxu0 %v100
  %159 = vmatpush.msra.mxu0 %v99
  %160 = vmatpush.msra.mxu0 %v98
  %161 = vmatpush.msra.mxu0 %v97
  %162 = vmatpush.msra.mxu0 %v96
  %163 = vmatpush.msra.mxu0 %v95
  %164 = vmatpush.msra.mxu0 %v94
  %165 = vmatpush.msra.mxu0 %v93
  %166 = vmatpush.msra.mxu0 %v92
  %167 = vmatpush.msra.mxu0 %v91
  %168 = vmatpush.msra.mxu0 %v90
  %169 = vmatpush.msra.mxu0 %v89
  %170 = vmatpush.msra.mxu0 %v88
  %171 = vmatpush.msra.mxu0 %v87
  %172 = vmatpush.msra.mxu0 %v86
  %173 = vmatpush.msra.mxu0 %v85
  %174 = vmatmul.f32.gmra.mxu0 %v150
  %v175 = vpop.f32.mrf.mxu0
  %v176 = vadd.f32 0.0, %v175
  %177 = vdwg.mxu0
  %178 = vmatpush.msra.mxu0 %v116
  %179 = vmatpush.msra.mxu0 %v115
  %180 = vmatpush.msra.mxu0 %v114
  %181 = vmatpush.msra.mxu0 %v113
  %182 = vmatpush.msra.mxu0 %v112
  %183 = vmatpush.msra.mxu0 %v111
  %184 = vmatpush.msra.mxu0 %v110
  %185 = vmatpush.msra.mxu0 %v109
  %186 = vmatpush.msra.mxu0 %v108
  %187 = vmatpush.msra.mxu0 %v107
  %188 = vmatpush.msra.mxu0 %v106
  %189 = vmatpush.msra.mxu0 %v105
  %190 = vmatpush.msra.mxu0 %v104
  %191 = vmatpush.msra.mxu0 %v103
  %192 = vmatpush.msra.mxu0 %v102
  %193 = vmatpush.msra.mxu0 %v101
  %194 = vmatmul.f32.gmra.mxu0 %v151
  %v195 = vpop.f32.mrf.mxu0
  %v196 = vadd.f32 %v176, %v195
  %197 = vdwg.mxu0
  %198 = vmatpush.msra.mxu0 %v132
  %199 = vmatpush.msra.mxu0 %v131
  %200 = vmatpush.msra.mxu0 %v130
  %201 = vmatpush.msra.mxu0 %v129
  %202 = vmatpush.msra.mxu0 %v128
  %203 = vmatpush.msra.mxu0 %v127
  %204 = vmatpush.msra.mxu0 %v126
  %205 = vmatpush.msra.mxu0 %v125
  %206 = vmatpush.msra.mxu0 %v124
  %207 = vmatpush.msra.mxu0 %v123
  %208 = vmatpush.msra.mxu0 %v122
  %209 = vmatpush.msra.mxu0 %v121
  %210 = vmatpush.msra.mxu0 %v120
  %211 = vmatpush.msra.mxu0 %v119
  %212 = vmatpush.msra.mxu0 %v118
  %213 = vmatpush.msra.mxu0 %v117
  %214 = vmatmul.f32.gmra.mxu0 %v152
  %v215 = vpop.f32.mrf.mxu0
  %v216 = vadd.f32 %v196, %v215
  %217 = vdwg.mxu0
  %218 = vmatpush.msra.mxu0 %v148
  %219 = vmatpush.msra.mxu0 %v147
  %220 = vmatpush.msra.mxu0 %v146
  %221 = vmatpush.msra.mxu0 %v145
  %222 = vmatpush.msra.mxu0 %v144
  %223 = vmatpush.msra.mxu0 %v143
  %224 = vmatpush.msra.mxu0 %v142
  %225 = vmatpush.msra.mxu0 %v141
  %226 = vmatpush.msra.mxu0 %v140
  %227 = vmatpush.msra.mxu0 %v139
  %228 = vmatpush.msra.mxu0 %v138
  %229 = vmatpush.msra.mxu0 %v137
  %230 = vmatpush.msra.mxu0 %v136
  %231 = vmatpush.msra.mxu0 %v135
  %232 = vmatpush.msra.mxu0 %v134
  %233 = vmatpush.msra.mxu0 %v133
  %234 = vmatmul.f32.gmra.mxu0 %v153
  %v235 = vpop.f32.mrf.mxu0
  %v236 = vadd.f32 %v216, %v235
  %237 = vdwg.mxu0
  %v238 = vadd.f32 %v19, %v236
  %239 = vst [vmem:[#allocation2] sm:$0x1] %v238
  // Predicated region
  $region18: #{dci_forward.6} parent=0 // pred_check
    %p240 = pneg %p14
  $region19: #{dci_forward.6} parent=0 // pred_check_branch
    %242 = sbr.rel (%p240) target = $region21
  $region20: #{dci_forward.6} parent=0 // pred_region
    %v243 = vld [vmem:[#allocation2] sm:$0x1]
    %v244 = vxor.u32 %v243, 2147483648
    %v245 = vmul.f32 %v244, 1.442695
    %v246 = vpow.pop %v245
    %v247 = vadd.f32 %v246, 1.0
    %v248 = vrcp.pop %v247
    %v249 = vmul.f32 %v247, %v248
    %v250 = vsub.f32 1.0, %v249
    %v251 = vmul.f32 %v248, %v250
    %v252 = vadd.f32 %v248, %v251
    %vm253 = vweird.f32 %v247
    %vm254 = vweird.f32 %v248
    %vm255 = vmor %vm253, %vm254
    %v256 = vsel %vm255, %v248, %v252
    %v257 = vand.u32 2147483647, %v247
    %vm258 = vcmp.eq.f32.partialorder %v257, 8.507059e+37
    %v259 = vand.u32 %v247, 2147483648
    %v260 = vor.u32 1.1754944e-38, %v259
    %v261 = vsel %vm258, %v260, %v256
    %v262 = vmul.f32 1.0, %v261
    %v263 = vld [vmem:[%s2] sm:$0xff]
    %v264 = vld [vmem:[%s2 + $0x8] sm:$0xff]
    %v265 = vld [vmem:[%s2 + $0x10] sm:$0xff]
    %v266 = vld [vmem:[%s2 + $0x18] sm:$0xff]
    %v267 = vld [vmem:[%s2 + $0x20] sm:$0xff]
    %v268 = vld [vmem:[%s2 + $0x28] sm:$0xff]
    %v269 = vld [vmem:[%s2 + $0x30] sm:$0xff]
    %v270 = vld [vmem:[%s2 + $0x38] sm:$0xff]
    %vm271 = vcmask 523264
    %v273 = vsel %vm271, %v262, 0
    %275 = vmatpush.msra.mxu0 0.0
    %276 = vmatpush.msra.mxu0 0.0
    %277 = vmatpush.msra.mxu0 0.0
    %278 = vmatpush.msra.mxu0 0.0
    %279 = vmatpush.msra.mxu0 0.0
    %280 = vmatpush.msra.mxu0 0.0
    %281 = vmatpush.msra.mxu0 0.0
    %282 = vmatpush.msra.mxu0 0.0
    %283 = vmatpush.msra.mxu0 %v270
    %284 = vmatpush.msra.mxu0 %v269
    %285 = vmatpush.msra.mxu0 %v268
    %286 = vmatpush.msra.mxu0 %v267
    %287 = vmatpush.msra.mxu0 %v266
    %288 = vmatpush.msra.mxu0 %v265
    %289 = vmatpush.msra.mxu0 %v264
    %290 = vmatpush.msra.mxu0 %v263
    %291 = vmatmul.f32.gmra.mxu0 %v273
    %v292 = vpop.f32.mrf.mxu0
    %v293 = vadd.f32 0.0, %v292
    %294 = vdwg.mxu0
    %vm295 = vcmask 516096
    %296 = vst.msk [vmem:[%s3] sm:$0x1] %vm295, %v293
  $region21: #{dci_forward.6} parent=0 // pred_fallthru
    _
  // Predicated region
  $region22: #{dci_forward.6} parent=0 // pred_check
    _
  $region23: #{dci_forward.6} parent=0 // pred_check_branch
    %298 = sbr.rel (0) target = $region25
  $region24: #{dci_forward.6} parent=0 // pred_region
    _
  $region25: #{dci_forward.6} parent=0 // pred_fallthru
    _
  // Predicated region
  $region26: #{dci_forward.6} parent=0 // pred_check
    _
  $region27: #{dci_forward.6} parent=0 // pred_check_branch
    %300 = sbr.rel (0) target = $region29
  $region28: #{dci_forward.6} parent=0 // pred_region
    _
  $region29: #{dci_forward.6} parent=0 // pred_fallthru
    _

// kernel: dci_forward.4
$region0: #{dci_forward.4}
  #allocation0 [shape = 'u32[]', space=smem, size = 0x4, offset = 0x4, fixed_abs, tag = 'smem constant byte address 0x4 - core index']
  #allocation1 [shape = 'u32[72,128]{1,0:T(1,128)}', space=vmem, size = 0x9000, scoped, tag = 'internal scratch']
  #allocation2 [shape = 'f32[256,32]{1,0:T(8,128)}', space=vmem, size = 0x20000, scoped, tag = 'scratch operand']
  %s0 = inlined_call_operand.vmem [shape: bf16[512,512], index: 0, kind: input, shape index: {}]
  %s1 = inlined_call_operand.vmem [shape: bf16[512,32], index: 1, kind: input, shape index: {}]
  %s2 = inlined_call_operand.vmem [shape: bf16[32,128], index: 2, kind: input, shape index: {}]
  %s3 = inlined_call_operand.vmem [shape: f32[1,128], index: 3, kind: input, shape index: {}]
  %s4 = inlined_call_operand.vmem [shape: bf16[512,128], index: 4, kind: output, shape index: {}]
  %s5 = sld [smem:[#allocation0]]
  $region57: #{dci_forward.4} parent=0
    _
  %s7 = ssub.s32 1, %s5
  %s8 = scalar_select 0, %s7, %s5
  loop: start=0, step=1, limit=4
  $region2: #{dci_forward.4} parent=0 // loop_pre_header
    _
  $region3: #{dci_forward.4} parent=0 // loop_header
    %s10 = sphi 0, %s14
    %p11 = scmp.ge.s32.totalorder %s10, 4
    %s17 = sphi 0, %s29
    %s18 = sphi 0, %s25
    %s19 = sphi 0, %s17
    %s20 = sphi 0, %s18
    %s21 = sphi 0, %s19
    %s22 = sphi 0, %s20
    %s34 = sphi 0, %s36
    %s37 = sphi 0, %s34
    %s38 = sphi 0, %s37
    %s54 = sphi 0, %s38
    %s58 = sphi 0, %s58
    %s60 = sphi 0, %s58
    %s61 = sphi 0, %s60
    %s75 = sphi 0, %s61
    %s79 = sphi 0, %s79
    %s81 = sphi 0, %s79
    %s82 = sphi 0, %s81
    %s96 = sphi 0, %s82
    %s100 = sphi 0, %s100
    %s102 = sphi 0, %s100
    %s103 = sphi 0, %s102
    %s117 = sphi 0, %s103
    %s123 = sphi 0, %s125
    %s126 = sphi 0, %s123
    %s127 = sphi 0, %s126
    %s143 = sphi 0, %s127
  $region4: #{dci_forward.4} parent=0 // loop_header_branch
    %13 = sbr.rel (%p11) target = $region8
  $region5: #{dci_forward.4} parent=0 // loop_body
    %s15 = ssub.s32 %s10, 1
    %s16 = ssub.s32 %s10, 2
    %s23 = sadd.s32 1, %s18
    %p24 = scmp.ge.s32.totalorder %s23, 1
    %s25 = scalar_select %p24, 0, %s23
    %s26 = sadd.s32 1, %s17
    %s27 = scalar_select %p24, %s26, %s17
    %p28 = scmp.ge.s32.totalorder %s27, 2
    %s29 = scalar_select %p28, 0, %s27
    %s30 = ssub.s32 %s17, %s29
    %s31 = ssub.s32 %s18, %s25
    %s32 = sor.u32 %s30, %s31
    %p33 = scmp.eq.s32.totalorder %s32, 0
    %s35 = sadd.s32 %s34, 1
    %s36 = scalar_select %p33, %s34, %s35
    %p39 = pneg %p33
    %p40 = scmp.eq.s32.totalorder %s10, 1
    %p41 = por %p39, %p40
    %p42 = scmp.ne.s32.totalorder %s34, %s37
    %p43 = scmp.eq.s32.totalorder %s10, 0
    %p44 = por %p42, %p43
    %p45 = scmp.ne.s32.totalorder %s34, %s37
    %p46 = scmp.eq.s32.totalorder %s15, 1
    %p47 = por %p45, %p46
    %p48 = scmp.ne.s32.totalorder %s37, %s38
    %p49 = scmp.eq.s32.totalorder %s15, 0
    %p50 = por %p48, %p49
    %p51 = scmp.ne.s32.totalorder %s37, %s38
    %p52 = scmp.eq.s32.totalorder %s16, 1
    %p53 = por %p51, %p52
    %p55 = scmp.ne.s32.totalorder %s38, %s54
    %p56 = scmp.eq.s32.totalorder %s16, 0
    %p57 = por %p55, %p56
    %s59 = sadd.s32 %s58, 1
    %p62 = scmp.eq.s32.totalorder %s10, 1
    %p63 = scmp.ne.s32.totalorder %s58, %s60
    %p64 = scmp.eq.s32.totalorder %s10, 0
    %p65 = por %p63, %p64
    %p66 = scmp.ne.s32.totalorder %s58, %s60
    %p67 = scmp.eq.s32.totalorder %s15, 1
    %p68 = por %p66, %p67
    %p69 = scmp.ne.s32.totalorder %s60, %s61
    %p70 = scmp.eq.s32.totalorder %s15, 0
    %p71 = por %p69, %p70
    %p72 = scmp.ne.s32.totalorder %s60, %s61
    %p73 = scmp.eq.s32.totalorder %s16, 1
    %p74 = por %p72, %p73
    %p76 = scmp.ne.s32.totalorder %s61, %s75
    %p77 = scmp.eq.s32.totalorder %s16, 0
    %p78 = por %p76, %p77
    %s80 = sadd.s32 %s79, 1
    %p83 = scmp.eq.s32.totalorder %s10, 1
    %p84 = scmp.ne.s32.totalorder %s79, %s81
    %p85 = scmp.eq.s32.totalorder %s10, 0
    %p86 = por %p84, %p85
    %p87 = scmp.ne.s32.totalorder %s79, %s81
    %p88 = scmp.eq.s32.totalorder %s15, 1
    %p89 = por %p87, %p88
    %p90 = scmp.ne.s32.totalorder %s81, %s82
    %p91 = scmp.eq.s32.totalorder %s15, 0
    %p92 = por %p90, %p91
    %p93 = scmp.ne.s32.totalorder %s81, %s82
    %p94 = scmp.eq.s32.totalorder %s16, 1
    %p95 = por %p93, %p94
    %p97 = scmp.ne.s32.totalorder %s82, %s96
    %p98 = scmp.eq.s32.totalorder %s16, 0
    %p99 = por %p97, %p98
    %s101 = sadd.s32 %s100, 1
    %p104 = scmp.eq.s32.totalorder %s10, 1
    %p105 = scmp.ne.s32.totalorder %s100, %s102
    %p106 = scmp.eq.s32.totalorder %s10, 0
    %p107 = por %p105, %p106
    %p108 = scmp.ne.s32.totalorder %s100, %s102
    %p109 = scmp.eq.s32.totalorder %s15, 1
    %p110 = por %p108, %p109
    %p111 = scmp.ne.s32.totalorder %s102, %s103
    %p112 = scmp.eq.s32.totalorder %s15, 0
    %p113 = por %p111, %p112
    %p114 = scmp.ne.s32.totalorder %s102, %s103
    %p115 = scmp.eq.s32.totalorder %s16, 1
    %p116 = por %p114, %p115
    %p118 = scmp.ne.s32.totalorder %s103, %s117
    %p119 = scmp.eq.s32.totalorder %s16, 0
    %p120 = por %p118, %p119
    %s121 = ssub.s32 %s17, %s29
    %p122 = scmp.eq.s32.totalorder %s121, 0
    %s124 = sadd.s32 %s123, 1
    %s125 = scalar_select %p122, %s123, %s124
    %p128 = pneg %p122
    %p129 = scmp.eq.s32.totalorder %s10, 1
    %p130 = por %p128, %p129
    %p131 = scmp.ne.s32.totalorder %s123, %s126
    %p132 = scmp.eq.s32.totalorder %s10, 0
    %p133 = por %p131, %p132
    %p134 = scmp.ne.s32.totalorder %s123, %s126
    %p135 = scmp.eq.s32.totalorder %s15, 1
    %p136 = por %p134, %p135
    %p137 = scmp.ne.s32.totalorder %s126, %s127
    %p138 = scmp.eq.s32.totalorder %s15, 0
    %p139 = por %p137, %p138
    %p140 = scmp.ne.s32.totalorder %s126, %s127
    %p141 = scmp.eq.s32.totalorder %s16, 1
    %p142 = por %p140, %p141
    %p144 = scmp.ne.s32.totalorder %s127, %s143
    %p145 = scmp.eq.s32.totalorder %s16, 0
    %p146 = por %p144, %p145
    %p147 = scmp.le.s32.totalorder 1, %s10
    %p148 = scmp.lt.s32.totalorder %s10, 3
    %p149 = pnand %p147, %p148
    %p150 = pneg %p149
    // Predicated region
    $region9: #{dci_forward.4} parent=5 // pred_check
      _
    $region10: #{dci_forward.4} parent=5 // pred_check_branch
      %152 = sbr.rel (%p149) target = $region12
    $region11: #{dci_forward.4} parent=5 // pred_region
      %s153 = ssub.s32 %s10, 1
      // Predicated region
      $region13: #{dci_forward.4} parent=11 // pred_check
        %p154 = pneg %p71
      $region14: #{dci_forward.4} parent=11 // pred_check_branch
        %156 = sbr.rel (%p154) target = $region16
      $region15: #{dci_forward.4} parent=11 // pred_region
        _
      $region16: #{dci_forward.4} parent=11 // pred_fallthru
        _
      // Predicated region
      $region17: #{dci_forward.4} parent=11 // pred_check
        %p157 = pneg %p92
      $region18: #{dci_forward.4} parent=11 // pred_check_branch
        %159 = sbr.rel (%p157) target = $region20
      $region19: #{dci_forward.4} parent=11 // pred_region
        _
      $region20: #{dci_forward.4} parent=11 // pred_fallthru
        _
      // Predicated region
      $region21: #{dci_forward.4} parent=11 // pred_check
        %p160 = pneg %p113
      $region22: #{dci_forward.4} parent=11 // pred_check_branch
        %162 = sbr.rel (%p160) target = $region24
      $region23: #{dci_forward.4} parent=11 // pred_region
        _
      $region24: #{dci_forward.4} parent=11 // pred_fallthru
        _
    $region12: #{dci_forward.4} parent=5 // pred_fallthru
      _
    %p163 = scmp.lt.s32.totalorder %s10, 2
    // Predicated region
    $region25: #{dci_forward.4} parent=5 // pred_check
      %p164 = pneg %p163
    $region26: #{dci_forward.4} parent=5 // pred_check_branch
      %166 = sbr.rel (%p164) target = $region28
    $region27: #{dci_forward.4} parent=5 // pred_region
      // Predicated region
      $region29: #{dci_forward.4} parent=27 // pred_check
        %p167 = pneg %p44
      $region30: #{dci_forward.4} parent=27 // pred_check_branch
        %169 = sbr.rel (%p167) target = $region32
      $region31: #{dci_forward.4} parent=27 // pred_region
        %s170 = smul.u32 32, %s17
        %s171 = smul.u32 4, %s18
        %p172 = scmp.lt.s32.totalorder %s170, 63
        %s173 = scalar_select %p172, %s170, 63
        %p174 = scmp.lt.s32.totalorder %s171, 3
        %s175 = scalar_select %p174, %s171, 3
        %s176 = smul.addr %s173, 4
        %s177 = sadd.s32 %s175, %s176
        %s178 = smul.addr %s177, 4
        %s179 = scalar_lea.vmem %s0, %s178
        %s180 = smul.u32 32, %s17
        %s181 = smul.u32 4, %s18
      $region32: #{dci_forward.4} parent=27 // pred_fallthru
        _
    $region28: #{dci_forward.4} parent=5 // pred_fallthru
      _
    %p182 = scmp.le.s32.totalorder 1, %s10
    %p183 = scmp.lt.s32.totalorder %s10, 3
    %p184 = pnand %p182, %p183
    %p185 = pneg %p184
    // Predicated region
    $region33: #{dci_forward.4} parent=5 // pred_check
      _
    $region34: #{dci_forward.4} parent=5 // pred_check_branch
      %187 = sbr.rel (%p184) target = $region36
    $region35: #{dci_forward.4} parent=5 // pred_region
      %s188 = ssub.s32 %s10, 1
      %s189 = smul.u32 32, %s19
      %s190 = smul.u32 4, %s20
      %p191 = scmp.lt.s32.totalorder %s189, 63
      %s192 = scalar_select %p191, %s189, 63
      %p193 = scmp.lt.s32.totalorder %s190, 3
      %s194 = scalar_select %p193, %s190, 3
      %s195 = smul.addr %s192, 4
      %s196 = sadd.s32 %s194, %s195
      %s197 = smul.addr %s196, 4
      %s198 = scalar_lea.vmem %s0, %s197
      %p199 = pneg %p50
      %p200 = pneg %p47
      %p201 = pneg %p71
      %p202 = pneg %p68
      %p203 = pneg %p92
      %p204 = pneg %p89
      %p205 = pneg %p113
      %p206 = pneg %p110
      %p207 = pneg %p139
      %p208 = pneg %p136
      %s209 = smul.u32 32, %s19
      %p210 = scmp.lt.s32.totalorder %s209, 63
      %s211 = scalar_select %p210, %s209, 63
      %s212 = smul.addr %s211, 4
      %s213 = scalar_lea.vmem %s4, %s212
      %s214 = smul.u32 32, %s19
      %s215 = smul.u32 4, %s20
      %p216 = scmp.lt.s32.totalorder %s214, 63
      %s217 = scalar_select %p216, %s214, 63
      %p218 = scmp.lt.s32.totalorder %s215, 3
      %s219 = scalar_select %p218, %s215, 3
      %s220 = smul.addr %s217, 4
      %s221 = sadd.s32 %s219, %s220
      %s222 = smul.addr %s221, 4
      %s223 = scalar_lea.vmem %s0, %s222
      %s224 = smul.u32 32, %s19
      %s225 = smul.u32 4, %s20
      %s226 = smul.u32 32, %s19
      %p227 = scmp.lt.s32.totalorder %s226, 63
      %s228 = scalar_select %p227, %s226, 63
      %s229 = smul.addr %s228, 4
      %s230 = scalar_lea.vmem %s4, %s229
      %s231 = smul.u32 32, %s19
      %p233 = scmp.eq.s32.totalorder %s20, 0
      // Predicated region
      $region37: #{dci_forward.4} parent=35 // pred_check
        %p234 = pneg %p233
      $region38: #{dci_forward.4} parent=35 // pred_check_branch
        %236 = sbr.rel (%p234) target = $region40
      $region39: #{dci_forward.4} parent=35 // pred_region
        %vm237 = vcmask 261120
        %238 = vst.msk [vmem:[#allocation2] sm:$0xff] %vm237, 0.0
        %239 = vst.msk [vmem:[#allocation2 + $0x8] sm:$0xff] %vm237, 0.0
        %240 = vst.msk [vmem:[#allocation2 + $0x10] sm:$0xff] %vm237, 0.0
        %241 = vst.msk [vmem:[#allocation2 + $0x18] sm:$0xff] %vm237, 0.0
        %242 = vst.msk [vmem:[#allocation2 + $0x20] sm:$0xff] %vm237, 0.0
        %243 = vst.msk [vmem:[#allocation2 + $0x28] sm:$0xff] %vm237, 0.0
        %244 = vst.msk [vmem:[#allocation2 + $0x30] sm:$0xff] %vm237, 0.0
        %245 = vst.msk [vmem:[#allocation2 + $0x38] sm:$0xff] %vm237, 0.0
        %246 = vst.msk [vmem:[#allocation2 + $0x40] sm:$0xff] %vm237, 0.0
        %247 = vst.msk [vmem:[#allocation2 + $0x48] sm:$0xff] %vm237, 0.0
        %248 = vst.msk [vmem:[#allocation2 + $0x50] sm:$0xff] %vm237, 0.0
        %249 = vst.msk [vmem:[#allocation2 + $0x58] sm:$0xff] %vm237, 0.0
        %250 = vst.msk [vmem:[#allocation2 + $0x60] sm:$0xff] %vm237, 0.0
        %251 = vst.msk [vmem:[#allocation2 + $0x68] sm:$0xff] %vm237, 0.0
        %252 = vst.msk [vmem:[#allocation2 + $0x70] sm:$0xff] %vm237, 0.0
        %253 = vst.msk [vmem:[#allocation2 + $0x78] sm:$0xff] %vm237, 0.0
        %254 = vst.msk [vmem:[#allocation2 + $0x80] sm:$0xff] %vm237, 0.0
        %255 = vst.msk [vmem:[#allocation2 + $0x88] sm:$0xff] %vm237, 0.0
        %256 = vst.msk [vmem:[#allocation2 + $0x90] sm:$0xff] %vm237, 0.0
        %257 = vst.msk [vmem:[#allocation2 + $0x98] sm:$0xff] %vm237, 0.0
        %258 = vst.msk [vmem:[#allocation2 + $0xa0] sm:$0xff] %vm237, 0.0
        %259 = vst.msk [vmem:[#allocation2 + $0xa8] sm:$0xff] %vm237, 0.0
        %260 = vst.msk [vmem:[#allocation2 + $0xb0] sm:$0xff] %vm237, 0.0
        %261 = vst.msk [vmem:[#allocation2 + $0xb8] sm:$0xff] %vm237, 0.0
        %262 = vst.msk [vmem:[#allocation2 + $0xc0] sm:$0xff] %vm237, 0.0
        %263 = vst.msk [vmem:[#allocation2 + $0xc8] sm:$0xff] %vm237, 0.0
        %264 = vst.msk [vmem:[#allocation2 + $0xd0] sm:$0xff] %vm237, 0.0
        %265 = vst.msk [vmem:[#allocation2 + $0xd8] sm:$0xff] %vm237, 0.0
        %266 = vst.msk [vmem:[#allocation2 + $0xe0] sm:$0xff] %vm237, 0.0
        %267 = vst.msk [vmem:[#allocation2 + $0xe8] sm:$0xff] %vm237, 0.0
        %268 = vst.msk [vmem:[#allocation2 + $0xf0] sm:$0xff] %vm237, 0.0
        %269 = vst.msk [vmem:[#allocation2 + $0xf8] sm:$0xff] %vm237, 0.0
      $region40: #{dci_forward.4} parent=35 // pred_fallthru
        _
      %s270 = smul.u32 %s20, 512
      %s271 = sshra.s32 %s270, 3
      %s272 = sand.u32 %s270, 7
      %s273 = smul.addr %s271, 4
      %s274 = scalar_lea.vmem %s1, %s273
      %v275 = vld [vmem:[%s274] sm:$0xf]
      %v276 = vld [vmem:[%s274 + $0x4] sm:$0xf]
      %v277 = vld [vmem:[%s274 + $0x8] sm:$0xf]
      %v278 = vld [vmem:[%s274 + $0xc] sm:$0xf]
      %v279 = vld [vmem:[%s274 + $0x10] sm:$0xf]
      %v280 = vld [vmem:[%s274 + $0x14] sm:$0xf]
      %v281 = vld [vmem:[%s274 + $0x18] sm:$0xf]
      %v282 = vld [vmem:[%s274 + $0x1c] sm:$0xf]
      %v283 = vld [vmem:[%s274 + $0x20] sm:$0xf]
      %v284 = vld [vmem:[%s274 + $0x24] sm:$0xf]
      %v285 = vld [vmem:[%s274 + $0x28] sm:$0xf]
      %v286 = vld [vmem:[%s274 + $0x2c] sm:$0xf]
      %v287 = vld [vmem:[%s274 + $0x30] sm:$0xf]
      %v288 = vld [vmem:[%s274 + $0x34] sm:$0xf]
      %v289 = vld [vmem:[%s274 + $0x38] sm:$0xf]
      %v290 = vld [vmem:[%s274 + $0x3c] sm:$0xf]
      %v291 = vld [vmem:[%s274 + $0x40] sm:$0xf]
      %v292 = vld [vmem:[%s274 + $0x44] sm:$0xf]
      %v293 = vld [vmem:[%s274 + $0x48] sm:$0xf]
      %v294 = vld [vmem:[%s274 + $0x4c] sm:$0xf]
      %v295 = vld [vmem:[%s274 + $0x50] sm:$0xf]
      %v296 = vld [vmem:[%s274 + $0x54] sm:$0xf]
      %v297 = vld [vmem:[%s274 + $0x58] sm:$0xf]
      %v298 = vld [vmem:[%s274 + $0x5c] sm:$0xf]
      %v299 = vld [vmem:[%s274 + $0x60] sm:$0xf]
      %v300 = vld [vmem:[%s274 + $0x64] sm:$0xf]
      %v301 = vld [vmem:[%s274 + $0x68] sm:$0xf]
      %v302 = vld [vmem:[%s274 + $0x6c] sm:$0xf]
      %v303 = vld [vmem:[%s274 + $0x70] sm:$0xf]
      %v304 = vld [vmem:[%s274 + $0x74] sm:$0xf]
      %v305 = vld [vmem:[%s274 + $0x78] sm:$0xf]
      %v306 = vld [vmem:[%s274 + $0x7c] sm:$0xf]
      %v307 = vld [vmem:[%s274 + $0x80] sm:$0xf]
      %v308 = vld [vmem:[%s274 + $0x84] sm:$0xf]
      %v309 = vld [vmem:[%s274 + $0x88] sm:$0xf]
      %v310 = vld [vmem:[%s274 + $0x8c] sm:$0xf]
      %v311 = vld [vmem:[%s274 + $0x90] sm:$0xf]
      %v312 = vld [vmem:[%s274 + $0x94] sm:$0xf]
      %v313 = vld [vmem:[%s274 + $0x98] sm:$0xf]
      %v314 = vld [vmem:[%s274 + $0x9c] sm:$0xf]
      %v315 = vld [vmem:[%s274 + $0xa0] sm:$0xf]
      %v316 = vld [vmem:[%s274 + $0xa4] sm:$0xf]
      %v317 = vld [vmem:[%s274 + $0xa8] sm:$0xf]
      %v318 = vld [vmem:[%s274 + $0xac] sm:$0xf]
      %v319 = vld [vmem:[%s274 + $0xb0] sm:$0xf]
      %v320 = vld [vmem:[%s274 + $0xb4] sm:$0xf]
      %v321 = vld [vmem:[%s274 + $0xb8] sm:$0xf]
      %v322 = vld [vmem:[%s274 + $0xbc] sm:$0xf]
      %v323 = vld [vmem:[%s274 + $0xc0] sm:$0xf]
      %v324 = vld [vmem:[%s274 + $0xc4] sm:$0xf]
      %v325 = vld [vmem:[%s274 + $0xc8] sm:$0xf]
      %v326 = vld [vmem:[%s274 + $0xcc] sm:$0xf]
      %v327 = vld [vmem:[%s274 + $0xd0] sm:$0xf]
      %v328 = vld [vmem:[%s274 + $0xd4] sm:$0xf]
      %v329 = vld [vmem:[%s274 + $0xd8] sm:$0xf]
      %v330 = vld [vmem:[%s274 + $0xdc] sm:$0xf]
      %v331 = vld [vmem:[%s274 + $0xe0] sm:$0xf]
      %v332 = vld [vmem:[%s274 + $0xe4] sm:$0xf]
      %v333 = vld [vmem:[%s274 + $0xe8] sm:$0xf]
      %v334 = vld [vmem:[%s274 + $0xec] sm:$0xf]
      %v335 = vld [vmem:[%s274 + $0xf0] sm:$0xf]
      %v336 = vld [vmem:[%s274 + $0xf4] sm:$0xf]
      %v337 = vld [vmem:[%s274 + $0xf8] sm:$0xf]
      %v338 = vld [vmem:[%s274 + $0xfc] sm:$0xf]
      %v339 = vld [vmem:[#allocation2] sm:$0xff]
      %v340 = vld [vmem:[#allocation2 + $0x8] sm:$0xff]
      %v341 = vld [vmem:[#allocation2 + $0x10] sm:$0xff]
      %v342 = vld [vmem:[#allocation2 + $0x18] sm:$0xff]
      %v343 = vld [vmem:[#allocation2 + $0x20] sm:$0xff]
      %v344 = vld [vmem:[#allocation2 + $0x28] sm:$0xff]
      %v345 = vld [vmem:[#allocation2 + $0x30] sm:$0xff]
      %v346 = vld [vmem:[#allocation2 + $0x38] sm:$0xff]
      %v347 = vld [vmem:[#allocation2 + $0x40] sm:$0xff]
      %v348 = vld [vmem:[#allocation2 + $0x48] sm:$0xff]
      %v349 = vld [vmem:[#allocation2 + $0x50] sm:$0xff]
      %v350 = vld [vmem:[#allocation2 + $0x58] sm:$0xff]
      %v351 = vld [vmem:[#allocation2 + $0x60] sm:$0xff]
      %v352 = vld [vmem:[#allocation2 + $0x68] sm:$0xff]
      %v353 = vld [vmem:[#allocation2 + $0x70] sm:$0xff]
      %v354 = vld [vmem:[#allocation2 + $0x78] sm:$0xff]
      %v355 = vld [vmem:[#allocation2 + $0x80] sm:$0xff]
      %v356 = vld [vmem:[#allocation2 + $0x88] sm:$0xff]
      %v357 = vld [vmem:[#allocation2 + $0x90] sm:$0xff]
      %v358 = vld [vmem:[#allocation2 + $0x98] sm:$0xff]
      %v359 = vld [vmem:[#allocation2 + $0xa0] sm:$0xff]
      %v360 = vld [vmem:[#allocation2 + $0xa8] sm:$0xff]
      %v361 = vld [vmem:[#allocation2 + $0xb0] sm:$0xff]
      %v362 = vld [vmem:[#allocation2 + $0xb8] sm:$0xff]
      %v363 = vld [vmem:[#allocation2 + $0xc0] sm:$0xff]
      %v364 = vld [vmem:[#allocation2 + $0xc8] sm:$0xff]
      %v365 = vld [vmem:[#allocation2 + $0xd0] sm:$0xff]
      %v366 = vld [vmem:[#allocation2 + $0xd8] sm:$0xff]
      %v367 = vld [vmem:[#allocation2 + $0xe0] sm:$0xff]
      %v368 = vld [vmem:[#allocation2 + $0xe8] sm:$0xff]
      %v369 = vld [vmem:[#allocation2 + $0xf0] sm:$0xff]
      %v370 = vld [vmem:[#allocation2 + $0xf8] sm:$0xff]
      %v371 = vld [vmem:[%s223] sm:$0xff]
      %v372 = vld [vmem:[%s223 + $0x8] sm:$0xff]
      %v373 = vld [vmem:[%s223 + $0x10] sm:$0xff]
      %v374 = vld [vmem:[%s223 + $0x18] sm:$0xff]
      %v375 = vld [vmem:[%s223 + $0x20] sm:$0xff]
      %v376 = vld [vmem:[%s223 + $0x28] sm:$0xff]
      %v377 = vld [vmem:[%s223 + $0x30] sm:$0xff]
      %v378 = vld [vmem:[%s223 + $0x38] sm:$0xff]
      %v379 = vld [vmem:[%s223 + $0x40] sm:$0xff]
      %v380 = vld [vmem:[%s223 + $0x48] sm:$0xff]
      %v381 = vld [vmem:[%s223 + $0x50] sm:$0xff]
      %v382 = vld [vmem:[%s223 + $0x58] sm:$0xff]
      %v383 = vld [vmem:[%s223 + $0x60] sm:$0xff]
      %v384 = vld [vmem:[%s223 + $0x68] sm:$0xff]
      %v385 = vld [vmem:[%s223 + $0x70] sm:$0xff]
      %v386 = vld [vmem:[%s223 + $0x78] sm:$0xff]
      %v387 = vld [vmem:[%s223 + $0x80] sm:$0xff]
      %v388 = vld [vmem:[%s223 + $0x88] sm:$0xff]
      %v389 = vld [vmem:[%s223 + $0x90] sm:$0xff]
      %v390 = vld [vmem:[%s223 + $0x98] sm:$0xff]
      %v391 = vld [vmem:[%s223 + $0xa0] sm:$0xff]
      %v392 = vld [vmem:[%s223 + $0xa8] sm:$0xff]
      %v393 = vld [vmem:[%s223 + $0xb0] sm:$0xff]
      %v394 = vld [vmem:[%s223 + $0xb8] sm:$0xff]
      %v395 = vld [vmem:[%s223 + $0xc0] sm:$0xff]
      %v396 = vld [vmem:[%s223 + $0xc8] sm:$0xff]
      %v397 = vld [vmem:[%s223 + $0xd0] sm:$0xff]
      %v398 = vld [vmem:[%s223 + $0xd8] sm:$0xff]
      %v399 = vld [vmem:[%s223 + $0xe0] sm:$0xff]
      %v400 = vld [vmem:[%s223 + $0xe8] sm:$0xff]
      %v401 = vld [vmem:[%s223 + $0xf0] sm:$0xff]
      %v402 = vld [vmem:[%s223 + $0xf8] sm:$0xff]
      %v403 = vld [vmem:[%s223 + $0x100] sm:$0xff]
      %v404 = vld [vmem:[%s223 + $0x108] sm:$0xff]
      %v405 = vld [vmem:[%s223 + $0x110] sm:$0xff]
      %v406 = vld [vmem:[%s223 + $0x118] sm:$0xff]
      %v407 = vld [vmem:[%s223 + $0x120] sm:$0xff]
      %v408 = vld [vmem:[%s223 + $0x128] sm:$0xff]
      %v409 = vld [vmem:[%s223 + $0x130] sm:$0xff]
      %v410 = vld [vmem:[%s223 + $0x138] sm:$0xff]
      %v411 = vld [vmem:[%s223 + $0x140] sm:$0xff]
      %v412 = vld [vmem:[%s223 + $0x148] sm:$0xff]
      %v413 = vld [vmem:[%s223 + $0x150] sm:$0xff]
      %v414 = vld [vmem:[%s223 + $0x158] sm:$0xff]
      %v415 = vld [vmem:[%s223 + $0x160] sm:$0xff]
      %v416 = vld [vmem:[%s223 + $0x168] sm:$0xff]
      %v417 = vld [vmem:[%s223 + $0x170] sm:$0xff]
      %v418 = vld [vmem:[%s223 + $0x178] sm:$0xff]
      %v419 = vld [vmem:[%s223 + $0x180] sm:$0xff]
      %v420 = vld [vmem:[%s223 + $0x188] sm:$0xff]
      %v421 = vld [vmem:[%s223 + $0x190] sm:$0xff]
      %v422 = vld [vmem:[%s223 + $0x198] sm:$0xff]
      %v423 = vld [vmem:[%s223 + $0x1a0] sm:$0xff]
      %v424 = vld [vmem:[%s223 + $0x1a8] sm:$0xff]
      %v425 = vld [vmem:[%s223 + $0x1b0] sm:$0xff]
      %v426 = vld [vmem:[%s223 + $0x1b8] sm:$0xff]
      %v427 = vld [vmem:[%s223 + $0x1c0] sm:$0xff]
      %v428 = vld [vmem:[%s223 + $0x1c8] sm:$0xff]
      %v429 = vld [vmem:[%s223 + $0x1d0] sm:$0xff]
      %v430 = vld [vmem:[%s223 + $0x1d8] sm:$0xff]
      %v431 = vld [vmem:[%s223 + $0x1e0] sm:$0xff]
      %v432 = vld [vmem:[%s223 + $0x1e8] sm:$0xff]
      %v433 = vld [vmem:[%s223 + $0x1f0] sm:$0xff]
      %v434 = vld [vmem:[%s223 + $0x1f8] sm:$0xff]
      %v499 = vunpack.c.l.b16 %v371
      %v500 = vunpack.c.h.b16 %v371
      %v501 = vunpack.c.l.b16 %v372
      %v502 = vunpack.c.h.b16 %v372
      %v503 = vunpack.c.l.b16 %v373
      %v504 = vunpack.c.h.b16 %v373
      %v505 = vunpack.c.l.b16 %v374
      %v506 = vunpack.c.h.b16 %v374
      %v507 = vunpack.c.l.b16 %v375
      %v508 = vunpack.c.h.b16 %v375
      %v509 = vunpack.c.l.b16 %v376
      %v510 = vunpack.c.h.b16 %v376
      %v511 = vunpack.c.l.b16 %v377
      %v512 = vunpack.c.h.b16 %v377
      %v513 = vunpack.c.l.b16 %v378
      %v514 = vunpack.c.h.b16 %v378
      %v515 = vunpack.c.l.b16 %v379
      %v516 = vunpack.c.h.b16 %v379
      %v517 = vunpack.c.l.b16 %v380
      %v518 = vunpack.c.h.b16 %v380
      %v519 = vunpack.c.l.b16 %v381
      %v520 = vunpack.c.h.b16 %v381
      %v521 = vunpack.c.l.b16 %v382
      %v522 = vunpack.c.h.b16 %v382
      %v523 = vunpack.c.l.b16 %v383
      %v524 = vunpack.c.h.b16 %v383
      %v525 = vunpack.c.l.b16 %v384
      %v526 = vunpack.c.h.b16 %v384
      %v527 = vunpack.c.l.b16 %v385
      %v528 = vunpack.c.h.b16 %v385
      %v529 = vunpack.c.l.b16 %v386
      %v530 = vunpack.c.h.b16 %v386
      %v531 = vunpack.c.l.b16 %v387
      %v532 = vunpack.c.h.b16 %v387
      %v533 = vunpack.c.l.b16 %v388
      %v534 = vunpack.c.h.b16 %v388
      %v535 = vunpack.c.l.b16 %v389
      %v536 = vunpack.c.h.b16 %v389
      %v537 = vunpack.c.l.b16 %v390
      %v538 = vunpack.c.h.b16 %v390
      %v539 = vunpack.c.l.b16 %v391
      %v540 = vunpack.c.h.b16 %v391
      %v541 = vunpack.c.l.b16 %v392
      %v542 = vunpack.c.h.b16 %v392
      %v543 = vunpack.c.l.b16 %v393
      %v544 = vunpack.c.h.b16 %v393
      %v545 = vunpack.c.l.b16 %v394
      %v546 = vunpack.c.h.b16 %v394
      %v547 = vunpack.c.l.b16 %v395
      %v548 = vunpack.c.h.b16 %v395
      %v549 = vunpack.c.l.b16 %v396
      %v550 = vunpack.c.h.b16 %v396
      %v551 = vunpack.c.l.b16 %v397
      %v552 = vunpack.c.h.b16 %v397
      %v553 = vunpack.c.l.b16 %v398
      %v554 = vunpack.c.h.b16 %v398
      %v555 = vunpack.c.l.b16 %v399
      %v556 = vunpack.c.h.b16 %v399
      %v557 = vunpack.c.l.b16 %v400
      %v558 = vunpack.c.h.b16 %v400
      %v559 = vunpack.c.l.b16 %v401
      %v560 = vunpack.c.h.b16 %v401
      %v561 = vunpack.c.l.b16 %v402
      %v562 = vunpack.c.h.b16 %v402
      %v563 = vunpack.c.l.b16 %v403
      %v564 = vunpack.c.h.b16 %v403
      %v565 = vunpack.c.l.b16 %v404
      %v566 = vunpack.c.h.b16 %v404
      %v567 = vunpack.c.l.b16 %v405
      %v568 = vunpack.c.h.b16 %v405
      %v569 = vunpack.c.l.b16 %v406
      %v570 = vunpack.c.h.b16 %v406
      %v571 = vunpack.c.l.b16 %v407
      %v572 = vunpack.c.h.b16 %v407
      %v573 = vunpack.c.l.b16 %v408
      %v574 = vunpack.c.h.b16 %v408
      %v575 = vunpack.c.l.b16 %v409
      %v576 = vunpack.c.h.b16 %v409
      %v577 = vunpack.c.l.b16 %v410
      %v578 = vunpack.c.h.b16 %v410
      %v579 = vunpack.c.l.b16 %v411
      %v580 = vunpack.c.h.b16 %v411
      %v581 = vunpack.c.l.b16 %v412
      %v582 = vunpack.c.h.b16 %v412
      %v583 = vunpack.c.l.b16 %v413
      %v584 = vunpack.c.h.b16 %v413
      %v585 = vunpack.c.l.b16 %v414
      %v586 = vunpack.c.h.b16 %v414
      %v587 = vunpack.c.l.b16 %v415
      %v588 = vunpack.c.h.b16 %v415
      %v589 = vunpack.c.l.b16 %v416
      %v590 = vunpack.c.h.b16 %v416
      %v591 = vunpack.c.l.b16 %v417
      %v592 = vunpack.c.h.b16 %v417
      %v593 = vunpack.c.l.b16 %v418
      %v594 = vunpack.c.h.b16 %v418
      %v595 = vunpack.c.l.b16 %v419
      %v596 = vunpack.c.h.b16 %v419
      %v597 = vunpack.c.l.b16 %v420
      %v598 = vunpack.c.h.b16 %v420
      %v599 = vunpack.c.l.b16 %v421
      %v600 = vunpack.c.h.b16 %v421
      %v601 = vunpack.c.l.b16 %v422
      %v602 = vunpack.c.h.b16 %v422
      %v603 = vunpack.c.l.b16 %v423
      %v604 = vunpack.c.h.b16 %v423
      %v605 = vunpack.c.l.b16 %v424
      %v606 = vunpack.c.h.b16 %v424
      %v607 = vunpack.c.l.b16 %v425
      %v608 = vunpack.c.h.b16 %v425
      %v609 = vunpack.c.l.b16 %v426
      %v610 = vunpack.c.h.b16 %v426
      %v611 = vunpack.c.l.b16 %v427
      %v612 = vunpack.c.h.b16 %v427
      %v613 = vunpack.c.l.b16 %v428
      %v614 = vunpack.c.h.b16 %v428
      %v615 = vunpack.c.l.b16 %v429
      %v616 = vunpack.c.h.b16 %v429
      %v617 = vunpack.c.l.b16 %v430
      %v618 = vunpack.c.h.b16 %v430
      %v619 = vunpack.c.l.b16 %v431
      %v620 = vunpack.c.h.b16 %v431
      %v621 = vunpack.c.l.b16 %v432
      %v622 = vunpack.c.h.b16 %v432
      %v623 = vunpack.c.l.b16 %v433
      %v624 = vunpack.c.h.b16 %v433
      %v625 = vunpack.c.l.b16 %v434
      %v626 = vunpack.c.h.b16 %v434
      %v627 = vpack.c.b16 %v503, %v499
      %v628 = vpack.c.b16 %v504, %v500
      %v629 = vpack.c.b16 %v505, %v501
      %v630 = vpack.c.b16 %v506, %v502
      %v631 = vpack.c.b16 %v511, %v507
      %v632 = vpack.c.b16 %v512, %v508
      %v633 = vpack.c.b16 %v513, %v509
      %v634 = vpack.c.b16 %v514, %v510
      %v635 = vpack.c.b16 %v519, %v515
      %v636 = vpack.c.b16 %v520, %v516
      %v637 = vpack.c.b16 %v521, %v517
      %v638 = vpack.c.b16 %v522, %v518
      %v639 = vpack.c.b16 %v527, %v523
      %v640 = vpack.c.b16 %v528, %v524
      %v641 = vpack.c.b16 %v529, %v525
      %v642 = vpack.c.b16 %v530, %v526
      %v643 = vpack.c.b16 %v535, %v531
      %v644 = vpack.c.b16 %v536, %v532
      %v645 = vpack.c.b16 %v537, %v533
      %v646 = vpack.c.b16 %v538, %v534
      %v647 = vpack.c.b16 %v543, %v539
      %v648 = vpack.c.b16 %v544, %v540
      %v649 = vpack.c.b16 %v545, %v541
      %v650 = vpack.c.b16 %v546, %v542
      %v651 = vpack.c.b16 %v551, %v547
      %v652 = vpack.c.b16 %v552, %v548
      %v653 = vpack.c.b16 %v553, %v549
      %v654 = vpack.c.b16 %v554, %v550
      %v655 = vpack.c.b16 %v559, %v555
      %v656 = vpack.c.b16 %v560, %v556
      %v657 = vpack.c.b16 %v561, %v557
      %v658 = vpack.c.b16 %v562, %v558
      %v659 = vpack.c.b16 %v567, %v563
      %v660 = vpack.c.b16 %v568, %v564
      %v661 = vpack.c.b16 %v569, %v565
      %v662 = vpack.c.b16 %v570, %v566
      %v663 = vpack.c.b16 %v575, %v571
      %v664 = vpack.c.b16 %v576, %v572
      %v665 = vpack.c.b16 %v577, %v573
      %v666 = vpack.c.b16 %v578, %v574
      %v667 = vpack.c.b16 %v583, %v579
      %v668 = vpack.c.b16 %v584, %v580
      %v669 = vpack.c.b16 %v585, %v581
      %v670 = vpack.c.b16 %v586, %v582
      %v671 = vpack.c.b16 %v591, %v587
      %v672 = vpack.c.b16 %v592, %v588
      %v673 = vpack.c.b16 %v593, %v589
      %v674 = vpack.c.b16 %v594, %v590
      %v675 = vpack.c.b16 %v599, %v595
      %v676 = vpack.c.b16 %v600, %v596
      %v677 = vpack.c.b16 %v601, %v597
      %v678 = vpack.c.b16 %v602, %v598
      %v679 = vpack.c.b16 %v607, %v603
      %v680 = vpack.c.b16 %v608, %v604
      %v681 = vpack.c.b16 %v609, %v605
      %v682 = vpack.c.b16 %v610, %v606
      %v683 = vpack.c.b16 %v615, %v611
      %v684 = vpack.c.b16 %v616, %v612
      %v685 = vpack.c.b16 %v617, %v613
      %v686 = vpack.c.b16 %v618, %v614
      %v687 = vpack.c.b16 %v623, %v619
      %v688 = vpack.c.b16 %v624, %v620
      %v689 = vpack.c.b16 %v625, %v621
      %v690 = vpack.c.b16 %v626, %v622
      %v819 = vunpack.c.l.b16 %v275
      %v820 = vunpack.c.l.b16 %v276
      %v821 = vunpack.c.l.b16 %v277
      %v822 = vunpack.c.l.b16 %v278
      %v823 = vunpack.c.l.b16 %v279
      %v824 = vunpack.c.l.b16 %v280
      %v825 = vunpack.c.l.b16 %v281
      %v826 = vunpack.c.l.b16 %v282
      %v827 = vunpack.c.l.b16 %v283
      %v828 = vunpack.c.l.b16 %v284
      %v829 = vunpack.c.l.b16 %v285
      %v830 = vunpack.c.l.b16 %v286
      %v831 = vunpack.c.l.b16 %v287
      %v832 = vunpack.c.l.b16 %v288
      %v833 = vunpack.c.l.b16 %v289
      %v834 = vunpack.c.l.b16 %v290
      %v835 = vunpack.c.l.b16 %v291
      %v836 = vunpack.c.l.b16 %v292
      %v837 = vunpack.c.l.b16 %v293
      %v838 = vunpack.c.l.b16 %v294
      %v839 = vunpack.c.l.b16 %v295
      %v840 = vunpack.c.l.b16 %v296
      %v841 = vunpack.c.l.b16 %v297
      %v842 = vunpack.c.l.b16 %v298
      %v843 = vunpack.c.l.b16 %v299
      %v844 = vunpack.c.l.b16 %v300
      %v845 = vunpack.c.l.b16 %v301
      %v846 = vunpack.c.l.b16 %v302
      %v847 = vunpack.c.l.b16 %v303
      %v848 = vunpack.c.l.b16 %v304
      %v849 = vunpack.c.l.b16 %v305
      %v850 = vunpack.c.l.b16 %v306
      %v851 = vunpack.c.l.b16 %v307
      %v852 = vunpack.c.l.b16 %v308
      %v853 = vunpack.c.l.b16 %v309
      %v854 = vunpack.c.l.b16 %v310
      %v855 = vunpack.c.l.b16 %v311
      %v856 = vunpack.c.l.b16 %v312
      %v857 = vunpack.c.l.b16 %v313
      %v858 = vunpack.c.l.b16 %v314
      %v859 = vunpack.c.l.b16 %v315
      %v860 = vunpack.c.l.b16 %v316
      %v861 = vunpack.c.l.b16 %v317
      %v862 = vunpack.c.l.b16 %v318
      %v863 = vunpack.c.l.b16 %v319
      %v864 = vunpack.c.l.b16 %v320
      %v865 = vunpack.c.l.b16 %v321
      %v866 = vunpack.c.l.b16 %v322
      %v867 = vunpack.c.l.b16 %v323
      %v868 = vunpack.c.l.b16 %v324
      %v869 = vunpack.c.l.b16 %v325
      %v870 = vunpack.c.l.b16 %v326
      %v871 = vunpack.c.l.b16 %v327
      %v872 = vunpack.c.l.b16 %v328
      %v873 = vunpack.c.l.b16 %v329
      %v874 = vunpack.c.l.b16 %v330
      %v875 = vunpack.c.l.b16 %v331
      %v876 = vunpack.c.l.b16 %v332
      %v877 = vunpack.c.l.b16 %v333
      %v878 = vunpack.c.l.b16 %v334
      %v879 = vunpack.c.l.b16 %v335
      %v880 = vunpack.c.l.b16 %v336
      %v881 = vunpack.c.l.b16 %v337
      %v882 = vunpack.c.l.b16 %v338
      %v883 = vpack.c.b16 %v820, %v819
      %v884 = vpack.c.b16 %v822, %v821
      %v885 = vpack.c.b16 %v824, %v823
      %v886 = vpack.c.b16 %v826, %v825
      %v887 = vpack.c.b16 %v828, %v827
      %v888 = vpack.c.b16 %v830, %v829
      %v889 = vpack.c.b16 %v832, %v831
      %v890 = vpack.c.b16 %v834, %v833
      %v891 = vpack.c.b16 %v836, %v835
      %v892 = vpack.c.b16 %v838, %v837
      %v893 = vpack.c.b16 %v840, %v839
      %v894 = vpack.c.b16 %v842, %v841
      %v895 = vpack.c.b16 %v844, %v843
      %v896 = vpack.c.b16 %v846, %v845
      %v897 = vpack.c.b16 %v848, %v847
      %v898 = vpack.c.b16 %v850, %v849
      %v899 = vpack.c.b16 %v852, %v851
      %v900 = vpack.c.b16 %v854, %v853
      %v901 = vpack.c.b16 %v856, %v855
      %v902 = vpack.c.b16 %v858, %v857
      %v903 = vpack.c.b16 %v860, %v859
      %v904 = vpack.c.b16 %v862, %v861
      %v905 = vpack.c.b16 %v864, %v863
      %v906 = vpack.c.b16 %v866, %v865
      %v907 = vpack.c.b16 %v868, %v867
      %v908 = vpack.c.b16 %v870, %v869
      %v909 = vpack.c.b16 %v872, %v871
      %v910 = vpack.c.b16 %v874, %v873
      %v911 = vpack.c.b16 %v876, %v875
      %v912 = vpack.c.b16 %v878, %v877
      %v913 = vpack.c.b16 %v880, %v879
      %v914 = vpack.c.b16 %v882, %v881
      %947 = vmatpush.bf16.msra.mxu0 %v890
      %948 = vmatpush.bf16.msra.mxu0 %v889
      %949 = vmatpush.bf16.msra.mxu0 %v888
      %950 = vmatpush.bf16.msra.mxu0 %v887
      %951 = vmatpush.bf16.msra.mxu0 %v886
      %952 = vmatpush.bf16.msra.mxu0 %v885
      %953 = vmatpush.bf16.msra.mxu0 %v884
      %954 = vmatpush.bf16.msra.mxu0 %v883
      %955 = vmatmul.bf16.gmra.mxu0 %v627
      %v956 = vpop.f32.mrf.mxu0
      %v957 = vadd.f32 0.0, %v956
      %v958 = vpop.f32.mrf.mxu0
      %v959 = vadd.f32 0.0, %v958
      %960 = vmatmul.bf16.gmra.mxu0 %v631
      %v961 = vpop.f32.mrf.mxu0
      %v962 = vadd.f32 0.0, %v961
      %v963 = vpop.f32.mrf.mxu0
      %v964 = vadd.f32 0.0, %v963
      %965 = vmatmul.bf16.gmra.mxu0 %v635
      %v966 = vpop.f32.mrf.mxu0
      %v967 = vadd.f32 0.0, %v966
      %v968 = vpop.f32.mrf.mxu0
      %v969 = vadd.f32 0.0, %v968
      %970 = vmatmul.bf16.gmra.mxu0 %v639
      %v971 = vpop.f32.mrf.mxu0
      %v972 = vadd.f32 0.0, %v971
      %v973 = vpop.f32.mrf.mxu0
      %v974 = vadd.f32 0.0, %v973
      %975 = vmatmul.bf16.gmra.mxu0 %v643
      %v976 = vpop.f32.mrf.mxu0
      %v977 = vadd.f32 0.0, %v976
      %v978 = vpop.f32.mrf.mxu0
      %v979 = vadd.f32 0.0, %v978
      %980 = vmatmul.bf16.gmra.mxu0 %v647
      %v981 = vpop.f32.mrf.mxu0
      %v982 = vadd.f32 0.0, %v981
      %v983 = vpop.f32.mrf.mxu0
      %v984 = vadd.f32 0.0, %v983
      %985 = vmatmul.bf16.gmra.mxu0 %v651
      %v986 = vpop.f32.mrf.mxu0
      %v987 = vadd.f32 0.0, %v986
      %v988 = vpop.f32.mrf.mxu0
      %v989 = vadd.f32 0.0, %v988
      %990 = vmatmul.bf16.gmra.mxu0 %v655
      %v991 = vpop.f32.mrf.mxu0
      %v992 = vadd.f32 0.0, %v991
      %v993 = vpop.f32.mrf.mxu0
      %v994 = vadd.f32 0.0, %v993
      %995 = vmatmul.bf16.gmra.mxu0 %v659
      %v996 = vpop.f32.mrf.mxu0
      %v997 = vadd.f32 0.0, %v996
      %v998 = vpop.f32.mrf.mxu0
      %v999 = vadd.f32 0.0, %v998
      %1000 = vmatmul.bf16.gmra.mxu0 %v663
      %v1001 = vpop.f32.mrf.mxu0
      %v1002 = vadd.f32 0.0, %v1001
      %v1003 = vpop.f32.mrf.mxu0
      %v1004 = vadd.f32 0.0, %v1003
      %1005 = vmatmul.bf16.gmra.mxu0 %v667
      %v1006 = vpop.f32.mrf.mxu0
      %v1007 = vadd.f32 0.0, %v1006
      %v1008 = vpop.f32.mrf.mxu0
      %v1009 = vadd.f32 0.0, %v1008
      %1010 = vmatmul.bf16.gmra.mxu0 %v671
      %v1011 = vpop.f32.mrf.mxu0
      %v1012 = vadd.f32 0.0, %v1011
      %v1013 = vpop.f32.mrf.mxu0
      %v1014 = vadd.f32 0.0, %v1013
      %1015 = vmatmul.bf16.gmra.mxu0 %v675
      %v1016 = vpop.f32.mrf.mxu0
      %v1017 = vadd.f32 0.0, %v1016
      %v1018 = vpop.f32.mrf.mxu0
      %v1019 = vadd.f32 0.0, %v1018
      %1020 = vmatmul.bf16.gmra.mxu0 %v679
      %v1021 = vpop.f32.mrf.mxu0
      %v1022 = vadd.f32 0.0, %v1021
      %v1023 = vpop.f32.mrf.mxu0
      %v1024 = vadd.f32 0.0, %v1023
      %1025 = vmatmul.bf16.gmra.mxu0 %v683
      %v1026 = vpop.f32.mrf.mxu0
      %v1027 = vadd.f32 0.0, %v1026
      %v1028 = vpop.f32.mrf.mxu0
      %v1029 = vadd.f32 0.0, %v1028
      %1030 = vmatmul.bf16.gmra.mxu0 %v687
      %v1031 = vpop.f32.mrf.mxu0
      %v1032 = vadd.f32 0.0, %v1031
      %v1033 = vpop.f32.mrf.mxu0
      %v1034 = vadd.f32 0.0, %v1033
      %1035 = vdwg.mxu0
      %1036 = vmatpush.bf16.msra.mxu0 %v898
      %1037 = vmatpush.bf16.msra.mxu0 %v897
      %1038 = vmatpush.bf16.msra.mxu0 %v896
      %1039 = vmatpush.bf16.msra.mxu0 %v895
      %1040 = vmatpush.bf16.msra.mxu0 %v894
      %1041 = vmatpush.bf16.msra.mxu0 %v893
      %1042 = vmatpush.bf16.msra.mxu0 %v892
      %1043 = vmatpush.bf16.msra.mxu0 %v891
      %1044 = vmatmul.bf16.gmra.mxu0 %v628
      %v1045 = vpop.f32.mrf.mxu0
      %v1046 = vadd.f32 %v957, %v1045
      %v1047 = vpop.f32.mrf.mxu0
      %v1048 = vadd.f32 %v959, %v1047
      %1049 = vmatmul.bf16.gmra.mxu0 %v632
      %v1050 = vpop.f32.mrf.mxu0
      %v1051 = vadd.f32 %v962, %v1050
      %v1052 = vpop.f32.mrf.mxu0
      %v1053 = vadd.f32 %v964, %v1052
      %1054 = vmatmul.bf16.gmra.mxu0 %v636
      %v1055 = vpop.f32.mrf.mxu0
      %v1056 = vadd.f32 %v967, %v1055
      %v1057 = vpop.f32.mrf.mxu0
      %v1058 = vadd.f32 %v969, %v1057
      %1059 = vmatmul.bf16.gmra.mxu0 %v640
      %v1060 = vpop.f32.mrf.mxu0
      %v1061 = vadd.f32 %v972, %v1060
      %v1062 = vpop.f32.mrf.mxu0
      %v1063 = vadd.f32 %v974, %v1062
      %1064 = vmatmul.bf16.gmra.mxu0 %v644
      %v1065 = vpop.f32.mrf.mxu0
      %v1066 = vadd.f32 %v977, %v1065
      %v1067 = vpop.f32.mrf.mxu0
      %v1068 = vadd.f32 %v979, %v1067
      %1069 = vmatmul.bf16.gmra.mxu0 %v648
      %v1070 = vpop.f32.mrf.mxu0
      %v1071 = vadd.f32 %v982, %v1070
      %v1072 = vpop.f32.mrf.mxu0
      %v1073 = vadd.f32 %v984, %v1072
      %1074 = vmatmul.bf16.gmra.mxu0 %v652
      %v1075 = vpop.f32.mrf.mxu0
      %v1076 = vadd.f32 %v987, %v1075
      %v1077 = vpop.f32.mrf.mxu0
      %v1078 = vadd.f32 %v989, %v1077
      %1079 = vmatmul.bf16.gmra.mxu0 %v656
      %v1080 = vpop.f32.mrf.mxu0
      %v1081 = vadd.f32 %v992, %v1080
      %v1082 = vpop.f32.mrf.mxu0
      %v1083 = vadd.f32 %v994, %v1082
      %1084 = vmatmul.bf16.gmra.mxu0 %v660
      %v1085 = vpop.f32.mrf.mxu0
      %v1086 = vadd.f32 %v997, %v1085
      %v1087 = vpop.f32.mrf.mxu0
      %v1088 = vadd.f32 %v999, %v1087
      %1089 = vmatmul.bf16.gmra.mxu0 %v664
      %v1090 = vpop.f32.mrf.mxu0
      %v1091 = vadd.f32 %v1002, %v1090
      %v1092 = vpop.f32.mrf.mxu0
      %v1093 = vadd.f32 %v1004, %v1092
      %1094 = vmatmul.bf16.gmra.mxu0 %v668
      %v1095 = vpop.f32.mrf.mxu0
      %v1096 = vadd.f32 %v1007, %v1095
      %v1097 = vpop.f32.mrf.mxu0
      %v1098 = vadd.f32 %v1009, %v1097
      %1099 = vmatmul.bf16.gmra.mxu0 %v672
      %v1100 = vpop.f32.mrf.mxu0
      %v1101 = vadd.f32 %v1012, %v1100
      %v1102 = vpop.f32.mrf.mxu0
      %v1103 = vadd.f32 %v1014, %v1102
      %1104 = vmatmul.bf16.gmra.mxu0 %v676
      %v1105 = vpop.f32.mrf.mxu0
      %v1106 = vadd.f32 %v1017, %v1105
      %v1107 = vpop.f32.mrf.mxu0
      %v1108 = vadd.f32 %v1019, %v1107
      %1109 = vmatmul.bf16.gmra.mxu0 %v680
      %v1110 = vpop.f32.mrf.mxu0
      %v1111 = vadd.f32 %v1022, %v1110
      %v1112 = vpop.f32.mrf.mxu0
      %v1113 = vadd.f32 %v1024, %v1112
      %1114 = vmatmul.bf16.gmra.mxu0 %v684
      %v1115 = vpop.f32.mrf.mxu0
      %v1116 = vadd.f32 %v1027, %v1115
      %v1117 = vpop.f32.mrf.mxu0
      %v1118 = vadd.f32 %v1029, %v1117
      %1119 = vmatmul.bf16.gmra.mxu0 %v688
      %v1120 = vpop.f32.mrf.mxu0
      %v1121 = vadd.f32 %v1032, %v1120
      %v1122 = vpop.f32.mrf.mxu0
      %v1123 = vadd.f32 %v1034, %v1122
      %1124 = vdwg.mxu0
      %1125 = vmatpush.bf16.msra.mxu0 %v906
      %1126 = vmatpush.bf16.msra.mxu0 %v905
      %1127 = vmatpush.bf16.msra.mxu0 %v904
      %1128 = vmatpush.bf16.msra.mxu0 %v903
      %1129 = vmatpush.bf16.msra.mxu0 %v902
      %1130 = vmatpush.bf16.msra.mxu0 %v901
      %1131 = vmatpush.bf16.msra.mxu0 %v900
      %1132 = vmatpush.bf16.msra.mxu0 %v899
      %1133 = vmatmul.bf16.gmra.mxu0 %v629
      %v1134 = vpop.f32.mrf.mxu0
      %v1135 = vadd.f32 %v1046, %v1134
      %v1136 = vpop.f32.mrf.mxu0
      %v1137 = vadd.f32 %v1048, %v1136
      %1138 = vmatmul.bf16.gmra.mxu0 %v633
      %v1139 = vpop.f32.mrf.mxu0
      %v1140 = vadd.f32 %v1051, %v1139
      %v1141 = vpop.f32.mrf.mxu0
      %v1142 = vadd.f32 %v1053, %v1141
      %1143 = vmatmul.bf16.gmra.mxu0 %v637
      %v1144 = vpop.f32.mrf.mxu0
      %v1145 = vadd.f32 %v1056, %v1144
      %v1146 = vpop.f32.mrf.mxu0
      %v1147 = vadd.f32 %v1058, %v1146
      %1148 = vmatmul.bf16.gmra.mxu0 %v641
      %v1149 = vpop.f32.mrf.mxu0
      %v1150 = vadd.f32 %v1061, %v1149
      %v1151 = vpop.f32.mrf.mxu0
      %v1152 = vadd.f32 %v1063, %v1151
      %1153 = vmatmul.bf16.gmra.mxu0 %v645
      %v1154 = vpop.f32.mrf.mxu0
      %v1155 = vadd.f32 %v1066, %v1154
      %v1156 = vpop.f32.mrf.mxu0
      %v1157 = vadd.f32 %v1068, %v1156
      %1158 = vmatmul.bf16.gmra.mxu0 %v649
      %v1159 = vpop.f32.mrf.mxu0
      %v1160 = vadd.f32 %v1071, %v1159
      %v1161 = vpop.f32.mrf.mxu0
      %v1162 = vadd.f32 %v1073, %v1161
      %1163 = vmatmul.bf16.gmra.mxu0 %v653
      %v1164 = vpop.f32.mrf.mxu0
      %v1165 = vadd.f32 %v1076, %v1164
      %v1166 = vpop.f32.mrf.mxu0
      %v1167 = vadd.f32 %v1078, %v1166
      %1168 = vmatmul.bf16.gmra.mxu0 %v657
      %v1169 = vpop.f32.mrf.mxu0
      %v1170 = vadd.f32 %v1081, %v1169
      %v1171 = vpop.f32.mrf.mxu0
      %v1172 = vadd.f32 %v1083, %v1171
      %1173 = vmatmul.bf16.gmra.mxu0 %v661
      %v1174 = vpop.f32.mrf.mxu0
      %v1175 = vadd.f32 %v1086, %v1174
      %v1176 = vpop.f32.mrf.mxu0
      %v1177 = vadd.f32 %v1088, %v1176
      %1178 = vmatmul.bf16.gmra.mxu0 %v665
      %v1179 = vpop.f32.mrf.mxu0
      %v1180 = vadd.f32 %v1091, %v1179
      %v1181 = vpop.f32.mrf.mxu0
      %v1182 = vadd.f32 %v1093, %v1181
      %1183 = vmatmul.bf16.gmra.mxu0 %v669
      %v1184 = vpop.f32.mrf.mxu0
      %v1185 = vadd.f32 %v1096, %v1184
      %v1186 = vpop.f32.mrf.mxu0
      %v1187 = vadd.f32 %v1098, %v1186
      %1188 = vmatmul.bf16.gmra.mxu0 %v673
      %v1189 = vpop.f32.mrf.mxu0
      %v1190 = vadd.f32 %v1101, %v1189
      %v1191 = vpop.f32.mrf.mxu0
      %v1192 = vadd.f32 %v1103, %v1191
      %1193 = vmatmul.bf16.gmra.mxu0 %v677
      %v1194 = vpop.f32.mrf.mxu0
      %v1195 = vadd.f32 %v1106, %v1194
      %v1196 = vpop.f32.mrf.mxu0
      %v1197 = vadd.f32 %v1108, %v1196
      %1198 = vmatmul.bf16.gmra.mxu0 %v681
      %v1199 = vpop.f32.mrf.mxu0
      %v1200 = vadd.f32 %v1111, %v1199
      %v1201 = vpop.f32.mrf.mxu0
      %v1202 = vadd.f32 %v1113, %v1201
      %1203 = vmatmul.bf16.gmra.mxu0 %v685
      %v1204 = vpop.f32.mrf.mxu0
      %v1205 = vadd.f32 %v1116, %v1204
      %v1206 = vpop.f32.mrf.mxu0
      %v1207 = vadd.f32 %v1118, %v1206
      %1208 = vmatmul.bf16.gmra.mxu0 %v689
      %v1209 = vpop.f32.mrf.mxu0
      %v1210 = vadd.f32 %v1121, %v1209
      %v1211 = vpop.f32.mrf.mxu0
      %v1212 = vadd.f32 %v1123, %v1211
      %1213 = vdwg.mxu0
      %1214 = vmatpush.bf16.msra.mxu0 %v914
      %1215 = vmatpush.bf16.msra.mxu0 %v913
      %1216 = vmatpush.bf16.msra.mxu0 %v912
      %1217 = vmatpush.bf16.msra.mxu0 %v911
      %1218 = vmatpush.bf16.msra.mxu0 %v910
      %1219 = vmatpush.bf16.msra.mxu0 %v909
      %1220 = vmatpush.bf16.msra.mxu0 %v908
      %1221 = vmatpush.bf16.msra.mxu0 %v907
      %1222 = vmatmul.bf16.gmra.mxu0 %v630
      %v1223 = vpop.f32.mrf.mxu0
      %v1224 = vadd.f32 %v1135, %v1223
      %v1225 = vpop.f32.mrf.mxu0
      %v1226 = vadd.f32 %v1137, %v1225
      %1227 = vmatmul.bf16.gmra.mxu0 %v634
      %v1228 = vpop.f32.mrf.mxu0
      %v1229 = vadd.f32 %v1140, %v1228
      %v1230 = vpop.f32.mrf.mxu0
      %v1231 = vadd.f32 %v1142, %v1230
      %1232 = vmatmul.bf16.gmra.mxu0 %v638
      %v1233 = vpop.f32.mrf.mxu0
      %v1234 = vadd.f32 %v1145, %v1233
      %v1235 = vpop.f32.mrf.mxu0
      %v1236 = vadd.f32 %v1147, %v1235
      %1237 = vmatmul.bf16.gmra.mxu0 %v642
      %v1238 = vpop.f32.mrf.mxu0
      %v1239 = vadd.f32 %v1150, %v1238
      %v1240 = vpop.f32.mrf.mxu0
      %v1241 = vadd.f32 %v1152, %v1240
      %1242 = vmatmul.bf16.gmra.mxu0 %v646
      %v1243 = vpop.f32.mrf.mxu0
      %v1244 = vadd.f32 %v1155, %v1243
      %v1245 = vpop.f32.mrf.mxu0
      %v1246 = vadd.f32 %v1157, %v1245
      %1247 = vmatmul.bf16.gmra.mxu0 %v650
      %v1248 = vpop.f32.mrf.mxu0
      %v1249 = vadd.f32 %v1160, %v1248
      %v1250 = vpop.f32.mrf.mxu0
      %v1251 = vadd.f32 %v1162, %v1250
      %1252 = vmatmul.bf16.gmra.mxu0 %v654
      %v1253 = vpop.f32.mrf.mxu0
      %v1254 = vadd.f32 %v1165, %v1253
      %v1255 = vpop.f32.mrf.mxu0
      %v1256 = vadd.f32 %v1167, %v1255
      %1257 = vmatmul.bf16.gmra.mxu0 %v658
      %v1258 = vpop.f32.mrf.mxu0
      %v1259 = vadd.f32 %v1170, %v1258
      %v1260 = vpop.f32.mrf.mxu0
      %v1261 = vadd.f32 %v1172, %v1260
      %1262 = vmatmul.bf16.gmra.mxu0 %v662
      %v1263 = vpop.f32.mrf.mxu0
      %v1264 = vadd.f32 %v1175, %v1263
      %v1265 = vpop.f32.mrf.mxu0
      %v1266 = vadd.f32 %v1177, %v1265
      %1267 = vmatmul.bf16.gmra.mxu0 %v666
      %v1268 = vpop.f32.mrf.mxu0
      %v1269 = vadd.f32 %v1180, %v1268
      %v1270 = vpop.f32.mrf.mxu0
      %v1271 = vadd.f32 %v1182, %v1270
      %1272 = vmatmul.bf16.gmra.mxu0 %v670
      %v1273 = vpop.f32.mrf.mxu0
      %v1274 = vadd.f32 %v1185, %v1273
      %v1275 = vpop.f32.mrf.mxu0
      %v1276 = vadd.f32 %v1187, %v1275
      %1277 = vmatmul.bf16.gmra.mxu0 %v674
      %v1278 = vpop.f32.mrf.mxu0
      %v1279 = vadd.f32 %v1190, %v1278
      %v1280 = vpop.f32.mrf.mxu0
      %v1281 = vadd.f32 %v1192, %v1280
      %1282 = vmatmul.bf16.gmra.mxu0 %v678
      %v1283 = vpop.f32.mrf.mxu0
      %v1284 = vadd.f32 %v1195, %v1283
      %v1285 = vpop.f32.mrf.mxu0
      %v1286 = vadd.f32 %v1197, %v1285
      %1287 = vmatmul.bf16.gmra.mxu0 %v682
      %v1288 = vpop.f32.mrf.mxu0
      %v1289 = vadd.f32 %v1200, %v1288
      %v1290 = vpop.f32.mrf.mxu0
      %v1291 = vadd.f32 %v1202, %v1290
      %1292 = vmatmul.bf16.gmra.mxu0 %v686
      %v1293 = vpop.f32.mrf.mxu0
      %v1294 = vadd.f32 %v1205, %v1293
      %v1295 = vpop.f32.mrf.mxu0
      %v1296 = vadd.f32 %v1207, %v1295
      %1297 = vmatmul.bf16.gmra.mxu0 %v690
      %v1298 = vpop.f32.mrf.mxu0
      %v1299 = vadd.f32 %v1210, %v1298
      %v1300 = vpop.f32.mrf.mxu0
      %v1301 = vadd.f32 %v1212, %v1300
      %1302 = vdwg.mxu0
      %v1303 = vadd.f32 %v339, %v1224
      %v1304 = vadd.f32 %v340, %v1226
      %v1305 = vadd.f32 %v341, %v1229
      %v1306 = vadd.f32 %v342, %v1231
      %v1307 = vadd.f32 %v343, %v1234
      %v1308 = vadd.f32 %v344, %v1236
      %v1309 = vadd.f32 %v345, %v1239
      %v1310 = vadd.f32 %v346, %v1241
      %v1311 = vadd.f32 %v347, %v1244
      %v1312 = vadd.f32 %v348, %v1246
      %v1313 = vadd.f32 %v349, %v1249
      %v1314 = vadd.f32 %v350, %v1251
      %v1315 = vadd.f32 %v351, %v1254
      %v1316 = vadd.f32 %v352, %v1256
      %v1317 = vadd.f32 %v353, %v1259
      %v1318 = vadd.f32 %v354, %v1261
      %v1319 = vadd.f32 %v355, %v1264
      %v1320 = vadd.f32 %v356, %v1266
      %v1321 = vadd.f32 %v357, %v1269
      %v1322 = vadd.f32 %v358, %v1271
      %v1323 = vadd.f32 %v359, %v1274
      %v1324 = vadd.f32 %v360, %v1276
      %v1325 = vadd.f32 %v361, %v1279
      %v1326 = vadd.f32 %v362, %v1281
      %v1327 = vadd.f32 %v363, %v1284
      %v1328 = vadd.f32 %v364, %v1286
      %v1329 = vadd.f32 %v365, %v1289
      %v1330 = vadd.f32 %v366, %v1291
      %v1331 = vadd.f32 %v367, %v1294
      %v1332 = vadd.f32 %v368, %v1296
      %v1333 = vadd.f32 %v369, %v1299
      %v1334 = vadd.f32 %v370, %v1301
      %vm1335 = vcmask 261120
      %1336 = vst.msk [vmem:[#allocation2] sm:$0xff] %vm1335, %v1303
      %1337 = vst.msk [vmem:[#allocation2 + $0x8] sm:$0xff] %vm1335, %v1304
      %1338 = vst.msk [vmem:[#allocation2 + $0x10] sm:$0xff] %vm1335, %v1305
      %1339 = vst.msk [vmem:[#allocation2 + $0x18] sm:$0xff] %vm1335, %v1306
      %1340 = vst.msk [vmem:[#allocation2 + $0x20] sm:$0xff] %vm1335, %v1307
      %1341 = vst.msk [vmem:[#allocation2 + $0x28] sm:$0xff] %vm1335, %v1308
      %1342 = vst.msk [vmem:[#allocation2 + $0x30] sm:$0xff] %vm1335, %v1309
      %1343 = vst.msk [vmem:[#allocation2 + $0x38] sm:$0xff] %vm1335, %v1310
      %1344 = vst.msk [vmem:[#allocation2 + $0x40] sm:$0xff] %vm1335, %v1311
      %1345 = vst.msk [vmem:[#allocation2 + $0x48] sm:$0xff] %vm1335, %v1312
      %1346 = vst.msk [vmem:[#allocation2 + $0x50] sm:$0xff] %vm1335, %v1313
      %1347 = vst.msk [vmem:[#allocation2 + $0x58] sm:$0xff] %vm1335, %v1314
      %1348 = vst.msk [vmem:[#allocation2 + $0x60] sm:$0xff] %vm1335, %v1315
      %1349 = vst.msk [vmem:[#allocation2 + $0x68] sm:$0xff] %vm1335, %v1316
      %1350 = vst.msk [vmem:[#allocation2 + $0x70] sm:$0xff] %vm1335, %v1317
      %1351 = vst.msk [vmem:[#allocation2 + $0x78] sm:$0xff] %vm1335, %v1318
      %1352 = vst.msk [vmem:[#allocation2 + $0x80] sm:$0xff] %vm1335, %v1319
      %1353 = vst.msk [vmem:[#allocation2 + $0x88] sm:$0xff] %vm1335, %v1320
      %1354 = vst.msk [vmem:[#allocation2 + $0x90] sm:$0xff] %vm1335, %v1321
      %1355 = vst.msk [vmem:[#allocation2 + $0x98] sm:$0xff] %vm1335, %v1322
      %1356 = vst.msk [vmem:[#allocation2 + $0xa0] sm:$0xff] %vm1335, %v1323
      %1357 = vst.msk [vmem:[#allocation2 + $0xa8] sm:$0xff] %vm1335, %v1324
      %1358 = vst.msk [vmem:[#allocation2 + $0xb0] sm:$0xff] %vm1335, %v1325
      %1359 = vst.msk [vmem:[#allocation2 + $0xb8] sm:$0xff] %vm1335, %v1326
      %1360 = vst.msk [vmem:[#allocation2 + $0xc0] sm:$0xff] %vm1335, %v1327
      %1361 = vst.msk [vmem:[#allocation2 + $0xc8] sm:$0xff] %vm1335, %v1328
      %1362 = vst.msk [vmem:[#allocation2 + $0xd0] sm:$0xff] %vm1335, %v1329
      %1363 = vst.msk [vmem:[#allocation2 + $0xd8] sm:$0xff] %vm1335, %v1330
      %1364 = vst.msk [vmem:[#allocation2 + $0xe0] sm:$0xff] %vm1335, %v1331
      %1365 = vst.msk [vmem:[#allocation2 + $0xe8] sm:$0xff] %vm1335, %v1332
      %1366 = vst.msk [vmem:[#allocation2 + $0xf0] sm:$0xff] %vm1335, %v1333
      %1367 = vst.msk [vmem:[#allocation2 + $0xf8] sm:$0xff] %vm1335, %v1334
      // Predicated region
      $region41: #{dci_forward.4} parent=35 // pred_check
        %p1368 = pneg %p233
      $region42: #{dci_forward.4} parent=35 // pred_check_branch
        %1370 = sbr.rel (%p1368) target = $region44
      $region43: #{dci_forward.4} parent=35 // pred_region
        %v1371 = vld [vmem:[#allocation2] sm:$0xff]
        %v1372 = vld [vmem:[#allocation2 + $0x8] sm:$0xff]
        %v1373 = vld [vmem:[#allocation2 + $0x10] sm:$0xff]
        %v1374 = vld [vmem:[#allocation2 + $0x18] sm:$0xff]
        %v1375 = vld [vmem:[#allocation2 + $0x20] sm:$0xff]
        %v1376 = vld [vmem:[#allocation2 + $0x28] sm:$0xff]
        %v1377 = vld [vmem:[#allocation2 + $0x30] sm:$0xff]
        %v1378 = vld [vmem:[#allocation2 + $0x38] sm:$0xff]
        %v1379 = vld [vmem:[#allocation2 + $0x40] sm:$0xff]
        %v1380 = vld [vmem:[#allocation2 + $0x48] sm:$0xff]
        %v1381 = vld [vmem:[#allocation2 + $0x50] sm:$0xff]
        %v1382 = vld [vmem:[#allocation2 + $0x58] sm:$0xff]
        %v1383 = vld [vmem:[#allocation2 + $0x60] sm:$0xff]
        %v1384 = vld [vmem:[#allocation2 + $0x68] sm:$0xff]
        %v1385 = vld [vmem:[#allocation2 + $0x70] sm:$0xff]
        %v1386 = vld [vmem:[#allocation2 + $0x78] sm:$0xff]
        %v1387 = vld [vmem:[#allocation2 + $0x80] sm:$0xff]
        %v1388 = vld [vmem:[#allocation2 + $0x88] sm:$0xff]
        %v1389 = vld [vmem:[#allocation2 + $0x90] sm:$0xff]
        %v1390 = vld [vmem:[#allocation2 + $0x98] sm:$0xff]
        %v1391 = vld [vmem:[#allocation2 + $0xa0] sm:$0xff]
        %v1392 = vld [vmem:[#allocation2 + $0xa8] sm:$0xff]
        %v1393 = vld [vmem:[#allocation2 + $0xb0] sm:$0xff]
        %v1394 = vld [vmem:[#allocation2 + $0xb8] sm:$0xff]
        %v1395 = vld [vmem:[#allocation2 + $0xc0] sm:$0xff]
        %v1396 = vld [vmem:[#allocation2 + $0xc8] sm:$0xff]
        %v1397 = vld [vmem:[#allocation2 + $0xd0] sm:$0xff]
        %v1398 = vld [vmem:[#allocation2 + $0xd8] sm:$0xff]
        %v1399 = vld [vmem:[#allocation2 + $0xe0] sm:$0xff]
        %v1400 = vld [vmem:[#allocation2 + $0xe8] sm:$0xff]
        %v1401 = vld [vmem:[#allocation2 + $0xf0] sm:$0xff]
        %v1402 = vld [vmem:[#allocation2 + $0xf8] sm:$0xff]
        %v1403 = vpack.c.bf16 %v1372, %v1371
        %v1404 = vpack.c.bf16 %v1374, %v1373
        %v1405 = vpack.c.bf16 %v1376, %v1375
        %v1406 = vpack.c.bf16 %v1378, %v1377
        %v1407 = vpack.c.bf16 %v1380, %v1379
        %v1408 = vpack.c.bf16 %v1382, %v1381
        %v1409 = vpack.c.bf16 %v1384, %v1383
        %v1410 = vpack.c.bf16 %v1386, %v1385
        %v1411 = vpack.c.bf16 %v1388, %v1387
        %v1412 = vpack.c.bf16 %v1390, %v1389
        %v1413 = vpack.c.bf16 %v1392, %v1391
        %v1414 = vpack.c.bf16 %v1394, %v1393
        %v1415 = vpack.c.bf16 %v1396, %v1395
        %v1416 = vpack.c.bf16 %v1398, %v1397
        %v1417 = vpack.c.bf16 %v1400, %v1399
        %v1418 = vpack.c.bf16 %v1402, %v1401
        %v1419 = vld [vmem:[%s2] sm:$0xf]
        %v1420 = vld [vmem:[%s2 + $0x4] sm:$0xf]
        %v1421 = vld [vmem:[%s2 + $0x8] sm:$0xf]
        %v1422 = vld [vmem:[%s2 + $0xc] sm:$0xf]
        %v1423 = vld [vmem:[%s3] sm:$0x1]
        %v1425 = vperm.slane %v1423, 0
        %v1431 = vunpack.c.l.b16 %v1419
        %v1432 = vunpack.c.l.b16 %v1420
        %v1433 = vunpack.c.l.b16 %v1421
        %v1434 = vunpack.c.l.b16 %v1422
        %v1435 = vpack.c.b16 %v1432, %v1431
        %v1436 = vpack.c.b16 %v1434, %v1433
        %v1440 = vsel %vm1335, %v1403, 0
        %v1443 = vsel %vm1335, %v1404, 0
        %v1446 = vsel %vm1335, %v1405, 0
        %v1449 = vsel %vm1335, %v1406, 0
        %v1452 = vsel %vm1335, %v1407, 0
        %v1455 = vsel %vm1335, %v1408, 0
        %v1458 = vsel %vm1335, %v1409, 0
        %v1461 = vsel %vm1335, %v1410, 0
        %v1464 = vsel %vm1335, %v1411, 0
        %v1467 = vsel %vm1335, %v1412, 0
        %v1470 = vsel %vm1335, %v1413, 0
        %v1473 = vsel %vm1335, %v1414, 0
        %v1476 = vsel %vm1335, %v1415, 0
        %v1479 = vsel %vm1335, %v1416, 0
        %v1482 = vsel %vm1335, %v1417, 0
        %v1485 = vsel %vm1335, %v1418, 0
        %1487 = vmatpush.bf16.msra.mxu0 0
        %1488 = vmatpush.bf16.msra.mxu0 0
        %1489 = vmatpush.bf16.msra.mxu0 0
        %1490 = vmatpush.bf16.msra.mxu0 0
        %1491 = vmatpush.bf16.msra.mxu0 0
        %1492 = vmatpush.bf16.msra.mxu0 0
        %1493 = vmatpush.bf16.msra.mxu0 %v1436
        %1494 = vmatpush.bf16.msra.mxu0 %v1435
        %1495 = vmatmul.bf16.gmra.mxu0 %v1440
        %v1496 = vpop.f32.mrf.mxu0
        %v1497 = vadd.f32 %v1425, %v1496
        %v1498 = vpop.f32.mrf.mxu0
        %v1499 = vadd.f32 %v1425, %v1498
        %1500 = vmatmul.bf16.gmra.mxu0 %v1443
        %v1501 = vpop.f32.mrf.mxu0
        %v1502 = vadd.f32 %v1425, %v1501
        %v1503 = vpop.f32.mrf.mxu0
        %v1504 = vadd.f32 %v1425, %v1503
        %1505 = vmatmul.bf16.gmra.mxu0 %v1446
        %v1506 = vpop.f32.mrf.mxu0
        %v1507 = vadd.f32 %v1425, %v1506
        %v1508 = vpop.f32.mrf.mxu0
        %v1509 = vadd.f32 %v1425, %v1508
        %1510 = vmatmul.bf16.gmra.mxu0 %v1449
        %v1511 = vpop.f32.mrf.mxu0
        %v1512 = vadd.f32 %v1425, %v1511
        %v1513 = vpop.f32.mrf.mxu0
        %v1514 = vadd.f32 %v1425, %v1513
        %1515 = vmatmul.bf16.gmra.mxu0 %v1452
        %v1516 = vpop.f32.mrf.mxu0
        %v1517 = vadd.f32 %v1425, %v1516
        %v1518 = vpop.f32.mrf.mxu0
        %v1519 = vadd.f32 %v1425, %v1518
        %1520 = vmatmul.bf16.gmra.mxu0 %v1455
        %v1521 = vpop.f32.mrf.mxu0
        %v1522 = vadd.f32 %v1425, %v1521
        %v1523 = vpop.f32.mrf.mxu0
        %v1524 = vadd.f32 %v1425, %v1523
        %1525 = vmatmul.bf16.gmra.mxu0 %v1458
        %v1526 = vpop.f32.mrf.mxu0
        %v1527 = vadd.f32 %v1425, %v1526
        %v1528 = vpop.f32.mrf.mxu0
        %v1529 = vadd.f32 %v1425, %v1528
        %1530 = vmatmul.bf16.gmra.mxu0 %v1461
        %v1531 = vpop.f32.mrf.mxu0
        %v1532 = vadd.f32 %v1425, %v1531
        %v1533 = vpop.f32.mrf.mxu0
        %v1534 = vadd.f32 %v1425, %v1533
        %1535 = vmatmul.bf16.gmra.mxu0 %v1464
        %v1536 = vpop.f32.mrf.mxu0
        %v1537 = vadd.f32 %v1425, %v1536
        %v1538 = vpop.f32.mrf.mxu0
        %v1539 = vadd.f32 %v1425, %v1538
        %1540 = vmatmul.bf16.gmra.mxu0 %v1467
        %v1541 = vpop.f32.mrf.mxu0
        %v1542 = vadd.f32 %v1425, %v1541
        %v1543 = vpop.f32.mrf.mxu0
        %v1544 = vadd.f32 %v1425, %v1543
        %1545 = vmatmul.bf16.gmra.mxu0 %v1470
        %v1546 = vpop.f32.mrf.mxu0
        %v1547 = vadd.f32 %v1425, %v1546
        %v1548 = vpop.f32.mrf.mxu0
        %v1549 = vadd.f32 %v1425, %v1548
        %1550 = vmatmul.bf16.gmra.mxu0 %v1473
        %v1551 = vpop.f32.mrf.mxu0
        %v1552 = vadd.f32 %v1425, %v1551
        %v1553 = vpop.f32.mrf.mxu0
        %v1554 = vadd.f32 %v1425, %v1553
        %1555 = vmatmul.bf16.gmra.mxu0 %v1476
        %v1556 = vpop.f32.mrf.mxu0
        %v1557 = vadd.f32 %v1425, %v1556
        %v1558 = vpop.f32.mrf.mxu0
        %v1559 = vadd.f32 %v1425, %v1558
        %1560 = vmatmul.bf16.gmra.mxu0 %v1479
        %v1561 = vpop.f32.mrf.mxu0
        %v1562 = vadd.f32 %v1425, %v1561
        %v1563 = vpop.f32.mrf.mxu0
        %v1564 = vadd.f32 %v1425, %v1563
        %1565 = vmatmul.bf16.gmra.mxu0 %v1482
        %v1566 = vpop.f32.mrf.mxu0
        %v1567 = vadd.f32 %v1425, %v1566
        %v1568 = vpop.f32.mrf.mxu0
        %v1569 = vadd.f32 %v1425, %v1568
        %1570 = vmatmul.bf16.gmra.mxu0 %v1485
        %v1571 = vpop.f32.mrf.mxu0
        %v1572 = vadd.f32 %v1425, %v1571
        %v1573 = vpop.f32.mrf.mxu0
        %v1574 = vadd.f32 %v1425, %v1573
        %1575 = vdwg.mxu0
        %v1576 = vmax.f32 %v1497, 0.0
        %v1577 = vmax.f32 %v1499, 0.0
        %v1578 = vmax.f32 %v1502, 0.0
        %v1579 = vmax.f32 %v1504, 0.0
        %v1580 = vmax.f32 %v1507, 0.0
        %v1581 = vmax.f32 %v1509, 0.0
        %v1582 = vmax.f32 %v1512, 0.0
        %v1583 = vmax.f32 %v1514, 0.0
        %v1584 = vmax.f32 %v1517, 0.0
        %v1585 = vmax.f32 %v1519, 0.0
        %v1586 = vmax.f32 %v1522, 0.0
        %v1587 = vmax.f32 %v1524, 0.0
        %v1588 = vmax.f32 %v1527, 0.0
        %v1589 = vmax.f32 %v1529, 0.0
        %v1590 = vmax.f32 %v1532, 0.0
        %v1591 = vmax.f32 %v1534, 0.0
        %v1592 = vmax.f32 %v1537, 0.0
        %v1593 = vmax.f32 %v1539, 0.0
        %v1594 = vmax.f32 %v1542, 0.0
        %v1595 = vmax.f32 %v1544, 0.0
        %v1596 = vmax.f32 %v1547, 0.0
        %v1597 = vmax.f32 %v1549, 0.0
        %v1598 = vmax.f32 %v1552, 0.0
        %v1599 = vmax.f32 %v1554, 0.0
        %v1600 = vmax.f32 %v1557, 0.0
        %v1601 = vmax.f32 %v1559, 0.0
        %v1602 = vmax.f32 %v1562, 0.0
        %v1603 = vmax.f32 %v1564, 0.0
        %v1604 = vmax.f32 %v1567, 0.0
        %v1605 = vmax.f32 %v1569, 0.0
        %v1606 = vmax.f32 %v1572, 0.0
        %v1607 = vmax.f32 %v1574, 0.0
        %v1608 = vpack.c.bf16 %v1576, %v1576
        %v1609 = vpack.c.bf16 %v1577, %v1577
        %v1610 = vpack.c.bf16 %v1578, %v1578
        %v1611 = vpack.c.bf16 %v1579, %v1579
        %v1612 = vpack.c.bf16 %v1580, %v1580
        %v1613 = vpack.c.bf16 %v1581, %v1581
        %v1614 = vpack.c.bf16 %v1582, %v1582
        %v1615 = vpack.c.bf16 %v1583, %v1583
        %v1616 = vpack.c.bf16 %v1584, %v1584
        %v1617 = vpack.c.bf16 %v1585, %v1585
        %v1618 = vpack.c.bf16 %v1586, %v1586
        %v1619 = vpack.c.bf16 %v1587, %v1587
        %v1620 = vpack.c.bf16 %v1588, %v1588
        %v1621 = vpack.c.bf16 %v1589, %v1589
        %v1622 = vpack.c.bf16 %v1590, %v1590
        %v1623 = vpack.c.bf16 %v1591, %v1591
        %v1624 = vpack.c.bf16 %v1592, %v1592
        %v1625 = vpack.c.bf16 %v1593, %v1593
        %v1626 = vpack.c.bf16 %v1594, %v1594
        %v1627 = vpack.c.bf16 %v1595, %v1595
        %v1628 = vpack.c.bf16 %v1596, %v1596
        %v1629 = vpack.c.bf16 %v1597, %v1597
        %v1630 = vpack.c.bf16 %v1598, %v1598
        %v1631 = vpack.c.bf16 %v1599, %v1599
        %v1632 = vpack.c.bf16 %v1600, %v1600
        %v1633 = vpack.c.bf16 %v1601, %v1601
        %v1634 = vpack.c.bf16 %v1602, %v1602
        %v1635 = vpack.c.bf16 %v1603, %v1603
        %v1636 = vpack.c.bf16 %v1604, %v1604
        %v1637 = vpack.c.bf16 %v1605, %v1605
        %v1638 = vpack.c.bf16 %v1606, %v1606
        %v1639 = vpack.c.bf16 %v1607, %v1607
        %1640 = vst [vmem:[%s230] sm:$0xf] %v1608
        %1641 = vst [vmem:[%s230 + $0x4] sm:$0xf] %v1609
        %1642 = vst [vmem:[%s230 + $0x8] sm:$0xf] %v1610
        %1643 = vst [vmem:[%s230 + $0xc] sm:$0xf] %v1611
        %1644 = vst [vmem:[%s230 + $0x10] sm:$0xf] %v1612
        %1645 = vst [vmem:[%s230 + $0x14] sm:$0xf] %v1613
        %1646 = vst [vmem:[%s230 + $0x18] sm:$0xf] %v1614
        %1647 = vst [vmem:[%s230 + $0x1c] sm:$0xf] %v1615
        %1648 = vst [vmem:[%s230 + $0x20] sm:$0xf] %v1616
        %1649 = vst [vmem:[%s230 + $0x24] sm:$0xf] %v1617
        %1650 = vst [vmem:[%s230 + $0x28] sm:$0xf] %v1618
        %1651 = vst [vmem:[%s230 + $0x2c] sm:$0xf] %v1619
        %1652 = vst [vmem:[%s230 + $0x30] sm:$0xf] %v1620
        %1653 = vst [vmem:[%s230 + $0x34] sm:$0xf] %v1621
        %1654 = vst [vmem:[%s230 + $0x38] sm:$0xf] %v1622
        %1655 = vst [vmem:[%s230 + $0x3c] sm:$0xf] %v1623
        %1656 = vst [vmem:[%s230 + $0x40] sm:$0xf] %v1624
        %1657 = vst [vmem:[%s230 + $0x44] sm:$0xf] %v1625
        %1658 = vst [vmem:[%s230 + $0x48] sm:$0xf] %v1626
        %1659 = vst [vmem:[%s230 + $0x4c] sm:$0xf] %v1627
        %1660 = vst [vmem:[%s230 + $0x50] sm:$0xf] %v1628
        %1661 = vst [vmem:[%s230 + $0x54] sm:$0xf] %v1629
        %1662 = vst [vmem:[%s230 + $0x58] sm:$0xf] %v1630
        %1663 = vst [vmem:[%s230 + $0x5c] sm:$0xf] %v1631
        %1664 = vst [vmem:[%s230 + $0x60] sm:$0xf] %v1632
        %1665 = vst [vmem:[%s230 + $0x64] sm:$0xf] %v1633
        %1666 = vst [vmem:[%s230 + $0x68] sm:$0xf] %v1634
        %1667 = vst [vmem:[%s230 + $0x6c] sm:$0xf] %v1635
        %1668 = vst [vmem:[%s230 + $0x70] sm:$0xf] %v1636
        %1669 = vst [vmem:[%s230 + $0x74] sm:$0xf] %v1637
        %1670 = vst [vmem:[%s230 + $0x78] sm:$0xf] %v1638
        %1671 = vst [vmem:[%s230 + $0x7c] sm:$0xf] %v1639
      $region44: #{dci_forward.4} parent=35 // pred_fallthru
        _
      %s1672 = smul.u32 32, %s19
      %p1673 = scmp.lt.s32.totalorder %s1672, 63
      %s1674 = scalar_select %p1673, %s1672, 63
      %s1675 = smul.addr %s1674, 4
      %s1676 = scalar_lea.vmem %s4, %s1675
      // Predicated region
      $region45: #{dci_forward.4} parent=35 // pred_check
        %p1677 = pneg %p136
      $region46: #{dci_forward.4} parent=35 // pred_check_branch
        %1679 = sbr.rel (%p1677) target = $region48
      $region47: #{dci_forward.4} parent=35 // pred_region
        %s1680 = smul.u32 32, %s19
      $region48: #{dci_forward.4} parent=35 // pred_fallthru
        _
    $region36: #{dci_forward.4} parent=5 // pred_fallthru
      _
    %p1681 = scmp.le.s32.totalorder 2, %s10
    // Predicated region
    $region49: #{dci_forward.4} parent=5 // pred_check
      %p1682 = pneg %p1681
    $region50: #{dci_forward.4} parent=5 // pred_check_branch
      %1684 = sbr.rel (%p1682) target = $region52
    $region51: #{dci_forward.4} parent=5 // pred_region
      %s1685 = ssub.s32 %s10, 2
      // Predicated region
      $region53: #{dci_forward.4} parent=51 // pred_check
        %p1686 = pneg %p142
      $region54: #{dci_forward.4} parent=51 // pred_check_branch
        %1688 = sbr.rel (%p1686) target = $region56
      $region55: #{dci_forward.4} parent=51 // pred_region
        %s1689 = smul.u32 32, %s21
        %p1690 = scmp.lt.s32.totalorder %s1689, 63
        %s1691 = scalar_select %p1690, %s1689, 63
        %s1692 = smul.addr %s1691, 4
        %s1693 = scalar_lea.vmem %s4, %s1692
      $region56: #{dci_forward.4} parent=51 // pred_fallthru
        _
    $region52: #{dci_forward.4} parent=5 // pred_fallthru
      _
  $region6: #{dci_forward.4} parent=0 // loop_footer
    %s14 = sadd.s32 1, %s10
  $region7: #{dci_forward.4} parent=0 // loop_footer_branch
    %9 = sbr.rel target = $region3
  $region8: #{dci_forward.4} parent=0 // loop_exit
    _

// kernel: dci_forward.5
$region0: #{dci_forward.5}
  #allocation0 [shape = 'u32[]', space=smem, size = 0x4, offset = 0x4, fixed_abs, tag = 'smem constant byte address 0x4 - core index']
  #allocation1 [shape = 'u32[72,128]{1,0:T(1,128)}', space=vmem, size = 0x9000, scoped, tag = 'internal scratch']
  #allocation2 [shape = 'f32[256,128]{1,0:T(8,128)}', space=vmem, size = 0x20000, scoped, tag = 'scratch operand']
  %s0 = inlined_call_operand.vmem [shape: bf16[512,512], index: 0, kind: input, shape index: {}]
  %s1 = inlined_call_operand.vmem [shape: bf16[512,128], index: 1, kind: input, shape index: {}]
  %s2 = inlined_call_operand.vmem [shape: bf16[128,128], index: 2, kind: input, shape index: {}]
  %s3 = inlined_call_operand.vmem [shape: f32[1,128], index: 3, kind: input, shape index: {}]
  %s4 = inlined_call_operand.vmem [shape: bf16[512,128], index: 4, kind: output, shape index: {}]
  %s5 = sld [smem:[#allocation0]]
  $region57: #{dci_forward.5} parent=0
    _
  %s7 = ssub.s32 1, %s5
  %s8 = scalar_select 0, %s7, %s5
  loop: start=0, step=1, limit=4
  $region2: #{dci_forward.5} parent=0 // loop_pre_header
    _
  $region3: #{dci_forward.5} parent=0 // loop_header
    %s10 = sphi 0, %s14
    %p11 = scmp.ge.s32.totalorder %s10, 4
    %s17 = sphi 0, %s29
    %s18 = sphi 0, %s25
    %s19 = sphi 0, %s17
    %s20 = sphi 0, %s18
    %s21 = sphi 0, %s19
    %s22 = sphi 0, %s20
    %s34 = sphi 0, %s36
    %s37 = sphi 0, %s34
    %s38 = sphi 0, %s37
    %s54 = sphi 0, %s38
    %s58 = sphi 0, %s58
    %s60 = sphi 0, %s58
    %s61 = sphi 0, %s60
    %s75 = sphi 0, %s61
    %s79 = sphi 0, %s79
    %s81 = sphi 0, %s79
    %s82 = sphi 0, %s81
    %s96 = sphi 0, %s82
    %s100 = sphi 0, %s100
    %s102 = sphi 0, %s100
    %s103 = sphi 0, %s102
    %s117 = sphi 0, %s103
    %s123 = sphi 0, %s125
    %s126 = sphi 0, %s123
    %s127 = sphi 0, %s126
    %s143 = sphi 0, %s127
  $region4: #{dci_forward.5} parent=0 // loop_header_branch
    %13 = sbr.rel (%p11) target = $region8
  $region5: #{dci_forward.5} parent=0 // loop_body
    %s15 = ssub.s32 %s10, 1
    %s16 = ssub.s32 %s10, 2
    %s23 = sadd.s32 1, %s18
    %p24 = scmp.ge.s32.totalorder %s23, 1
    %s25 = scalar_select %p24, 0, %s23
    %s26 = sadd.s32 1, %s17
    %s27 = scalar_select %p24, %s26, %s17
    %p28 = scmp.ge.s32.totalorder %s27, 2
    %s29 = scalar_select %p28, 0, %s27
    %s30 = ssub.s32 %s17, %s29
    %s31 = ssub.s32 %s18, %s25
    %s32 = sor.u32 %s30, %s31
    %p33 = scmp.eq.s32.totalorder %s32, 0
    %s35 = sadd.s32 %s34, 1
    %s36 = scalar_select %p33, %s34, %s35
    %p39 = pneg %p33
    %p40 = scmp.eq.s32.totalorder %s10, 1
    %p41 = por %p39, %p40
    %p42 = scmp.ne.s32.totalorder %s34, %s37
    %p43 = scmp.eq.s32.totalorder %s10, 0
    %p44 = por %p42, %p43
    %p45 = scmp.ne.s32.totalorder %s34, %s37
    %p46 = scmp.eq.s32.totalorder %s15, 1
    %p47 = por %p45, %p46
    %p48 = scmp.ne.s32.totalorder %s37, %s38
    %p49 = scmp.eq.s32.totalorder %s15, 0
    %p50 = por %p48, %p49
    %p51 = scmp.ne.s32.totalorder %s37, %s38
    %p52 = scmp.eq.s32.totalorder %s16, 1
    %p53 = por %p51, %p52
    %p55 = scmp.ne.s32.totalorder %s38, %s54
    %p56 = scmp.eq.s32.totalorder %s16, 0
    %p57 = por %p55, %p56
    %s59 = sadd.s32 %s58, 1
    %p62 = scmp.eq.s32.totalorder %s10, 1
    %p63 = scmp.ne.s32.totalorder %s58, %s60
    %p64 = scmp.eq.s32.totalorder %s10, 0
    %p65 = por %p63, %p64
    %p66 = scmp.ne.s32.totalorder %s58, %s60
    %p67 = scmp.eq.s32.totalorder %s15, 1
    %p68 = por %p66, %p67
    %p69 = scmp.ne.s32.totalorder %s60, %s61
    %p70 = scmp.eq.s32.totalorder %s15, 0
    %p71 = por %p69, %p70
    %p72 = scmp.ne.s32.totalorder %s60, %s61
    %p73 = scmp.eq.s32.totalorder %s16, 1
    %p74 = por %p72, %p73
    %p76 = scmp.ne.s32.totalorder %s61, %s75
    %p77 = scmp.eq.s32.totalorder %s16, 0
    %p78 = por %p76, %p77
    %s80 = sadd.s32 %s79, 1
    %p83 = scmp.eq.s32.totalorder %s10, 1
    %p84 = scmp.ne.s32.totalorder %s79, %s81
    %p85 = scmp.eq.s32.totalorder %s10, 0
    %p86 = por %p84, %p85
    %p87 = scmp.ne.s32.totalorder %s79, %s81
    %p88 = scmp.eq.s32.totalorder %s15, 1
    %p89 = por %p87, %p88
    %p90 = scmp.ne.s32.totalorder %s81, %s82
    %p91 = scmp.eq.s32.totalorder %s15, 0
    %p92 = por %p90, %p91
    %p93 = scmp.ne.s32.totalorder %s81, %s82
    %p94 = scmp.eq.s32.totalorder %s16, 1
    %p95 = por %p93, %p94
    %p97 = scmp.ne.s32.totalorder %s82, %s96
    %p98 = scmp.eq.s32.totalorder %s16, 0
    %p99 = por %p97, %p98
    %s101 = sadd.s32 %s100, 1
    %p104 = scmp.eq.s32.totalorder %s10, 1
    %p105 = scmp.ne.s32.totalorder %s100, %s102
    %p106 = scmp.eq.s32.totalorder %s10, 0
    %p107 = por %p105, %p106
    %p108 = scmp.ne.s32.totalorder %s100, %s102
    %p109 = scmp.eq.s32.totalorder %s15, 1
    %p110 = por %p108, %p109
    %p111 = scmp.ne.s32.totalorder %s102, %s103
    %p112 = scmp.eq.s32.totalorder %s15, 0
    %p113 = por %p111, %p112
    %p114 = scmp.ne.s32.totalorder %s102, %s103
    %p115 = scmp.eq.s32.totalorder %s16, 1
    %p116 = por %p114, %p115
    %p118 = scmp.ne.s32.totalorder %s103, %s117
    %p119 = scmp.eq.s32.totalorder %s16, 0
    %p120 = por %p118, %p119
    %s121 = ssub.s32 %s17, %s29
    %p122 = scmp.eq.s32.totalorder %s121, 0
    %s124 = sadd.s32 %s123, 1
    %s125 = scalar_select %p122, %s123, %s124
    %p128 = pneg %p122
    %p129 = scmp.eq.s32.totalorder %s10, 1
    %p130 = por %p128, %p129
    %p131 = scmp.ne.s32.totalorder %s123, %s126
    %p132 = scmp.eq.s32.totalorder %s10, 0
    %p133 = por %p131, %p132
    %p134 = scmp.ne.s32.totalorder %s123, %s126
    %p135 = scmp.eq.s32.totalorder %s15, 1
    %p136 = por %p134, %p135
    %p137 = scmp.ne.s32.totalorder %s126, %s127
    %p138 = scmp.eq.s32.totalorder %s15, 0
    %p139 = por %p137, %p138
    %p140 = scmp.ne.s32.totalorder %s126, %s127
    %p141 = scmp.eq.s32.totalorder %s16, 1
    %p142 = por %p140, %p141
    %p144 = scmp.ne.s32.totalorder %s127, %s143
    %p145 = scmp.eq.s32.totalorder %s16, 0
    %p146 = por %p144, %p145
    %p147 = scmp.le.s32.totalorder 1, %s10
    %p148 = scmp.lt.s32.totalorder %s10, 3
    %p149 = pnand %p147, %p148
    %p150 = pneg %p149
    // Predicated region
    $region9: #{dci_forward.5} parent=5 // pred_check
      _
    $region10: #{dci_forward.5} parent=5 // pred_check_branch
      %152 = sbr.rel (%p149) target = $region12
    $region11: #{dci_forward.5} parent=5 // pred_region
      %s153 = ssub.s32 %s10, 1
      // Predicated region
      $region13: #{dci_forward.5} parent=11 // pred_check
        %p154 = pneg %p71
      $region14: #{dci_forward.5} parent=11 // pred_check_branch
        %156 = sbr.rel (%p154) target = $region16
      $region15: #{dci_forward.5} parent=11 // pred_region
        _
      $region16: #{dci_forward.5} parent=11 // pred_fallthru
        _
      // Predicated region
      $region17: #{dci_forward.5} parent=11 // pred_check
        %p157 = pneg %p92
      $region18: #{dci_forward.5} parent=11 // pred_check_branch
        %159 = sbr.rel (%p157) target = $region20
      $region19: #{dci_forward.5} parent=11 // pred_region
        _
      $region20: #{dci_forward.5} parent=11 // pred_fallthru
        _
      // Predicated region
      $region21: #{dci_forward.5} parent=11 // pred_check
        %p160 = pneg %p113
      $region22: #{dci_forward.5} parent=11 // pred_check_branch
        %162 = sbr.rel (%p160) target = $region24
      $region23: #{dci_forward.5} parent=11 // pred_region
        _
      $region24: #{dci_forward.5} parent=11 // pred_fallthru
        _
    $region12: #{dci_forward.5} parent=5 // pred_fallthru
      _
    %p163 = scmp.lt.s32.totalorder %s10, 2
    // Predicated region
    $region25: #{dci_forward.5} parent=5 // pred_check
      %p164 = pneg %p163
    $region26: #{dci_forward.5} parent=5 // pred_check_branch
      %166 = sbr.rel (%p164) target = $region28
    $region27: #{dci_forward.5} parent=5 // pred_region
      // Predicated region
      $region29: #{dci_forward.5} parent=27 // pred_check
        %p167 = pneg %p44
      $region30: #{dci_forward.5} parent=27 // pred_check_branch
        %169 = sbr.rel (%p167) target = $region32
      $region31: #{dci_forward.5} parent=27 // pred_region
        %s170 = smul.u32 32, %s17
        %s171 = smul.u32 4, %s18
        %p172 = scmp.lt.s32.totalorder %s170, 63
        %s173 = scalar_select %p172, %s170, 63
        %p174 = scmp.lt.s32.totalorder %s171, 3
        %s175 = scalar_select %p174, %s171, 3
        %s176 = smul.addr %s173, 4
        %s177 = sadd.s32 %s175, %s176
        %s178 = smul.addr %s177, 4
        %s179 = scalar_lea.vmem %s0, %s178
        %s180 = smul.u32 32, %s17
        %s181 = smul.u32 4, %s18
      $region32: #{dci_forward.5} parent=27 // pred_fallthru
        _
    $region28: #{dci_forward.5} parent=5 // pred_fallthru
      _
    %p182 = scmp.le.s32.totalorder 1, %s10
    %p183 = scmp.lt.s32.totalorder %s10, 3
    %p184 = pnand %p182, %p183
    %p185 = pneg %p184
    // Predicated region
    $region33: #{dci_forward.5} parent=5 // pred_check
      _
    $region34: #{dci_forward.5} parent=5 // pred_check_branch
      %187 = sbr.rel (%p184) target = $region36
    $region35: #{dci_forward.5} parent=5 // pred_region
      %s188 = ssub.s32 %s10, 1
      %s189 = smul.u32 32, %s19
      %s190 = smul.u32 4, %s20
      %p191 = scmp.lt.s32.totalorder %s189, 63
      %s192 = scalar_select %p191, %s189, 63
      %p193 = scmp.lt.s32.totalorder %s190, 3
      %s194 = scalar_select %p193, %s190, 3
      %s195 = smul.addr %s192, 4
      %s196 = sadd.s32 %s194, %s195
      %s197 = smul.addr %s196, 4
      %s198 = scalar_lea.vmem %s0, %s197
      %p199 = pneg %p50
      %p200 = pneg %p47
      %p201 = pneg %p71
      %p202 = pneg %p68
      %p203 = pneg %p92
      %p204 = pneg %p89
      %p205 = pneg %p113
      %p206 = pneg %p110
      %p207 = pneg %p139
      %p208 = pneg %p136
      %s209 = smul.u32 32, %s19
      %p210 = scmp.lt.s32.totalorder %s209, 63
      %s211 = scalar_select %p210, %s209, 63
      %s212 = smul.addr %s211, 4
      %s213 = scalar_lea.vmem %s4, %s212
      %s214 = smul.u32 32, %s19
      %s215 = smul.u32 4, %s20
      %p216 = scmp.lt.s32.totalorder %s214, 63
      %s217 = scalar_select %p216, %s214, 63
      %p218 = scmp.lt.s32.totalorder %s215, 3
      %s219 = scalar_select %p218, %s215, 3
      %s220 = smul.addr %s217, 4
      %s221 = sadd.s32 %s219, %s220
      %s222 = smul.addr %s221, 4
      %s223 = scalar_lea.vmem %s0, %s222
      %s224 = smul.u32 32, %s19
      %s225 = smul.u32 4, %s20
      %s226 = smul.u32 32, %s19
      %p227 = scmp.lt.s32.totalorder %s226, 63
      %s228 = scalar_select %p227, %s226, 63
      %s229 = smul.addr %s228, 4
      %s230 = scalar_lea.vmem %s4, %s229
      %s231 = smul.u32 32, %s19
      %p232 = scmp.eq.s32.totalorder %s20, 0
      // Predicated region
      $region37: #{dci_forward.5} parent=35 // pred_check
        %p233 = pneg %p232
      $region38: #{dci_forward.5} parent=35 // pred_check_branch
        %235 = sbr.rel (%p233) target = $region40
      $region39: #{dci_forward.5} parent=35 // pred_region
        %236 = vst [vmem:[#allocation2] sm:$0xff] 0.0
        %237 = vst [vmem:[#allocation2 + $0x8] sm:$0xff] 0.0
        %238 = vst [vmem:[#allocation2 + $0x10] sm:$0xff] 0.0
        %239 = vst [vmem:[#allocation2 + $0x18] sm:$0xff] 0.0
        %240 = vst [vmem:[#allocation2 + $0x20] sm:$0xff] 0.0
        %241 = vst [vmem:[#allocation2 + $0x28] sm:$0xff] 0.0
        %242 = vst [vmem:[#allocation2 + $0x30] sm:$0xff] 0.0
        %243 = vst [vmem:[#allocation2 + $0x38] sm:$0xff] 0.0
        %244 = vst [vmem:[#allocation2 + $0x40] sm:$0xff] 0.0
        %245 = vst [vmem:[#allocation2 + $0x48] sm:$0xff] 0.0
        %246 = vst [vmem:[#allocation2 + $0x50] sm:$0xff] 0.0
        %247 = vst [vmem:[#allocation2 + $0x58] sm:$0xff] 0.0
        %248 = vst [vmem:[#allocation2 + $0x60] sm:$0xff] 0.0
        %249 = vst [vmem:[#allocation2 + $0x68] sm:$0xff] 0.0
        %250 = vst [vmem:[#allocation2 + $0x70] sm:$0xff] 0.0
        %251 = vst [vmem:[#allocation2 + $0x78] sm:$0xff] 0.0
        %252 = vst [vmem:[#allocation2 + $0x80] sm:$0xff] 0.0
        %253 = vst [vmem:[#allocation2 + $0x88] sm:$0xff] 0.0
        %254 = vst [vmem:[#allocation2 + $0x90] sm:$0xff] 0.0
        %255 = vst [vmem:[#allocation2 + $0x98] sm:$0xff] 0.0
        %256 = vst [vmem:[#allocation2 + $0xa0] sm:$0xff] 0.0
        %257 = vst [vmem:[#allocation2 + $0xa8] sm:$0xff] 0.0
        %258 = vst [vmem:[#allocation2 + $0xb0] sm:$0xff] 0.0
        %259 = vst [vmem:[#allocation2 + $0xb8] sm:$0xff] 0.0
        %260 = vst [vmem:[#allocation2 + $0xc0] sm:$0xff] 0.0
        %261 = vst [vmem:[#allocation2 + $0xc8] sm:$0xff] 0.0
        %262 = vst [vmem:[#allocation2 + $0xd0] sm:$0xff] 0.0
        %263 = vst [vmem:[#allocation2 + $0xd8] sm:$0xff] 0.0
        %264 = vst [vmem:[#allocation2 + $0xe0] sm:$0xff] 0.0
        %265 = vst [vmem:[#allocation2 + $0xe8] sm:$0xff] 0.0
        %266 = vst [vmem:[#allocation2 + $0xf0] sm:$0xff] 0.0
        %267 = vst [vmem:[#allocation2 + $0xf8] sm:$0xff] 0.0
      $region40: #{dci_forward.5} parent=35 // pred_fallthru
        _
      %s268 = smul.u32 %s20, 512
      %s269 = sshra.s32 %s268, 3
      %s270 = sand.u32 %s268, 7
      %s271 = smul.addr %s269, 4
      %s272 = scalar_lea.vmem %s1, %s271
      %v273 = vld [vmem:[%s272] sm:$0xf]
      %v274 = vld [vmem:[%s272 + $0x4] sm:$0xf]
      %v275 = vld [vmem:[%s272 + $0x8] sm:$0xf]
      %v276 = vld [vmem:[%s272 + $0xc] sm:$0xf]
      %v277 = vld [vmem:[%s272 + $0x10] sm:$0xf]
      %v278 = vld [vmem:[%s272 + $0x14] sm:$0xf]
      %v279 = vld [vmem:[%s272 + $0x18] sm:$0xf]
      %v280 = vld [vmem:[%s272 + $0x1c] sm:$0xf]
      %v281 = vld [vmem:[%s272 + $0x20] sm:$0xf]
      %v282 = vld [vmem:[%s272 + $0x24] sm:$0xf]
      %v283 = vld [vmem:[%s272 + $0x28] sm:$0xf]
      %v284 = vld [vmem:[%s272 + $0x2c] sm:$0xf]
      %v285 = vld [vmem:[%s272 + $0x30] sm:$0xf]
      %v286 = vld [vmem:[%s272 + $0x34] sm:$0xf]
      %v287 = vld [vmem:[%s272 + $0x38] sm:$0xf]
      %v288 = vld [vmem:[%s272 + $0x3c] sm:$0xf]
      %v289 = vld [vmem:[%s272 + $0x40] sm:$0xf]
      %v290 = vld [vmem:[%s272 + $0x44] sm:$0xf]
      %v291 = vld [vmem:[%s272 + $0x48] sm:$0xf]
      %v292 = vld [vmem:[%s272 + $0x4c] sm:$0xf]
      %v293 = vld [vmem:[%s272 + $0x50] sm:$0xf]
      %v294 = vld [vmem:[%s272 + $0x54] sm:$0xf]
      %v295 = vld [vmem:[%s272 + $0x58] sm:$0xf]
      %v296 = vld [vmem:[%s272 + $0x5c] sm:$0xf]
      %v297 = vld [vmem:[%s272 + $0x60] sm:$0xf]
      %v298 = vld [vmem:[%s272 + $0x64] sm:$0xf]
      %v299 = vld [vmem:[%s272 + $0x68] sm:$0xf]
      %v300 = vld [vmem:[%s272 + $0x6c] sm:$0xf]
      %v301 = vld [vmem:[%s272 + $0x70] sm:$0xf]
      %v302 = vld [vmem:[%s272 + $0x74] sm:$0xf]
      %v303 = vld [vmem:[%s272 + $0x78] sm:$0xf]
      %v304 = vld [vmem:[%s272 + $0x7c] sm:$0xf]
      %v305 = vld [vmem:[%s272 + $0x80] sm:$0xf]
      %v306 = vld [vmem:[%s272 + $0x84] sm:$0xf]
      %v307 = vld [vmem:[%s272 + $0x88] sm:$0xf]
      %v308 = vld [vmem:[%s272 + $0x8c] sm:$0xf]
      %v309 = vld [vmem:[%s272 + $0x90] sm:$0xf]
      %v310 = vld [vmem:[%s272 + $0x94] sm:$0xf]
      %v311 = vld [vmem:[%s272 + $0x98] sm:$0xf]
      %v312 = vld [vmem:[%s272 + $0x9c] sm:$0xf]
      %v313 = vld [vmem:[%s272 + $0xa0] sm:$0xf]
      %v314 = vld [vmem:[%s272 + $0xa4] sm:$0xf]
      %v315 = vld [vmem:[%s272 + $0xa8] sm:$0xf]
      %v316 = vld [vmem:[%s272 + $0xac] sm:$0xf]
      %v317 = vld [vmem:[%s272 + $0xb0] sm:$0xf]
      %v318 = vld [vmem:[%s272 + $0xb4] sm:$0xf]
      %v319 = vld [vmem:[%s272 + $0xb8] sm:$0xf]
      %v320 = vld [vmem:[%s272 + $0xbc] sm:$0xf]
      %v321 = vld [vmem:[%s272 + $0xc0] sm:$0xf]
      %v322 = vld [vmem:[%s272 + $0xc4] sm:$0xf]
      %v323 = vld [vmem:[%s272 + $0xc8] sm:$0xf]
      %v324 = vld [vmem:[%s272 + $0xcc] sm:$0xf]
      %v325 = vld [vmem:[%s272 + $0xd0] sm:$0xf]
      %v326 = vld [vmem:[%s272 + $0xd4] sm:$0xf]
      %v327 = vld [vmem:[%s272 + $0xd8] sm:$0xf]
      %v328 = vld [vmem:[%s272 + $0xdc] sm:$0xf]
      %v329 = vld [vmem:[%s272 + $0xe0] sm:$0xf]
      %v330 = vld [vmem:[%s272 + $0xe4] sm:$0xf]
      %v331 = vld [vmem:[%s272 + $0xe8] sm:$0xf]
      %v332 = vld [vmem:[%s272 + $0xec] sm:$0xf]
      %v333 = vld [vmem:[%s272 + $0xf0] sm:$0xf]
      %v334 = vld [vmem:[%s272 + $0xf4] sm:$0xf]
      %v335 = vld [vmem:[%s272 + $0xf8] sm:$0xf]
      %v336 = vld [vmem:[%s272 + $0xfc] sm:$0xf]
      %v337 = vld [vmem:[#allocation2] sm:$0xff]
      %v338 = vld [vmem:[#allocation2 + $0x8] sm:$0xff]
      %v339 = vld [vmem:[#allocation2 + $0x10] sm:$0xff]
      %v340 = vld [vmem:[#allocation2 + $0x18] sm:$0xff]
      %v341 = vld [vmem:[#allocation2 + $0x20] sm:$0xff]
      %v342 = vld [vmem:[#allocation2 + $0x28] sm:$0xff]
      %v343 = vld [vmem:[#allocation2 + $0x30] sm:$0xff]
      %v344 = vld [vmem:[#allocation2 + $0x38] sm:$0xff]
      %v345 = vld [vmem:[#allocation2 + $0x40] sm:$0xff]
      %v346 = vld [vmem:[#allocation2 + $0x48] sm:$0xff]
      %v347 = vld [vmem:[#allocation2 + $0x50] sm:$0xff]
      %v348 = vld [vmem:[#allocation2 + $0x58] sm:$0xff]
      %v349 = vld [vmem:[#allocation2 + $0x60] sm:$0xff]
      %v350 = vld [vmem:[#allocation2 + $0x68] sm:$0xff]
      %v351 = vld [vmem:[#allocation2 + $0x70] sm:$0xff]
      %v352 = vld [vmem:[#allocation2 + $0x78] sm:$0xff]
      %v353 = vld [vmem:[#allocation2 + $0x80] sm:$0xff]
      %v354 = vld [vmem:[#allocation2 + $0x88] sm:$0xff]
      %v355 = vld [vmem:[#allocation2 + $0x90] sm:$0xff]
      %v356 = vld [vmem:[#allocation2 + $0x98] sm:$0xff]
      %v357 = vld [vmem:[#allocation2 + $0xa0] sm:$0xff]
      %v358 = vld [vmem:[#allocation2 + $0xa8] sm:$0xff]
      %v359 = vld [vmem:[#allocation2 + $0xb0] sm:$0xff]
      %v360 = vld [vmem:[#allocation2 + $0xb8] sm:$0xff]
      %v361 = vld [vmem:[#allocation2 + $0xc0] sm:$0xff]
      %v362 = vld [vmem:[#allocation2 + $0xc8] sm:$0xff]
      %v363 = vld [vmem:[#allocation2 + $0xd0] sm:$0xff]
      %v364 = vld [vmem:[#allocation2 + $0xd8] sm:$0xff]
      %v365 = vld [vmem:[#allocation2 + $0xe0] sm:$0xff]
      %v366 = vld [vmem:[#allocation2 + $0xe8] sm:$0xff]
      %v367 = vld [vmem:[#allocation2 + $0xf0] sm:$0xff]
      %v368 = vld [vmem:[#allocation2 + $0xf8] sm:$0xff]
      %v369 = vld [vmem:[%s223] sm:$0xff]
      %v370 = vld [vmem:[%s223 + $0x8] sm:$0xff]
      %v371 = vld [vmem:[%s223 + $0x10] sm:$0xff]
      %v372 = vld [vmem:[%s223 + $0x18] sm:$0xff]
      %v373 = vld [vmem:[%s223 + $0x20] sm:$0xff]
      %v374 = vld [vmem:[%s223 + $0x28] sm:$0xff]
      %v375 = vld [vmem:[%s223 + $0x30] sm:$0xff]
      %v376 = vld [vmem:[%s223 + $0x38] sm:$0xff]
      %v377 = vld [vmem:[%s223 + $0x40] sm:$0xff]
      %v378 = vld [vmem:[%s223 + $0x48] sm:$0xff]
      %v379 = vld [vmem:[%s223 + $0x50] sm:$0xff]
      %v380 = vld [vmem:[%s223 + $0x58] sm:$0xff]
      %v381 = vld [vmem:[%s223 + $0x60] sm:$0xff]
      %v382 = vld [vmem:[%s223 + $0x68] sm:$0xff]
      %v383 = vld [vmem:[%s223 + $0x70] sm:$0xff]
      %v384 = vld [vmem:[%s223 + $0x78] sm:$0xff]
      %v385 = vld [vmem:[%s223 + $0x80] sm:$0xff]
      %v386 = vld [vmem:[%s223 + $0x88] sm:$0xff]
      %v387 = vld [vmem:[%s223 + $0x90] sm:$0xff]
      %v388 = vld [vmem:[%s223 + $0x98] sm:$0xff]
      %v389 = vld [vmem:[%s223 + $0xa0] sm:$0xff]
      %v390 = vld [vmem:[%s223 + $0xa8] sm:$0xff]
      %v391 = vld [vmem:[%s223 + $0xb0] sm:$0xff]
      %v392 = vld [vmem:[%s223 + $0xb8] sm:$0xff]
      %v393 = vld [vmem:[%s223 + $0xc0] sm:$0xff]
      %v394 = vld [vmem:[%s223 + $0xc8] sm:$0xff]
      %v395 = vld [vmem:[%s223 + $0xd0] sm:$0xff]
      %v396 = vld [vmem:[%s223 + $0xd8] sm:$0xff]
      %v397 = vld [vmem:[%s223 + $0xe0] sm:$0xff]
      %v398 = vld [vmem:[%s223 + $0xe8] sm:$0xff]
      %v399 = vld [vmem:[%s223 + $0xf0] sm:$0xff]
      %v400 = vld [vmem:[%s223 + $0xf8] sm:$0xff]
      %v401 = vld [vmem:[%s223 + $0x100] sm:$0xff]
      %v402 = vld [vmem:[%s223 + $0x108] sm:$0xff]
      %v403 = vld [vmem:[%s223 + $0x110] sm:$0xff]
      %v404 = vld [vmem:[%s223 + $0x118] sm:$0xff]
      %v405 = vld [vmem:[%s223 + $0x120] sm:$0xff]
      %v406 = vld [vmem:[%s223 + $0x128] sm:$0xff]
      %v407 = vld [vmem:[%s223 + $0x130] sm:$0xff]
      %v408 = vld [vmem:[%s223 + $0x138] sm:$0xff]
      %v409 = vld [vmem:[%s223 + $0x140] sm:$0xff]
      %v410 = vld [vmem:[%s223 + $0x148] sm:$0xff]
      %v411 = vld [vmem:[%s223 + $0x150] sm:$0xff]
      %v412 = vld [vmem:[%s223 + $0x158] sm:$0xff]
      %v413 = vld [vmem:[%s223 + $0x160] sm:$0xff]
      %v414 = vld [vmem:[%s223 + $0x168] sm:$0xff]
      %v415 = vld [vmem:[%s223 + $0x170] sm:$0xff]
      %v416 = vld [vmem:[%s223 + $0x178] sm:$0xff]
      %v417 = vld [vmem:[%s223 + $0x180] sm:$0xff]
      %v418 = vld [vmem:[%s223 + $0x188] sm:$0xff]
      %v419 = vld [vmem:[%s223 + $0x190] sm:$0xff]
      %v420 = vld [vmem:[%s223 + $0x198] sm:$0xff]
      %v421 = vld [vmem:[%s223 + $0x1a0] sm:$0xff]
      %v422 = vld [vmem:[%s223 + $0x1a8] sm:$0xff]
      %v423 = vld [vmem:[%s223 + $0x1b0] sm:$0xff]
      %v424 = vld [vmem:[%s223 + $0x1b8] sm:$0xff]
      %v425 = vld [vmem:[%s223 + $0x1c0] sm:$0xff]
      %v426 = vld [vmem:[%s223 + $0x1c8] sm:$0xff]
      %v427 = vld [vmem:[%s223 + $0x1d0] sm:$0xff]
      %v428 = vld [vmem:[%s223 + $0x1d8] sm:$0xff]
      %v429 = vld [vmem:[%s223 + $0x1e0] sm:$0xff]
      %v430 = vld [vmem:[%s223 + $0x1e8] sm:$0xff]
      %v431 = vld [vmem:[%s223 + $0x1f0] sm:$0xff]
      %v432 = vld [vmem:[%s223 + $0x1f8] sm:$0xff]
      %v497 = vunpack.c.l.b16 %v369
      %v498 = vunpack.c.h.b16 %v369
      %v499 = vunpack.c.l.b16 %v370
      %v500 = vunpack.c.h.b16 %v370
      %v501 = vunpack.c.l.b16 %v371
      %v502 = vunpack.c.h.b16 %v371
      %v503 = vunpack.c.l.b16 %v372
      %v504 = vunpack.c.h.b16 %v372
      %v505 = vunpack.c.l.b16 %v373
      %v506 = vunpack.c.h.b16 %v373
      %v507 = vunpack.c.l.b16 %v374
      %v508 = vunpack.c.h.b16 %v374
      %v509 = vunpack.c.l.b16 %v375
      %v510 = vunpack.c.h.b16 %v375
      %v511 = vunpack.c.l.b16 %v376
      %v512 = vunpack.c.h.b16 %v376
      %v513 = vunpack.c.l.b16 %v377
      %v514 = vunpack.c.h.b16 %v377
      %v515 = vunpack.c.l.b16 %v378
      %v516 = vunpack.c.h.b16 %v378
      %v517 = vunpack.c.l.b16 %v379
      %v518 = vunpack.c.h.b16 %v379
      %v519 = vunpack.c.l.b16 %v380
      %v520 = vunpack.c.h.b16 %v380
      %v521 = vunpack.c.l.b16 %v381
      %v522 = vunpack.c.h.b16 %v381
      %v523 = vunpack.c.l.b16 %v382
      %v524 = vunpack.c.h.b16 %v382
      %v525 = vunpack.c.l.b16 %v383
      %v526 = vunpack.c.h.b16 %v383
      %v527 = vunpack.c.l.b16 %v384
      %v528 = vunpack.c.h.b16 %v384
      %v529 = vunpack.c.l.b16 %v385
      %v530 = vunpack.c.h.b16 %v385
      %v531 = vunpack.c.l.b16 %v386
      %v532 = vunpack.c.h.b16 %v386
      %v533 = vunpack.c.l.b16 %v387
      %v534 = vunpack.c.h.b16 %v387
      %v535 = vunpack.c.l.b16 %v388
      %v536 = vunpack.c.h.b16 %v388
      %v537 = vunpack.c.l.b16 %v389
      %v538 = vunpack.c.h.b16 %v389
      %v539 = vunpack.c.l.b16 %v390
      %v540 = vunpack.c.h.b16 %v390
      %v541 = vunpack.c.l.b16 %v391
      %v542 = vunpack.c.h.b16 %v391
      %v543 = vunpack.c.l.b16 %v392
      %v544 = vunpack.c.h.b16 %v392
      %v545 = vunpack.c.l.b16 %v393
      %v546 = vunpack.c.h.b16 %v393
      %v547 = vunpack.c.l.b16 %v394
      %v548 = vunpack.c.h.b16 %v394
      %v549 = vunpack.c.l.b16 %v395
      %v550 = vunpack.c.h.b16 %v395
      %v551 = vunpack.c.l.b16 %v396
      %v552 = vunpack.c.h.b16 %v396
      %v553 = vunpack.c.l.b16 %v397
      %v554 = vunpack.c.h.b16 %v397
      %v555 = vunpack.c.l.b16 %v398
      %v556 = vunpack.c.h.b16 %v398
      %v557 = vunpack.c.l.b16 %v399
      %v558 = vunpack.c.h.b16 %v399
      %v559 = vunpack.c.l.b16 %v400
      %v560 = vunpack.c.h.b16 %v400
      %v561 = vunpack.c.l.b16 %v401
      %v562 = vunpack.c.h.b16 %v401
      %v563 = vunpack.c.l.b16 %v402
      %v564 = vunpack.c.h.b16 %v402
      %v565 = vunpack.c.l.b16 %v403
      %v566 = vunpack.c.h.b16 %v403
      %v567 = vunpack.c.l.b16 %v404
      %v568 = vunpack.c.h.b16 %v404
      %v569 = vunpack.c.l.b16 %v405
      %v570 = vunpack.c.h.b16 %v405
      %v571 = vunpack.c.l.b16 %v406
      %v572 = vunpack.c.h.b16 %v406
      %v573 = vunpack.c.l.b16 %v407
      %v574 = vunpack.c.h.b16 %v407
      %v575 = vunpack.c.l.b16 %v408
      %v576 = vunpack.c.h.b16 %v408
      %v577 = vunpack.c.l.b16 %v409
      %v578 = vunpack.c.h.b16 %v409
      %v579 = vunpack.c.l.b16 %v410
      %v580 = vunpack.c.h.b16 %v410
      %v581 = vunpack.c.l.b16 %v411
      %v582 = vunpack.c.h.b16 %v411
      %v583 = vunpack.c.l.b16 %v412
      %v584 = vunpack.c.h.b16 %v412
      %v585 = vunpack.c.l.b16 %v413
      %v586 = vunpack.c.h.b16 %v413
      %v587 = vunpack.c.l.b16 %v414
      %v588 = vunpack.c.h.b16 %v414
      %v589 = vunpack.c.l.b16 %v415
      %v590 = vunpack.c.h.b16 %v415
      %v591 = vunpack.c.l.b16 %v416
      %v592 = vunpack.c.h.b16 %v416
      %v593 = vunpack.c.l.b16 %v417
      %v594 = vunpack.c.h.b16 %v417
      %v595 = vunpack.c.l.b16 %v418
      %v596 = vunpack.c.h.b16 %v418
      %v597 = vunpack.c.l.b16 %v419
      %v598 = vunpack.c.h.b16 %v419
      %v599 = vunpack.c.l.b16 %v420
      %v600 = vunpack.c.h.b16 %v420
      %v601 = vunpack.c.l.b16 %v421
      %v602 = vunpack.c.h.b16 %v421
      %v603 = vunpack.c.l.b16 %v422
      %v604 = vunpack.c.h.b16 %v422
      %v605 = vunpack.c.l.b16 %v423
      %v606 = vunpack.c.h.b16 %v423
      %v607 = vunpack.c.l.b16 %v424
      %v608 = vunpack.c.h.b16 %v424
      %v609 = vunpack.c.l.b16 %v425
      %v610 = vunpack.c.h.b16 %v425
      %v611 = vunpack.c.l.b16 %v426
      %v612 = vunpack.c.h.b16 %v426
      %v613 = vunpack.c.l.b16 %v427
      %v614 = vunpack.c.h.b16 %v427
      %v615 = vunpack.c.l.b16 %v428
      %v616 = vunpack.c.h.b16 %v428
      %v617 = vunpack.c.l.b16 %v429
      %v618 = vunpack.c.h.b16 %v429
      %v619 = vunpack.c.l.b16 %v430
      %v620 = vunpack.c.h.b16 %v430
      %v621 = vunpack.c.l.b16 %v431
      %v622 = vunpack.c.h.b16 %v431
      %v623 = vunpack.c.l.b16 %v432
      %v624 = vunpack.c.h.b16 %v432
      %v625 = vpack.c.b16 %v501, %v497
      %v626 = vpack.c.b16 %v502, %v498
      %v627 = vpack.c.b16 %v503, %v499
      %v628 = vpack.c.b16 %v504, %v500
      %v629 = vpack.c.b16 %v509, %v505
      %v630 = vpack.c.b16 %v510, %v506
      %v631 = vpack.c.b16 %v511, %v507
      %v632 = vpack.c.b16 %v512, %v508
      %v633 = vpack.c.b16 %v517, %v513
      %v634 = vpack.c.b16 %v518, %v514
      %v635 = vpack.c.b16 %v519, %v515
      %v636 = vpack.c.b16 %v520, %v516
      %v637 = vpack.c.b16 %v525, %v521
      %v638 = vpack.c.b16 %v526, %v522
      %v639 = vpack.c.b16 %v527, %v523
      %v640 = vpack.c.b16 %v528, %v524
      %v641 = vpack.c.b16 %v533, %v529
      %v642 = vpack.c.b16 %v534, %v530
      %v643 = vpack.c.b16 %v535, %v531
      %v644 = vpack.c.b16 %v536, %v532
      %v645 = vpack.c.b16 %v541, %v537
      %v646 = vpack.c.b16 %v542, %v538
      %v647 = vpack.c.b16 %v543, %v539
      %v648 = vpack.c.b16 %v544, %v540
      %v649 = vpack.c.b16 %v549, %v545
      %v650 = vpack.c.b16 %v550, %v546
      %v651 = vpack.c.b16 %v551, %v547
      %v652 = vpack.c.b16 %v552, %v548
      %v653 = vpack.c.b16 %v557, %v553
      %v654 = vpack.c.b16 %v558, %v554
      %v655 = vpack.c.b16 %v559, %v555
      %v656 = vpack.c.b16 %v560, %v556
      %v657 = vpack.c.b16 %v565, %v561
      %v658 = vpack.c.b16 %v566, %v562
      %v659 = vpack.c.b16 %v567, %v563
      %v660 = vpack.c.b16 %v568, %v564
      %v661 = vpack.c.b16 %v573, %v569
      %v662 = vpack.c.b16 %v574, %v570
      %v663 = vpack.c.b16 %v575, %v571
      %v664 = vpack.c.b16 %v576, %v572
      %v665 = vpack.c.b16 %v581, %v577
      %v666 = vpack.c.b16 %v582, %v578
      %v667 = vpack.c.b16 %v583, %v579
      %v668 = vpack.c.b16 %v584, %v580
      %v669 = vpack.c.b16 %v589, %v585
      %v670 = vpack.c.b16 %v590, %v586
      %v671 = vpack.c.b16 %v591, %v587
      %v672 = vpack.c.b16 %v592, %v588
      %v673 = vpack.c.b16 %v597, %v593
      %v674 = vpack.c.b16 %v598, %v594
      %v675 = vpack.c.b16 %v599, %v595
      %v676 = vpack.c.b16 %v600, %v596
      %v677 = vpack.c.b16 %v605, %v601
      %v678 = vpack.c.b16 %v606, %v602
      %v679 = vpack.c.b16 %v607, %v603
      %v680 = vpack.c.b16 %v608, %v604
      %v681 = vpack.c.b16 %v613, %v609
      %v682 = vpack.c.b16 %v614, %v610
      %v683 = vpack.c.b16 %v615, %v611
      %v684 = vpack.c.b16 %v616, %v612
      %v685 = vpack.c.b16 %v621, %v617
      %v686 = vpack.c.b16 %v622, %v618
      %v687 = vpack.c.b16 %v623, %v619
      %v688 = vpack.c.b16 %v624, %v620
      %v817 = vunpack.c.l.b16 %v273
      %v818 = vunpack.c.l.b16 %v274
      %v819 = vunpack.c.l.b16 %v275
      %v820 = vunpack.c.l.b16 %v276
      %v821 = vunpack.c.l.b16 %v277
      %v822 = vunpack.c.l.b16 %v278
      %v823 = vunpack.c.l.b16 %v279
      %v824 = vunpack.c.l.b16 %v280
      %v825 = vunpack.c.l.b16 %v281
      %v826 = vunpack.c.l.b16 %v282
      %v827 = vunpack.c.l.b16 %v283
      %v828 = vunpack.c.l.b16 %v284
      %v829 = vunpack.c.l.b16 %v285
      %v830 = vunpack.c.l.b16 %v286
      %v831 = vunpack.c.l.b16 %v287
      %v832 = vunpack.c.l.b16 %v288
      %v833 = vunpack.c.l.b16 %v289
      %v834 = vunpack.c.l.b16 %v290
      %v835 = vunpack.c.l.b16 %v291
      %v836 = vunpack.c.l.b16 %v292
      %v837 = vunpack.c.l.b16 %v293
      %v838 = vunpack.c.l.b16 %v294
      %v839 = vunpack.c.l.b16 %v295
      %v840 = vunpack.c.l.b16 %v296
      %v841 = vunpack.c.l.b16 %v297
      %v842 = vunpack.c.l.b16 %v298
      %v843 = vunpack.c.l.b16 %v299
      %v844 = vunpack.c.l.b16 %v300
      %v845 = vunpack.c.l.b16 %v301
      %v846 = vunpack.c.l.b16 %v302
      %v847 = vunpack.c.l.b16 %v303
      %v848 = vunpack.c.l.b16 %v304
      %v849 = vunpack.c.l.b16 %v305
      %v850 = vunpack.c.l.b16 %v306
      %v851 = vunpack.c.l.b16 %v307
      %v852 = vunpack.c.l.b16 %v308
      %v853 = vunpack.c.l.b16 %v309
      %v854 = vunpack.c.l.b16 %v310
      %v855 = vunpack.c.l.b16 %v311
      %v856 = vunpack.c.l.b16 %v312
      %v857 = vunpack.c.l.b16 %v313
      %v858 = vunpack.c.l.b16 %v314
      %v859 = vunpack.c.l.b16 %v315
      %v860 = vunpack.c.l.b16 %v316
      %v861 = vunpack.c.l.b16 %v317
      %v862 = vunpack.c.l.b16 %v318
      %v863 = vunpack.c.l.b16 %v319
      %v864 = vunpack.c.l.b16 %v320
      %v865 = vunpack.c.l.b16 %v321
      %v866 = vunpack.c.l.b16 %v322
      %v867 = vunpack.c.l.b16 %v323
      %v868 = vunpack.c.l.b16 %v324
      %v869 = vunpack.c.l.b16 %v325
      %v870 = vunpack.c.l.b16 %v326
      %v871 = vunpack.c.l.b16 %v327
      %v872 = vunpack.c.l.b16 %v328
      %v873 = vunpack.c.l.b16 %v329
      %v874 = vunpack.c.l.b16 %v330
      %v875 = vunpack.c.l.b16 %v331
      %v876 = vunpack.c.l.b16 %v332
      %v877 = vunpack.c.l.b16 %v333
      %v878 = vunpack.c.l.b16 %v334
      %v879 = vunpack.c.l.b16 %v335
      %v880 = vunpack.c.l.b16 %v336
      %v881 = vpack.c.b16 %v818, %v817
      %v882 = vpack.c.b16 %v820, %v819
      %v883 = vpack.c.b16 %v822, %v821
      %v884 = vpack.c.b16 %v824, %v823
      %v885 = vpack.c.b16 %v826, %v825
      %v886 = vpack.c.b16 %v828, %v827
      %v887 = vpack.c.b16 %v830, %v829
      %v888 = vpack.c.b16 %v832, %v831
      %v889 = vpack.c.b16 %v834, %v833
      %v890 = vpack.c.b16 %v836, %v835
      %v891 = vpack.c.b16 %v838, %v837
      %v892 = vpack.c.b16 %v840, %v839
      %v893 = vpack.c.b16 %v842, %v841
      %v894 = vpack.c.b16 %v844, %v843
      %v895 = vpack.c.b16 %v846, %v845
      %v896 = vpack.c.b16 %v848, %v847
      %v897 = vpack.c.b16 %v850, %v849
      %v898 = vpack.c.b16 %v852, %v851
      %v899 = vpack.c.b16 %v854, %v853
      %v900 = vpack.c.b16 %v856, %v855
      %v901 = vpack.c.b16 %v858, %v857
      %v902 = vpack.c.b16 %v860, %v859
      %v903 = vpack.c.b16 %v862, %v861
      %v904 = vpack.c.b16 %v864, %v863
      %v905 = vpack.c.b16 %v866, %v865
      %v906 = vpack.c.b16 %v868, %v867
      %v907 = vpack.c.b16 %v870, %v869
      %v908 = vpack.c.b16 %v872, %v871
      %v909 = vpack.c.b16 %v874, %v873
      %v910 = vpack.c.b16 %v876, %v875
      %v911 = vpack.c.b16 %v878, %v877
      %v912 = vpack.c.b16 %v880, %v879
      %945 = vmatpush.bf16.msra.mxu0 %v888
      %946 = vmatpush.bf16.msra.mxu0 %v887
      %947 = vmatpush.bf16.msra.mxu0 %v886
      %948 = vmatpush.bf16.msra.mxu0 %v885
      %949 = vmatpush.bf16.msra.mxu0 %v884
      %950 = vmatpush.bf16.msra.mxu0 %v883
      %951 = vmatpush.bf16.msra.mxu0 %v882
      %952 = vmatpush.bf16.msra.mxu0 %v881
      %953 = vmatmul.bf16.gmra.mxu0 %v625
      %v954 = vpop.f32.mrf.mxu0
      %v955 = vadd.f32 0.0, %v954
      %v956 = vpop.f32.mrf.mxu0
      %v957 = vadd.f32 0.0, %v956
      %958 = vmatmul.bf16.gmra.mxu0 %v629
      %v959 = vpop.f32.mrf.mxu0
      %v960 = vadd.f32 0.0, %v959
      %v961 = vpop.f32.mrf.mxu0
      %v962 = vadd.f32 0.0, %v961
      %963 = vmatmul.bf16.gmra.mxu0 %v633
      %v964 = vpop.f32.mrf.mxu0
      %v965 = vadd.f32 0.0, %v964
      %v966 = vpop.f32.mrf.mxu0
      %v967 = vadd.f32 0.0, %v966
      %968 = vmatmul.bf16.gmra.mxu0 %v637
      %v969 = vpop.f32.mrf.mxu0
      %v970 = vadd.f32 0.0, %v969
      %v971 = vpop.f32.mrf.mxu0
      %v972 = vadd.f32 0.0, %v971
      %973 = vmatmul.bf16.gmra.mxu0 %v641
      %v974 = vpop.f32.mrf.mxu0
      %v975 = vadd.f32 0.0, %v974
      %v976 = vpop.f32.mrf.mxu0
      %v977 = vadd.f32 0.0, %v976
      %978 = vmatmul.bf16.gmra.mxu0 %v645
      %v979 = vpop.f32.mrf.mxu0
      %v980 = vadd.f32 0.0, %v979
      %v981 = vpop.f32.mrf.mxu0
      %v982 = vadd.f32 0.0, %v981
      %983 = vmatmul.bf16.gmra.mxu0 %v649
      %v984 = vpop.f32.mrf.mxu0
      %v985 = vadd.f32 0.0, %v984
      %v986 = vpop.f32.mrf.mxu0
      %v987 = vadd.f32 0.0, %v986
      %988 = vmatmul.bf16.gmra.mxu0 %v653
      %v989 = vpop.f32.mrf.mxu0
      %v990 = vadd.f32 0.0, %v989
      %v991 = vpop.f32.mrf.mxu0
      %v992 = vadd.f32 0.0, %v991
      %993 = vmatmul.bf16.gmra.mxu0 %v657
      %v994 = vpop.f32.mrf.mxu0
      %v995 = vadd.f32 0.0, %v994
      %v996 = vpop.f32.mrf.mxu0
      %v997 = vadd.f32 0.0, %v996
      %998 = vmatmul.bf16.gmra.mxu0 %v661
      %v999 = vpop.f32.mrf.mxu0
      %v1000 = vadd.f32 0.0, %v999
      %v1001 = vpop.f32.mrf.mxu0
      %v1002 = vadd.f32 0.0, %v1001
      %1003 = vmatmul.bf16.gmra.mxu0 %v665
      %v1004 = vpop.f32.mrf.mxu0
      %v1005 = vadd.f32 0.0, %v1004
      %v1006 = vpop.f32.mrf.mxu0
      %v1007 = vadd.f32 0.0, %v1006
      %1008 = vmatmul.bf16.gmra.mxu0 %v669
      %v1009 = vpop.f32.mrf.mxu0
      %v1010 = vadd.f32 0.0, %v1009
      %v1011 = vpop.f32.mrf.mxu0
      %v1012 = vadd.f32 0.0, %v1011
      %1013 = vmatmul.bf16.gmra.mxu0 %v673
      %v1014 = vpop.f32.mrf.mxu0
      %v1015 = vadd.f32 0.0, %v1014
      %v1016 = vpop.f32.mrf.mxu0
      %v1017 = vadd.f32 0.0, %v1016
      %1018 = vmatmul.bf16.gmra.mxu0 %v677
      %v1019 = vpop.f32.mrf.mxu0
      %v1020 = vadd.f32 0.0, %v1019
      %v1021 = vpop.f32.mrf.mxu0
      %v1022 = vadd.f32 0.0, %v1021
      %1023 = vmatmul.bf16.gmra.mxu0 %v681
      %v1024 = vpop.f32.mrf.mxu0
      %v1025 = vadd.f32 0.0, %v1024
      %v1026 = vpop.f32.mrf.mxu0
      %v1027 = vadd.f32 0.0, %v1026
      %1028 = vmatmul.bf16.gmra.mxu0 %v685
      %v1029 = vpop.f32.mrf.mxu0
      %v1030 = vadd.f32 0.0, %v1029
      %v1031 = vpop.f32.mrf.mxu0
      %v1032 = vadd.f32 0.0, %v1031
      %1033 = vdwg.mxu0
      %1034 = vmatpush.bf16.msra.mxu0 %v896
      %1035 = vmatpush.bf16.msra.mxu0 %v895
      %1036 = vmatpush.bf16.msra.mxu0 %v894
      %1037 = vmatpush.bf16.msra.mxu0 %v893
      %1038 = vmatpush.bf16.msra.mxu0 %v892
      %1039 = vmatpush.bf16.msra.mxu0 %v891
      %1040 = vmatpush.bf16.msra.mxu0 %v890
      %1041 = vmatpush.bf16.msra.mxu0 %v889
      %1042 = vmatmul.bf16.gmra.mxu0 %v626
      %v1043 = vpop.f32.mrf.mxu0
      %v1044 = vadd.f32 %v955, %v1043
      %v1045 = vpop.f32.mrf.mxu0
      %v1046 = vadd.f32 %v957, %v1045
      %1047 = vmatmul.bf16.gmra.mxu0 %v630
      %v1048 = vpop.f32.mrf.mxu0
      %v1049 = vadd.f32 %v960, %v1048
      %v1050 = vpop.f32.mrf.mxu0
      %v1051 = vadd.f32 %v962, %v1050
      %1052 = vmatmul.bf16.gmra.mxu0 %v634
      %v1053 = vpop.f32.mrf.mxu0
      %v1054 = vadd.f32 %v965, %v1053
      %v1055 = vpop.f32.mrf.mxu0
      %v1056 = vadd.f32 %v967, %v1055
      %1057 = vmatmul.bf16.gmra.mxu0 %v638
      %v1058 = vpop.f32.mrf.mxu0
      %v1059 = vadd.f32 %v970, %v1058
      %v1060 = vpop.f32.mrf.mxu0
      %v1061 = vadd.f32 %v972, %v1060
      %1062 = vmatmul.bf16.gmra.mxu0 %v642
      %v1063 = vpop.f32.mrf.mxu0
      %v1064 = vadd.f32 %v975, %v1063
      %v1065 = vpop.f32.mrf.mxu0
      %v1066 = vadd.f32 %v977, %v1065
      %1067 = vmatmul.bf16.gmra.mxu0 %v646
      %v1068 = vpop.f32.mrf.mxu0
      %v1069 = vadd.f32 %v980, %v1068
      %v1070 = vpop.f32.mrf.mxu0
      %v1071 = vadd.f32 %v982, %v1070
      %1072 = vmatmul.bf16.gmra.mxu0 %v650
      %v1073 = vpop.f32.mrf.mxu0
      %v1074 = vadd.f32 %v985, %v1073
      %v1075 = vpop.f32.mrf.mxu0
      %v1076 = vadd.f32 %v987, %v1075
      %1077 = vmatmul.bf16.gmra.mxu0 %v654
      %v1078 = vpop.f32.mrf.mxu0
      %v1079 = vadd.f32 %v990, %v1078
      %v1080 = vpop.f32.mrf.mxu0
      %v1081 = vadd.f32 %v992, %v1080
      %1082 = vmatmul.bf16.gmra.mxu0 %v658
      %v1083 = vpop.f32.mrf.mxu0
      %v1084 = vadd.f32 %v995, %v1083
      %v1085 = vpop.f32.mrf.mxu0
      %v1086 = vadd.f32 %v997, %v1085
      %1087 = vmatmul.bf16.gmra.mxu0 %v662
      %v1088 = vpop.f32.mrf.mxu0
      %v1089 = vadd.f32 %v1000, %v1088
      %v1090 = vpop.f32.mrf.mxu0
      %v1091 = vadd.f32 %v1002, %v1090
      %1092 = vmatmul.bf16.gmra.mxu0 %v666
      %v1093 = vpop.f32.mrf.mxu0
      %v1094 = vadd.f32 %v1005, %v1093
      %v1095 = vpop.f32.mrf.mxu0
      %v1096 = vadd.f32 %v1007, %v1095
      %1097 = vmatmul.bf16.gmra.mxu0 %v670
      %v1098 = vpop.f32.mrf.mxu0
      %v1099 = vadd.f32 %v1010, %v1098
      %v1100 = vpop.f32.mrf.mxu0
      %v1101 = vadd.f32 %v1012, %v1100
      %1102 = vmatmul.bf16.gmra.mxu0 %v674
      %v1103 = vpop.f32.mrf.mxu0
      %v1104 = vadd.f32 %v1015, %v1103
      %v1105 = vpop.f32.mrf.mxu0
      %v1106 = vadd.f32 %v1017, %v1105
      %1107 = vmatmul.bf16.gmra.mxu0 %v678
      %v1108 = vpop.f32.mrf.mxu0
      %v1109 = vadd.f32 %v1020, %v1108
      %v1110 = vpop.f32.mrf.mxu0
      %v1111 = vadd.f32 %v1022, %v1110
      %1112 = vmatmul.bf16.gmra.mxu0 %v682
      %v1113 = vpop.f32.mrf.mxu0
      %v1114 = vadd.f32 %v1025, %v1113
      %v1115 = vpop.f32.mrf.mxu0
      %v1116 = vadd.f32 %v1027, %v1115
      %1117 = vmatmul.bf16.gmra.mxu0 %v686
      %v1118 = vpop.f32.mrf.mxu0
      %v1119 = vadd.f32 %v1030, %v1118
      %v1120 = vpop.f32.mrf.mxu0
      %v1121 = vadd.f32 %v1032, %v1120
      %1122 = vdwg.mxu0
      %1123 = vmatpush.bf16.msra.mxu0 %v904
      %1124 = vmatpush.bf16.msra.mxu0 %v903
      %1125 = vmatpush.bf16.msra.mxu0 %v902
      %1126 = vmatpush.bf16.msra.mxu0 %v901
      %1127 = vmatpush.bf16.msra.mxu0 %v900
      %1128 = vmatpush.bf16.msra.mxu0 %v899
      %1129 = vmatpush.bf16.msra.mxu0 %v898
      %1130 = vmatpush.bf16.msra.mxu0 %v897
      %1131 = vmatmul.bf16.gmra.mxu0 %v627
      %v1132 = vpop.f32.mrf.mxu0
      %v1133 = vadd.f32 %v1044, %v1132
      %v1134 = vpop.f32.mrf.mxu0
      %v1135 = vadd.f32 %v1046, %v1134
      %1136 = vmatmul.bf16.gmra.mxu0 %v631
      %v1137 = vpop.f32.mrf.mxu0
      %v1138 = vadd.f32 %v1049, %v1137
      %v1139 = vpop.f32.mrf.mxu0
      %v1140 = vadd.f32 %v1051, %v1139
      %1141 = vmatmul.bf16.gmra.mxu0 %v635
      %v1142 = vpop.f32.mrf.mxu0
      %v1143 = vadd.f32 %v1054, %v1142
      %v1144 = vpop.f32.mrf.mxu0
      %v1145 = vadd.f32 %v1056, %v1144
      %1146 = vmatmul.bf16.gmra.mxu0 %v639
      %v1147 = vpop.f32.mrf.mxu0
      %v1148 = vadd.f32 %v1059, %v1147
      %v1149 = vpop.f32.mrf.mxu0
      %v1150 = vadd.f32 %v1061, %v1149
      %1151 = vmatmul.bf16.gmra.mxu0 %v643
      %v1152 = vpop.f32.mrf.mxu0
      %v1153 = vadd.f32 %v1064, %v1152
      %v1154 = vpop.f32.mrf.mxu0
      %v1155 = vadd.f32 %v1066, %v1154
      %1156 = vmatmul.bf16.gmra.mxu0 %v647
      %v1157 = vpop.f32.mrf.mxu0
      %v1158 = vadd.f32 %v1069, %v1157
      %v1159 = vpop.f32.mrf.mxu0
      %v1160 = vadd.f32 %v1071, %v1159
      %1161 = vmatmul.bf16.gmra.mxu0 %v651
      %v1162 = vpop.f32.mrf.mxu0
      %v1163 = vadd.f32 %v1074, %v1162
      %v1164 = vpop.f32.mrf.mxu0
      %v1165 = vadd.f32 %v1076, %v1164
      %1166 = vmatmul.bf16.gmra.mxu0 %v655
      %v1167 = vpop.f32.mrf.mxu0
      %v1168 = vadd.f32 %v1079, %v1167
      %v1169 = vpop.f32.mrf.mxu0
      %v1170 = vadd.f32 %v1081, %v1169
      %1171 = vmatmul.bf16.gmra.mxu0 %v659
      %v1172 = vpop.f32.mrf.mxu0
      %v1173 = vadd.f32 %v1084, %v1172
      %v1174 = vpop.f32.mrf.mxu0
      %v1175 = vadd.f32 %v1086, %v1174
      %1176 = vmatmul.bf16.gmra.mxu0 %v663
      %v1177 = vpop.f32.mrf.mxu0
      %v1178 = vadd.f32 %v1089, %v1177
      %v1179 = vpop.f32.mrf.mxu0
      %v1180 = vadd.f32 %v1091, %v1179
      %1181 = vmatmul.bf16.gmra.mxu0 %v667
      %v1182 = vpop.f32.mrf.mxu0
      %v1183 = vadd.f32 %v1094, %v1182
      %v1184 = vpop.f32.mrf.mxu0
      %v1185 = vadd.f32 %v1096, %v1184
      %1186 = vmatmul.bf16.gmra.mxu0 %v671
      %v1187 = vpop.f32.mrf.mxu0
      %v1188 = vadd.f32 %v1099, %v1187
      %v1189 = vpop.f32.mrf.mxu0
      %v1190 = vadd.f32 %v1101, %v1189
      %1191 = vmatmul.bf16.gmra.mxu0 %v675
      %v1192 = vpop.f32.mrf.mxu0
      %v1193 = vadd.f32 %v1104, %v1192
      %v1194 = vpop.f32.mrf.mxu0
      %v1195 = vadd.f32 %v1106, %v1194
      %1196 = vmatmul.bf16.gmra.mxu0 %v679
      %v1197 = vpop.f32.mrf.mxu0
      %v1198 = vadd.f32 %v1109, %v1197
      %v1199 = vpop.f32.mrf.mxu0
      %v1200 = vadd.f32 %v1111, %v1199
      %1201 = vmatmul.bf16.gmra.mxu0 %v683
      %v1202 = vpop.f32.mrf.mxu0
      %v1203 = vadd.f32 %v1114, %v1202
      %v1204 = vpop.f32.mrf.mxu0
      %v1205 = vadd.f32 %v1116, %v1204
      %1206 = vmatmul.bf16.gmra.mxu0 %v687
      %v1207 = vpop.f32.mrf.mxu0
      %v1208 = vadd.f32 %v1119, %v1207
      %v1209 = vpop.f32.mrf.mxu0
      %v1210 = vadd.f32 %v1121, %v1209
      %1211 = vdwg.mxu0
      %1212 = vmatpush.bf16.msra.mxu0 %v912
      %1213 = vmatpush.bf16.msra.mxu0 %v911
      %1214 = vmatpush.bf16.msra.mxu0 %v910
      %1215 = vmatpush.bf16.msra.mxu0 %v909
      %1216 = vmatpush.bf16.msra.mxu0 %v908
      %1217 = vmatpush.bf16.msra.mxu0 %v907
      %1218 = vmatpush.bf16.msra.mxu0 %v906
      %1219 = vmatpush.bf16.msra.mxu0 %v905
      %1220 = vmatmul.bf16.gmra.mxu0 %v628
      %v1221 = vpop.f32.mrf.mxu0
      %v1222 = vadd.f32 %v1133, %v1221
      %v1223 = vpop.f32.mrf.mxu0
      %v1224 = vadd.f32 %v1135, %v1223
      %1225 = vmatmul.bf16.gmra.mxu0 %v632
      %v1226 = vpop.f32.mrf.mxu0
      %v1227 = vadd.f32 %v1138, %v1226
      %v1228 = vpop.f32.mrf.mxu0
      %v1229 = vadd.f32 %v1140, %v1228
      %1230 = vmatmul.bf16.gmra.mxu0 %v636
      %v1231 = vpop.f32.mrf.mxu0
      %v1232 = vadd.f32 %v1143, %v1231
      %v1233 = vpop.f32.mrf.mxu0
      %v1234 = vadd.f32 %v1145, %v1233
      %1235 = vmatmul.bf16.gmra.mxu0 %v640
      %v1236 = vpop.f32.mrf.mxu0
      %v1237 = vadd.f32 %v1148, %v1236
      %v1238 = vpop.f32.mrf.mxu0
      %v1239 = vadd.f32 %v1150, %v1238
      %1240 = vmatmul.bf16.gmra.mxu0 %v644
      %v1241 = vpop.f32.mrf.mxu0
      %v1242 = vadd.f32 %v1153, %v1241
      %v1243 = vpop.f32.mrf.mxu0
      %v1244 = vadd.f32 %v1155, %v1243
      %1245 = vmatmul.bf16.gmra.mxu0 %v648
      %v1246 = vpop.f32.mrf.mxu0
      %v1247 = vadd.f32 %v1158, %v1246
      %v1248 = vpop.f32.mrf.mxu0
      %v1249 = vadd.f32 %v1160, %v1248
      %1250 = vmatmul.bf16.gmra.mxu0 %v652
      %v1251 = vpop.f32.mrf.mxu0
      %v1252 = vadd.f32 %v1163, %v1251
      %v1253 = vpop.f32.mrf.mxu0
      %v1254 = vadd.f32 %v1165, %v1253
      %1255 = vmatmul.bf16.gmra.mxu0 %v656
      %v1256 = vpop.f32.mrf.mxu0
      %v1257 = vadd.f32 %v1168, %v1256
      %v1258 = vpop.f32.mrf.mxu0
      %v1259 = vadd.f32 %v1170, %v1258
      %1260 = vmatmul.bf16.gmra.mxu0 %v660
      %v1261 = vpop.f32.mrf.mxu0
      %v1262 = vadd.f32 %v1173, %v1261
      %v1263 = vpop.f32.mrf.mxu0
      %v1264 = vadd.f32 %v1175, %v1263
      %1265 = vmatmul.bf16.gmra.mxu0 %v664
      %v1266 = vpop.f32.mrf.mxu0
      %v1267 = vadd.f32 %v1178, %v1266
      %v1268 = vpop.f32.mrf.mxu0
      %v1269 = vadd.f32 %v1180, %v1268
      %1270 = vmatmul.bf16.gmra.mxu0 %v668
      %v1271 = vpop.f32.mrf.mxu0
      %v1272 = vadd.f32 %v1183, %v1271
      %v1273 = vpop.f32.mrf.mxu0
      %v1274 = vadd.f32 %v1185, %v1273
      %1275 = vmatmul.bf16.gmra.mxu0 %v672
      %v1276 = vpop.f32.mrf.mxu0
      %v1277 = vadd.f32 %v1188, %v1276
      %v1278 = vpop.f32.mrf.mxu0
      %v1279 = vadd.f32 %v1190, %v1278
      %1280 = vmatmul.bf16.gmra.mxu0 %v676
      %v1281 = vpop.f32.mrf.mxu0
      %v1282 = vadd.f32 %v1193, %v1281
      %v1283 = vpop.f32.mrf.mxu0
      %v1284 = vadd.f32 %v1195, %v1283
      %1285 = vmatmul.bf16.gmra.mxu0 %v680
      %v1286 = vpop.f32.mrf.mxu0
      %v1287 = vadd.f32 %v1198, %v1286
      %v1288 = vpop.f32.mrf.mxu0
      %v1289 = vadd.f32 %v1200, %v1288
      %1290 = vmatmul.bf16.gmra.mxu0 %v684
      %v1291 = vpop.f32.mrf.mxu0
      %v1292 = vadd.f32 %v1203, %v1291
      %v1293 = vpop.f32.mrf.mxu0
      %v1294 = vadd.f32 %v1205, %v1293
      %1295 = vmatmul.bf16.gmra.mxu0 %v688
      %v1296 = vpop.f32.mrf.mxu0
      %v1297 = vadd.f32 %v1208, %v1296
      %v1298 = vpop.f32.mrf.mxu0
      %v1299 = vadd.f32 %v1210, %v1298
      %1300 = vdwg.mxu0
      %v1301 = vadd.f32 %v337, %v1222
      %v1302 = vadd.f32 %v338, %v1224
      %v1303 = vadd.f32 %v339, %v1227
      %v1304 = vadd.f32 %v340, %v1229
      %v1305 = vadd.f32 %v341, %v1232
      %v1306 = vadd.f32 %v342, %v1234
      %v1307 = vadd.f32 %v343, %v1237
      %v1308 = vadd.f32 %v344, %v1239
      %v1309 = vadd.f32 %v345, %v1242
      %v1310 = vadd.f32 %v346, %v1244
      %v1311 = vadd.f32 %v347, %v1247
      %v1312 = vadd.f32 %v348, %v1249
      %v1313 = vadd.f32 %v349, %v1252
      %v1314 = vadd.f32 %v350, %v1254
      %v1315 = vadd.f32 %v351, %v1257
      %v1316 = vadd.f32 %v352, %v1259
      %v1317 = vadd.f32 %v353, %v1262
      %v1318 = vadd.f32 %v354, %v1264
      %v1319 = vadd.f32 %v355, %v1267
      %v1320 = vadd.f32 %v356, %v1269
      %v1321 = vadd.f32 %v357, %v1272
      %v1322 = vadd.f32 %v358, %v1274
      %v1323 = vadd.f32 %v359, %v1277
      %v1324 = vadd.f32 %v360, %v1279
      %v1325 = vadd.f32 %v361, %v1282
      %v1326 = vadd.f32 %v362, %v1284
      %v1327 = vadd.f32 %v363, %v1287
      %v1328 = vadd.f32 %v364, %v1289
      %v1329 = vadd.f32 %v365, %v1292
      %v1330 = vadd.f32 %v366, %v1294
      %v1331 = vadd.f32 %v367, %v1297
      %v1332 = vadd.f32 %v368, %v1299
      %1333 = vst [vmem:[#allocation2] sm:$0xff] %v1301
      %1334 = vst [vmem:[#allocation2 + $0x8] sm:$0xff] %v1302
      %1335 = vst [vmem:[#allocation2 + $0x10] sm:$0xff] %v1303
      %1336 = vst [vmem:[#allocation2 + $0x18] sm:$0xff] %v1304
      %1337 = vst [vmem:[#allocation2 + $0x20] sm:$0xff] %v1305
      %1338 = vst [vmem:[#allocation2 + $0x28] sm:$0xff] %v1306
      %1339 = vst [vmem:[#allocation2 + $0x30] sm:$0xff] %v1307
      %1340 = vst [vmem:[#allocation2 + $0x38] sm:$0xff] %v1308
      %1341 = vst [vmem:[#allocation2 + $0x40] sm:$0xff] %v1309
      %1342 = vst [vmem:[#allocation2 + $0x48] sm:$0xff] %v1310
      %1343 = vst [vmem:[#allocation2 + $0x50] sm:$0xff] %v1311
      %1344 = vst [vmem:[#allocation2 + $0x58] sm:$0xff] %v1312
      %1345 = vst [vmem:[#allocation2 + $0x60] sm:$0xff] %v1313
      %1346 = vst [vmem:[#allocation2 + $0x68] sm:$0xff] %v1314
      %1347 = vst [vmem:[#allocation2 + $0x70] sm:$0xff] %v1315
      %1348 = vst [vmem:[#allocation2 + $0x78] sm:$0xff] %v1316
      %1349 = vst [vmem:[#allocation2 + $0x80] sm:$0xff] %v1317
      %1350 = vst [vmem:[#allocation2 + $0x88] sm:$0xff] %v1318
      %1351 = vst [vmem:[#allocation2 + $0x90] sm:$0xff] %v1319
      %1352 = vst [vmem:[#allocation2 + $0x98] sm:$0xff] %v1320
      %1353 = vst [vmem:[#allocation2 + $0xa0] sm:$0xff] %v1321
      %1354 = vst [vmem:[#allocation2 + $0xa8] sm:$0xff] %v1322
      %1355 = vst [vmem:[#allocation2 + $0xb0] sm:$0xff] %v1323
      %1356 = vst [vmem:[#allocation2 + $0xb8] sm:$0xff] %v1324
      %1357 = vst [vmem:[#allocation2 + $0xc0] sm:$0xff] %v1325
      %1358 = vst [vmem:[#allocation2 + $0xc8] sm:$0xff] %v1326
      %1359 = vst [vmem:[#allocation2 + $0xd0] sm:$0xff] %v1327
      %1360 = vst [vmem:[#allocation2 + $0xd8] sm:$0xff] %v1328
      %1361 = vst [vmem:[#allocation2 + $0xe0] sm:$0xff] %v1329
      %1362 = vst [vmem:[#allocation2 + $0xe8] sm:$0xff] %v1330
      %1363 = vst [vmem:[#allocation2 + $0xf0] sm:$0xff] %v1331
      %1364 = vst [vmem:[#allocation2 + $0xf8] sm:$0xff] %v1332
      // Predicated region
      $region41: #{dci_forward.5} parent=35 // pred_check
        %p1365 = pneg %p232
      $region42: #{dci_forward.5} parent=35 // pred_check_branch
        %1367 = sbr.rel (%p1365) target = $region44
      $region43: #{dci_forward.5} parent=35 // pred_region
        %v1368 = vld [vmem:[#allocation2] sm:$0xff]
        %v1369 = vld [vmem:[#allocation2 + $0x8] sm:$0xff]
        %v1370 = vld [vmem:[#allocation2 + $0x10] sm:$0xff]
        %v1371 = vld [vmem:[#allocation2 + $0x18] sm:$0xff]
        %v1372 = vld [vmem:[#allocation2 + $0x20] sm:$0xff]
        %v1373 = vld [vmem:[#allocation2 + $0x28] sm:$0xff]
        %v1374 = vld [vmem:[#allocation2 + $0x30] sm:$0xff]
        %v1375 = vld [vmem:[#allocation2 + $0x38] sm:$0xff]
        %v1376 = vld [vmem:[#allocation2 + $0x40] sm:$0xff]
        %v1377 = vld [vmem:[#allocation2 + $0x48] sm:$0xff]
        %v1378 = vld [vmem:[#allocation2 + $0x50] sm:$0xff]
        %v1379 = vld [vmem:[#allocation2 + $0x58] sm:$0xff]
        %v1380 = vld [vmem:[#allocation2 + $0x60] sm:$0xff]
        %v1381 = vld [vmem:[#allocation2 + $0x68] sm:$0xff]
        %v1382 = vld [vmem:[#allocation2 + $0x70] sm:$0xff]
        %v1383 = vld [vmem:[#allocation2 + $0x78] sm:$0xff]
        %v1384 = vld [vmem:[#allocation2 + $0x80] sm:$0xff]
        %v1385 = vld [vmem:[#allocation2 + $0x88] sm:$0xff]
        %v1386 = vld [vmem:[#allocation2 + $0x90] sm:$0xff]
        %v1387 = vld [vmem:[#allocation2 + $0x98] sm:$0xff]
        %v1388 = vld [vmem:[#allocation2 + $0xa0] sm:$0xff]
        %v1389 = vld [vmem:[#allocation2 + $0xa8] sm:$0xff]
        %v1390 = vld [vmem:[#allocation2 + $0xb0] sm:$0xff]
        %v1391 = vld [vmem:[#allocation2 + $0xb8] sm:$0xff]
        %v1392 = vld [vmem:[#allocation2 + $0xc0] sm:$0xff]
        %v1393 = vld [vmem:[#allocation2 + $0xc8] sm:$0xff]
        %v1394 = vld [vmem:[#allocation2 + $0xd0] sm:$0xff]
        %v1395 = vld [vmem:[#allocation2 + $0xd8] sm:$0xff]
        %v1396 = vld [vmem:[#allocation2 + $0xe0] sm:$0xff]
        %v1397 = vld [vmem:[#allocation2 + $0xe8] sm:$0xff]
        %v1398 = vld [vmem:[#allocation2 + $0xf0] sm:$0xff]
        %v1399 = vld [vmem:[#allocation2 + $0xf8] sm:$0xff]
        %v1400 = vpack.c.bf16 %v1369, %v1368
        %v1401 = vpack.c.bf16 %v1371, %v1370
        %v1402 = vpack.c.bf16 %v1373, %v1372
        %v1403 = vpack.c.bf16 %v1375, %v1374
        %v1404 = vpack.c.bf16 %v1377, %v1376
        %v1405 = vpack.c.bf16 %v1379, %v1378
        %v1406 = vpack.c.bf16 %v1381, %v1380
        %v1407 = vpack.c.bf16 %v1383, %v1382
        %v1408 = vpack.c.bf16 %v1385, %v1384
        %v1409 = vpack.c.bf16 %v1387, %v1386
        %v1410 = vpack.c.bf16 %v1389, %v1388
        %v1411 = vpack.c.bf16 %v1391, %v1390
        %v1412 = vpack.c.bf16 %v1393, %v1392
        %v1413 = vpack.c.bf16 %v1395, %v1394
        %v1414 = vpack.c.bf16 %v1397, %v1396
        %v1415 = vpack.c.bf16 %v1399, %v1398
        %v1416 = vld [vmem:[%s2] sm:$0xf]
        %v1417 = vld [vmem:[%s2 + $0x4] sm:$0xf]
        %v1418 = vld [vmem:[%s2 + $0x8] sm:$0xf]
        %v1419 = vld [vmem:[%s2 + $0xc] sm:$0xf]
        %v1420 = vld [vmem:[%s2 + $0x10] sm:$0xf]
        %v1421 = vld [vmem:[%s2 + $0x14] sm:$0xf]
        %v1422 = vld [vmem:[%s2 + $0x18] sm:$0xf]
        %v1423 = vld [vmem:[%s2 + $0x1c] sm:$0xf]
        %v1424 = vld [vmem:[%s2 + $0x20] sm:$0xf]
        %v1425 = vld [vmem:[%s2 + $0x24] sm:$0xf]
        %v1426 = vld [vmem:[%s2 + $0x28] sm:$0xf]
        %v1427 = vld [vmem:[%s2 + $0x2c] sm:$0xf]
        %v1428 = vld [vmem:[%s2 + $0x30] sm:$0xf]
        %v1429 = vld [vmem:[%s2 + $0x34] sm:$0xf]
        %v1430 = vld [vmem:[%s2 + $0x38] sm:$0xf]
        %v1431 = vld [vmem:[%s2 + $0x3c] sm:$0xf]
        %v1432 = vld [vmem:[%s3] sm:$0x1]
        %v1434 = vperm.slane %v1432, 0
        %v1452 = vunpack.c.l.b16 %v1416
        %v1453 = vunpack.c.l.b16 %v1417
        %v1454 = vunpack.c.l.b16 %v1418
        %v1455 = vunpack.c.l.b16 %v1419
        %v1456 = vunpack.c.l.b16 %v1420
        %v1457 = vunpack.c.l.b16 %v1421
        %v1458 = vunpack.c.l.b16 %v1422
        %v1459 = vunpack.c.l.b16 %v1423
        %v1460 = vunpack.c.l.b16 %v1424
        %v1461 = vunpack.c.l.b16 %v1425
        %v1462 = vunpack.c.l.b16 %v1426
        %v1463 = vunpack.c.l.b16 %v1427
        %v1464 = vunpack.c.l.b16 %v1428
        %v1465 = vunpack.c.l.b16 %v1429
        %v1466 = vunpack.c.l.b16 %v1430
        %v1467 = vunpack.c.l.b16 %v1431
        %v1468 = vpack.c.b16 %v1453, %v1452
        %v1469 = vpack.c.b16 %v1455, %v1454
        %v1470 = vpack.c.b16 %v1457, %v1456
        %v1471 = vpack.c.b16 %v1459, %v1458
        %v1472 = vpack.c.b16 %v1461, %v1460
        %v1473 = vpack.c.b16 %v1463, %v1462
        %v1474 = vpack.c.b16 %v1465, %v1464
        %v1475 = vpack.c.b16 %v1467, %v1466
        %1484 = vmatpush.bf16.msra.mxu0 %v1475
        %1485 = vmatpush.bf16.msra.mxu0 %v1474
        %1486 = vmatpush.bf16.msra.mxu0 %v1473
        %1487 = vmatpush.bf16.msra.mxu0 %v1472
        %1488 = vmatpush.bf16.msra.mxu0 %v1471
        %1489 = vmatpush.bf16.msra.mxu0 %v1470
        %1490 = vmatpush.bf16.msra.mxu0 %v1469
        %1491 = vmatpush.bf16.msra.mxu0 %v1468
        %1492 = vmatmul.bf16.gmra.mxu0 %v1400
        %v1493 = vpop.f32.mrf.mxu0
        %v1494 = vadd.f32 %v1434, %v1493
        %v1495 = vpop.f32.mrf.mxu0
        %v1496 = vadd.f32 %v1434, %v1495
        %1497 = vmatmul.bf16.gmra.mxu0 %v1401
        %v1498 = vpop.f32.mrf.mxu0
        %v1499 = vadd.f32 %v1434, %v1498
        %v1500 = vpop.f32.mrf.mxu0
        %v1501 = vadd.f32 %v1434, %v1500
        %1502 = vmatmul.bf16.gmra.mxu0 %v1402
        %v1503 = vpop.f32.mrf.mxu0
        %v1504 = vadd.f32 %v1434, %v1503
        %v1505 = vpop.f32.mrf.mxu0
        %v1506 = vadd.f32 %v1434, %v1505
        %1507 = vmatmul.bf16.gmra.mxu0 %v1403
        %v1508 = vpop.f32.mrf.mxu0
        %v1509 = vadd.f32 %v1434, %v1508
        %v1510 = vpop.f32.mrf.mxu0
        %v1511 = vadd.f32 %v1434, %v1510
        %1512 = vmatmul.bf16.gmra.mxu0 %v1404
        %v1513 = vpop.f32.mrf.mxu0
        %v1514 = vadd.f32 %v1434, %v1513
        %v1515 = vpop.f32.mrf.mxu0
        %v1516 = vadd.f32 %v1434, %v1515
        %1517 = vmatmul.bf16.gmra.mxu0 %v1405
        %v1518 = vpop.f32.mrf.mxu0
        %v1519 = vadd.f32 %v1434, %v1518
        %v1520 = vpop.f32.mrf.mxu0
        %v1521 = vadd.f32 %v1434, %v1520
        %1522 = vmatmul.bf16.gmra.mxu0 %v1406
        %v1523 = vpop.f32.mrf.mxu0
        %v1524 = vadd.f32 %v1434, %v1523
        %v1525 = vpop.f32.mrf.mxu0
        %v1526 = vadd.f32 %v1434, %v1525
        %1527 = vmatmul.bf16.gmra.mxu0 %v1407
        %v1528 = vpop.f32.mrf.mxu0
        %v1529 = vadd.f32 %v1434, %v1528
        %v1530 = vpop.f32.mrf.mxu0
        %v1531 = vadd.f32 %v1434, %v1530
        %1532 = vmatmul.bf16.gmra.mxu0 %v1408
        %v1533 = vpop.f32.mrf.mxu0
        %v1534 = vadd.f32 %v1434, %v1533
        %v1535 = vpop.f32.mrf.mxu0
        %v1536 = vadd.f32 %v1434, %v1535
        %1537 = vmatmul.bf16.gmra.mxu0 %v1409
        %v1538 = vpop.f32.mrf.mxu0
        %v1539 = vadd.f32 %v1434, %v1538
        %v1540 = vpop.f32.mrf.mxu0
        %v1541 = vadd.f32 %v1434, %v1540
        %1542 = vmatmul.bf16.gmra.mxu0 %v1410
        %v1543 = vpop.f32.mrf.mxu0
        %v1544 = vadd.f32 %v1434, %v1543
        %v1545 = vpop.f32.mrf.mxu0
        %v1546 = vadd.f32 %v1434, %v1545
        %1547 = vmatmul.bf16.gmra.mxu0 %v1411
        %v1548 = vpop.f32.mrf.mxu0
        %v1549 = vadd.f32 %v1434, %v1548
        %v1550 = vpop.f32.mrf.mxu0
        %v1551 = vadd.f32 %v1434, %v1550
        %1552 = vmatmul.bf16.gmra.mxu0 %v1412
        %v1553 = vpop.f32.mrf.mxu0
        %v1554 = vadd.f32 %v1434, %v1553
        %v1555 = vpop.f32.mrf.mxu0
        %v1556 = vadd.f32 %v1434, %v1555
        %1557 = vmatmul.bf16.gmra.mxu0 %v1413
        %v1558 = vpop.f32.mrf.mxu0
        %v1559 = vadd.f32 %v1434, %v1558
        %v1560 = vpop.f32.mrf.mxu0
        %v1561 = vadd.f32 %v1434, %v1560
        %1562 = vmatmul.bf16.gmra.mxu0 %v1414
        %v1563 = vpop.f32.mrf.mxu0
        %v1564 = vadd.f32 %v1434, %v1563
        %v1565 = vpop.f32.mrf.mxu0
        %v1566 = vadd.f32 %v1434, %v1565
        %1567 = vmatmul.bf16.gmra.mxu0 %v1415
        %v1568 = vpop.f32.mrf.mxu0
        %v1569 = vadd.f32 %v1434, %v1568
        %v1570 = vpop.f32.mrf.mxu0
        %v1571 = vadd.f32 %v1434, %v1570
        %1572 = vdwg.mxu0
        %v1573 = vmax.f32 %v1494, 0.0
        %v1574 = vmax.f32 %v1496, 0.0
        %v1575 = vmax.f32 %v1499, 0.0
        %v1576 = vmax.f32 %v1501, 0.0
        %v1577 = vmax.f32 %v1504, 0.0
        %v1578 = vmax.f32 %v1506, 0.0
        %v1579 = vmax.f32 %v1509, 0.0
        %v1580 = vmax.f32 %v1511, 0.0
        %v1581 = vmax.f32 %v1514, 0.0
        %v1582 = vmax.f32 %v1516, 0.0
        %v1583 = vmax.f32 %v1519, 0.0
        %v1584 = vmax.f32 %v1521, 0.0
        %v1585 = vmax.f32 %v1524, 0.0
        %v1586 = vmax.f32 %v1526, 0.0
        %v1587 = vmax.f32 %v1529, 0.0
        %v1588 = vmax.f32 %v1531, 0.0
        %v1589 = vmax.f32 %v1534, 0.0
        %v1590 = vmax.f32 %v1536, 0.0
        %v1591 = vmax.f32 %v1539, 0.0
        %v1592 = vmax.f32 %v1541, 0.0
        %v1593 = vmax.f32 %v1544, 0.0
        %v1594 = vmax.f32 %v1546, 0.0
        %v1595 = vmax.f32 %v1549, 0.0
        %v1596 = vmax.f32 %v1551, 0.0
        %v1597 = vmax.f32 %v1554, 0.0
        %v1598 = vmax.f32 %v1556, 0.0
        %v1599 = vmax.f32 %v1559, 0.0
        %v1600 = vmax.f32 %v1561, 0.0
        %v1601 = vmax.f32 %v1564, 0.0
        %v1602 = vmax.f32 %v1566, 0.0
        %v1603 = vmax.f32 %v1569, 0.0
        %v1604 = vmax.f32 %v1571, 0.0
        %v1605 = vpack.c.bf16 %v1573, %v1573
        %v1606 = vpack.c.bf16 %v1574, %v1574
        %v1607 = vpack.c.bf16 %v1575, %v1575
        %v1608 = vpack.c.bf16 %v1576, %v1576
        %v1609 = vpack.c.bf16 %v1577, %v1577
        %v1610 = vpack.c.bf16 %v1578, %v1578
        %v1611 = vpack.c.bf16 %v1579, %v1579
        %v1612 = vpack.c.bf16 %v1580, %v1580
        %v1613 = vpack.c.bf16 %v1581, %v1581
        %v1614 = vpack.c.bf16 %v1582, %v1582
        %v1615 = vpack.c.bf16 %v1583, %v1583
        %v1616 = vpack.c.bf16 %v1584, %v1584
        %v1617 = vpack.c.bf16 %v1585, %v1585
        %v1618 = vpack.c.bf16 %v1586, %v1586
        %v1619 = vpack.c.bf16 %v1587, %v1587
        %v1620 = vpack.c.bf16 %v1588, %v1588
        %v1621 = vpack.c.bf16 %v1589, %v1589
        %v1622 = vpack.c.bf16 %v1590, %v1590
        %v1623 = vpack.c.bf16 %v1591, %v1591
        %v1624 = vpack.c.bf16 %v1592, %v1592
        %v1625 = vpack.c.bf16 %v1593, %v1593
        %v1626 = vpack.c.bf16 %v1594, %v1594
        %v1627 = vpack.c.bf16 %v1595, %v1595
        %v1628 = vpack.c.bf16 %v1596, %v1596
        %v1629 = vpack.c.bf16 %v1597, %v1597
        %v1630 = vpack.c.bf16 %v1598, %v1598
        %v1631 = vpack.c.bf16 %v1599, %v1599
        %v1632 = vpack.c.bf16 %v1600, %v1600
        %v1633 = vpack.c.bf16 %v1601, %v1601
        %v1634 = vpack.c.bf16 %v1602, %v1602
        %v1635 = vpack.c.bf16 %v1603, %v1603
        %v1636 = vpack.c.bf16 %v1604, %v1604
        %1637 = vst [vmem:[%s230] sm:$0xf] %v1605
        %1638 = vst [vmem:[%s230 + $0x4] sm:$0xf] %v1606
        %1639 = vst [vmem:[%s230 + $0x8] sm:$0xf] %v1607
        %1640 = vst [vmem:[%s230 + $0xc] sm:$0xf] %v1608
        %1641 = vst [vmem:[%s230 + $0x10] sm:$0xf] %v1609
        %1642 = vst [vmem:[%s230 + $0x14] sm:$0xf] %v1610
        %1643 = vst [vmem:[%s230 + $0x18] sm:$0xf] %v1611
        %1644 = vst [vmem:[%s230 + $0x1c] sm:$0xf] %v1612
        %1645 = vst [vmem:[%s230 + $0x20] sm:$0xf] %v1613
        %1646 = vst [vmem:[%s230 + $0x24] sm:$0xf] %v1614
        %1647 = vst [vmem:[%s230 + $0x28] sm:$0xf] %v1615
        %1648 = vst [vmem:[%s230 + $0x2c] sm:$0xf] %v1616
        %1649 = vst [vmem:[%s230 + $0x30] sm:$0xf] %v1617
        %1650 = vst [vmem:[%s230 + $0x34] sm:$0xf] %v1618
        %1651 = vst [vmem:[%s230 + $0x38] sm:$0xf] %v1619
        %1652 = vst [vmem:[%s230 + $0x3c] sm:$0xf] %v1620
        %1653 = vst [vmem:[%s230 + $0x40] sm:$0xf] %v1621
        %1654 = vst [vmem:[%s230 + $0x44] sm:$0xf] %v1622
        %1655 = vst [vmem:[%s230 + $0x48] sm:$0xf] %v1623
        %1656 = vst [vmem:[%s230 + $0x4c] sm:$0xf] %v1624
        %1657 = vst [vmem:[%s230 + $0x50] sm:$0xf] %v1625
        %1658 = vst [vmem:[%s230 + $0x54] sm:$0xf] %v1626
        %1659 = vst [vmem:[%s230 + $0x58] sm:$0xf] %v1627
        %1660 = vst [vmem:[%s230 + $0x5c] sm:$0xf] %v1628
        %1661 = vst [vmem:[%s230 + $0x60] sm:$0xf] %v1629
        %1662 = vst [vmem:[%s230 + $0x64] sm:$0xf] %v1630
        %1663 = vst [vmem:[%s230 + $0x68] sm:$0xf] %v1631
        %1664 = vst [vmem:[%s230 + $0x6c] sm:$0xf] %v1632
        %1665 = vst [vmem:[%s230 + $0x70] sm:$0xf] %v1633
        %1666 = vst [vmem:[%s230 + $0x74] sm:$0xf] %v1634
        %1667 = vst [vmem:[%s230 + $0x78] sm:$0xf] %v1635
        %1668 = vst [vmem:[%s230 + $0x7c] sm:$0xf] %v1636
      $region44: #{dci_forward.5} parent=35 // pred_fallthru
        _
      %s1669 = smul.u32 32, %s19
      %p1670 = scmp.lt.s32.totalorder %s1669, 63
      %s1671 = scalar_select %p1670, %s1669, 63
      %s1672 = smul.addr %s1671, 4
      %s1673 = scalar_lea.vmem %s4, %s1672
      // Predicated region
      $region45: #{dci_forward.5} parent=35 // pred_check
        %p1674 = pneg %p136
      $region46: #{dci_forward.5} parent=35 // pred_check_branch
        %1676 = sbr.rel (%p1674) target = $region48
      $region47: #{dci_forward.5} parent=35 // pred_region
        %s1677 = smul.u32 32, %s19
      $region48: #{dci_forward.5} parent=35 // pred_fallthru
        _
    $region36: #{dci_forward.5} parent=5 // pred_fallthru
      _
    %p1678 = scmp.le.s32.totalorder 2, %s10
    // Predicated region
    $region49: #{dci_forward.5} parent=5 // pred_check
      %p1679 = pneg %p1678
    $region50: #{dci_forward.5} parent=5 // pred_check_branch
      %1681 = sbr.rel (%p1679) target = $region52
    $region51: #{dci_forward.5} parent=5 // pred_region
      %s1682 = ssub.s32 %s10, 2
      // Predicated region
      $region53: #{dci_forward.5} parent=51 // pred_check
        %p1683 = pneg %p142
      $region54: #{dci_forward.5} parent=51 // pred_check_branch
        %1685 = sbr.rel (%p1683) target = $region56
      $region55: #{dci_forward.5} parent=51 // pred_region
        %s1686 = smul.u32 32, %s21
        %p1687 = scmp.lt.s32.totalorder %s1686, 63
        %s1688 = scalar_select %p1687, %s1686, 63
        %s1689 = smul.addr %s1688, 4
        %s1690 = scalar_lea.vmem %s4, %s1689
      $region56: #{dci_forward.5} parent=51 // pred_fallthru
        _
    $region52: #{dci_forward.5} parent=5 // pred_fallthru
      _
  $region6: #{dci_forward.5} parent=0 // loop_footer
    %s14 = sadd.s32 1, %s10
  $region7: #{dci_forward.5} parent=0 // loop_footer_branch
    %9 = sbr.rel target = $region3
  $region8: #{dci_forward.5} parent=0 // loop_exit
    _

// kernel: dci_forward.7
$region0: #{dci_forward.7}
  #allocation0 [shape = 'u32[]', space=smem, size = 0x4, offset = 0x4, fixed_abs, tag = 'smem constant byte address 0x4 - core index']
  #allocation1 [shape = 'u32[72,128]{1,0:T(1,128)}', space=vmem, size = 0x9000, scoped, tag = 'internal scratch']
  #allocation2 [shape = 'f32[1,1]{1,0:T(1,128)}', space=vmem, size = 0x200, scoped, tag = 'scratch operand']
  %s0 = inlined_call_operand.vmem [shape: bf16[512,128], index: 0, kind: input, shape index: {}]
  %s1 = inlined_call_operand.vmem [shape: f32[1,64], index: 1, kind: input, shape index: {}]
  %s2 = inlined_call_operand.vmem [shape: f32[1,512], index: 2, kind: input, shape index: {}]
  %s3 = inlined_call_operand.hbm [shape: f32[1,1], index: 3, kind: output, shape index: {}]
  %s4 = sld [smem:[#allocation0]]
  $region30: #{dci_forward.7} parent=0
    _
  %s6 = ssub.s32 1, %s4
  %s7 = scalar_select 0, %s6, %s4
  $region1: #{dci_forward.7} parent=0
    #allocation3 [shape = 'u8[512]{0}', space=vmem, size = 0x400, scoped, tag = 'output window, operand 0, single buffered']
    #allocation4 [shape = 's32[1]{0}', space=sflag, size = 0x4, scoped, tag = 'scoped memory for dci_forward.7']
    %8 = vsyncpa [#allocation4], 0
    // Predicated region
    $region2: #{dci_forward.7} parent=1 // pred_check
      _
    $region3: #{dci_forward.7} parent=1 // pred_check_branch
      %10 = sbr.rel (0) target = $region5
    $region4: #{dci_forward.7} parent=1 // pred_region
      _
    $region5: #{dci_forward.7} parent=1 // pred_fallthru
      _
    // Predicated region
    $region6: #{dci_forward.7} parent=1 // pred_check
      _
    $region7: #{dci_forward.7} parent=1 // pred_check_branch
      %12 = sbr.rel (0) target = $region9
    $region8: #{dci_forward.7} parent=1 // pred_region
      _
    $region9: #{dci_forward.7} parent=1 // pred_fallthru
      _
    // Predicated region
    $region10: #{dci_forward.7} parent=1 // pred_check
      _
    $region11: #{dci_forward.7} parent=1 // pred_check_branch
      %14 = sbr.rel (0) target = $region13
    $region12: #{dci_forward.7} parent=1 // pred_region
      _
    $region13: #{dci_forward.7} parent=1 // pred_fallthru
      _
    %p15 = scmp.eq.s32.totalorder 0, 0
    // Predicated region
    $region14: #{dci_forward.7} parent=1 // pred_check
      %p16 = pneg %p15
    $region15: #{dci_forward.7} parent=1 // pred_check_branch
      %18 = sbr.rel (%p16) target = $region17
    $region16: #{dci_forward.7} parent=1 // pred_region
      %vm19 = vcmask 0
      %20 = vst.msk [vmem:[#allocation2] sm:$0x1] %vm19, 0.0
    $region17: #{dci_forward.7} parent=1 // pred_fallthru
      _
    %v21 = vld [vmem:[%s0] sm:$0xf]
    %v22 = vld [vmem:[%s0 + $0x4] sm:$0xf]
    %v23 = vld [vmem:[%s0 + $0x8] sm:$0xf]
    %v24 = vld [vmem:[%s0 + $0xc] sm:$0xf]
    %v25 = vld [vmem:[%s0 + $0x10] sm:$0xf]
    %v26 = vld [vmem:[%s0 + $0x14] sm:$0xf]
    %v27 = vld [vmem:[%s0 + $0x18] sm:$0xf]
    %v28 = vld [vmem:[%s0 + $0x1c] sm:$0xf]
    %v29 = vld [vmem:[%s0 + $0x20] sm:$0xf]
    %v30 = vld [vmem:[%s0 + $0x24] sm:$0xf]
    %v31 = vld [vmem:[%s0 + $0x28] sm:$0xf]
    %v32 = vld [vmem:[%s0 + $0x2c] sm:$0xf]
    %v33 = vld [vmem:[%s0 + $0x30] sm:$0xf]
    %v34 = vld [vmem:[%s0 + $0x34] sm:$0xf]
    %v35 = vld [vmem:[%s0 + $0x38] sm:$0xf]
    %v36 = vld [vmem:[%s0 + $0x3c] sm:$0xf]
    %v37 = vld [vmem:[%s0 + $0x40] sm:$0xf]
    %v38 = vld [vmem:[%s0 + $0x44] sm:$0xf]
    %v39 = vld [vmem:[%s0 + $0x48] sm:$0xf]
    %v40 = vld [vmem:[%s0 + $0x4c] sm:$0xf]
    %v41 = vld [vmem:[%s0 + $0x50] sm:$0xf]
    %v42 = vld [vmem:[%s0 + $0x54] sm:$0xf]
    %v43 = vld [vmem:[%s0 + $0x58] sm:$0xf]
    %v44 = vld [vmem:[%s0 + $0x5c] sm:$0xf]
    %v45 = vld [vmem:[%s0 + $0x60] sm:$0xf]
    %v46 = vld [vmem:[%s0 + $0x64] sm:$0xf]
    %v47 = vld [vmem:[%s0 + $0x68] sm:$0xf]
    %v48 = vld [vmem:[%s0 + $0x6c] sm:$0xf]
    %v49 = vld [vmem:[%s0 + $0x70] sm:$0xf]
    %v50 = vld [vmem:[%s0 + $0x74] sm:$0xf]
    %v51 = vld [vmem:[%s0 + $0x78] sm:$0xf]
    %v52 = vld [vmem:[%s0 + $0x7c] sm:$0xf]
    %v53 = vld [vmem:[%s0 + $0x80] sm:$0xf]
    %v54 = vld [vmem:[%s0 + $0x84] sm:$0xf]
    %v55 = vld [vmem:[%s0 + $0x88] sm:$0xf]
    %v56 = vld [vmem:[%s0 + $0x8c] sm:$0xf]
    %v57 = vld [vmem:[%s0 + $0x90] sm:$0xf]
    %v58 = vld [vmem:[%s0 + $0x94] sm:$0xf]
    %v59 = vld [vmem:[%s0 + $0x98] sm:$0xf]
    %v60 = vld [vmem:[%s0 + $0x9c] sm:$0xf]
    %v61 = vld [vmem:[%s0 + $0xa0] sm:$0xf]
    %v62 = vld [vmem:[%s0 + $0xa4] sm:$0xf]
    %v63 = vld [vmem:[%s0 + $0xa8] sm:$0xf]
    %v64 = vld [vmem:[%s0 + $0xac] sm:$0xf]
    %v65 = vld [vmem:[%s0 + $0xb0] sm:$0xf]
    %v66 = vld [vmem:[%s0 + $0xb4] sm:$0xf]
    %v67 = vld [vmem:[%s0 + $0xb8] sm:$0xf]
    %v68 = vld [vmem:[%s0 + $0xbc] sm:$0xf]
    %v69 = vld [vmem:[%s0 + $0xc0] sm:$0xf]
    %v70 = vld [vmem:[%s0 + $0xc4] sm:$0xf]
    %v71 = vld [vmem:[%s0 + $0xc8] sm:$0xf]
    %v72 = vld [vmem:[%s0 + $0xcc] sm:$0xf]
    %v73 = vld [vmem:[%s0 + $0xd0] sm:$0xf]
    %v74 = vld [vmem:[%s0 + $0xd4] sm:$0xf]
    %v75 = vld [vmem:[%s0 + $0xd8] sm:$0xf]
    %v76 = vld [vmem:[%s0 + $0xdc] sm:$0xf]
    %v77 = vld [vmem:[%s0 + $0xe0] sm:$0xf]
    %v78 = vld [vmem:[%s0 + $0xe4] sm:$0xf]
    %v79 = vld [vmem:[%s0 + $0xe8] sm:$0xf]
    %v80 = vld [vmem:[%s0 + $0xec] sm:$0xf]
    %v81 = vld [vmem:[%s0 + $0xf0] sm:$0xf]
    %v82 = vld [vmem:[%s0 + $0xf4] sm:$0xf]
    %v83 = vld [vmem:[%s0 + $0xf8] sm:$0xf]
    %v84 = vld [vmem:[%s0 + $0xfc] sm:$0xf]
    %v85 = vunpack.c.l.bf16 %v21
    %v86 = vunpack.c.l.bf16 %v22
    %v87 = vunpack.c.l.bf16 %v23
    %v88 = vunpack.c.l.bf16 %v24
    %v89 = vunpack.c.l.bf16 %v25
    %v90 = vunpack.c.l.bf16 %v26
    %v91 = vunpack.c.l.bf16 %v27
    %v92 = vunpack.c.l.bf16 %v28
    %v93 = vunpack.c.l.bf16 %v29
    %v94 = vunpack.c.l.bf16 %v30
    %v95 = vunpack.c.l.bf16 %v31
    %v96 = vunpack.c.l.bf16 %v32
    %v97 = vunpack.c.l.bf16 %v33
    %v98 = vunpack.c.l.bf16 %v34
    %v99 = vunpack.c.l.bf16 %v35
    %v100 = vunpack.c.l.bf16 %v36
    %v101 = vunpack.c.l.bf16 %v37
    %v102 = vunpack.c.l.bf16 %v38
    %v103 = vunpack.c.l.bf16 %v39
    %v104 = vunpack.c.l.bf16 %v40
    %v105 = vunpack.c.l.bf16 %v41
    %v106 = vunpack.c.l.bf16 %v42
    %v107 = vunpack.c.l.bf16 %v43
    %v108 = vunpack.c.l.bf16 %v44
    %v109 = vunpack.c.l.bf16 %v45
    %v110 = vunpack.c.l.bf16 %v46
    %v111 = vunpack.c.l.bf16 %v47
    %v112 = vunpack.c.l.bf16 %v48
    %v113 = vunpack.c.l.bf16 %v49
    %v114 = vunpack.c.l.bf16 %v50
    %v115 = vunpack.c.l.bf16 %v51
    %v116 = vunpack.c.l.bf16 %v52
    %v117 = vunpack.c.l.bf16 %v53
    %v118 = vunpack.c.l.bf16 %v54
    %v119 = vunpack.c.l.bf16 %v55
    %v120 = vunpack.c.l.bf16 %v56
    %v121 = vunpack.c.l.bf16 %v57
    %v122 = vunpack.c.l.bf16 %v58
    %v123 = vunpack.c.l.bf16 %v59
    %v124 = vunpack.c.l.bf16 %v60
    %v125 = vunpack.c.l.bf16 %v61
    %v126 = vunpack.c.l.bf16 %v62
    %v127 = vunpack.c.l.bf16 %v63
    %v128 = vunpack.c.l.bf16 %v64
    %v129 = vunpack.c.l.bf16 %v65
    %v130 = vunpack.c.l.bf16 %v66
    %v131 = vunpack.c.l.bf16 %v67
    %v132 = vunpack.c.l.bf16 %v68
    %v133 = vunpack.c.l.bf16 %v69
    %v134 = vunpack.c.l.bf16 %v70
    %v135 = vunpack.c.l.bf16 %v71
    %v136 = vunpack.c.l.bf16 %v72
    %v137 = vunpack.c.l.bf16 %v73
    %v138 = vunpack.c.l.bf16 %v74
    %v139 = vunpack.c.l.bf16 %v75
    %v140 = vunpack.c.l.bf16 %v76
    %v141 = vunpack.c.l.bf16 %v77
    %v142 = vunpack.c.l.bf16 %v78
    %v143 = vunpack.c.l.bf16 %v79
    %v144 = vunpack.c.l.bf16 %v80
    %v145 = vunpack.c.l.bf16 %v81
    %v146 = vunpack.c.l.bf16 %v82
    %v147 = vunpack.c.l.bf16 %v83
    %v148 = vunpack.c.l.bf16 %v84
    %v149 = vld [vmem:[%s1] sm:$0x1]
    %v151 = vperm.slane %v149, 0
    %v153 = vmul.f32 %v85, %v151
    %v154 = vmul.f32 %v86, %v151
    %v155 = vmul.f32 %v87, %v151
    %v156 = vmul.f32 %v88, %v151
    %v157 = vmul.f32 %v89, %v151
    %v158 = vmul.f32 %v90, %v151
    %v159 = vmul.f32 %v91, %v151
    %v160 = vmul.f32 %v92, %v151
    %v161 = vmul.f32 %v93, %v151
    %v162 = vmul.f32 %v94, %v151
    %v163 = vmul.f32 %v95, %v151
    %v164 = vmul.f32 %v96, %v151
    %v165 = vmul.f32 %v97, %v151
    %v166 = vmul.f32 %v98, %v151
    %v167 = vmul.f32 %v99, %v151
    %v168 = vmul.f32 %v100, %v151
    %v169 = vmul.f32 %v101, %v151
    %v170 = vmul.f32 %v102, %v151
    %v171 = vmul.f32 %v103, %v151
    %v172 = vmul.f32 %v104, %v151
    %v173 = vmul.f32 %v105, %v151
    %v174 = vmul.f32 %v106, %v151
    %v175 = vmul.f32 %v107, %v151
    %v176 = vmul.f32 %v108, %v151
    %v177 = vmul.f32 %v109, %v151
    %v178 = vmul.f32 %v110, %v151
    %v179 = vmul.f32 %v111, %v151
    %v180 = vmul.f32 %v112, %v151
    %v181 = vmul.f32 %v113, %v151
    %v182 = vmul.f32 %v114, %v151
    %v183 = vmul.f32 %v115, %v151
    %v184 = vmul.f32 %v116, %v151
    %v185 = vmul.f32 %v117, %v151
    %v186 = vmul.f32 %v118, %v151
    %v187 = vmul.f32 %v119, %v151
    %v188 = vmul.f32 %v120, %v151
    %v189 = vmul.f32 %v121, %v151
    %v190 = vmul.f32 %v122, %v151
    %v191 = vmul.f32 %v123, %v151
    %v192 = vmul.f32 %v124, %v151
    %v193 = vmul.f32 %v125, %v151
    %v194 = vmul.f32 %v126, %v151
    %v195 = vmul.f32 %v127, %v151
    %v196 = vmul.f32 %v128, %v151
    %v197 = vmul.f32 %v129, %v151
    %v198 = vmul.f32 %v130, %v151
    %v199 = vmul.f32 %v131, %v151
    %v200 = vmul.f32 %v132, %v151
    %v201 = vmul.f32 %v133, %v151
    %v202 = vmul.f32 %v134, %v151
    %v203 = vmul.f32 %v135, %v151
    %v204 = vmul.f32 %v136, %v151
    %v205 = vmul.f32 %v137, %v151
    %v206 = vmul.f32 %v138, %v151
    %v207 = vmul.f32 %v139, %v151
    %v208 = vmul.f32 %v140, %v151
    %v209 = vmul.f32 %v141, %v151
    %v210 = vmul.f32 %v142, %v151
    %v211 = vmul.f32 %v143, %v151
    %v212 = vmul.f32 %v144, %v151
    %v213 = vmul.f32 %v145, %v151
    %v214 = vmul.f32 %v146, %v151
    %v215 = vmul.f32 %v147, %v151
    %v216 = vmul.f32 %v148, %v151
    %vm217 = vcmask 523264
    %v218 = vsel %vm217, %v153, 0.0
    %219 = vadd.xlane.f32.xlu0 %v218
    %v220 = vpop.xlane.xlu0 %219
    %v221 = vsel %vm217, %v154, 0.0
    %222 = vadd.xlane.f32.xlu0 %v221
    %v223 = vpop.xlane.xlu0 %222
    %v224 = vsel %vm217, %v155, 0.0
    %225 = vadd.xlane.f32.xlu0 %v224
    %v226 = vpop.xlane.xlu0 %225
    %v227 = vsel %vm217, %v156, 0.0
    %228 = vadd.xlane.f32.xlu0 %v227
    %v229 = vpop.xlane.xlu0 %228
    %v230 = vsel %vm217, %v157, 0.0
    %231 = vadd.xlane.f32.xlu0 %v230
    %v232 = vpop.xlane.xlu0 %231
    %v233 = vsel %vm217, %v158, 0.0
    %234 = vadd.xlane.f32.xlu0 %v233
    %v235 = vpop.xlane.xlu0 %234
    %v236 = vsel %vm217, %v159, 0.0
    %237 = vadd.xlane.f32.xlu0 %v236
    %v238 = vpop.xlane.xlu0 %237
    %v239 = vsel %vm217, %v160, 0.0
    %240 = vadd.xlane.f32.xlu0 %v239
    %v241 = vpop.xlane.xlu0 %240
    %v242 = vsel %vm217, %v161, 0.0
    %243 = vadd.xlane.f32.xlu0 %v242
    %v244 = vpop.xlane.xlu0 %243
    %v245 = vsel %vm217, %v162, 0.0
    %246 = vadd.xlane.f32.xlu0 %v245
    %v247 = vpop.xlane.xlu0 %246
    %v248 = vsel %vm217, %v163, 0.0
    %249 = vadd.xlane.f32.xlu0 %v248
    %v250 = vpop.xlane.xlu0 %249
    %v251 = vsel %vm217, %v164, 0.0
    %252 = vadd.xlane.f32.xlu0 %v251
    %v253 = vpop.xlane.xlu0 %252
    %v254 = vsel %vm217, %v165, 0.0
    %255 = vadd.xlane.f32.xlu0 %v254
    %v256 = vpop.xlane.xlu0 %255
    %v257 = vsel %vm217, %v166, 0.0
    %258 = vadd.xlane.f32.xlu0 %v257
    %v259 = vpop.xlane.xlu0 %258
    %v260 = vsel %vm217, %v167, 0.0
    %261 = vadd.xlane.f32.xlu0 %v260
    %v262 = vpop.xlane.xlu0 %261
    %v263 = vsel %vm217, %v168, 0.0
    %264 = vadd.xlane.f32.xlu0 %v263
    %v265 = vpop.xlane.xlu0 %264
    %v266 = vsel %vm217, %v169, 0.0
    %267 = vadd.xlane.f32.xlu0 %v266
    %v268 = vpop.xlane.xlu0 %267
    %v269 = vsel %vm217, %v170, 0.0
    %270 = vadd.xlane.f32.xlu0 %v269
    %v271 = vpop.xlane.xlu0 %270
    %v272 = vsel %vm217, %v171, 0.0
    %273 = vadd.xlane.f32.xlu0 %v272
    %v274 = vpop.xlane.xlu0 %273
    %v275 = vsel %vm217, %v172, 0.0
    %276 = vadd.xlane.f32.xlu0 %v275
    %v277 = vpop.xlane.xlu0 %276
    %v278 = vsel %vm217, %v173, 0.0
    %279 = vadd.xlane.f32.xlu0 %v278
    %v280 = vpop.xlane.xlu0 %279
    %v281 = vsel %vm217, %v174, 0.0
    %282 = vadd.xlane.f32.xlu0 %v281
    %v283 = vpop.xlane.xlu0 %282
    %v284 = vsel %vm217, %v175, 0.0
    %285 = vadd.xlane.f32.xlu0 %v284
    %v286 = vpop.xlane.xlu0 %285
    %v287 = vsel %vm217, %v176, 0.0
    %288 = vadd.xlane.f32.xlu0 %v287
    %v289 = vpop.xlane.xlu0 %288
    %v290 = vsel %vm217, %v177, 0.0
    %291 = vadd.xlane.f32.xlu0 %v290
    %v292 = vpop.xlane.xlu0 %291
    %v293 = vsel %vm217, %v178, 0.0
    %294 = vadd.xlane.f32.xlu0 %v293
    %v295 = vpop.xlane.xlu0 %294
    %v296 = vsel %vm217, %v179, 0.0
    %297 = vadd.xlane.f32.xlu0 %v296
    %v298 = vpop.xlane.xlu0 %297
    %v299 = vsel %vm217, %v180, 0.0
    %300 = vadd.xlane.f32.xlu0 %v299
    %v301 = vpop.xlane.xlu0 %300
    %v302 = vsel %vm217, %v181, 0.0
    %303 = vadd.xlane.f32.xlu0 %v302
    %v304 = vpop.xlane.xlu0 %303
    %v305 = vsel %vm217, %v182, 0.0
    %306 = vadd.xlane.f32.xlu0 %v305
    %v307 = vpop.xlane.xlu0 %306
    %v308 = vsel %vm217, %v183, 0.0
    %309 = vadd.xlane.f32.xlu0 %v308
    %v310 = vpop.xlane.xlu0 %309
    %v311 = vsel %vm217, %v184, 0.0
    %312 = vadd.xlane.f32.xlu0 %v311
    %v313 = vpop.xlane.xlu0 %312
    %v314 = vsel %vm217, %v185, 0.0
    %315 = vadd.xlane.f32.xlu0 %v314
    %v316 = vpop.xlane.xlu0 %315
    %v317 = vsel %vm217, %v186, 0.0
    %318 = vadd.xlane.f32.xlu0 %v317
    %v319 = vpop.xlane.xlu0 %318
    %v320 = vsel %vm217, %v187, 0.0
    %321 = vadd.xlane.f32.xlu0 %v320
    %v322 = vpop.xlane.xlu0 %321
    %v323 = vsel %vm217, %v188, 0.0
    %324 = vadd.xlane.f32.xlu0 %v323
    %v325 = vpop.xlane.xlu0 %324
    %v326 = vsel %vm217, %v189, 0.0
    %327 = vadd.xlane.f32.xlu0 %v326
    %v328 = vpop.xlane.xlu0 %327
    %v329 = vsel %vm217, %v190, 0.0
    %330 = vadd.xlane.f32.xlu0 %v329
    %v331 = vpop.xlane.xlu0 %330
    %v332 = vsel %vm217, %v191, 0.0
    %333 = vadd.xlane.f32.xlu0 %v332
    %v334 = vpop.xlane.xlu0 %333
    %v335 = vsel %vm217, %v192, 0.0
    %336 = vadd.xlane.f32.xlu0 %v335
    %v337 = vpop.xlane.xlu0 %336
    %v338 = vsel %vm217, %v193, 0.0
    %339 = vadd.xlane.f32.xlu0 %v338
    %v340 = vpop.xlane.xlu0 %339
    %v341 = vsel %vm217, %v194, 0.0
    %342 = vadd.xlane.f32.xlu0 %v341
    %v343 = vpop.xlane.xlu0 %342
    %v344 = vsel %vm217, %v195, 0.0
    %345 = vadd.xlane.f32.xlu0 %v344
    %v346 = vpop.xlane.xlu0 %345
    %v347 = vsel %vm217, %v196, 0.0
    %348 = vadd.xlane.f32.xlu0 %v347
    %v349 = vpop.xlane.xlu0 %348
    %v350 = vsel %vm217, %v197, 0.0
    %351 = vadd.xlane.f32.xlu0 %v350
    %v352 = vpop.xlane.xlu0 %351
    %v353 = vsel %vm217, %v198, 0.0
    %354 = vadd.xlane.f32.xlu0 %v353
    %v355 = vpop.xlane.xlu0 %354
    %v356 = vsel %vm217, %v199, 0.0
    %357 = vadd.xlane.f32.xlu0 %v356
    %v358 = vpop.xlane.xlu0 %357
    %v359 = vsel %vm217, %v200, 0.0
    %360 = vadd.xlane.f32.xlu0 %v359
    %v361 = vpop.xlane.xlu0 %360
    %v362 = vsel %vm217, %v201, 0.0
    %363 = vadd.xlane.f32.xlu0 %v362
    %v364 = vpop.xlane.xlu0 %363
    %v365 = vsel %vm217, %v202, 0.0
    %366 = vadd.xlane.f32.xlu0 %v365
    %v367 = vpop.xlane.xlu0 %366
    %v368 = vsel %vm217, %v203, 0.0
    %369 = vadd.xlane.f32.xlu0 %v368
    %v370 = vpop.xlane.xlu0 %369
    %v371 = vsel %vm217, %v204, 0.0
    %372 = vadd.xlane.f32.xlu0 %v371
    %v373 = vpop.xlane.xlu0 %372
    %v374 = vsel %vm217, %v205, 0.0
    %375 = vadd.xlane.f32.xlu0 %v374
    %v376 = vpop.xlane.xlu0 %375
    %v377 = vsel %vm217, %v206, 0.0
    %378 = vadd.xlane.f32.xlu0 %v377
    %v379 = vpop.xlane.xlu0 %378
    %v380 = vsel %vm217, %v207, 0.0
    %381 = vadd.xlane.f32.xlu0 %v380
    %v382 = vpop.xlane.xlu0 %381
    %v383 = vsel %vm217, %v208, 0.0
    %384 = vadd.xlane.f32.xlu0 %v383
    %v385 = vpop.xlane.xlu0 %384
    %v386 = vsel %vm217, %v209, 0.0
    %387 = vadd.xlane.f32.xlu0 %v386
    %v388 = vpop.xlane.xlu0 %387
    %v389 = vsel %vm217, %v210, 0.0
    %390 = vadd.xlane.f32.xlu0 %v389
    %v391 = vpop.xlane.xlu0 %390
    %v392 = vsel %vm217, %v211, 0.0
    %393 = vadd.xlane.f32.xlu0 %v392
    %v394 = vpop.xlane.xlu0 %393
    %v395 = vsel %vm217, %v212, 0.0
    %396 = vadd.xlane.f32.xlu0 %v395
    %v397 = vpop.xlane.xlu0 %396
    %v398 = vsel %vm217, %v213, 0.0
    %399 = vadd.xlane.f32.xlu0 %v398
    %v400 = vpop.xlane.xlu0 %399
    %v401 = vsel %vm217, %v214, 0.0
    %402 = vadd.xlane.f32.xlu0 %v401
    %v403 = vpop.xlane.xlu0 %402
    %v404 = vsel %vm217, %v215, 0.0
    %405 = vadd.xlane.f32.xlu0 %v404
    %v406 = vpop.xlane.xlu0 %405
    %v407 = vsel %vm217, %v216, 0.0
    %408 = vadd.xlane.f32.xlu0 %v407
    %v409 = vpop.xlane.xlu0 %408
    %410 = vrot.lane.b32.xlu0 %v151, 64
    %v411 = vpop.permute.xlu0 %410
    %v413 = vmul.f32 %v85, %v411
    %v414 = vmul.f32 %v86, %v411
    %v415 = vmul.f32 %v87, %v411
    %v416 = vmul.f32 %v88, %v411
    %v417 = vmul.f32 %v89, %v411
    %v418 = vmul.f32 %v90, %v411
    %v419 = vmul.f32 %v91, %v411
    %v420 = vmul.f32 %v92, %v411
    %v421 = vmul.f32 %v93, %v411
    %v422 = vmul.f32 %v94, %v411
    %v423 = vmul.f32 %v95, %v411
    %v424 = vmul.f32 %v96, %v411
    %v425 = vmul.f32 %v97, %v411
    %v426 = vmul.f32 %v98, %v411
    %v427 = vmul.f32 %v99, %v411
    %v428 = vmul.f32 %v100, %v411
    %v429 = vmul.f32 %v101, %v411
    %v430 = vmul.f32 %v102, %v411
    %v431 = vmul.f32 %v103, %v411
    %v432 = vmul.f32 %v104, %v411
    %v433 = vmul.f32 %v105, %v411
    %v434 = vmul.f32 %v106, %v411
    %v435 = vmul.f32 %v107, %v411
    %v436 = vmul.f32 %v108, %v411
    %v437 = vmul.f32 %v109, %v411
    %v438 = vmul.f32 %v110, %v411
    %v439 = vmul.f32 %v111, %v411
    %v440 = vmul.f32 %v112, %v411
    %v441 = vmul.f32 %v113, %v411
    %v442 = vmul.f32 %v114, %v411
    %v443 = vmul.f32 %v115, %v411
    %v444 = vmul.f32 %v116, %v411
    %v445 = vmul.f32 %v117, %v411
    %v446 = vmul.f32 %v118, %v411
    %v447 = vmul.f32 %v119, %v411
    %v448 = vmul.f32 %v120, %v411
    %v449 = vmul.f32 %v121, %v411
    %v450 = vmul.f32 %v122, %v411
    %v451 = vmul.f32 %v123, %v411
    %v452 = vmul.f32 %v124, %v411
    %v453 = vmul.f32 %v125, %v411
    %v454 = vmul.f32 %v126, %v411
    %v455 = vmul.f32 %v127, %v411
    %v456 = vmul.f32 %v128, %v411
    %v457 = vmul.f32 %v129, %v411
    %v458 = vmul.f32 %v130, %v411
    %v459 = vmul.f32 %v131, %v411
    %v460 = vmul.f32 %v132, %v411
    %v461 = vmul.f32 %v133, %v411
    %v462 = vmul.f32 %v134, %v411
    %v463 = vmul.f32 %v135, %v411
    %v464 = vmul.f32 %v136, %v411
    %v465 = vmul.f32 %v137, %v411
    %v466 = vmul.f32 %v138, %v411
    %v467 = vmul.f32 %v139, %v411
    %v468 = vmul.f32 %v140, %v411
    %v469 = vmul.f32 %v141, %v411
    %v470 = vmul.f32 %v142, %v411
    %v471 = vmul.f32 %v143, %v411
    %v472 = vmul.f32 %v144, %v411
    %v473 = vmul.f32 %v145, %v411
    %v474 = vmul.f32 %v146, %v411
    %v475 = vmul.f32 %v147, %v411
    %v476 = vmul.f32 %v148, %v411
    %541 = vrot.lane.b32.xlu0 %v413, 64
    %v542 = vpop.permute.xlu0 %541
    %543 = vrot.lane.b32.xlu0 %v414, 64
    %v544 = vpop.permute.xlu0 %543
    %545 = vrot.lane.b32.xlu0 %v415, 64
    %v546 = vpop.permute.xlu0 %545
    %547 = vrot.lane.b32.xlu0 %v416, 64
    %v548 = vpop.permute.xlu0 %547
    %549 = vrot.lane.b32.xlu0 %v417, 64
    %v550 = vpop.permute.xlu0 %549
    %551 = vrot.lane.b32.xlu0 %v418, 64
    %v552 = vpop.permute.xlu0 %551
    %553 = vrot.lane.b32.xlu0 %v419, 64
    %v554 = vpop.permute.xlu0 %553
    %555 = vrot.lane.b32.xlu0 %v420, 64
    %v556 = vpop.permute.xlu0 %555
    %557 = vrot.lane.b32.xlu0 %v421, 64
    %v558 = vpop.permute.xlu0 %557
    %559 = vrot.lane.b32.xlu0 %v422, 64
    %v560 = vpop.permute.xlu0 %559
    %561 = vrot.lane.b32.xlu0 %v423, 64
    %v562 = vpop.permute.xlu0 %561
    %563 = vrot.lane.b32.xlu0 %v424, 64
    %v564 = vpop.permute.xlu0 %563
    %565 = vrot.lane.b32.xlu0 %v425, 64
    %v566 = vpop.permute.xlu0 %565
    %567 = vrot.lane.b32.xlu0 %v426, 64
    %v568 = vpop.permute.xlu0 %567
    %569 = vrot.lane.b32.xlu0 %v427, 64
    %v570 = vpop.permute.xlu0 %569
    %571 = vrot.lane.b32.xlu0 %v428, 64
    %v572 = vpop.permute.xlu0 %571
    %573 = vrot.lane.b32.xlu0 %v429, 64
    %v574 = vpop.permute.xlu0 %573
    %575 = vrot.lane.b32.xlu0 %v430, 64
    %v576 = vpop.permute.xlu0 %575
    %577 = vrot.lane.b32.xlu0 %v431, 64
    %v578 = vpop.permute.xlu0 %577
    %579 = vrot.lane.b32.xlu0 %v432, 64
    %v580 = vpop.permute.xlu0 %579
    %581 = vrot.lane.b32.xlu0 %v433, 64
    %v582 = vpop.permute.xlu0 %581
    %583 = vrot.lane.b32.xlu0 %v434, 64
    %v584 = vpop.permute.xlu0 %583
    %585 = vrot.lane.b32.xlu0 %v435, 64
    %v586 = vpop.permute.xlu0 %585
    %587 = vrot.lane.b32.xlu0 %v436, 64
    %v588 = vpop.permute.xlu0 %587
    %589 = vrot.lane.b32.xlu0 %v437, 64
    %v590 = vpop.permute.xlu0 %589
    %591 = vrot.lane.b32.xlu0 %v438, 64
    %v592 = vpop.permute.xlu0 %591
    %593 = vrot.lane.b32.xlu0 %v439, 64
    %v594 = vpop.permute.xlu0 %593
    %595 = vrot.lane.b32.xlu0 %v440, 64
    %v596 = vpop.permute.xlu0 %595
    %597 = vrot.lane.b32.xlu0 %v441, 64
    %v598 = vpop.permute.xlu0 %597
    %599 = vrot.lane.b32.xlu0 %v442, 64
    %v600 = vpop.permute.xlu0 %599
    %601 = vrot.lane.b32.xlu0 %v443, 64
    %v602 = vpop.permute.xlu0 %601
    %603 = vrot.lane.b32.xlu0 %v444, 64
    %v604 = vpop.permute.xlu0 %603
    %605 = vrot.lane.b32.xlu0 %v445, 64
    %v606 = vpop.permute.xlu0 %605
    %607 = vrot.lane.b32.xlu0 %v446, 64
    %v608 = vpop.permute.xlu0 %607
    %609 = vrot.lane.b32.xlu0 %v447, 64
    %v610 = vpop.permute.xlu0 %609
    %611 = vrot.lane.b32.xlu0 %v448, 64
    %v612 = vpop.permute.xlu0 %611
    %613 = vrot.lane.b32.xlu0 %v449, 64
    %v614 = vpop.permute.xlu0 %613
    %615 = vrot.lane.b32.xlu0 %v450, 64
    %v616 = vpop.permute.xlu0 %615
    %617 = vrot.lane.b32.xlu0 %v451, 64
    %v618 = vpop.permute.xlu0 %617
    %619 = vrot.lane.b32.xlu0 %v452, 64
    %v620 = vpop.permute.xlu0 %619
    %621 = vrot.lane.b32.xlu0 %v453, 64
    %v622 = vpop.permute.xlu0 %621
    %623 = vrot.lane.b32.xlu0 %v454, 64
    %v624 = vpop.permute.xlu0 %623
    %625 = vrot.lane.b32.xlu0 %v455, 64
    %v626 = vpop.permute.xlu0 %625
    %627 = vrot.lane.b32.xlu0 %v456, 64
    %v628 = vpop.permute.xlu0 %627
    %629 = vrot.lane.b32.xlu0 %v457, 64
    %v630 = vpop.permute.xlu0 %629
    %631 = vrot.lane.b32.xlu0 %v458, 64
    %v632 = vpop.permute.xlu0 %631
    %633 = vrot.lane.b32.xlu0 %v459, 64
    %v634 = vpop.permute.xlu0 %633
    %635 = vrot.lane.b32.xlu0 %v460, 64
    %v636 = vpop.permute.xlu0 %635
    %637 = vrot.lane.b32.xlu0 %v461, 64
    %v638 = vpop.permute.xlu0 %637
    %639 = vrot.lane.b32.xlu0 %v462, 64
    %v640 = vpop.permute.xlu0 %639
    %641 = vrot.lane.b32.xlu0 %v463, 64
    %v642 = vpop.permute.xlu0 %641
    %643 = vrot.lane.b32.xlu0 %v464, 64
    %v644 = vpop.permute.xlu0 %643
    %645 = vrot.lane.b32.xlu0 %v465, 64
    %v646 = vpop.permute.xlu0 %645
    %647 = vrot.lane.b32.xlu0 %v466, 64
    %v648 = vpop.permute.xlu0 %647
    %649 = vrot.lane.b32.xlu0 %v467, 64
    %v650 = vpop.permute.xlu0 %649
    %651 = vrot.lane.b32.xlu0 %v468, 64
    %v652 = vpop.permute.xlu0 %651
    %653 = vrot.lane.b32.xlu0 %v469, 64
    %v654 = vpop.permute.xlu0 %653
    %655 = vrot.lane.b32.xlu0 %v470, 64
    %v656 = vpop.permute.xlu0 %655
    %657 = vrot.lane.b32.xlu0 %v471, 64
    %v658 = vpop.permute.xlu0 %657
    %659 = vrot.lane.b32.xlu0 %v472, 64
    %v660 = vpop.permute.xlu0 %659
    %661 = vrot.lane.b32.xlu0 %v473, 64
    %v662 = vpop.permute.xlu0 %661
    %663 = vrot.lane.b32.xlu0 %v474, 64
    %v664 = vpop.permute.xlu0 %663
    %665 = vrot.lane.b32.xlu0 %v475, 64
    %v666 = vpop.permute.xlu0 %665
    %667 = vrot.lane.b32.xlu0 %v476, 64
    %v668 = vpop.permute.xlu0 %667
    %v733 = vsel %vm217, %v542, 0.0
    %734 = vadd.xlane.f32.xlu0 %v733
    %v735 = vpop.xlane.xlu0 %734
    %v736 = vsel %vm217, %v544, 0.0
    %737 = vadd.xlane.f32.xlu0 %v736
    %v738 = vpop.xlane.xlu0 %737
    %v739 = vsel %vm217, %v546, 0.0
    %740 = vadd.xlane.f32.xlu0 %v739
    %v741 = vpop.xlane.xlu0 %740
    %v742 = vsel %vm217, %v548, 0.0
    %743 = vadd.xlane.f32.xlu0 %v742
    %v744 = vpop.xlane.xlu0 %743
    %v745 = vsel %vm217, %v550, 0.0
    %746 = vadd.xlane.f32.xlu0 %v745
    %v747 = vpop.xlane.xlu0 %746
    %v748 = vsel %vm217, %v552, 0.0
    %749 = vadd.xlane.f32.xlu0 %v748
    %v750 = vpop.xlane.xlu0 %749
    %v751 = vsel %vm217, %v554, 0.0
    %752 = vadd.xlane.f32.xlu0 %v751
    %v753 = vpop.xlane.xlu0 %752
    %v754 = vsel %vm217, %v556, 0.0
    %755 = vadd.xlane.f32.xlu0 %v754
    %v756 = vpop.xlane.xlu0 %755
    %v757 = vsel %vm217, %v558, 0.0
    %758 = vadd.xlane.f32.xlu0 %v757
    %v759 = vpop.xlane.xlu0 %758
    %v760 = vsel %vm217, %v560, 0.0
    %761 = vadd.xlane.f32.xlu0 %v760
    %v762 = vpop.xlane.xlu0 %761
    %v763 = vsel %vm217, %v562, 0.0
    %764 = vadd.xlane.f32.xlu0 %v763
    %v765 = vpop.xlane.xlu0 %764
    %v766 = vsel %vm217, %v564, 0.0
    %767 = vadd.xlane.f32.xlu0 %v766
    %v768 = vpop.xlane.xlu0 %767
    %v769 = vsel %vm217, %v566, 0.0
    %770 = vadd.xlane.f32.xlu0 %v769
    %v771 = vpop.xlane.xlu0 %770
    %v772 = vsel %vm217, %v568, 0.0
    %773 = vadd.xlane.f32.xlu0 %v772
    %v774 = vpop.xlane.xlu0 %773
    %v775 = vsel %vm217, %v570, 0.0
    %776 = vadd.xlane.f32.xlu0 %v775
    %v777 = vpop.xlane.xlu0 %776
    %v778 = vsel %vm217, %v572, 0.0
    %779 = vadd.xlane.f32.xlu0 %v778
    %v780 = vpop.xlane.xlu0 %779
    %v781 = vsel %vm217, %v574, 0.0
    %782 = vadd.xlane.f32.xlu0 %v781
    %v783 = vpop.xlane.xlu0 %782
    %v784 = vsel %vm217, %v576, 0.0
    %785 = vadd.xlane.f32.xlu0 %v784
    %v786 = vpop.xlane.xlu0 %785
    %v787 = vsel %vm217, %v578, 0.0
    %788 = vadd.xlane.f32.xlu0 %v787
    %v789 = vpop.xlane.xlu0 %788
    %v790 = vsel %vm217, %v580, 0.0
    %791 = vadd.xlane.f32.xlu0 %v790
    %v792 = vpop.xlane.xlu0 %791
    %v793 = vsel %vm217, %v582, 0.0
    %794 = vadd.xlane.f32.xlu0 %v793
    %v795 = vpop.xlane.xlu0 %794
    %v796 = vsel %vm217, %v584, 0.0
    %797 = vadd.xlane.f32.xlu0 %v796
    %v798 = vpop.xlane.xlu0 %797
    %v799 = vsel %vm217, %v586, 0.0
    %800 = vadd.xlane.f32.xlu0 %v799
    %v801 = vpop.xlane.xlu0 %800
    %v802 = vsel %vm217, %v588, 0.0
    %803 = vadd.xlane.f32.xlu0 %v802
    %v804 = vpop.xlane.xlu0 %803
    %v805 = vsel %vm217, %v590, 0.0
    %806 = vadd.xlane.f32.xlu0 %v805
    %v807 = vpop.xlane.xlu0 %806
    %v808 = vsel %vm217, %v592, 0.0
    %809 = vadd.xlane.f32.xlu0 %v808
    %v810 = vpop.xlane.xlu0 %809
    %v811 = vsel %vm217, %v594, 0.0
    %812 = vadd.xlane.f32.xlu0 %v811
    %v813 = vpop.xlane.xlu0 %812
    %v814 = vsel %vm217, %v596, 0.0
    %815 = vadd.xlane.f32.xlu0 %v814
    %v816 = vpop.xlane.xlu0 %815
    %v817 = vsel %vm217, %v598, 0.0
    %818 = vadd.xlane.f32.xlu0 %v817
    %v819 = vpop.xlane.xlu0 %818
    %v820 = vsel %vm217, %v600, 0.0
    %821 = vadd.xlane.f32.xlu0 %v820
    %v822 = vpop.xlane.xlu0 %821
    %v823 = vsel %vm217, %v602, 0.0
    %824 = vadd.xlane.f32.xlu0 %v823
    %v825 = vpop.xlane.xlu0 %824
    %v826 = vsel %vm217, %v604, 0.0
    %827 = vadd.xlane.f32.xlu0 %v826
    %v828 = vpop.xlane.xlu0 %827
    %v829 = vsel %vm217, %v606, 0.0
    %830 = vadd.xlane.f32.xlu0 %v829
    %v831 = vpop.xlane.xlu0 %830
    %v832 = vsel %vm217, %v608, 0.0
    %833 = vadd.xlane.f32.xlu0 %v832
    %v834 = vpop.xlane.xlu0 %833
    %v835 = vsel %vm217, %v610, 0.0
    %836 = vadd.xlane.f32.xlu0 %v835
    %v837 = vpop.xlane.xlu0 %836
    %v838 = vsel %vm217, %v612, 0.0
    %839 = vadd.xlane.f32.xlu0 %v838
    %v840 = vpop.xlane.xlu0 %839
    %v841 = vsel %vm217, %v614, 0.0
    %842 = vadd.xlane.f32.xlu0 %v841
    %v843 = vpop.xlane.xlu0 %842
    %v844 = vsel %vm217, %v616, 0.0
    %845 = vadd.xlane.f32.xlu0 %v844
    %v846 = vpop.xlane.xlu0 %845
    %v847 = vsel %vm217, %v618, 0.0
    %848 = vadd.xlane.f32.xlu0 %v847
    %v849 = vpop.xlane.xlu0 %848
    %v850 = vsel %vm217, %v620, 0.0
    %851 = vadd.xlane.f32.xlu0 %v850
    %v852 = vpop.xlane.xlu0 %851
    %v853 = vsel %vm217, %v622, 0.0
    %854 = vadd.xlane.f32.xlu0 %v853
    %v855 = vpop.xlane.xlu0 %854
    %v856 = vsel %vm217, %v624, 0.0
    %857 = vadd.xlane.f32.xlu0 %v856
    %v858 = vpop.xlane.xlu0 %857
    %v859 = vsel %vm217, %v626, 0.0
    %860 = vadd.xlane.f32.xlu0 %v859
    %v861 = vpop.xlane.xlu0 %860
    %v862 = vsel %vm217, %v628, 0.0
    %863 = vadd.xlane.f32.xlu0 %v862
    %v864 = vpop.xlane.xlu0 %863
    %v865 = vsel %vm217, %v630, 0.0
    %866 = vadd.xlane.f32.xlu0 %v865
    %v867 = vpop.xlane.xlu0 %866
    %v868 = vsel %vm217, %v632, 0.0
    %869 = vadd.xlane.f32.xlu0 %v868
    %v870 = vpop.xlane.xlu0 %869
    %v871 = vsel %vm217, %v634, 0.0
    %872 = vadd.xlane.f32.xlu0 %v871
    %v873 = vpop.xlane.xlu0 %872
    %v874 = vsel %vm217, %v636, 0.0
    %875 = vadd.xlane.f32.xlu0 %v874
    %v876 = vpop.xlane.xlu0 %875
    %v877 = vsel %vm217, %v638, 0.0
    %878 = vadd.xlane.f32.xlu0 %v877
    %v879 = vpop.xlane.xlu0 %878
    %v880 = vsel %vm217, %v640, 0.0
    %881 = vadd.xlane.f32.xlu0 %v880
    %v882 = vpop.xlane.xlu0 %881
    %v883 = vsel %vm217, %v642, 0.0
    %884 = vadd.xlane.f32.xlu0 %v883
    %v885 = vpop.xlane.xlu0 %884
    %v886 = vsel %vm217, %v644, 0.0
    %887 = vadd.xlane.f32.xlu0 %v886
    %v888 = vpop.xlane.xlu0 %887
    %v889 = vsel %vm217, %v646, 0.0
    %890 = vadd.xlane.f32.xlu0 %v889
    %v891 = vpop.xlane.xlu0 %890
    %v892 = vsel %vm217, %v648, 0.0
    %893 = vadd.xlane.f32.xlu0 %v892
    %v894 = vpop.xlane.xlu0 %893
    %v895 = vsel %vm217, %v650, 0.0
    %896 = vadd.xlane.f32.xlu0 %v895
    %v897 = vpop.xlane.xlu0 %896
    %v898 = vsel %vm217, %v652, 0.0
    %899 = vadd.xlane.f32.xlu0 %v898
    %v900 = vpop.xlane.xlu0 %899
    %v901 = vsel %vm217, %v654, 0.0
    %902 = vadd.xlane.f32.xlu0 %v901
    %v903 = vpop.xlane.xlu0 %902
    %v904 = vsel %vm217, %v656, 0.0
    %905 = vadd.xlane.f32.xlu0 %v904
    %v906 = vpop.xlane.xlu0 %905
    %v907 = vsel %vm217, %v658, 0.0
    %908 = vadd.xlane.f32.xlu0 %v907
    %v909 = vpop.xlane.xlu0 %908
    %v910 = vsel %vm217, %v660, 0.0
    %911 = vadd.xlane.f32.xlu0 %v910
    %v912 = vpop.xlane.xlu0 %911
    %v913 = vsel %vm217, %v662, 0.0
    %914 = vadd.xlane.f32.xlu0 %v913
    %v915 = vpop.xlane.xlu0 %914
    %v916 = vsel %vm217, %v664, 0.0
    %917 = vadd.xlane.f32.xlu0 %v916
    %v918 = vpop.xlane.xlu0 %917
    %v919 = vsel %vm217, %v666, 0.0
    %920 = vadd.xlane.f32.xlu0 %v919
    %v921 = vpop.xlane.xlu0 %920
    %v922 = vsel %vm217, %v668, 0.0
    %923 = vadd.xlane.f32.xlu0 %v922
    %v924 = vpop.xlane.xlu0 %923
    %v925 = vsub.f32 0.0, %v220
    %v926 = vsub.f32 0.0, %v223
    %v927 = vsub.f32 0.0, %v226
    %v928 = vsub.f32 0.0, %v229
    %v929 = vsub.f32 0.0, %v232
    %v930 = vsub.f32 0.0, %v235
    %v931 = vsub.f32 0.0, %v238
    %v932 = vsub.f32 0.0, %v241
    %v933 = vsub.f32 0.0, %v244
    %v934 = vsub.f32 0.0, %v247
    %v935 = vsub.f32 0.0, %v250
    %v936 = vsub.f32 0.0, %v253
    %v937 = vsub.f32 0.0, %v256
    %v938 = vsub.f32 0.0, %v259
    %v939 = vsub.f32 0.0, %v262
    %v940 = vsub.f32 0.0, %v265
    %v941 = vsub.f32 0.0, %v268
    %v942 = vsub.f32 0.0, %v271
    %v943 = vsub.f32 0.0, %v274
    %v944 = vsub.f32 0.0, %v277
    %v945 = vsub.f32 0.0, %v280
    %v946 = vsub.f32 0.0, %v283
    %v947 = vsub.f32 0.0, %v286
    %v948 = vsub.f32 0.0, %v289
    %v949 = vsub.f32 0.0, %v292
    %v950 = vsub.f32 0.0, %v295
    %v951 = vsub.f32 0.0, %v298
    %v952 = vsub.f32 0.0, %v301
    %v953 = vsub.f32 0.0, %v304
    %v954 = vsub.f32 0.0, %v307
    %v955 = vsub.f32 0.0, %v310
    %v956 = vsub.f32 0.0, %v313
    %v957 = vsub.f32 0.0, %v316
    %v958 = vsub.f32 0.0, %v319
    %v959 = vsub.f32 0.0, %v322
    %v960 = vsub.f32 0.0, %v325
    %v961 = vsub.f32 0.0, %v328
    %v962 = vsub.f32 0.0, %v331
    %v963 = vsub.f32 0.0, %v334
    %v964 = vsub.f32 0.0, %v337
    %v965 = vsub.f32 0.0, %v340
    %v966 = vsub.f32 0.0, %v343
    %v967 = vsub.f32 0.0, %v346
    %v968 = vsub.f32 0.0, %v349
    %v969 = vsub.f32 0.0, %v352
    %v970 = vsub.f32 0.0, %v355
    %v971 = vsub.f32 0.0, %v358
    %v972 = vsub.f32 0.0, %v361
    %v973 = vsub.f32 0.0, %v364
    %v974 = vsub.f32 0.0, %v367
    %v975 = vsub.f32 0.0, %v370
    %v976 = vsub.f32 0.0, %v373
    %v977 = vsub.f32 0.0, %v376
    %v978 = vsub.f32 0.0, %v379
    %v979 = vsub.f32 0.0, %v382
    %v980 = vsub.f32 0.0, %v385
    %v981 = vsub.f32 0.0, %v388
    %v982 = vsub.f32 0.0, %v391
    %v983 = vsub.f32 0.0, %v394
    %v984 = vsub.f32 0.0, %v397
    %v985 = vsub.f32 0.0, %v400
    %v986 = vsub.f32 0.0, %v403
    %v987 = vsub.f32 0.0, %v406
    %v988 = vsub.f32 0.0, %v409
    %v989 = vmax.f32 %v925, 0.0
    %v990 = vmax.f32 %v926, 0.0
    %v991 = vmax.f32 %v927, 0.0
    %v992 = vmax.f32 %v928, 0.0
    %v993 = vmax.f32 %v929, 0.0
    %v994 = vmax.f32 %v930, 0.0
    %v995 = vmax.f32 %v931, 0.0
    %v996 = vmax.f32 %v932, 0.0
    %v997 = vmax.f32 %v933, 0.0
    %v998 = vmax.f32 %v934, 0.0
    %v999 = vmax.f32 %v935, 0.0
    %v1000 = vmax.f32 %v936, 0.0
    %v1001 = vmax.f32 %v937, 0.0
    %v1002 = vmax.f32 %v938, 0.0
    %v1003 = vmax.f32 %v939, 0.0
    %v1004 = vmax.f32 %v940, 0.0
    %v1005 = vmax.f32 %v941, 0.0
    %v1006 = vmax.f32 %v942, 0.0
    %v1007 = vmax.f32 %v943, 0.0
    %v1008 = vmax.f32 %v944, 0.0
    %v1009 = vmax.f32 %v945, 0.0
    %v1010 = vmax.f32 %v946, 0.0
    %v1011 = vmax.f32 %v947, 0.0
    %v1012 = vmax.f32 %v948, 0.0
    %v1013 = vmax.f32 %v949, 0.0
    %v1014 = vmax.f32 %v950, 0.0
    %v1015 = vmax.f32 %v951, 0.0
    %v1016 = vmax.f32 %v952, 0.0
    %v1017 = vmax.f32 %v953, 0.0
    %v1018 = vmax.f32 %v954, 0.0
    %v1019 = vmax.f32 %v955, 0.0
    %v1020 = vmax.f32 %v956, 0.0
    %v1021 = vmax.f32 %v957, 0.0
    %v1022 = vmax.f32 %v958, 0.0
    %v1023 = vmax.f32 %v959, 0.0
    %v1024 = vmax.f32 %v960, 0.0
    %v1025 = vmax.f32 %v961, 0.0
    %v1026 = vmax.f32 %v962, 0.0
    %v1027 = vmax.f32 %v963, 0.0
    %v1028 = vmax.f32 %v964, 0.0
    %v1029 = vmax.f32 %v965, 0.0
    %v1030 = vmax.f32 %v966, 0.0
    %v1031 = vmax.f32 %v967, 0.0
    %v1032 = vmax.f32 %v968, 0.0
    %v1033 = vmax.f32 %v969, 0.0
    %v1034 = vmax.f32 %v970, 0.0
    %v1035 = vmax.f32 %v971, 0.0
    %v1036 = vmax.f32 %v972, 0.0
    %v1037 = vmax.f32 %v973, 0.0
    %v1038 = vmax.f32 %v974, 0.0
    %v1039 = vmax.f32 %v975, 0.0
    %v1040 = vmax.f32 %v976, 0.0
    %v1041 = vmax.f32 %v977, 0.0
    %v1042 = vmax.f32 %v978, 0.0
    %v1043 = vmax.f32 %v979, 0.0
    %v1044 = vmax.f32 %v980, 0.0
    %v1045 = vmax.f32 %v981, 0.0
    %v1046 = vmax.f32 %v982, 0.0
    %v1047 = vmax.f32 %v983, 0.0
    %v1048 = vmax.f32 %v984, 0.0
    %v1049 = vmax.f32 %v985, 0.0
    %v1050 = vmax.f32 %v986, 0.0
    %v1051 = vmax.f32 %v987, 0.0
    %v1052 = vmax.f32 %v988, 0.0
    %vm1053 = vcmp.ne.f32.partialorder %v925, %v925
    %vm1054 = vcmp.ne.f32.partialorder %v926, %v926
    %vm1055 = vcmp.ne.f32.partialorder %v927, %v927
    %vm1056 = vcmp.ne.f32.partialorder %v928, %v928
    %vm1057 = vcmp.ne.f32.partialorder %v929, %v929
    %vm1058 = vcmp.ne.f32.partialorder %v930, %v930
    %vm1059 = vcmp.ne.f32.partialorder %v931, %v931
    %vm1060 = vcmp.ne.f32.partialorder %v932, %v932
    %vm1061 = vcmp.ne.f32.partialorder %v933, %v933
    %vm1062 = vcmp.ne.f32.partialorder %v934, %v934
    %vm1063 = vcmp.ne.f32.partialorder %v935, %v935
    %vm1064 = vcmp.ne.f32.partialorder %v936, %v936
    %vm1065 = vcmp.ne.f32.partialorder %v937, %v937
    %vm1066 = vcmp.ne.f32.partialorder %v938, %v938
    %vm1067 = vcmp.ne.f32.partialorder %v939, %v939
    %vm1068 = vcmp.ne.f32.partialorder %v940, %v940
    %vm1069 = vcmp.ne.f32.partialorder %v941, %v941
    %vm1070 = vcmp.ne.f32.partialorder %v942, %v942
    %vm1071 = vcmp.ne.f32.partialorder %v943, %v943
    %vm1072 = vcmp.ne.f32.partialorder %v944, %v944
    %vm1073 = vcmp.ne.f32.partialorder %v945, %v945
    %vm1074 = vcmp.ne.f32.partialorder %v946, %v946
    %vm1075 = vcmp.ne.f32.partialorder %v947, %v947
    %vm1076 = vcmp.ne.f32.partialorder %v948, %v948
    %vm1077 = vcmp.ne.f32.partialorder %v949, %v949
    %vm1078 = vcmp.ne.f32.partialorder %v950, %v950
    %vm1079 = vcmp.ne.f32.partialorder %v951, %v951
    %vm1080 = vcmp.ne.f32.partialorder %v952, %v952
    %vm1081 = vcmp.ne.f32.partialorder %v953, %v953
    %vm1082 = vcmp.ne.f32.partialorder %v954, %v954
    %vm1083 = vcmp.ne.f32.partialorder %v955, %v955
    %vm1084 = vcmp.ne.f32.partialorder %v956, %v956
    %vm1085 = vcmp.ne.f32.partialorder %v957, %v957
    %vm1086 = vcmp.ne.f32.partialorder %v958, %v958
    %vm1087 = vcmp.ne.f32.partialorder %v959, %v959
    %vm1088 = vcmp.ne.f32.partialorder %v960, %v960
    %vm1089 = vcmp.ne.f32.partialorder %v961, %v961
    %vm1090 = vcmp.ne.f32.partialorder %v962, %v962
    %vm1091 = vcmp.ne.f32.partialorder %v963, %v963
    %vm1092 = vcmp.ne.f32.partialorder %v964, %v964
    %vm1093 = vcmp.ne.f32.partialorder %v965, %v965
    %vm1094 = vcmp.ne.f32.partialorder %v966, %v966
    %vm1095 = vcmp.ne.f32.partialorder %v967, %v967
    %vm1096 = vcmp.ne.f32.partialorder %v968, %v968
    %vm1097 = vcmp.ne.f32.partialorder %v969, %v969
    %vm1098 = vcmp.ne.f32.partialorder %v970, %v970
    %vm1099 = vcmp.ne.f32.partialorder %v971, %v971
    %vm1100 = vcmp.ne.f32.partialorder %v972, %v972
    %vm1101 = vcmp.ne.f32.partialorder %v973, %v973
    %vm1102 = vcmp.ne.f32.partialorder %v974, %v974
    %vm1103 = vcmp.ne.f32.partialorder %v975, %v975
    %vm1104 = vcmp.ne.f32.partialorder %v976, %v976
    %vm1105 = vcmp.ne.f32.partialorder %v977, %v977
    %vm1106 = vcmp.ne.f32.partialorder %v978, %v978
    %vm1107 = vcmp.ne.f32.partialorder %v979, %v979
    %vm1108 = vcmp.ne.f32.partialorder %v980, %v980
    %vm1109 = vcmp.ne.f32.partialorder %v981, %v981
    %vm1110 = vcmp.ne.f32.partialorder %v982, %v982
    %vm1111 = vcmp.ne.f32.partialorder %v983, %v983
    %vm1112 = vcmp.ne.f32.partialorder %v984, %v984
    %vm1113 = vcmp.ne.f32.partialorder %v985, %v985
    %vm1114 = vcmp.ne.f32.partialorder %v986, %v986
    %vm1115 = vcmp.ne.f32.partialorder %v987, %v987
    %vm1116 = vcmp.ne.f32.partialorder %v988, %v988
    %v1117 = vadd.f32 %v925, 0.0
    %v1118 = vadd.f32 %v926, 0.0
    %v1119 = vadd.f32 %v927, 0.0
    %v1120 = vadd.f32 %v928, 0.0
    %v1121 = vadd.f32 %v929, 0.0
    %v1122 = vadd.f32 %v930, 0.0
    %v1123 = vadd.f32 %v931, 0.0
    %v1124 = vadd.f32 %v932, 0.0
    %v1125 = vadd.f32 %v933, 0.0
    %v1126 = vadd.f32 %v934, 0.0
    %v1127 = vadd.f32 %v935, 0.0
    %v1128 = vadd.f32 %v936, 0.0
    %v1129 = vadd.f32 %v937, 0.0
    %v1130 = vadd.f32 %v938, 0.0
    %v1131 = vadd.f32 %v939, 0.0
    %v1132 = vadd.f32 %v940, 0.0
    %v1133 = vadd.f32 %v941, 0.0
    %v1134 = vadd.f32 %v942, 0.0
    %v1135 = vadd.f32 %v943, 0.0
    %v1136 = vadd.f32 %v944, 0.0
    %v1137 = vadd.f32 %v945, 0.0
    %v1138 = vadd.f32 %v946, 0.0
    %v1139 = vadd.f32 %v947, 0.0
    %v1140 = vadd.f32 %v948, 0.0
    %v1141 = vadd.f32 %v949, 0.0
    %v1142 = vadd.f32 %v950, 0.0
    %v1143 = vadd.f32 %v951, 0.0
    %v1144 = vadd.f32 %v952, 0.0
    %v1145 = vadd.f32 %v953, 0.0
    %v1146 = vadd.f32 %v954, 0.0
    %v1147 = vadd.f32 %v955, 0.0
    %v1148 = vadd.f32 %v956, 0.0
    %v1149 = vadd.f32 %v957, 0.0
    %v1150 = vadd.f32 %v958, 0.0
    %v1151 = vadd.f32 %v959, 0.0
    %v1152 = vadd.f32 %v960, 0.0
    %v1153 = vadd.f32 %v961, 0.0
    %v1154 = vadd.f32 %v962, 0.0
    %v1155 = vadd.f32 %v963, 0.0
    %v1156 = vadd.f32 %v964, 0.0
    %v1157 = vadd.f32 %v965, 0.0
    %v1158 = vadd.f32 %v966, 0.0
    %v1159 = vadd.f32 %v967, 0.0
    %v1160 = vadd.f32 %v968, 0.0
    %v1161 = vadd.f32 %v969, 0.0
    %v1162 = vadd.f32 %v970, 0.0
    %v1163 = vadd.f32 %v971, 0.0
    %v1164 = vadd.f32 %v972, 0.0
    %v1165 = vadd.f32 %v973, 0.0
    %v1166 = vadd.f32 %v974, 0.0
    %v1167 = vadd.f32 %v975, 0.0
    %v1168 = vadd.f32 %v976, 0.0
    %v1169 = vadd.f32 %v977, 0.0
    %v1170 = vadd.f32 %v978, 0.0
    %v1171 = vadd.f32 %v979, 0.0
    %v1172 = vadd.f32 %v980, 0.0
    %v1173 = vadd.f32 %v981, 0.0
    %v1174 = vadd.f32 %v982, 0.0
    %v1175 = vadd.f32 %v983, 0.0
    %v1176 = vadd.f32 %v984, 0.0
    %v1177 = vadd.f32 %v985, 0.0
    %v1178 = vadd.f32 %v986, 0.0
    %v1179 = vadd.f32 %v987, 0.0
    %v1180 = vadd.f32 %v988, 0.0
    %v1181 = vand.u32 2147483647, %v925
    %v1182 = vand.u32 2147483647, %v926
    %v1183 = vand.u32 2147483647, %v927
    %v1184 = vand.u32 2147483647, %v928
    %v1185 = vand.u32 2147483647, %v929
    %v1186 = vand.u32 2147483647, %v930
    %v1187 = vand.u32 2147483647, %v931
    %v1188 = vand.u32 2147483647, %v932
    %v1189 = vand.u32 2147483647, %v933
    %v1190 = vand.u32 2147483647, %v934
    %v1191 = vand.u32 2147483647, %v935
    %v1192 = vand.u32 2147483647, %v936
    %v1193 = vand.u32 2147483647, %v937
    %v1194 = vand.u32 2147483647, %v938
    %v1195 = vand.u32 2147483647, %v939
    %v1196 = vand.u32 2147483647, %v940
    %v1197 = vand.u32 2147483647, %v941
    %v1198 = vand.u32 2147483647, %v942
    %v1199 = vand.u32 2147483647, %v943
    %v1200 = vand.u32 2147483647, %v944
    %v1201 = vand.u32 2147483647, %v945
    %v1202 = vand.u32 2147483647, %v946
    %v1203 = vand.u32 2147483647, %v947
    %v1204 = vand.u32 2147483647, %v948
    %v1205 = vand.u32 2147483647, %v949
    %v1206 = vand.u32 2147483647, %v950
    %v1207 = vand.u32 2147483647, %v951
    %v1208 = vand.u32 2147483647, %v952
    %v1209 = vand.u32 2147483647, %v953
    %v1210 = vand.u32 2147483647, %v954
    %v1211 = vand.u32 2147483647, %v955
    %v1212 = vand.u32 2147483647, %v956
    %v1213 = vand.u32 2147483647, %v957
    %v1214 = vand.u32 2147483647, %v958
    %v1215 = vand.u32 2147483647, %v959
    %v1216 = vand.u32 2147483647, %v960
    %v1217 = vand.u32 2147483647, %v961
    %v1218 = vand.u32 2147483647, %v962
    %v1219 = vand.u32 2147483647, %v963
    %v1220 = vand.u32 2147483647, %v964
    %v1221 = vand.u32 2147483647, %v965
    %v1222 = vand.u32 2147483647, %v966
    %v1223 = vand.u32 2147483647, %v967
    %v1224 = vand.u32 2147483647, %v968
    %v1225 = vand.u32 2147483647, %v969
    %v1226 = vand.u32 2147483647, %v970
    %v1227 = vand.u32 2147483647, %v971
    %v1228 = vand.u32 2147483647, %v972
    %v1229 = vand.u32 2147483647, %v973
    %v1230 = vand.u32 2147483647, %v974
    %v1231 = vand.u32 2147483647, %v975
    %v1232 = vand.u32 2147483647, %v976
    %v1233 = vand.u32 2147483647, %v977
    %v1234 = vand.u32 2147483647, %v978
    %v1235 = vand.u32 2147483647, %v979
    %v1236 = vand.u32 2147483647, %v980
    %v1237 = vand.u32 2147483647, %v981
    %v1238 = vand.u32 2147483647, %v982
    %v1239 = vand.u32 2147483647, %v983
    %v1240 = vand.u32 2147483647, %v984
    %v1241 = vand.u32 2147483647, %v985
    %v1242 = vand.u32 2147483647, %v986
    %v1243 = vand.u32 2147483647, %v987
    %v1244 = vand.u32 2147483647, %v988
    %v1245 = vsub.f32 0.0, %v1181
    %v1246 = vsub.f32 0.0, %v1182
    %v1247 = vsub.f32 0.0, %v1183
    %v1248 = vsub.f32 0.0, %v1184
    %v1249 = vsub.f32 0.0, %v1185
    %v1250 = vsub.f32 0.0, %v1186
    %v1251 = vsub.f32 0.0, %v1187
    %v1252 = vsub.f32 0.0, %v1188
    %v1253 = vsub.f32 0.0, %v1189
    %v1254 = vsub.f32 0.0, %v1190
    %v1255 = vsub.f32 0.0, %v1191
    %v1256 = vsub.f32 0.0, %v1192
    %v1257 = vsub.f32 0.0, %v1193
    %v1258 = vsub.f32 0.0, %v1194
    %v1259 = vsub.f32 0.0, %v1195
    %v1260 = vsub.f32 0.0, %v1196
    %v1261 = vsub.f32 0.0, %v1197
    %v1262 = vsub.f32 0.0, %v1198
    %v1263 = vsub.f32 0.0, %v1199
    %v1264 = vsub.f32 0.0, %v1200
    %v1265 = vsub.f32 0.0, %v1201
    %v1266 = vsub.f32 0.0, %v1202
    %v1267 = vsub.f32 0.0, %v1203
    %v1268 = vsub.f32 0.0, %v1204
    %v1269 = vsub.f32 0.0, %v1205
    %v1270 = vsub.f32 0.0, %v1206
    %v1271 = vsub.f32 0.0, %v1207
    %v1272 = vsub.f32 0.0, %v1208
    %v1273 = vsub.f32 0.0, %v1209
    %v1274 = vsub.f32 0.0, %v1210
    %v1275 = vsub.f32 0.0, %v1211
    %v1276 = vsub.f32 0.0, %v1212
    %v1277 = vsub.f32 0.0, %v1213
    %v1278 = vsub.f32 0.0, %v1214
    %v1279 = vsub.f32 0.0, %v1215
    %v1280 = vsub.f32 0.0, %v1216
    %v1281 = vsub.f32 0.0, %v1217
    %v1282 = vsub.f32 0.0, %v1218
    %v1283 = vsub.f32 0.0, %v1219
    %v1284 = vsub.f32 0.0, %v1220
    %v1285 = vsub.f32 0.0, %v1221
    %v1286 = vsub.f32 0.0, %v1222
    %v1287 = vsub.f32 0.0, %v1223
    %v1288 = vsub.f32 0.0, %v1224
    %v1289 = vsub.f32 0.0, %v1225
    %v1290 = vsub.f32 0.0, %v1226
    %v1291 = vsub.f32 0.0, %v1227
    %v1292 = vsub.f32 0.0, %v1228
    %v1293 = vsub.f32 0.0, %v1229
    %v1294 = vsub.f32 0.0, %v1230
    %v1295 = vsub.f32 0.0, %v1231
    %v1296 = vsub.f32 0.0, %v1232
    %v1297 = vsub.f32 0.0, %v1233
    %v1298 = vsub.f32 0.0, %v1234
    %v1299 = vsub.f32 0.0, %v1235
    %v1300 = vsub.f32 0.0, %v1236
    %v1301 = vsub.f32 0.0, %v1237
    %v1302 = vsub.f32 0.0, %v1238
    %v1303 = vsub.f32 0.0, %v1239
    %v1304 = vsub.f32 0.0, %v1240
    %v1305 = vsub.f32 0.0, %v1241
    %v1306 = vsub.f32 0.0, %v1242
    %v1307 = vsub.f32 0.0, %v1243
    %v1308 = vsub.f32 0.0, %v1244
    %v1309 = vmul.f32 %v1245, 1.442695
    %v1310 = vpow.pop %v1309
    %v1311 = vmul.f32 %v1246, 1.442695
    %v1312 = vpow.pop %v1311
    %v1313 = vmul.f32 %v1247, 1.442695
    %v1314 = vpow.pop %v1313
    %v1315 = vmul.f32 %v1248, 1.442695
    %v1316 = vpow.pop %v1315
    %v1317 = vmul.f32 %v1249, 1.442695
    %v1318 = vpow.pop %v1317
    %v1319 = vmul.f32 %v1250, 1.442695
    %v1320 = vpow.pop %v1319
    %v1321 = vmul.f32 %v1251, 1.442695
    %v1322 = vpow.pop %v1321
    %v1323 = vmul.f32 %v1252, 1.442695
    %v1324 = vpow.pop %v1323
    %v1325 = vmul.f32 %v1253, 1.442695
    %v1326 = vpow.pop %v1325
    %v1327 = vmul.f32 %v1254, 1.442695
    %v1328 = vpow.pop %v1327
    %v1329 = vmul.f32 %v1255, 1.442695
    %v1330 = vpow.pop %v1329
    %v1331 = vmul.f32 %v1256, 1.442695
    %v1332 = vpow.pop %v1331
    %v1333 = vmul.f32 %v1257, 1.442695
    %v1334 = vpow.pop %v1333
    %v1335 = vmul.f32 %v1258, 1.442695
    %v1336 = vpow.pop %v1335
    %v1337 = vmul.f32 %v1259, 1.442695
    %v1338 = vpow.pop %v1337
    %v1339 = vmul.f32 %v1260, 1.442695
    %v1340 = vpow.pop %v1339
    %v1341 = vmul.f32 %v1261, 1.442695
    %v1342 = vpow.pop %v1341
    %v1343 = vmul.f32 %v1262, 1.442695
    %v1344 = vpow.pop %v1343
    %v1345 = vmul.f32 %v1263, 1.442695
    %v1346 = vpow.pop %v1345
    %v1347 = vmul.f32 %v1264, 1.442695
    %v1348 = vpow.pop %v1347
    %v1349 = vmul.f32 %v1265, 1.442695
    %v1350 = vpow.pop %v1349
    %v1351 = vmul.f32 %v1266, 1.442695
    %v1352 = vpow.pop %v1351
    %v1353 = vmul.f32 %v1267, 1.442695
    %v1354 = vpow.pop %v1353
    %v1355 = vmul.f32 %v1268, 1.442695
    %v1356 = vpow.pop %v1355
    %v1357 = vmul.f32 %v1269, 1.442695
    %v1358 = vpow.pop %v1357
    %v1359 = vmul.f32 %v1270, 1.442695
    %v1360 = vpow.pop %v1359
    %v1361 = vmul.f32 %v1271, 1.442695
    %v1362 = vpow.pop %v1361
    %v1363 = vmul.f32 %v1272, 1.442695
    %v1364 = vpow.pop %v1363
    %v1365 = vmul.f32 %v1273, 1.442695
    %v1366 = vpow.pop %v1365
    %v1367 = vmul.f32 %v1274, 1.442695
    %v1368 = vpow.pop %v1367
    %v1369 = vmul.f32 %v1275, 1.442695
    %v1370 = vpow.pop %v1369
    %v1371 = vmul.f32 %v1276, 1.442695
    %v1372 = vpow.pop %v1371
    %v1373 = vmul.f32 %v1277, 1.442695
    %v1374 = vpow.pop %v1373
    %v1375 = vmul.f32 %v1278, 1.442695
    %v1376 = vpow.pop %v1375
    %v1377 = vmul.f32 %v1279, 1.442695
    %v1378 = vpow.pop %v1377
    %v1379 = vmul.f32 %v1280, 1.442695
    %v1380 = vpow.pop %v1379
    %v1381 = vmul.f32 %v1281, 1.442695
    %v1382 = vpow.pop %v1381
    %v1383 = vmul.f32 %v1282, 1.442695
    %v1384 = vpow.pop %v1383
    %v1385 = vmul.f32 %v1283, 1.442695
    %v1386 = vpow.pop %v1385
    %v1387 = vmul.f32 %v1284, 1.442695
    %v1388 = vpow.pop %v1387
    %v1389 = vmul.f32 %v1285, 1.442695
    %v1390 = vpow.pop %v1389
    %v1391 = vmul.f32 %v1286, 1.442695
    %v1392 = vpow.pop %v1391
    %v1393 = vmul.f32 %v1287, 1.442695
    %v1394 = vpow.pop %v1393
    %v1395 = vmul.f32 %v1288, 1.442695
    %v1396 = vpow.pop %v1395
    %v1397 = vmul.f32 %v1289, 1.442695
    %v1398 = vpow.pop %v1397
    %v1399 = vmul.f32 %v1290, 1.442695
    %v1400 = vpow.pop %v1399
    %v1401 = vmul.f32 %v1291, 1.442695
    %v1402 = vpow.pop %v1401
    %v1403 = vmul.f32 %v1292, 1.442695
    %v1404 = vpow.pop %v1403
    %v1405 = vmul.f32 %v1293, 1.442695
    %v1406 = vpow.pop %v1405
    %v1407 = vmul.f32 %v1294, 1.442695
    %v1408 = vpow.pop %v1407
    %v1409 = vmul.f32 %v1295, 1.442695
    %v1410 = vpow.pop %v1409
    %v1411 = vmul.f32 %v1296, 1.442695
    %v1412 = vpow.pop %v1411
    %v1413 = vmul.f32 %v1297, 1.442695
    %v1414 = vpow.pop %v1413
    %v1415 = vmul.f32 %v1298, 1.442695
    %v1416 = vpow.pop %v1415
    %v1417 = vmul.f32 %v1299, 1.442695
    %v1418 = vpow.pop %v1417
    %v1419 = vmul.f32 %v1300, 1.442695
    %v1420 = vpow.pop %v1419
    %v1421 = vmul.f32 %v1301, 1.442695
    %v1422 = vpow.pop %v1421
    %v1423 = vmul.f32 %v1302, 1.442695
    %v1424 = vpow.pop %v1423
    %v1425 = vmul.f32 %v1303, 1.442695
    %v1426 = vpow.pop %v1425
    %v1427 = vmul.f32 %v1304, 1.442695
    %v1428 = vpow.pop %v1427
    %v1429 = vmul.f32 %v1305, 1.442695
    %v1430 = vpow.pop %v1429
    %v1431 = vmul.f32 %v1306, 1.442695
    %v1432 = vpow.pop %v1431
    %v1433 = vmul.f32 %v1307, 1.442695
    %v1434 = vpow.pop %v1433
    %v1435 = vmul.f32 %v1308, 1.442695
    %v1436 = vpow.pop %v1435
    %v1437 = vadd.f32 %v1310, 1.0
    %v1438 = vlog2.pop %v1437
    %v1439 = vmul.f32 %v1438, 0.6931472
    %v1440 = vmul.f32 -0.5, %v1310
    %v1441 = vadd.f32 %v1440, 1.0
    %v1442 = vmul.f32 %v1441, %v1310
    %v1443 = vand.u32 2147483647, %v1310
    %vm1444 = vcmp.lt.f32.partialorder %v1443, 0.0004427343
    %v1445 = vsel %vm1444, %v1442, %v1439
    %v1446 = vadd.f32 %v1312, 1.0
    %v1447 = vlog2.pop %v1446
    %v1448 = vmul.f32 %v1447, 0.6931472
    %v1449 = vmul.f32 -0.5, %v1312
    %v1450 = vadd.f32 %v1449, 1.0
    %v1451 = vmul.f32 %v1450, %v1312
    %v1452 = vand.u32 2147483647, %v1312
    %vm1453 = vcmp.lt.f32.partialorder %v1452, 0.0004427343
    %v1454 = vsel %vm1453, %v1451, %v1448
    %v1455 = vadd.f32 %v1314, 1.0
    %v1456 = vlog2.pop %v1455
    %v1457 = vmul.f32 %v1456, 0.6931472
    %v1458 = vmul.f32 -0.5, %v1314
    %v1459 = vadd.f32 %v1458, 1.0
    %v1460 = vmul.f32 %v1459, %v1314
    %v1461 = vand.u32 2147483647, %v1314
    %vm1462 = vcmp.lt.f32.partialorder %v1461, 0.0004427343
    %v1463 = vsel %vm1462, %v1460, %v1457
    %v1464 = vadd.f32 %v1316, 1.0
    %v1465 = vlog2.pop %v1464
    %v1466 = vmul.f32 %v1465, 0.6931472
    %v1467 = vmul.f32 -0.5, %v1316
    %v1468 = vadd.f32 %v1467, 1.0
    %v1469 = vmul.f32 %v1468, %v1316
    %v1470 = vand.u32 2147483647, %v1316
    %vm1471 = vcmp.lt.f32.partialorder %v1470, 0.0004427343
    %v1472 = vsel %vm1471, %v1469, %v1466
    %v1473 = vadd.f32 %v1318, 1.0
    %v1474 = vlog2.pop %v1473
    %v1475 = vmul.f32 %v1474, 0.6931472
    %v1476 = vmul.f32 -0.5, %v1318
    %v1477 = vadd.f32 %v1476, 1.0
    %v1478 = vmul.f32 %v1477, %v1318
    %v1479 = vand.u32 2147483647, %v1318
    %vm1480 = vcmp.lt.f32.partialorder %v1479, 0.0004427343
    %v1481 = vsel %vm1480, %v1478, %v1475
    %v1482 = vadd.f32 %v1320, 1.0
    %v1483 = vlog2.pop %v1482
    %v1484 = vmul.f32 %v1483, 0.6931472
    %v1485 = vmul.f32 -0.5, %v1320
    %v1486 = vadd.f32 %v1485, 1.0
    %v1487 = vmul.f32 %v1486, %v1320
    %v1488 = vand.u32 2147483647, %v1320
    %vm1489 = vcmp.lt.f32.partialorder %v1488, 0.0004427343
    %v1490 = vsel %vm1489, %v1487, %v1484
    %v1491 = vadd.f32 %v1322, 1.0
    %v1492 = vlog2.pop %v1491
    %v1493 = vmul.f32 %v1492, 0.6931472
    %v1494 = vmul.f32 -0.5, %v1322
    %v1495 = vadd.f32 %v1494, 1.0
    %v1496 = vmul.f32 %v1495, %v1322
    %v1497 = vand.u32 2147483647, %v1322
    %vm1498 = vcmp.lt.f32.partialorder %v1497, 0.0004427343
    %v1499 = vsel %vm1498, %v1496, %v1493
    %v1500 = vadd.f32 %v1324, 1.0
    %v1501 = vlog2.pop %v1500
    %v1502 = vmul.f32 %v1501, 0.6931472
    %v1503 = vmul.f32 -0.5, %v1324
    %v1504 = vadd.f32 %v1503, 1.0
    %v1505 = vmul.f32 %v1504, %v1324
    %v1506 = vand.u32 2147483647, %v1324
    %vm1507 = vcmp.lt.f32.partialorder %v1506, 0.0004427343
    %v1508 = vsel %vm1507, %v1505, %v1502
    %v1509 = vadd.f32 %v1326, 1.0
    %v1510 = vlog2.pop %v1509
    %v1511 = vmul.f32 %v1510, 0.6931472
    %v1512 = vmul.f32 -0.5, %v1326
    %v1513 = vadd.f32 %v1512, 1.0
    %v1514 = vmul.f32 %v1513, %v1326
    %v1515 = vand.u32 2147483647, %v1326
    %vm1516 = vcmp.lt.f32.partialorder %v1515, 0.0004427343
    %v1517 = vsel %vm1516, %v1514, %v1511
    %v1518 = vadd.f32 %v1328, 1.0
    %v1519 = vlog2.pop %v1518
    %v1520 = vmul.f32 %v1519, 0.6931472
    %v1521 = vmul.f32 -0.5, %v1328
    %v1522 = vadd.f32 %v1521, 1.0
    %v1523 = vmul.f32 %v1522, %v1328
    %v1524 = vand.u32 2147483647, %v1328
    %vm1525 = vcmp.lt.f32.partialorder %v1524, 0.0004427343
    %v1526 = vsel %vm1525, %v1523, %v1520
    %v1527 = vadd.f32 %v1330, 1.0
    %v1528 = vlog2.pop %v1527
    %v1529 = vmul.f32 %v1528, 0.6931472
    %v1530 = vmul.f32 -0.5, %v1330
    %v1531 = vadd.f32 %v1530, 1.0
    %v1532 = vmul.f32 %v1531, %v1330
    %v1533 = vand.u32 2147483647, %v1330
    %vm1534 = vcmp.lt.f32.partialorder %v1533, 0.0004427343
    %v1535 = vsel %vm1534, %v1532, %v1529
    %v1536 = vadd.f32 %v1332, 1.0
    %v1537 = vlog2.pop %v1536
    %v1538 = vmul.f32 %v1537, 0.6931472
    %v1539 = vmul.f32 -0.5, %v1332
    %v1540 = vadd.f32 %v1539, 1.0
    %v1541 = vmul.f32 %v1540, %v1332
    %v1542 = vand.u32 2147483647, %v1332
    %vm1543 = vcmp.lt.f32.partialorder %v1542, 0.0004427343
    %v1544 = vsel %vm1543, %v1541, %v1538
    %v1545 = vadd.f32 %v1334, 1.0
    %v1546 = vlog2.pop %v1545
    %v1547 = vmul.f32 %v1546, 0.6931472
    %v1548 = vmul.f32 -0.5, %v1334
    %v1549 = vadd.f32 %v1548, 1.0
    %v1550 = vmul.f32 %v1549, %v1334
    %v1551 = vand.u32 2147483647, %v1334
    %vm1552 = vcmp.lt.f32.partialorder %v1551, 0.0004427343
    %v1553 = vsel %vm1552, %v1550, %v1547
    %v1554 = vadd.f32 %v1336, 1.0
    %v1555 = vlog2.pop %v1554
    %v1556 = vmul.f32 %v1555, 0.6931472
    %v1557 = vmul.f32 -0.5, %v1336
    %v1558 = vadd.f32 %v1557, 1.0
    %v1559 = vmul.f32 %v1558, %v1336
    %v1560 = vand.u32 2147483647, %v1336
    %vm1561 = vcmp.lt.f32.partialorder %v1560, 0.0004427343
    %v1562 = vsel %vm1561, %v1559, %v1556
    %v1563 = vadd.f32 %v1338, 1.0
    %v1564 = vlog2.pop %v1563
    %v1565 = vmul.f32 %v1564, 0.6931472
    %v1566 = vmul.f32 -0.5, %v1338
    %v1567 = vadd.f32 %v1566, 1.0
    %v1568 = vmul.f32 %v1567, %v1338
    %v1569 = vand.u32 2147483647, %v1338
    %vm1570 = vcmp.lt.f32.partialorder %v1569, 0.0004427343
    %v1571 = vsel %vm1570, %v1568, %v1565
    %v1572 = vadd.f32 %v1340, 1.0
    %v1573 = vlog2.pop %v1572
    %v1574 = vmul.f32 %v1573, 0.6931472
    %v1575 = vmul.f32 -0.5, %v1340
    %v1576 = vadd.f32 %v1575, 1.0
    %v1577 = vmul.f32 %v1576, %v1340
    %v1578 = vand.u32 2147483647, %v1340
    %vm1579 = vcmp.lt.f32.partialorder %v1578, 0.0004427343
    %v1580 = vsel %vm1579, %v1577, %v1574
    %v1581 = vadd.f32 %v1342, 1.0
    %v1582 = vlog2.pop %v1581
    %v1583 = vmul.f32 %v1582, 0.6931472
    %v1584 = vmul.f32 -0.5, %v1342
    %v1585 = vadd.f32 %v1584, 1.0
    %v1586 = vmul.f32 %v1585, %v1342
    %v1587 = vand.u32 2147483647, %v1342
    %vm1588 = vcmp.lt.f32.partialorder %v1587, 0.0004427343
    %v1589 = vsel %vm1588, %v1586, %v1583
    %v1590 = vadd.f32 %v1344, 1.0
    %v1591 = vlog2.pop %v1590
    %v1592 = vmul.f32 %v1591, 0.6931472
    %v1593 = vmul.f32 -0.5, %v1344
    %v1594 = vadd.f32 %v1593, 1.0
    %v1595 = vmul.f32 %v1594, %v1344
    %v1596 = vand.u32 2147483647, %v1344
    %vm1597 = vcmp.lt.f32.partialorder %v1596, 0.0004427343
    %v1598 = vsel %vm1597, %v1595, %v1592
    %v1599 = vadd.f32 %v1346, 1.0
    %v1600 = vlog2.pop %v1599
    %v1601 = vmul.f32 %v1600, 0.6931472
    %v1602 = vmul.f32 -0.5, %v1346
    %v1603 = vadd.f32 %v1602, 1.0
    %v1604 = vmul.f32 %v1603, %v1346
    %v1605 = vand.u32 2147483647, %v1346
    %vm1606 = vcmp.lt.f32.partialorder %v1605, 0.0004427343
    %v1607 = vsel %vm1606, %v1604, %v1601
    %v1608 = vadd.f32 %v1348, 1.0
    %v1609 = vlog2.pop %v1608
    %v1610 = vmul.f32 %v1609, 0.6931472
    %v1611 = vmul.f32 -0.5, %v1348
    %v1612 = vadd.f32 %v1611, 1.0
    %v1613 = vmul.f32 %v1612, %v1348
    %v1614 = vand.u32 2147483647, %v1348
    %vm1615 = vcmp.lt.f32.partialorder %v1614, 0.0004427343
    %v1616 = vsel %vm1615, %v1613, %v1610
    %v1617 = vadd.f32 %v1350, 1.0
    %v1618 = vlog2.pop %v1617
    %v1619 = vmul.f32 %v1618, 0.6931472
    %v1620 = vmul.f32 -0.5, %v1350
    %v1621 = vadd.f32 %v1620, 1.0
    %v1622 = vmul.f32 %v1621, %v1350
    %v1623 = vand.u32 2147483647, %v1350
    %vm1624 = vcmp.lt.f32.partialorder %v1623, 0.0004427343
    %v1625 = vsel %vm1624, %v1622, %v1619
    %v1626 = vadd.f32 %v1352, 1.0
    %v1627 = vlog2.pop %v1626
    %v1628 = vmul.f32 %v1627, 0.6931472
    %v1629 = vmul.f32 -0.5, %v1352
    %v1630 = vadd.f32 %v1629, 1.0
    %v1631 = vmul.f32 %v1630, %v1352
    %v1632 = vand.u32 2147483647, %v1352
    %vm1633 = vcmp.lt.f32.partialorder %v1632, 0.0004427343
    %v1634 = vsel %vm1633, %v1631, %v1628
    %v1635 = vadd.f32 %v1354, 1.0
    %v1636 = vlog2.pop %v1635
    %v1637 = vmul.f32 %v1636, 0.6931472
    %v1638 = vmul.f32 -0.5, %v1354
    %v1639 = vadd.f32 %v1638, 1.0
    %v1640 = vmul.f32 %v1639, %v1354
    %v1641 = vand.u32 2147483647, %v1354
    %vm1642 = vcmp.lt.f32.partialorder %v1641, 0.0004427343
    %v1643 = vsel %vm1642, %v1640, %v1637
    %v1644 = vadd.f32 %v1356, 1.0
    %v1645 = vlog2.pop %v1644
    %v1646 = vmul.f32 %v1645, 0.6931472
    %v1647 = vmul.f32 -0.5, %v1356
    %v1648 = vadd.f32 %v1647, 1.0
    %v1649 = vmul.f32 %v1648, %v1356
    %v1650 = vand.u32 2147483647, %v1356
    %vm1651 = vcmp.lt.f32.partialorder %v1650, 0.0004427343
    %v1652 = vsel %vm1651, %v1649, %v1646
    %v1653 = vadd.f32 %v1358, 1.0
    %v1654 = vlog2.pop %v1653
    %v1655 = vmul.f32 %v1654, 0.6931472
    %v1656 = vmul.f32 -0.5, %v1358
    %v1657 = vadd.f32 %v1656, 1.0
    %v1658 = vmul.f32 %v1657, %v1358
    %v1659 = vand.u32 2147483647, %v1358
    %vm1660 = vcmp.lt.f32.partialorder %v1659, 0.0004427343
    %v1661 = vsel %vm1660, %v1658, %v1655
    %v1662 = vadd.f32 %v1360, 1.0
    %v1663 = vlog2.pop %v1662
    %v1664 = vmul.f32 %v1663, 0.6931472
    %v1665 = vmul.f32 -0.5, %v1360
    %v1666 = vadd.f32 %v1665, 1.0
    %v1667 = vmul.f32 %v1666, %v1360
    %v1668 = vand.u32 2147483647, %v1360
    %vm1669 = vcmp.lt.f32.partialorder %v1668, 0.0004427343
    %v1670 = vsel %vm1669, %v1667, %v1664
    %v1671 = vadd.f32 %v1362, 1.0
    %v1672 = vlog2.pop %v1671
    %v1673 = vmul.f32 %v1672, 0.6931472
    %v1674 = vmul.f32 -0.5, %v1362
    %v1675 = vadd.f32 %v1674, 1.0
    %v1676 = vmul.f32 %v1675, %v1362
    %v1677 = vand.u32 2147483647, %v1362
    %vm1678 = vcmp.lt.f32.partialorder %v1677, 0.0004427343
    %v1679 = vsel %vm1678, %v1676, %v1673
    %v1680 = vadd.f32 %v1364, 1.0
    %v1681 = vlog2.pop %v1680
    %v1682 = vmul.f32 %v1681, 0.6931472
    %v1683 = vmul.f32 -0.5, %v1364
    %v1684 = vadd.f32 %v1683, 1.0
    %v1685 = vmul.f32 %v1684, %v1364
    %v1686 = vand.u32 2147483647, %v1364
    %vm1687 = vcmp.lt.f32.partialorder %v1686, 0.0004427343
    %v1688 = vsel %vm1687, %v1685, %v1682
    %v1689 = vadd.f32 %v1366, 1.0
    %v1690 = vlog2.pop %v1689
    %v1691 = vmul.f32 %v1690, 0.6931472
    %v1692 = vmul.f32 -0.5, %v1366
    %v1693 = vadd.f32 %v1692, 1.0
    %v1694 = vmul.f32 %v1693, %v1366
    %v1695 = vand.u32 2147483647, %v1366
    %vm1696 = vcmp.lt.f32.partialorder %v1695, 0.0004427343
    %v1697 = vsel %vm1696, %v1694, %v1691
    %v1698 = vadd.f32 %v1368, 1.0
    %v1699 = vlog2.pop %v1698
    %v1700 = vmul.f32 %v1699, 0.6931472
    %v1701 = vmul.f32 -0.5, %v1368
    %v1702 = vadd.f32 %v1701, 1.0
    %v1703 = vmul.f32 %v1702, %v1368
    %v1704 = vand.u32 2147483647, %v1368
    %vm1705 = vcmp.lt.f32.partialorder %v1704, 0.0004427343
    %v1706 = vsel %vm1705, %v1703, %v1700
    %v1707 = vadd.f32 %v1370, 1.0
    %v1708 = vlog2.pop %v1707
    %v1709 = vmul.f32 %v1708, 0.6931472
    %v1710 = vmul.f32 -0.5, %v1370
    %v1711 = vadd.f32 %v1710, 1.0
    %v1712 = vmul.f32 %v1711, %v1370
    %v1713 = vand.u32 2147483647, %v1370
    %vm1714 = vcmp.lt.f32.partialorder %v1713, 0.0004427343
    %v1715 = vsel %vm1714, %v1712, %v1709
    %v1716 = vadd.f32 %v1372, 1.0
    %v1717 = vlog2.pop %v1716
    %v1718 = vmul.f32 %v1717, 0.6931472
    %v1719 = vmul.f32 -0.5, %v1372
    %v1720 = vadd.f32 %v1719, 1.0
    %v1721 = vmul.f32 %v1720, %v1372
    %v1722 = vand.u32 2147483647, %v1372
    %vm1723 = vcmp.lt.f32.partialorder %v1722, 0.0004427343
    %v1724 = vsel %vm1723, %v1721, %v1718
    %v1725 = vadd.f32 %v1374, 1.0
    %v1726 = vlog2.pop %v1725
    %v1727 = vmul.f32 %v1726, 0.6931472
    %v1728 = vmul.f32 -0.5, %v1374
    %v1729 = vadd.f32 %v1728, 1.0
    %v1730 = vmul.f32 %v1729, %v1374
    %v1731 = vand.u32 2147483647, %v1374
    %vm1732 = vcmp.lt.f32.partialorder %v1731, 0.0004427343
    %v1733 = vsel %vm1732, %v1730, %v1727
    %v1734 = vadd.f32 %v1376, 1.0
    %v1735 = vlog2.pop %v1734
    %v1736 = vmul.f32 %v1735, 0.6931472
    %v1737 = vmul.f32 -0.5, %v1376
    %v1738 = vadd.f32 %v1737, 1.0
    %v1739 = vmul.f32 %v1738, %v1376
    %v1740 = vand.u32 2147483647, %v1376
    %vm1741 = vcmp.lt.f32.partialorder %v1740, 0.0004427343
    %v1742 = vsel %vm1741, %v1739, %v1736
    %v1743 = vadd.f32 %v1378, 1.0
    %v1744 = vlog2.pop %v1743
    %v1745 = vmul.f32 %v1744, 0.6931472
    %v1746 = vmul.f32 -0.5, %v1378
    %v1747 = vadd.f32 %v1746, 1.0
    %v1748 = vmul.f32 %v1747, %v1378
    %v1749 = vand.u32 2147483647, %v1378
    %vm1750 = vcmp.lt.f32.partialorder %v1749, 0.0004427343
    %v1751 = vsel %vm1750, %v1748, %v1745
    %v1752 = vadd.f32 %v1380, 1.0
    %v1753 = vlog2.pop %v1752
    %v1754 = vmul.f32 %v1753, 0.6931472
    %v1755 = vmul.f32 -0.5, %v1380
    %v1756 = vadd.f32 %v1755, 1.0
    %v1757 = vmul.f32 %v1756, %v1380
    %v1758 = vand.u32 2147483647, %v1380
    %vm1759 = vcmp.lt.f32.partialorder %v1758, 0.0004427343
    %v1760 = vsel %vm1759, %v1757, %v1754
    %v1761 = vadd.f32 %v1382, 1.0
    %v1762 = vlog2.pop %v1761
    %v1763 = vmul.f32 %v1762, 0.6931472
    %v1764 = vmul.f32 -0.5, %v1382
    %v1765 = vadd.f32 %v1764, 1.0
    %v1766 = vmul.f32 %v1765, %v1382
    %v1767 = vand.u32 2147483647, %v1382
    %vm1768 = vcmp.lt.f32.partialorder %v1767, 0.0004427343
    %v1769 = vsel %vm1768, %v1766, %v1763
    %v1770 = vadd.f32 %v1384, 1.0
    %v1771 = vlog2.pop %v1770
    %v1772 = vmul.f32 %v1771, 0.6931472
    %v1773 = vmul.f32 -0.5, %v1384
    %v1774 = vadd.f32 %v1773, 1.0
    %v1775 = vmul.f32 %v1774, %v1384
    %v1776 = vand.u32 2147483647, %v1384
    %vm1777 = vcmp.lt.f32.partialorder %v1776, 0.0004427343
    %v1778 = vsel %vm1777, %v1775, %v1772
    %v1779 = vadd.f32 %v1386, 1.0
    %v1780 = vlog2.pop %v1779
    %v1781 = vmul.f32 %v1780, 0.6931472
    %v1782 = vmul.f32 -0.5, %v1386
    %v1783 = vadd.f32 %v1782, 1.0
    %v1784 = vmul.f32 %v1783, %v1386
    %v1785 = vand.u32 2147483647, %v1386
    %vm1786 = vcmp.lt.f32.partialorder %v1785, 0.0004427343
    %v1787 = vsel %vm1786, %v1784, %v1781
    %v1788 = vadd.f32 %v1388, 1.0
    %v1789 = vlog2.pop %v1788
    %v1790 = vmul.f32 %v1789, 0.6931472
    %v1791 = vmul.f32 -0.5, %v1388
    %v1792 = vadd.f32 %v1791, 1.0
    %v1793 = vmul.f32 %v1792, %v1388
    %v1794 = vand.u32 2147483647, %v1388
    %vm1795 = vcmp.lt.f32.partialorder %v1794, 0.0004427343
    %v1796 = vsel %vm1795, %v1793, %v1790
    %v1797 = vadd.f32 %v1390, 1.0
    %v1798 = vlog2.pop %v1797
    %v1799 = vmul.f32 %v1798, 0.6931472
    %v1800 = vmul.f32 -0.5, %v1390
    %v1801 = vadd.f32 %v1800, 1.0
    %v1802 = vmul.f32 %v1801, %v1390
    %v1803 = vand.u32 2147483647, %v1390
    %vm1804 = vcmp.lt.f32.partialorder %v1803, 0.0004427343
    %v1805 = vsel %vm1804, %v1802, %v1799
    %v1806 = vadd.f32 %v1392, 1.0
    %v1807 = vlog2.pop %v1806
    %v1808 = vmul.f32 %v1807, 0.6931472
    %v1809 = vmul.f32 -0.5, %v1392
    %v1810 = vadd.f32 %v1809, 1.0
    %v1811 = vmul.f32 %v1810, %v1392
    %v1812 = vand.u32 2147483647, %v1392
    %vm1813 = vcmp.lt.f32.partialorder %v1812, 0.0004427343
    %v1814 = vsel %vm1813, %v1811, %v1808
    %v1815 = vadd.f32 %v1394, 1.0
    %v1816 = vlog2.pop %v1815
    %v1817 = vmul.f32 %v1816, 0.6931472
    %v1818 = vmul.f32 -0.5, %v1394
    %v1819 = vadd.f32 %v1818, 1.0
    %v1820 = vmul.f32 %v1819, %v1394
    %v1821 = vand.u32 2147483647, %v1394
    %vm1822 = vcmp.lt.f32.partialorder %v1821, 0.0004427343
    %v1823 = vsel %vm1822, %v1820, %v1817
    %v1824 = vadd.f32 %v1396, 1.0
    %v1825 = vlog2.pop %v1824
    %v1826 = vmul.f32 %v1825, 0.6931472
    %v1827 = vmul.f32 -0.5, %v1396
    %v1828 = vadd.f32 %v1827, 1.0
    %v1829 = vmul.f32 %v1828, %v1396
    %v1830 = vand.u32 2147483647, %v1396
    %vm1831 = vcmp.lt.f32.partialorder %v1830, 0.0004427343
    %v1832 = vsel %vm1831, %v1829, %v1826
    %v1833 = vadd.f32 %v1398, 1.0
    %v1834 = vlog2.pop %v1833
    %v1835 = vmul.f32 %v1834, 0.6931472
    %v1836 = vmul.f32 -0.5, %v1398
    %v1837 = vadd.f32 %v1836, 1.0
    %v1838 = vmul.f32 %v1837, %v1398
    %v1839 = vand.u32 2147483647, %v1398
    %vm1840 = vcmp.lt.f32.partialorder %v1839, 0.0004427343
    %v1841 = vsel %vm1840, %v1838, %v1835
    %v1842 = vadd.f32 %v1400, 1.0
    %v1843 = vlog2.pop %v1842
    %v1844 = vmul.f32 %v1843, 0.6931472
    %v1845 = vmul.f32 -0.5, %v1400
    %v1846 = vadd.f32 %v1845, 1.0
    %v1847 = vmul.f32 %v1846, %v1400
    %v1848 = vand.u32 2147483647, %v1400
    %vm1849 = vcmp.lt.f32.partialorder %v1848, 0.0004427343
    %v1850 = vsel %vm1849, %v1847, %v1844
    %v1851 = vadd.f32 %v1402, 1.0
    %v1852 = vlog2.pop %v1851
    %v1853 = vmul.f32 %v1852, 0.6931472
    %v1854 = vmul.f32 -0.5, %v1402
    %v1855 = vadd.f32 %v1854, 1.0
    %v1856 = vmul.f32 %v1855, %v1402
    %v1857 = vand.u32 2147483647, %v1402
    %vm1858 = vcmp.lt.f32.partialorder %v1857, 0.0004427343
    %v1859 = vsel %vm1858, %v1856, %v1853
    %v1860 = vadd.f32 %v1404, 1.0
    %v1861 = vlog2.pop %v1860
    %v1862 = vmul.f32 %v1861, 0.6931472
    %v1863 = vmul.f32 -0.5, %v1404
    %v1864 = vadd.f32 %v1863, 1.0
    %v1865 = vmul.f32 %v1864, %v1404
    %v1866 = vand.u32 2147483647, %v1404
    %vm1867 = vcmp.lt.f32.partialorder %v1866, 0.0004427343
    %v1868 = vsel %vm1867, %v1865, %v1862
    %v1869 = vadd.f32 %v1406, 1.0
    %v1870 = vlog2.pop %v1869
    %v1871 = vmul.f32 %v1870, 0.6931472
    %v1872 = vmul.f32 -0.5, %v1406
    %v1873 = vadd.f32 %v1872, 1.0
    %v1874 = vmul.f32 %v1873, %v1406
    %v1875 = vand.u32 2147483647, %v1406
    %vm1876 = vcmp.lt.f32.partialorder %v1875, 0.0004427343
    %v1877 = vsel %vm1876, %v1874, %v1871
    %v1878 = vadd.f32 %v1408, 1.0
    %v1879 = vlog2.pop %v1878
    %v1880 = vmul.f32 %v1879, 0.6931472
    %v1881 = vmul.f32 -0.5, %v1408
    %v1882 = vadd.f32 %v1881, 1.0
    %v1883 = vmul.f32 %v1882, %v1408
    %v1884 = vand.u32 2147483647, %v1408
    %vm1885 = vcmp.lt.f32.partialorder %v1884, 0.0004427343
    %v1886 = vsel %vm1885, %v1883, %v1880
    %v1887 = vadd.f32 %v1410, 1.0
    %v1888 = vlog2.pop %v1887
    %v1889 = vmul.f32 %v1888, 0.6931472
    %v1890 = vmul.f32 -0.5, %v1410
    %v1891 = vadd.f32 %v1890, 1.0
    %v1892 = vmul.f32 %v1891, %v1410
    %v1893 = vand.u32 2147483647, %v1410
    %vm1894 = vcmp.lt.f32.partialorder %v1893, 0.0004427343
    %v1895 = vsel %vm1894, %v1892, %v1889
    %v1896 = vadd.f32 %v1412, 1.0
    %v1897 = vlog2.pop %v1896
    %v1898 = vmul.f32 %v1897, 0.6931472
    %v1899 = vmul.f32 -0.5, %v1412
    %v1900 = vadd.f32 %v1899, 1.0
    %v1901 = vmul.f32 %v1900, %v1412
    %v1902 = vand.u32 2147483647, %v1412
    %vm1903 = vcmp.lt.f32.partialorder %v1902, 0.0004427343
    %v1904 = vsel %vm1903, %v1901, %v1898
    %v1905 = vadd.f32 %v1414, 1.0
    %v1906 = vlog2.pop %v1905
    %v1907 = vmul.f32 %v1906, 0.6931472
    %v1908 = vmul.f32 -0.5, %v1414
    %v1909 = vadd.f32 %v1908, 1.0
    %v1910 = vmul.f32 %v1909, %v1414
    %v1911 = vand.u32 2147483647, %v1414
    %vm1912 = vcmp.lt.f32.partialorder %v1911, 0.0004427343
    %v1913 = vsel %vm1912, %v1910, %v1907
    %v1914 = vadd.f32 %v1416, 1.0
    %v1915 = vlog2.pop %v1914
    %v1916 = vmul.f32 %v1915, 0.6931472
    %v1917 = vmul.f32 -0.5, %v1416
    %v1918 = vadd.f32 %v1917, 1.0
    %v1919 = vmul.f32 %v1918, %v1416
    %v1920 = vand.u32 2147483647, %v1416
    %vm1921 = vcmp.lt.f32.partialorder %v1920, 0.0004427343
    %v1922 = vsel %vm1921, %v1919, %v1916
    %v1923 = vadd.f32 %v1418, 1.0
    %v1924 = vlog2.pop %v1923
    %v1925 = vmul.f32 %v1924, 0.6931472
    %v1926 = vmul.f32 -0.5, %v1418
    %v1927 = vadd.f32 %v1926, 1.0
    %v1928 = vmul.f32 %v1927, %v1418
    %v1929 = vand.u32 2147483647, %v1418
    %vm1930 = vcmp.lt.f32.partialorder %v1929, 0.0004427343
    %v1931 = vsel %vm1930, %v1928, %v1925
    %v1932 = vadd.f32 %v1420, 1.0
    %v1933 = vlog2.pop %v1932
    %v1934 = vmul.f32 %v1933, 0.6931472
    %v1935 = vmul.f32 -0.5, %v1420
    %v1936 = vadd.f32 %v1935, 1.0
    %v1937 = vmul.f32 %v1936, %v1420
    %v1938 = vand.u32 2147483647, %v1420
    %vm1939 = vcmp.lt.f32.partialorder %v1938, 0.0004427343
    %v1940 = vsel %vm1939, %v1937, %v1934
    %v1941 = vadd.f32 %v1422, 1.0
    %v1942 = vlog2.pop %v1941
    %v1943 = vmul.f32 %v1942, 0.6931472
    %v1944 = vmul.f32 -0.5, %v1422
    %v1945 = vadd.f32 %v1944, 1.0
    %v1946 = vmul.f32 %v1945, %v1422
    %v1947 = vand.u32 2147483647, %v1422
    %vm1948 = vcmp.lt.f32.partialorder %v1947, 0.0004427343
    %v1949 = vsel %vm1948, %v1946, %v1943
    %v1950 = vadd.f32 %v1424, 1.0
    %v1951 = vlog2.pop %v1950
    %v1952 = vmul.f32 %v1951, 0.6931472
    %v1953 = vmul.f32 -0.5, %v1424
    %v1954 = vadd.f32 %v1953, 1.0
    %v1955 = vmul.f32 %v1954, %v1424
    %v1956 = vand.u32 2147483647, %v1424
    %vm1957 = vcmp.lt.f32.partialorder %v1956, 0.0004427343
    %v1958 = vsel %vm1957, %v1955, %v1952
    %v1959 = vadd.f32 %v1426, 1.0
    %v1960 = vlog2.pop %v1959
    %v1961 = vmul.f32 %v1960, 0.6931472
    %v1962 = vmul.f32 -0.5, %v1426
    %v1963 = vadd.f32 %v1962, 1.0
    %v1964 = vmul.f32 %v1963, %v1426
    %v1965 = vand.u32 2147483647, %v1426
    %vm1966 = vcmp.lt.f32.partialorder %v1965, 0.0004427343
    %v1967 = vsel %vm1966, %v1964, %v1961
    %v1968 = vadd.f32 %v1428, 1.0
    %v1969 = vlog2.pop %v1968
    %v1970 = vmul.f32 %v1969, 0.6931472
    %v1971 = vmul.f32 -0.5, %v1428
    %v1972 = vadd.f32 %v1971, 1.0
    %v1973 = vmul.f32 %v1972, %v1428
    %v1974 = vand.u32 2147483647, %v1428
    %vm1975 = vcmp.lt.f32.partialorder %v1974, 0.0004427343
    %v1976 = vsel %vm1975, %v1973, %v1970
    %v1977 = vadd.f32 %v1430, 1.0
    %v1978 = vlog2.pop %v1977
    %v1979 = vmul.f32 %v1978, 0.6931472
    %v1980 = vmul.f32 -0.5, %v1430
    %v1981 = vadd.f32 %v1980, 1.0
    %v1982 = vmul.f32 %v1981, %v1430
    %v1983 = vand.u32 2147483647, %v1430
    %vm1984 = vcmp.lt.f32.partialorder %v1983, 0.0004427343
    %v1985 = vsel %vm1984, %v1982, %v1979
    %v1986 = vadd.f32 %v1432, 1.0
    %v1987 = vlog2.pop %v1986
    %v1988 = vmul.f32 %v1987, 0.6931472
    %v1989 = vmul.f32 -0.5, %v1432
    %v1990 = vadd.f32 %v1989, 1.0
    %v1991 = vmul.f32 %v1990, %v1432
    %v1992 = vand.u32 2147483647, %v1432
    %vm1993 = vcmp.lt.f32.partialorder %v1992, 0.0004427343
    %v1994 = vsel %vm1993, %v1991, %v1988
    %v1995 = vadd.f32 %v1434, 1.0
    %v1996 = vlog2.pop %v1995
    %v1997 = vmul.f32 %v1996, 0.6931472
    %v1998 = vmul.f32 -0.5, %v1434
    %v1999 = vadd.f32 %v1998, 1.0
    %v2000 = vmul.f32 %v1999, %v1434
    %v2001 = vand.u32 2147483647, %v1434
    %vm2002 = vcmp.lt.f32.partialorder %v2001, 0.0004427343
    %v2003 = vsel %vm2002, %v2000, %v1997
    %v2004 = vadd.f32 %v1436, 1.0
    %v2005 = vlog2.pop %v2004
    %v2006 = vmul.f32 %v2005, 0.6931472
    %v2007 = vmul.f32 -0.5, %v1436
    %v2008 = vadd.f32 %v2007, 1.0
    %v2009 = vmul.f32 %v2008, %v1436
    %v2010 = vand.u32 2147483647, %v1436
    %vm2011 = vcmp.lt.f32.partialorder %v2010, 0.0004427343
    %v2012 = vsel %vm2011, %v2009, %v2006
    %v2013 = vadd.f32 %v989, %v1445
    %v2014 = vadd.f32 %v990, %v1454
    %v2015 = vadd.f32 %v991, %v1463
    %v2016 = vadd.f32 %v992, %v1472
    %v2017 = vadd.f32 %v993, %v1481
    %v2018 = vadd.f32 %v994, %v1490
    %v2019 = vadd.f32 %v995, %v1499
    %v2020 = vadd.f32 %v996, %v1508
    %v2021 = vadd.f32 %v997, %v1517
    %v2022 = vadd.f32 %v998, %v1526
    %v2023 = vadd.f32 %v999, %v1535
    %v2024 = vadd.f32 %v1000, %v1544
    %v2025 = vadd.f32 %v1001, %v1553
    %v2026 = vadd.f32 %v1002, %v1562
    %v2027 = vadd.f32 %v1003, %v1571
    %v2028 = vadd.f32 %v1004, %v1580
    %v2029 = vadd.f32 %v1005, %v1589
    %v2030 = vadd.f32 %v1006, %v1598
    %v2031 = vadd.f32 %v1007, %v1607
    %v2032 = vadd.f32 %v1008, %v1616
    %v2033 = vadd.f32 %v1009, %v1625
    %v2034 = vadd.f32 %v1010, %v1634
    %v2035 = vadd.f32 %v1011, %v1643
    %v2036 = vadd.f32 %v1012, %v1652
    %v2037 = vadd.f32 %v1013, %v1661
    %v2038 = vadd.f32 %v1014, %v1670
    %v2039 = vadd.f32 %v1015, %v1679
    %v2040 = vadd.f32 %v1016, %v1688
    %v2041 = vadd.f32 %v1017, %v1697
    %v2042 = vadd.f32 %v1018, %v1706
    %v2043 = vadd.f32 %v1019, %v1715
    %v2044 = vadd.f32 %v1020, %v1724
    %v2045 = vadd.f32 %v1021, %v1733
    %v2046 = vadd.f32 %v1022, %v1742
    %v2047 = vadd.f32 %v1023, %v1751
    %v2048 = vadd.f32 %v1024, %v1760
    %v2049 = vadd.f32 %v1025, %v1769
    %v2050 = vadd.f32 %v1026, %v1778
    %v2051 = vadd.f32 %v1027, %v1787
    %v2052 = vadd.f32 %v1028, %v1796
    %v2053 = vadd.f32 %v1029, %v1805
    %v2054 = vadd.f32 %v1030, %v1814
    %v2055 = vadd.f32 %v1031, %v1823
    %v2056 = vadd.f32 %v1032, %v1832
    %v2057 = vadd.f32 %v1033, %v1841
    %v2058 = vadd.f32 %v1034, %v1850
    %v2059 = vadd.f32 %v1035, %v1859
    %v2060 = vadd.f32 %v1036, %v1868
    %v2061 = vadd.f32 %v1037, %v1877
    %v2062 = vadd.f32 %v1038, %v1886
    %v2063 = vadd.f32 %v1039, %v1895
    %v2064 = vadd.f32 %v1040, %v1904
    %v2065 = vadd.f32 %v1041, %v1913
    %v2066 = vadd.f32 %v1042, %v1922
    %v2067 = vadd.f32 %v1043, %v1931
    %v2068 = vadd.f32 %v1044, %v1940
    %v2069 = vadd.f32 %v1045, %v1949
    %v2070 = vadd.f32 %v1046, %v1958
    %v2071 = vadd.f32 %v1047, %v1967
    %v2072 = vadd.f32 %v1048, %v1976
    %v2073 = vadd.f32 %v1049, %v1985
    %v2074 = vadd.f32 %v1050, %v1994
    %v2075 = vadd.f32 %v1051, %v2003
    %v2076 = vadd.f32 %v1052, %v2012
    %v2077 = vsel %vm1053, %v1117, %v2013
    %v2078 = vsel %vm1054, %v1118, %v2014
    %v2079 = vsel %vm1055, %v1119, %v2015
    %v2080 = vsel %vm1056, %v1120, %v2016
    %v2081 = vsel %vm1057, %v1121, %v2017
    %v2082 = vsel %vm1058, %v1122, %v2018
    %v2083 = vsel %vm1059, %v1123, %v2019
    %v2084 = vsel %vm1060, %v1124, %v2020
    %v2085 = vsel %vm1061, %v1125, %v2021
    %v2086 = vsel %vm1062, %v1126, %v2022
    %v2087 = vsel %vm1063, %v1127, %v2023
    %v2088 = vsel %vm1064, %v1128, %v2024
    %v2089 = vsel %vm1065, %v1129, %v2025
    %v2090 = vsel %vm1066, %v1130, %v2026
    %v2091 = vsel %vm1067, %v1131, %v2027
    %v2092 = vsel %vm1068, %v1132, %v2028
    %v2093 = vsel %vm1069, %v1133, %v2029
    %v2094 = vsel %vm1070, %v1134, %v2030
    %v2095 = vsel %vm1071, %v1135, %v2031
    %v2096 = vsel %vm1072, %v1136, %v2032
    %v2097 = vsel %vm1073, %v1137, %v2033
    %v2098 = vsel %vm1074, %v1138, %v2034
    %v2099 = vsel %vm1075, %v1139, %v2035
    %v2100 = vsel %vm1076, %v1140, %v2036
    %v2101 = vsel %vm1077, %v1141, %v2037
    %v2102 = vsel %vm1078, %v1142, %v2038
    %v2103 = vsel %vm1079, %v1143, %v2039
    %v2104 = vsel %vm1080, %v1144, %v2040
    %v2105 = vsel %vm1081, %v1145, %v2041
    %v2106 = vsel %vm1082, %v1146, %v2042
    %v2107 = vsel %vm1083, %v1147, %v2043
    %v2108 = vsel %vm1084, %v1148, %v2044
    %v2109 = vsel %vm1085, %v1149, %v2045
    %v2110 = vsel %vm1086, %v1150, %v2046
    %v2111 = vsel %vm1087, %v1151, %v2047
    %v2112 = vsel %vm1088, %v1152, %v2048
    %v2113 = vsel %vm1089, %v1153, %v2049
    %v2114 = vsel %vm1090, %v1154, %v2050
    %v2115 = vsel %vm1091, %v1155, %v2051
    %v2116 = vsel %vm1092, %v1156, %v2052
    %v2117 = vsel %vm1093, %v1157, %v2053
    %v2118 = vsel %vm1094, %v1158, %v2054
    %v2119 = vsel %vm1095, %v1159, %v2055
    %v2120 = vsel %vm1096, %v1160, %v2056
    %v2121 = vsel %vm1097, %v1161, %v2057
    %v2122 = vsel %vm1098, %v1162, %v2058
    %v2123 = vsel %vm1099, %v1163, %v2059
    %v2124 = vsel %vm1100, %v1164, %v2060
    %v2125 = vsel %vm1101, %v1165, %v2061
    %v2126 = vsel %vm1102, %v1166, %v2062
    %v2127 = vsel %vm1103, %v1167, %v2063
    %v2128 = vsel %vm1104, %v1168, %v2064
    %v2129 = vsel %vm1105, %v1169, %v2065
    %v2130 = vsel %vm1106, %v1170, %v2066
    %v2131 = vsel %vm1107, %v1171, %v2067
    %v2132 = vsel %vm1108, %v1172, %v2068
    %v2133 = vsel %vm1109, %v1173, %v2069
    %v2134 = vsel %vm1110, %v1174, %v2070
    %v2135 = vsel %vm1111, %v1175, %v2071
    %v2136 = vsel %vm1112, %v1176, %v2072
    %v2137 = vsel %vm1113, %v1177, %v2073
    %v2138 = vsel %vm1114, %v1178, %v2074
    %v2139 = vsel %vm1115, %v1179, %v2075
    %v2140 = vsel %vm1116, %v1180, %v2076
    %v2141 = vmax.f32 %v735, 0.0
    %v2142 = vmax.f32 %v738, 0.0
    %v2143 = vmax.f32 %v741, 0.0
    %v2144 = vmax.f32 %v744, 0.0
    %v2145 = vmax.f32 %v747, 0.0
    %v2146 = vmax.f32 %v750, 0.0
    %v2147 = vmax.f32 %v753, 0.0
    %v2148 = vmax.f32 %v756, 0.0
    %v2149 = vmax.f32 %v759, 0.0
    %v2150 = vmax.f32 %v762, 0.0
    %v2151 = vmax.f32 %v765, 0.0
    %v2152 = vmax.f32 %v768, 0.0
    %v2153 = vmax.f32 %v771, 0.0
    %v2154 = vmax.f32 %v774, 0.0
    %v2155 = vmax.f32 %v777, 0.0
    %v2156 = vmax.f32 %v780, 0.0
    %v2157 = vmax.f32 %v783, 0.0
    %v2158 = vmax.f32 %v786, 0.0
    %v2159 = vmax.f32 %v789, 0.0
    %v2160 = vmax.f32 %v792, 0.0
    %v2161 = vmax.f32 %v795, 0.0
    %v2162 = vmax.f32 %v798, 0.0
    %v2163 = vmax.f32 %v801, 0.0
    %v2164 = vmax.f32 %v804, 0.0
    %v2165 = vmax.f32 %v807, 0.0
    %v2166 = vmax.f32 %v810, 0.0
    %v2167 = vmax.f32 %v813, 0.0
    %v2168 = vmax.f32 %v816, 0.0
    %v2169 = vmax.f32 %v819, 0.0
    %v2170 = vmax.f32 %v822, 0.0
    %v2171 = vmax.f32 %v825, 0.0
    %v2172 = vmax.f32 %v828, 0.0
    %v2173 = vmax.f32 %v831, 0.0
    %v2174 = vmax.f32 %v834, 0.0
    %v2175 = vmax.f32 %v837, 0.0
    %v2176 = vmax.f32 %v840, 0.0
    %v2177 = vmax.f32 %v843, 0.0
    %v2178 = vmax.f32 %v846, 0.0
    %v2179 = vmax.f32 %v849, 0.0
    %v2180 = vmax.f32 %v852, 0.0
    %v2181 = vmax.f32 %v855, 0.0
    %v2182 = vmax.f32 %v858, 0.0
    %v2183 = vmax.f32 %v861, 0.0
    %v2184 = vmax.f32 %v864, 0.0
    %v2185 = vmax.f32 %v867, 0.0
    %v2186 = vmax.f32 %v870, 0.0
    %v2187 = vmax.f32 %v873, 0.0
    %v2188 = vmax.f32 %v876, 0.0
    %v2189 = vmax.f32 %v879, 0.0
    %v2190 = vmax.f32 %v882, 0.0
    %v2191 = vmax.f32 %v885, 0.0
    %v2192 = vmax.f32 %v888, 0.0
    %v2193 = vmax.f32 %v891, 0.0
    %v2194 = vmax.f32 %v894, 0.0
    %v2195 = vmax.f32 %v897, 0.0
    %v2196 = vmax.f32 %v900, 0.0
    %v2197 = vmax.f32 %v903, 0.0
    %v2198 = vmax.f32 %v906, 0.0
    %v2199 = vmax.f32 %v909, 0.0
    %v2200 = vmax.f32 %v912, 0.0
    %v2201 = vmax.f32 %v915, 0.0
    %v2202 = vmax.f32 %v918, 0.0
    %v2203 = vmax.f32 %v921, 0.0
    %v2204 = vmax.f32 %v924, 0.0
    %vm2205 = vcmp.ne.f32.partialorder %v735, %v735
    %vm2206 = vcmp.ne.f32.partialorder %v738, %v738
    %vm2207 = vcmp.ne.f32.partialorder %v741, %v741
    %vm2208 = vcmp.ne.f32.partialorder %v744, %v744
    %vm2209 = vcmp.ne.f32.partialorder %v747, %v747
    %vm2210 = vcmp.ne.f32.partialorder %v750, %v750
    %vm2211 = vcmp.ne.f32.partialorder %v753, %v753
    %vm2212 = vcmp.ne.f32.partialorder %v756, %v756
    %vm2213 = vcmp.ne.f32.partialorder %v759, %v759
    %vm2214 = vcmp.ne.f32.partialorder %v762, %v762
    %vm2215 = vcmp.ne.f32.partialorder %v765, %v765
    %vm2216 = vcmp.ne.f32.partialorder %v768, %v768
    %vm2217 = vcmp.ne.f32.partialorder %v771, %v771
    %vm2218 = vcmp.ne.f32.partialorder %v774, %v774
    %vm2219 = vcmp.ne.f32.partialorder %v777, %v777
    %vm2220 = vcmp.ne.f32.partialorder %v780, %v780
    %vm2221 = vcmp.ne.f32.partialorder %v783, %v783
    %vm2222 = vcmp.ne.f32.partialorder %v786, %v786
    %vm2223 = vcmp.ne.f32.partialorder %v789, %v789
    %vm2224 = vcmp.ne.f32.partialorder %v792, %v792
    %vm2225 = vcmp.ne.f32.partialorder %v795, %v795
    %vm2226 = vcmp.ne.f32.partialorder %v798, %v798
    %vm2227 = vcmp.ne.f32.partialorder %v801, %v801
    %vm2228 = vcmp.ne.f32.partialorder %v804, %v804
    %vm2229 = vcmp.ne.f32.partialorder %v807, %v807
    %vm2230 = vcmp.ne.f32.partialorder %v810, %v810
    %vm2231 = vcmp.ne.f32.partialorder %v813, %v813
    %vm2232 = vcmp.ne.f32.partialorder %v816, %v816
    %vm2233 = vcmp.ne.f32.partialorder %v819, %v819
    %vm2234 = vcmp.ne.f32.partialorder %v822, %v822
    %vm2235 = vcmp.ne.f32.partialorder %v825, %v825
    %vm2236 = vcmp.ne.f32.partialorder %v828, %v828
    %vm2237 = vcmp.ne.f32.partialorder %v831, %v831
    %vm2238 = vcmp.ne.f32.partialorder %v834, %v834
    %vm2239 = vcmp.ne.f32.partialorder %v837, %v837
    %vm2240 = vcmp.ne.f32.partialorder %v840, %v840
    %vm2241 = vcmp.ne.f32.partialorder %v843, %v843
    %vm2242 = vcmp.ne.f32.partialorder %v846, %v846
    %vm2243 = vcmp.ne.f32.partialorder %v849, %v849
    %vm2244 = vcmp.ne.f32.partialorder %v852, %v852
    %vm2245 = vcmp.ne.f32.partialorder %v855, %v855
    %vm2246 = vcmp.ne.f32.partialorder %v858, %v858
    %vm2247 = vcmp.ne.f32.partialorder %v861, %v861
    %vm2248 = vcmp.ne.f32.partialorder %v864, %v864
    %vm2249 = vcmp.ne.f32.partialorder %v867, %v867
    %vm2250 = vcmp.ne.f32.partialorder %v870, %v870
    %vm2251 = vcmp.ne.f32.partialorder %v873, %v873
    %vm2252 = vcmp.ne.f32.partialorder %v876, %v876
    %vm2253 = vcmp.ne.f32.partialorder %v879, %v879
    %vm2254 = vcmp.ne.f32.partialorder %v882, %v882
    %vm2255 = vcmp.ne.f32.partialorder %v885, %v885
    %vm2256 = vcmp.ne.f32.partialorder %v888, %v888
    %vm2257 = vcmp.ne.f32.partialorder %v891, %v891
    %vm2258 = vcmp.ne.f32.partialorder %v894, %v894
    %vm2259 = vcmp.ne.f32.partialorder %v897, %v897
    %vm2260 = vcmp.ne.f32.partialorder %v900, %v900
    %vm2261 = vcmp.ne.f32.partialorder %v903, %v903
    %vm2262 = vcmp.ne.f32.partialorder %v906, %v906
    %vm2263 = vcmp.ne.f32.partialorder %v909, %v909
    %vm2264 = vcmp.ne.f32.partialorder %v912, %v912
    %vm2265 = vcmp.ne.f32.partialorder %v915, %v915
    %vm2266 = vcmp.ne.f32.partialorder %v918, %v918
    %vm2267 = vcmp.ne.f32.partialorder %v921, %v921
    %vm2268 = vcmp.ne.f32.partialorder %v924, %v924
    %v2269 = vadd.f32 %v735, 0.0
    %v2270 = vadd.f32 %v738, 0.0
    %v2271 = vadd.f32 %v741, 0.0
    %v2272 = vadd.f32 %v744, 0.0
    %v2273 = vadd.f32 %v747, 0.0
    %v2274 = vadd.f32 %v750, 0.0
    %v2275 = vadd.f32 %v753, 0.0
    %v2276 = vadd.f32 %v756, 0.0
    %v2277 = vadd.f32 %v759, 0.0
    %v2278 = vadd.f32 %v762, 0.0
    %v2279 = vadd.f32 %v765, 0.0
    %v2280 = vadd.f32 %v768, 0.0
    %v2281 = vadd.f32 %v771, 0.0
    %v2282 = vadd.f32 %v774, 0.0
    %v2283 = vadd.f32 %v777, 0.0
    %v2284 = vadd.f32 %v780, 0.0
    %v2285 = vadd.f32 %v783, 0.0
    %v2286 = vadd.f32 %v786, 0.0
    %v2287 = vadd.f32 %v789, 0.0
    %v2288 = vadd.f32 %v792, 0.0
    %v2289 = vadd.f32 %v795, 0.0
    %v2290 = vadd.f32 %v798, 0.0
    %v2291 = vadd.f32 %v801, 0.0
    %v2292 = vadd.f32 %v804, 0.0
    %v2293 = vadd.f32 %v807, 0.0
    %v2294 = vadd.f32 %v810, 0.0
    %v2295 = vadd.f32 %v813, 0.0
    %v2296 = vadd.f32 %v816, 0.0
    %v2297 = vadd.f32 %v819, 0.0
    %v2298 = vadd.f32 %v822, 0.0
    %v2299 = vadd.f32 %v825, 0.0
    %v2300 = vadd.f32 %v828, 0.0
    %v2301 = vadd.f32 %v831, 0.0
    %v2302 = vadd.f32 %v834, 0.0
    %v2303 = vadd.f32 %v837, 0.0
    %v2304 = vadd.f32 %v840, 0.0
    %v2305 = vadd.f32 %v843, 0.0
    %v2306 = vadd.f32 %v846, 0.0
    %v2307 = vadd.f32 %v849, 0.0
    %v2308 = vadd.f32 %v852, 0.0
    %v2309 = vadd.f32 %v855, 0.0
    %v2310 = vadd.f32 %v858, 0.0
    %v2311 = vadd.f32 %v861, 0.0
    %v2312 = vadd.f32 %v864, 0.0
    %v2313 = vadd.f32 %v867, 0.0
    %v2314 = vadd.f32 %v870, 0.0
    %v2315 = vadd.f32 %v873, 0.0
    %v2316 = vadd.f32 %v876, 0.0
    %v2317 = vadd.f32 %v879, 0.0
    %v2318 = vadd.f32 %v882, 0.0
    %v2319 = vadd.f32 %v885, 0.0
    %v2320 = vadd.f32 %v888, 0.0
    %v2321 = vadd.f32 %v891, 0.0
    %v2322 = vadd.f32 %v894, 0.0
    %v2323 = vadd.f32 %v897, 0.0
    %v2324 = vadd.f32 %v900, 0.0
    %v2325 = vadd.f32 %v903, 0.0
    %v2326 = vadd.f32 %v906, 0.0
    %v2327 = vadd.f32 %v909, 0.0
    %v2328 = vadd.f32 %v912, 0.0
    %v2329 = vadd.f32 %v915, 0.0
    %v2330 = vadd.f32 %v918, 0.0
    %v2331 = vadd.f32 %v921, 0.0
    %v2332 = vadd.f32 %v924, 0.0
    %v2333 = vand.u32 2147483647, %v735
    %v2334 = vand.u32 2147483647, %v738
    %v2335 = vand.u32 2147483647, %v741
    %v2336 = vand.u32 2147483647, %v744
    %v2337 = vand.u32 2147483647, %v747
    %v2338 = vand.u32 2147483647, %v750
    %v2339 = vand.u32 2147483647, %v753
    %v2340 = vand.u32 2147483647, %v756
    %v2341 = vand.u32 2147483647, %v759
    %v2342 = vand.u32 2147483647, %v762
    %v2343 = vand.u32 2147483647, %v765
    %v2344 = vand.u32 2147483647, %v768
    %v2345 = vand.u32 2147483647, %v771
    %v2346 = vand.u32 2147483647, %v774
    %v2347 = vand.u32 2147483647, %v777
    %v2348 = vand.u32 2147483647, %v780
    %v2349 = vand.u32 2147483647, %v783
    %v2350 = vand.u32 2147483647, %v786
    %v2351 = vand.u32 2147483647, %v789
    %v2352 = vand.u32 2147483647, %v792
    %v2353 = vand.u32 2147483647, %v795
    %v2354 = vand.u32 2147483647, %v798
    %v2355 = vand.u32 2147483647, %v801
    %v2356 = vand.u32 2147483647, %v804
    %v2357 = vand.u32 2147483647, %v807
    %v2358 = vand.u32 2147483647, %v810
    %v2359 = vand.u32 2147483647, %v813
    %v2360 = vand.u32 2147483647, %v816
    %v2361 = vand.u32 2147483647, %v819
    %v2362 = vand.u32 2147483647, %v822
    %v2363 = vand.u32 2147483647, %v825
    %v2364 = vand.u32 2147483647, %v828
    %v2365 = vand.u32 2147483647, %v831
    %v2366 = vand.u32 2147483647, %v834
    %v2367 = vand.u32 2147483647, %v837
    %v2368 = vand.u32 2147483647, %v840
    %v2369 = vand.u32 2147483647, %v843
    %v2370 = vand.u32 2147483647, %v846
    %v2371 = vand.u32 2147483647, %v849
    %v2372 = vand.u32 2147483647, %v852
    %v2373 = vand.u32 2147483647, %v855
    %v2374 = vand.u32 2147483647, %v858
    %v2375 = vand.u32 2147483647, %v861
    %v2376 = vand.u32 2147483647, %v864
    %v2377 = vand.u32 2147483647, %v867
    %v2378 = vand.u32 2147483647, %v870
    %v2379 = vand.u32 2147483647, %v873
    %v2380 = vand.u32 2147483647, %v876
    %v2381 = vand.u32 2147483647, %v879
    %v2382 = vand.u32 2147483647, %v882
    %v2383 = vand.u32 2147483647, %v885
    %v2384 = vand.u32 2147483647, %v888
    %v2385 = vand.u32 2147483647, %v891
    %v2386 = vand.u32 2147483647, %v894
    %v2387 = vand.u32 2147483647, %v897
    %v2388 = vand.u32 2147483647, %v900
    %v2389 = vand.u32 2147483647, %v903
    %v2390 = vand.u32 2147483647, %v906
    %v2391 = vand.u32 2147483647, %v909
    %v2392 = vand.u32 2147483647, %v912
    %v2393 = vand.u32 2147483647, %v915
    %v2394 = vand.u32 2147483647, %v918
    %v2395 = vand.u32 2147483647, %v921
    %v2396 = vand.u32 2147483647, %v924
    %v2397 = vsub.f32 0.0, %v2333
    %v2398 = vsub.f32 0.0, %v2334
    %v2399 = vsub.f32 0.0, %v2335
    %v2400 = vsub.f32 0.0, %v2336
    %v2401 = vsub.f32 0.0, %v2337
    %v2402 = vsub.f32 0.0, %v2338
    %v2403 = vsub.f32 0.0, %v2339
    %v2404 = vsub.f32 0.0, %v2340
    %v2405 = vsub.f32 0.0, %v2341
    %v2406 = vsub.f32 0.0, %v2342
    %v2407 = vsub.f32 0.0, %v2343
    %v2408 = vsub.f32 0.0, %v2344
    %v2409 = vsub.f32 0.0, %v2345
    %v2410 = vsub.f32 0.0, %v2346
    %v2411 = vsub.f32 0.0, %v2347
    %v2412 = vsub.f32 0.0, %v2348
    %v2413 = vsub.f32 0.0, %v2349
    %v2414 = vsub.f32 0.0, %v2350
    %v2415 = vsub.f32 0.0, %v2351
    %v2416 = vsub.f32 0.0, %v2352
    %v2417 = vsub.f32 0.0, %v2353
    %v2418 = vsub.f32 0.0, %v2354
    %v2419 = vsub.f32 0.0, %v2355
    %v2420 = vsub.f32 0.0, %v2356
    %v2421 = vsub.f32 0.0, %v2357
    %v2422 = vsub.f32 0.0, %v2358
    %v2423 = vsub.f32 0.0, %v2359
    %v2424 = vsub.f32 0.0, %v2360
    %v2425 = vsub.f32 0.0, %v2361
    %v2426 = vsub.f32 0.0, %v2362
    %v2427 = vsub.f32 0.0, %v2363
    %v2428 = vsub.f32 0.0, %v2364
    %v2429 = vsub.f32 0.0, %v2365
    %v2430 = vsub.f32 0.0, %v2366
    %v2431 = vsub.f32 0.0, %v2367
    %v2432 = vsub.f32 0.0, %v2368
    %v2433 = vsub.f32 0.0, %v2369
    %v2434 = vsub.f32 0.0, %v2370
    %v2435 = vsub.f32 0.0, %v2371
    %v2436 = vsub.f32 0.0, %v2372
    %v2437 = vsub.f32 0.0, %v2373
    %v2438 = vsub.f32 0.0, %v2374
    %v2439 = vsub.f32 0.0, %v2375
    %v2440 = vsub.f32 0.0, %v2376
    %v2441 = vsub.f32 0.0, %v2377
    %v2442 = vsub.f32 0.0, %v2378
    %v2443 = vsub.f32 0.0, %v2379
    %v2444 = vsub.f32 0.0, %v2380
    %v2445 = vsub.f32 0.0, %v2381
    %v2446 = vsub.f32 0.0, %v2382
    %v2447 = vsub.f32 0.0, %v2383
    %v2448 = vsub.f32 0.0, %v2384
    %v2449 = vsub.f32 0.0, %v2385
    %v2450 = vsub.f32 0.0, %v2386
    %v2451 = vsub.f32 0.0, %v2387
    %v2452 = vsub.f32 0.0, %v2388
    %v2453 = vsub.f32 0.0, %v2389
    %v2454 = vsub.f32 0.0, %v2390
    %v2455 = vsub.f32 0.0, %v2391
    %v2456 = vsub.f32 0.0, %v2392
    %v2457 = vsub.f32 0.0, %v2393
    %v2458 = vsub.f32 0.0, %v2394
    %v2459 = vsub.f32 0.0, %v2395
    %v2460 = vsub.f32 0.0, %v2396
    %v2461 = vmul.f32 %v2397, 1.442695
    %v2462 = vpow.pop %v2461
    %v2463 = vmul.f32 %v2398, 1.442695
    %v2464 = vpow.pop %v2463
    %v2465 = vmul.f32 %v2399, 1.442695
    %v2466 = vpow.pop %v2465
    %v2467 = vmul.f32 %v2400, 1.442695
    %v2468 = vpow.pop %v2467
    %v2469 = vmul.f32 %v2401, 1.442695
    %v2470 = vpow.pop %v2469
    %v2471 = vmul.f32 %v2402, 1.442695
    %v2472 = vpow.pop %v2471
    %v2473 = vmul.f32 %v2403, 1.442695
    %v2474 = vpow.pop %v2473
    %v2475 = vmul.f32 %v2404, 1.442695
    %v2476 = vpow.pop %v2475
    %v2477 = vmul.f32 %v2405, 1.442695
    %v2478 = vpow.pop %v2477
    %v2479 = vmul.f32 %v2406, 1.442695
    %v2480 = vpow.pop %v2479
    %v2481 = vmul.f32 %v2407, 1.442695
    %v2482 = vpow.pop %v2481
    %v2483 = vmul.f32 %v2408, 1.442695
    %v2484 = vpow.pop %v2483
    %v2485 = vmul.f32 %v2409, 1.442695
    %v2486 = vpow.pop %v2485
    %v2487 = vmul.f32 %v2410, 1.442695
    %v2488 = vpow.pop %v2487
    %v2489 = vmul.f32 %v2411, 1.442695
    %v2490 = vpow.pop %v2489
    %v2491 = vmul.f32 %v2412, 1.442695
    %v2492 = vpow.pop %v2491
    %v2493 = vmul.f32 %v2413, 1.442695
    %v2494 = vpow.pop %v2493
    %v2495 = vmul.f32 %v2414, 1.442695
    %v2496 = vpow.pop %v2495
    %v2497 = vmul.f32 %v2415, 1.442695
    %v2498 = vpow.pop %v2497
    %v2499 = vmul.f32 %v2416, 1.442695
    %v2500 = vpow.pop %v2499
    %v2501 = vmul.f32 %v2417, 1.442695
    %v2502 = vpow.pop %v2501
    %v2503 = vmul.f32 %v2418, 1.442695
    %v2504 = vpow.pop %v2503
    %v2505 = vmul.f32 %v2419, 1.442695
    %v2506 = vpow.pop %v2505
    %v2507 = vmul.f32 %v2420, 1.442695
    %v2508 = vpow.pop %v2507
    %v2509 = vmul.f32 %v2421, 1.442695
    %v2510 = vpow.pop %v2509
    %v2511 = vmul.f32 %v2422, 1.442695
    %v2512 = vpow.pop %v2511
    %v2513 = vmul.f32 %v2423, 1.442695
    %v2514 = vpow.pop %v2513
    %v2515 = vmul.f32 %v2424, 1.442695
    %v2516 = vpow.pop %v2515
    %v2517 = vmul.f32 %v2425, 1.442695
    %v2518 = vpow.pop %v2517
    %v2519 = vmul.f32 %v2426, 1.442695
    %v2520 = vpow.pop %v2519
    %v2521 = vmul.f32 %v2427, 1.442695
    %v2522 = vpow.pop %v2521
    %v2523 = vmul.f32 %v2428, 1.442695
    %v2524 = vpow.pop %v2523
    %v2525 = vmul.f32 %v2429, 1.442695
    %v2526 = vpow.pop %v2525
    %v2527 = vmul.f32 %v2430, 1.442695
    %v2528 = vpow.pop %v2527
    %v2529 = vmul.f32 %v2431, 1.442695
    %v2530 = vpow.pop %v2529
    %v2531 = vmul.f32 %v2432, 1.442695
    %v2532 = vpow.pop %v2531
    %v2533 = vmul.f32 %v2433, 1.442695
    %v2534 = vpow.pop %v2533
    %v2535 = vmul.f32 %v2434, 1.442695
    %v2536 = vpow.pop %v2535
    %v2537 = vmul.f32 %v2435, 1.442695
    %v2538 = vpow.pop %v2537
    %v2539 = vmul.f32 %v2436, 1.442695
    %v2540 = vpow.pop %v2539
    %v2541 = vmul.f32 %v2437, 1.442695
    %v2542 = vpow.pop %v2541
    %v2543 = vmul.f32 %v2438, 1.442695
    %v2544 = vpow.pop %v2543
    %v2545 = vmul.f32 %v2439, 1.442695
    %v2546 = vpow.pop %v2545
    %v2547 = vmul.f32 %v2440, 1.442695
    %v2548 = vpow.pop %v2547
    %v2549 = vmul.f32 %v2441, 1.442695
    %v2550 = vpow.pop %v2549
    %v2551 = vmul.f32 %v2442, 1.442695
    %v2552 = vpow.pop %v2551
    %v2553 = vmul.f32 %v2443, 1.442695
    %v2554 = vpow.pop %v2553
    %v2555 = vmul.f32 %v2444, 1.442695
    %v2556 = vpow.pop %v2555
    %v2557 = vmul.f32 %v2445, 1.442695
    %v2558 = vpow.pop %v2557
    %v2559 = vmul.f32 %v2446, 1.442695
    %v2560 = vpow.pop %v2559
    %v2561 = vmul.f32 %v2447, 1.442695
    %v2562 = vpow.pop %v2561
    %v2563 = vmul.f32 %v2448, 1.442695
    %v2564 = vpow.pop %v2563
    %v2565 = vmul.f32 %v2449, 1.442695
    %v2566 = vpow.pop %v2565
    %v2567 = vmul.f32 %v2450, 1.442695
    %v2568 = vpow.pop %v2567
    %v2569 = vmul.f32 %v2451, 1.442695
    %v2570 = vpow.pop %v2569
    %v2571 = vmul.f32 %v2452, 1.442695
    %v2572 = vpow.pop %v2571
    %v2573 = vmul.f32 %v2453, 1.442695
    %v2574 = vpow.pop %v2573
    %v2575 = vmul.f32 %v2454, 1.442695
    %v2576 = vpow.pop %v2575
    %v2577 = vmul.f32 %v2455, 1.442695
    %v2578 = vpow.pop %v2577
    %v2579 = vmul.f32 %v2456, 1.442695
    %v2580 = vpow.pop %v2579
    %v2581 = vmul.f32 %v2457, 1.442695
    %v2582 = vpow.pop %v2581
    %v2583 = vmul.f32 %v2458, 1.442695
    %v2584 = vpow.pop %v2583
    %v2585 = vmul.f32 %v2459, 1.442695
    %v2586 = vpow.pop %v2585
    %v2587 = vmul.f32 %v2460, 1.442695
    %v2588 = vpow.pop %v2587
    %v2589 = vadd.f32 %v2462, 1.0
    %v2590 = vlog2.pop %v2589
    %v2591 = vmul.f32 %v2590, 0.6931472
    %v2592 = vmul.f32 -0.5, %v2462
    %v2593 = vadd.f32 %v2592, 1.0
    %v2594 = vmul.f32 %v2593, %v2462
    %v2595 = vand.u32 2147483647, %v2462
    %vm2596 = vcmp.lt.f32.partialorder %v2595, 0.0004427343
    %v2597 = vsel %vm2596, %v2594, %v2591
    %v2598 = vadd.f32 %v2464, 1.0
    %v2599 = vlog2.pop %v2598
    %v2600 = vmul.f32 %v2599, 0.6931472
    %v2601 = vmul.f32 -0.5, %v2464
    %v2602 = vadd.f32 %v2601, 1.0
    %v2603 = vmul.f32 %v2602, %v2464
    %v2604 = vand.u32 2147483647, %v2464
    %vm2605 = vcmp.lt.f32.partialorder %v2604, 0.0004427343
    %v2606 = vsel %vm2605, %v2603, %v2600
    %v2607 = vadd.f32 %v2466, 1.0
    %v2608 = vlog2.pop %v2607
    %v2609 = vmul.f32 %v2608, 0.6931472
    %v2610 = vmul.f32 -0.5, %v2466
    %v2611 = vadd.f32 %v2610, 1.0
    %v2612 = vmul.f32 %v2611, %v2466
    %v2613 = vand.u32 2147483647, %v2466
    %vm2614 = vcmp.lt.f32.partialorder %v2613, 0.0004427343
    %v2615 = vsel %vm2614, %v2612, %v2609
    %v2616 = vadd.f32 %v2468, 1.0
    %v2617 = vlog2.pop %v2616
    %v2618 = vmul.f32 %v2617, 0.6931472
    %v2619 = vmul.f32 -0.5, %v2468
    %v2620 = vadd.f32 %v2619, 1.0
    %v2621 = vmul.f32 %v2620, %v2468
    %v2622 = vand.u32 2147483647, %v2468
    %vm2623 = vcmp.lt.f32.partialorder %v2622, 0.0004427343
    %v2624 = vsel %vm2623, %v2621, %v2618
    %v2625 = vadd.f32 %v2470, 1.0
    %v2626 = vlog2.pop %v2625
    %v2627 = vmul.f32 %v2626, 0.6931472
    %v2628 = vmul.f32 -0.5, %v2470
    %v2629 = vadd.f32 %v2628, 1.0
    %v2630 = vmul.f32 %v2629, %v2470
    %v2631 = vand.u32 2147483647, %v2470
    %vm2632 = vcmp.lt.f32.partialorder %v2631, 0.0004427343
    %v2633 = vsel %vm2632, %v2630, %v2627
    %v2634 = vadd.f32 %v2472, 1.0
    %v2635 = vlog2.pop %v2634
    %v2636 = vmul.f32 %v2635, 0.6931472
    %v2637 = vmul.f32 -0.5, %v2472
    %v2638 = vadd.f32 %v2637, 1.0
    %v2639 = vmul.f32 %v2638, %v2472
    %v2640 = vand.u32 2147483647, %v2472
    %vm2641 = vcmp.lt.f32.partialorder %v2640, 0.0004427343
    %v2642 = vsel %vm2641, %v2639, %v2636
    %v2643 = vadd.f32 %v2474, 1.0
    %v2644 = vlog2.pop %v2643
    %v2645 = vmul.f32 %v2644, 0.6931472
    %v2646 = vmul.f32 -0.5, %v2474
    %v2647 = vadd.f32 %v2646, 1.0
    %v2648 = vmul.f32 %v2647, %v2474
    %v2649 = vand.u32 2147483647, %v2474
    %vm2650 = vcmp.lt.f32.partialorder %v2649, 0.0004427343
    %v2651 = vsel %vm2650, %v2648, %v2645
    %v2652 = vadd.f32 %v2476, 1.0
    %v2653 = vlog2.pop %v2652
    %v2654 = vmul.f32 %v2653, 0.6931472
    %v2655 = vmul.f32 -0.5, %v2476
    %v2656 = vadd.f32 %v2655, 1.0
    %v2657 = vmul.f32 %v2656, %v2476
    %v2658 = vand.u32 2147483647, %v2476
    %vm2659 = vcmp.lt.f32.partialorder %v2658, 0.0004427343
    %v2660 = vsel %vm2659, %v2657, %v2654
    %v2661 = vadd.f32 %v2478, 1.0
    %v2662 = vlog2.pop %v2661
    %v2663 = vmul.f32 %v2662, 0.6931472
    %v2664 = vmul.f32 -0.5, %v2478
    %v2665 = vadd.f32 %v2664, 1.0
    %v2666 = vmul.f32 %v2665, %v2478
    %v2667 = vand.u32 2147483647, %v2478
    %vm2668 = vcmp.lt.f32.partialorder %v2667, 0.0004427343
    %v2669 = vsel %vm2668, %v2666, %v2663
    %v2670 = vadd.f32 %v2480, 1.0
    %v2671 = vlog2.pop %v2670
    %v2672 = vmul.f32 %v2671, 0.6931472
    %v2673 = vmul.f32 -0.5, %v2480
    %v2674 = vadd.f32 %v2673, 1.0
    %v2675 = vmul.f32 %v2674, %v2480
    %v2676 = vand.u32 2147483647, %v2480
    %vm2677 = vcmp.lt.f32.partialorder %v2676, 0.0004427343
    %v2678 = vsel %vm2677, %v2675, %v2672
    %v2679 = vadd.f32 %v2482, 1.0
    %v2680 = vlog2.pop %v2679
    %v2681 = vmul.f32 %v2680, 0.6931472
    %v2682 = vmul.f32 -0.5, %v2482
    %v2683 = vadd.f32 %v2682, 1.0
    %v2684 = vmul.f32 %v2683, %v2482
    %v2685 = vand.u32 2147483647, %v2482
    %vm2686 = vcmp.lt.f32.partialorder %v2685, 0.0004427343
    %v2687 = vsel %vm2686, %v2684, %v2681
    %v2688 = vadd.f32 %v2484, 1.0
    %v2689 = vlog2.pop %v2688
    %v2690 = vmul.f32 %v2689, 0.6931472
    %v2691 = vmul.f32 -0.5, %v2484
    %v2692 = vadd.f32 %v2691, 1.0
    %v2693 = vmul.f32 %v2692, %v2484
    %v2694 = vand.u32 2147483647, %v2484
    %vm2695 = vcmp.lt.f32.partialorder %v2694, 0.0004427343
    %v2696 = vsel %vm2695, %v2693, %v2690
    %v2697 = vadd.f32 %v2486, 1.0
    %v2698 = vlog2.pop %v2697
    %v2699 = vmul.f32 %v2698, 0.6931472
    %v2700 = vmul.f32 -0.5, %v2486
    %v2701 = vadd.f32 %v2700, 1.0
    %v2702 = vmul.f32 %v2701, %v2486
    %v2703 = vand.u32 2147483647, %v2486
    %vm2704 = vcmp.lt.f32.partialorder %v2703, 0.0004427343
    %v2705 = vsel %vm2704, %v2702, %v2699
    %v2706 = vadd.f32 %v2488, 1.0
    %v2707 = vlog2.pop %v2706
    %v2708 = vmul.f32 %v2707, 0.6931472
    %v2709 = vmul.f32 -0.5, %v2488
    %v2710 = vadd.f32 %v2709, 1.0
    %v2711 = vmul.f32 %v2710, %v2488
    %v2712 = vand.u32 2147483647, %v2488
    %vm2713 = vcmp.lt.f32.partialorder %v2712, 0.0004427343
    %v2714 = vsel %vm2713, %v2711, %v2708
    %v2715 = vadd.f32 %v2490, 1.0
    %v2716 = vlog2.pop %v2715
    %v2717 = vmul.f32 %v2716, 0.6931472
    %v2718 = vmul.f32 -0.5, %v2490
    %v2719 = vadd.f32 %v2718, 1.0
    %v2720 = vmul.f32 %v2719, %v2490
    %v2721 = vand.u32 2147483647, %v2490
    %vm2722 = vcmp.lt.f32.partialorder %v2721, 0.0004427343
    %v2723 = vsel %vm2722, %v2720, %v2717
    %v2724 = vadd.f32 %v2492, 1.0
    %v2725 = vlog2.pop %v2724
    %v2726 = vmul.f32 %v2725, 0.6931472
    %v2727 = vmul.f32 -0.5, %v2492
    %v2728 = vadd.f32 %v2727, 1.0
    %v2729 = vmul.f32 %v2728, %v2492
    %v2730 = vand.u32 2147483647, %v2492
    %vm2731 = vcmp.lt.f32.partialorder %v2730, 0.0004427343
    %v2732 = vsel %vm2731, %v2729, %v2726
    %v2733 = vadd.f32 %v2494, 1.0
    %v2734 = vlog2.pop %v2733
    %v2735 = vmul.f32 %v2734, 0.6931472
    %v2736 = vmul.f32 -0.5, %v2494
    %v2737 = vadd.f32 %v2736, 1.0
    %v2738 = vmul.f32 %v2737, %v2494
    %v2739 = vand.u32 2147483647, %v2494
    %vm2740 = vcmp.lt.f32.partialorder %v2739, 0.0004427343
    %v2741 = vsel %vm2740, %v2738, %v2735
    %v2742 = vadd.f32 %v2496, 1.0
    %v2743 = vlog2.pop %v2742
    %v2744 = vmul.f32 %v2743, 0.6931472
    %v2745 = vmul.f32 -0.5, %v2496
    %v2746 = vadd.f32 %v2745, 1.0
    %v2747 = vmul.f32 %v2746, %v2496
    %v2748 = vand.u32 2147483647, %v2496
    %vm2749 = vcmp.lt.f32.partialorder %v2748, 0.0004427343
    %v2750 = vsel %vm2749, %v2747, %v2744
    %v2751 = vadd.f32 %v2498, 1.0
    %v2752 = vlog2.pop %v2751
    %v2753 = vmul.f32 %v2752, 0.6931472
    %v2754 = vmul.f32 -0.5, %v2498
    %v2755 = vadd.f32 %v2754, 1.0
    %v2756 = vmul.f32 %v2755, %v2498
    %v2757 = vand.u32 2147483647, %v2498
    %vm2758 = vcmp.lt.f32.partialorder %v2757, 0.0004427343
    %v2759 = vsel %vm2758, %v2756, %v2753
    %v2760 = vadd.f32 %v2500, 1.0
    %v2761 = vlog2.pop %v2760
    %v2762 = vmul.f32 %v2761, 0.6931472
    %v2763 = vmul.f32 -0.5, %v2500
    %v2764 = vadd.f32 %v2763, 1.0
    %v2765 = vmul.f32 %v2764, %v2500
    %v2766 = vand.u32 2147483647, %v2500
    %vm2767 = vcmp.lt.f32.partialorder %v2766, 0.0004427343
    %v2768 = vsel %vm2767, %v2765, %v2762
    %v2769 = vadd.f32 %v2502, 1.0
    %v2770 = vlog2.pop %v2769
    %v2771 = vmul.f32 %v2770, 0.6931472
    %v2772 = vmul.f32 -0.5, %v2502
    %v2773 = vadd.f32 %v2772, 1.0
    %v2774 = vmul.f32 %v2773, %v2502
    %v2775 = vand.u32 2147483647, %v2502
    %vm2776 = vcmp.lt.f32.partialorder %v2775, 0.0004427343
    %v2777 = vsel %vm2776, %v2774, %v2771
    %v2778 = vadd.f32 %v2504, 1.0
    %v2779 = vlog2.pop %v2778
    %v2780 = vmul.f32 %v2779, 0.6931472
    %v2781 = vmul.f32 -0.5, %v2504
    %v2782 = vadd.f32 %v2781, 1.0
    %v2783 = vmul.f32 %v2782, %v2504
    %v2784 = vand.u32 2147483647, %v2504
    %vm2785 = vcmp.lt.f32.partialorder %v2784, 0.0004427343
    %v2786 = vsel %vm2785, %v2783, %v2780
    %v2787 = vadd.f32 %v2506, 1.0
    %v2788 = vlog2.pop %v2787
    %v2789 = vmul.f32 %v2788, 0.6931472
    %v2790 = vmul.f32 -0.5, %v2506
    %v2791 = vadd.f32 %v2790, 1.0
    %v2792 = vmul.f32 %v2791, %v2506
    %v2793 = vand.u32 2147483647, %v2506
    %vm2794 = vcmp.lt.f32.partialorder %v2793, 0.0004427343
    %v2795 = vsel %vm2794, %v2792, %v2789
    %v2796 = vadd.f32 %v2508, 1.0
    %v2797 = vlog2.pop %v2796
    %v2798 = vmul.f32 %v2797, 0.6931472
    %v2799 = vmul.f32 -0.5, %v2508
    %v2800 = vadd.f32 %v2799, 1.0
    %v2801 = vmul.f32 %v2800, %v2508
    %v2802 = vand.u32 2147483647, %v2508
    %vm2803 = vcmp.lt.f32.partialorder %v2802, 0.0004427343
    %v2804 = vsel %vm2803, %v2801, %v2798
    %v2805 = vadd.f32 %v2510, 1.0
    %v2806 = vlog2.pop %v2805
    %v2807 = vmul.f32 %v2806, 0.6931472
    %v2808 = vmul.f32 -0.5, %v2510
    %v2809 = vadd.f32 %v2808, 1.0
    %v2810 = vmul.f32 %v2809, %v2510
    %v2811 = vand.u32 2147483647, %v2510
    %vm2812 = vcmp.lt.f32.partialorder %v2811, 0.0004427343
    %v2813 = vsel %vm2812, %v2810, %v2807
    %v2814 = vadd.f32 %v2512, 1.0
    %v2815 = vlog2.pop %v2814
    %v2816 = vmul.f32 %v2815, 0.6931472
    %v2817 = vmul.f32 -0.5, %v2512
    %v2818 = vadd.f32 %v2817, 1.0
    %v2819 = vmul.f32 %v2818, %v2512
    %v2820 = vand.u32 2147483647, %v2512
    %vm2821 = vcmp.lt.f32.partialorder %v2820, 0.0004427343
    %v2822 = vsel %vm2821, %v2819, %v2816
    %v2823 = vadd.f32 %v2514, 1.0
    %v2824 = vlog2.pop %v2823
    %v2825 = vmul.f32 %v2824, 0.6931472
    %v2826 = vmul.f32 -0.5, %v2514
    %v2827 = vadd.f32 %v2826, 1.0
    %v2828 = vmul.f32 %v2827, %v2514
    %v2829 = vand.u32 2147483647, %v2514
    %vm2830 = vcmp.lt.f32.partialorder %v2829, 0.0004427343
    %v2831 = vsel %vm2830, %v2828, %v2825
    %v2832 = vadd.f32 %v2516, 1.0
    %v2833 = vlog2.pop %v2832
    %v2834 = vmul.f32 %v2833, 0.6931472
    %v2835 = vmul.f32 -0.5, %v2516
    %v2836 = vadd.f32 %v2835, 1.0
    %v2837 = vmul.f32 %v2836, %v2516
    %v2838 = vand.u32 2147483647, %v2516
    %vm2839 = vcmp.lt.f32.partialorder %v2838, 0.0004427343
    %v2840 = vsel %vm2839, %v2837, %v2834
    %v2841 = vadd.f32 %v2518, 1.0
    %v2842 = vlog2.pop %v2841
    %v2843 = vmul.f32 %v2842, 0.6931472
    %v2844 = vmul.f32 -0.5, %v2518
    %v2845 = vadd.f32 %v2844, 1.0
    %v2846 = vmul.f32 %v2845, %v2518
    %v2847 = vand.u32 2147483647, %v2518
    %vm2848 = vcmp.lt.f32.partialorder %v2847, 0.0004427343
    %v2849 = vsel %vm2848, %v2846, %v2843
    %v2850 = vadd.f32 %v2520, 1.0
    %v2851 = vlog2.pop %v2850
    %v2852 = vmul.f32 %v2851, 0.6931472
    %v2853 = vmul.f32 -0.5, %v2520
    %v2854 = vadd.f32 %v2853, 1.0
    %v2855 = vmul.f32 %v2854, %v2520
    %v2856 = vand.u32 2147483647, %v2520
    %vm2857 = vcmp.lt.f32.partialorder %v2856, 0.0004427343
    %v2858 = vsel %vm2857, %v2855, %v2852
    %v2859 = vadd.f32 %v2522, 1.0
    %v2860 = vlog2.pop %v2859
    %v2861 = vmul.f32 %v2860, 0.6931472
    %v2862 = vmul.f32 -0.5, %v2522
    %v2863 = vadd.f32 %v2862, 1.0
    %v2864 = vmul.f32 %v2863, %v2522
    %v2865 = vand.u32 2147483647, %v2522
    %vm2866 = vcmp.lt.f32.partialorder %v2865, 0.0004427343
    %v2867 = vsel %vm2866, %v2864, %v2861
    %v2868 = vadd.f32 %v2524, 1.0
    %v2869 = vlog2.pop %v2868
    %v2870 = vmul.f32 %v2869, 0.6931472
    %v2871 = vmul.f32 -0.5, %v2524
    %v2872 = vadd.f32 %v2871, 1.0
    %v2873 = vmul.f32 %v2872, %v2524
    %v2874 = vand.u32 2147483647, %v2524
    %vm2875 = vcmp.lt.f32.partialorder %v2874, 0.0004427343
    %v2876 = vsel %vm2875, %v2873, %v2870
    %v2877 = vadd.f32 %v2526, 1.0
    %v2878 = vlog2.pop %v2877
    %v2879 = vmul.f32 %v2878, 0.6931472
    %v2880 = vmul.f32 -0.5, %v2526
    %v2881 = vadd.f32 %v2880, 1.0
    %v2882 = vmul.f32 %v2881, %v2526
    %v2883 = vand.u32 2147483647, %v2526
    %vm2884 = vcmp.lt.f32.partialorder %v2883, 0.0004427343
    %v2885 = vsel %vm2884, %v2882, %v2879
    %v2886 = vadd.f32 %v2528, 1.0
    %v2887 = vlog2.pop %v2886
    %v2888 = vmul.f32 %v2887, 0.6931472
    %v2889 = vmul.f32 -0.5, %v2528
    %v2890 = vadd.f32 %v2889, 1.0
    %v2891 = vmul.f32 %v2890, %v2528
    %v2892 = vand.u32 2147483647, %v2528
    %vm2893 = vcmp.lt.f32.partialorder %v2892, 0.0004427343
    %v2894 = vsel %vm2893, %v2891, %v2888
    %v2895 = vadd.f32 %v2530, 1.0
    %v2896 = vlog2.pop %v2895
    %v2897 = vmul.f32 %v2896, 0.6931472
    %v2898 = vmul.f32 -0.5, %v2530
    %v2899 = vadd.f32 %v2898, 1.0
    %v2900 = vmul.f32 %v2899, %v2530
    %v2901 = vand.u32 2147483647, %v2530
    %vm2902 = vcmp.lt.f32.partialorder %v2901, 0.0004427343
    %v2903 = vsel %vm2902, %v2900, %v2897
    %v2904 = vadd.f32 %v2532, 1.0
    %v2905 = vlog2.pop %v2904
    %v2906 = vmul.f32 %v2905, 0.6931472
    %v2907 = vmul.f32 -0.5, %v2532
    %v2908 = vadd.f32 %v2907, 1.0
    %v2909 = vmul.f32 %v2908, %v2532
    %v2910 = vand.u32 2147483647, %v2532
    %vm2911 = vcmp.lt.f32.partialorder %v2910, 0.0004427343
    %v2912 = vsel %vm2911, %v2909, %v2906
    %v2913 = vadd.f32 %v2534, 1.0
    %v2914 = vlog2.pop %v2913
    %v2915 = vmul.f32 %v2914, 0.6931472
    %v2916 = vmul.f32 -0.5, %v2534
    %v2917 = vadd.f32 %v2916, 1.0
    %v2918 = vmul.f32 %v2917, %v2534
    %v2919 = vand.u32 2147483647, %v2534
    %vm2920 = vcmp.lt.f32.partialorder %v2919, 0.0004427343
    %v2921 = vsel %vm2920, %v2918, %v2915
    %v2922 = vadd.f32 %v2536, 1.0
    %v2923 = vlog2.pop %v2922
    %v2924 = vmul.f32 %v2923, 0.6931472
    %v2925 = vmul.f32 -0.5, %v2536
    %v2926 = vadd.f32 %v2925, 1.0
    %v2927 = vmul.f32 %v2926, %v2536
    %v2928 = vand.u32 2147483647, %v2536
    %vm2929 = vcmp.lt.f32.partialorder %v2928, 0.0004427343
    %v2930 = vsel %vm2929, %v2927, %v2924
    %v2931 = vadd.f32 %v2538, 1.0
    %v2932 = vlog2.pop %v2931
    %v2933 = vmul.f32 %v2932, 0.6931472
    %v2934 = vmul.f32 -0.5, %v2538
    %v2935 = vadd.f32 %v2934, 1.0
    %v2936 = vmul.f32 %v2935, %v2538
    %v2937 = vand.u32 2147483647, %v2538
    %vm2938 = vcmp.lt.f32.partialorder %v2937, 0.0004427343
    %v2939 = vsel %vm2938, %v2936, %v2933
    %v2940 = vadd.f32 %v2540, 1.0
    %v2941 = vlog2.pop %v2940
    %v2942 = vmul.f32 %v2941, 0.6931472
    %v2943 = vmul.f32 -0.5, %v2540
    %v2944 = vadd.f32 %v2943, 1.0
    %v2945 = vmul.f32 %v2944, %v2540
    %v2946 = vand.u32 2147483647, %v2540
    %vm2947 = vcmp.lt.f32.partialorder %v2946, 0.0004427343
    %v2948 = vsel %vm2947, %v2945, %v2942
    %v2949 = vadd.f32 %v2542, 1.0
    %v2950 = vlog2.pop %v2949
    %v2951 = vmul.f32 %v2950, 0.6931472
    %v2952 = vmul.f32 -0.5, %v2542
    %v2953 = vadd.f32 %v2952, 1.0
    %v2954 = vmul.f32 %v2953, %v2542
    %v2955 = vand.u32 2147483647, %v2542
    %vm2956 = vcmp.lt.f32.partialorder %v2955, 0.0004427343
    %v2957 = vsel %vm2956, %v2954, %v2951
    %v2958 = vadd.f32 %v2544, 1.0
    %v2959 = vlog2.pop %v2958
    %v2960 = vmul.f32 %v2959, 0.6931472
    %v2961 = vmul.f32 -0.5, %v2544
    %v2962 = vadd.f32 %v2961, 1.0
    %v2963 = vmul.f32 %v2962, %v2544
    %v2964 = vand.u32 2147483647, %v2544
    %vm2965 = vcmp.lt.f32.partialorder %v2964, 0.0004427343
    %v2966 = vsel %vm2965, %v2963, %v2960
    %v2967 = vadd.f32 %v2546, 1.0
    %v2968 = vlog2.pop %v2967
    %v2969 = vmul.f32 %v2968, 0.6931472
    %v2970 = vmul.f32 -0.5, %v2546
    %v2971 = vadd.f32 %v2970, 1.0
    %v2972 = vmul.f32 %v2971, %v2546
    %v2973 = vand.u32 2147483647, %v2546
    %vm2974 = vcmp.lt.f32.partialorder %v2973, 0.0004427343
    %v2975 = vsel %vm2974, %v2972, %v2969
    %v2976 = vadd.f32 %v2548, 1.0
    %v2977 = vlog2.pop %v2976
    %v2978 = vmul.f32 %v2977, 0.6931472
    %v2979 = vmul.f32 -0.5, %v2548
    %v2980 = vadd.f32 %v2979, 1.0
    %v2981 = vmul.f32 %v2980, %v2548
    %v2982 = vand.u32 2147483647, %v2548
    %vm2983 = vcmp.lt.f32.partialorder %v2982, 0.0004427343
    %v2984 = vsel %vm2983, %v2981, %v2978
    %v2985 = vadd.f32 %v2550, 1.0
    %v2986 = vlog2.pop %v2985
    %v2987 = vmul.f32 %v2986, 0.6931472
    %v2988 = vmul.f32 -0.5, %v2550
    %v2989 = vadd.f32 %v2988, 1.0
    %v2990 = vmul.f32 %v2989, %v2550
    %v2991 = vand.u32 2147483647, %v2550
    %vm2992 = vcmp.lt.f32.partialorder %v2991, 0.0004427343
    %v2993 = vsel %vm2992, %v2990, %v2987
    %v2994 = vadd.f32 %v2552, 1.0
    %v2995 = vlog2.pop %v2994
    %v2996 = vmul.f32 %v2995, 0.6931472
    %v2997 = vmul.f32 -0.5, %v2552
    %v2998 = vadd.f32 %v2997, 1.0
    %v2999 = vmul.f32 %v2998, %v2552
    %v3000 = vand.u32 2147483647, %v2552
    %vm3001 = vcmp.lt.f32.partialorder %v3000, 0.0004427343
    %v3002 = vsel %vm3001, %v2999, %v2996
    %v3003 = vadd.f32 %v2554, 1.0
    %v3004 = vlog2.pop %v3003
    %v3005 = vmul.f32 %v3004, 0.6931472
    %v3006 = vmul.f32 -0.5, %v2554
    %v3007 = vadd.f32 %v3006, 1.0
    %v3008 = vmul.f32 %v3007, %v2554
    %v3009 = vand.u32 2147483647, %v2554
    %vm3010 = vcmp.lt.f32.partialorder %v3009, 0.0004427343
    %v3011 = vsel %vm3010, %v3008, %v3005
    %v3012 = vadd.f32 %v2556, 1.0
    %v3013 = vlog2.pop %v3012
    %v3014 = vmul.f32 %v3013, 0.6931472
    %v3015 = vmul.f32 -0.5, %v2556
    %v3016 = vadd.f32 %v3015, 1.0
    %v3017 = vmul.f32 %v3016, %v2556
    %v3018 = vand.u32 2147483647, %v2556
    %vm3019 = vcmp.lt.f32.partialorder %v3018, 0.0004427343
    %v3020 = vsel %vm3019, %v3017, %v3014
    %v3021 = vadd.f32 %v2558, 1.0
    %v3022 = vlog2.pop %v3021
    %v3023 = vmul.f32 %v3022, 0.6931472
    %v3024 = vmul.f32 -0.5, %v2558
    %v3025 = vadd.f32 %v3024, 1.0
    %v3026 = vmul.f32 %v3025, %v2558
    %v3027 = vand.u32 2147483647, %v2558
    %vm3028 = vcmp.lt.f32.partialorder %v3027, 0.0004427343
    %v3029 = vsel %vm3028, %v3026, %v3023
    %v3030 = vadd.f32 %v2560, 1.0
    %v3031 = vlog2.pop %v3030
    %v3032 = vmul.f32 %v3031, 0.6931472
    %v3033 = vmul.f32 -0.5, %v2560
    %v3034 = vadd.f32 %v3033, 1.0
    %v3035 = vmul.f32 %v3034, %v2560
    %v3036 = vand.u32 2147483647, %v2560
    %vm3037 = vcmp.lt.f32.partialorder %v3036, 0.0004427343
    %v3038 = vsel %vm3037, %v3035, %v3032
    %v3039 = vadd.f32 %v2562, 1.0
    %v3040 = vlog2.pop %v3039
    %v3041 = vmul.f32 %v3040, 0.6931472
    %v3042 = vmul.f32 -0.5, %v2562
    %v3043 = vadd.f32 %v3042, 1.0
    %v3044 = vmul.f32 %v3043, %v2562
    %v3045 = vand.u32 2147483647, %v2562
    %vm3046 = vcmp.lt.f32.partialorder %v3045, 0.0004427343
    %v3047 = vsel %vm3046, %v3044, %v3041
    %v3048 = vadd.f32 %v2564, 1.0
    %v3049 = vlog2.pop %v3048
    %v3050 = vmul.f32 %v3049, 0.6931472
    %v3051 = vmul.f32 -0.5, %v2564
    %v3052 = vadd.f32 %v3051, 1.0
    %v3053 = vmul.f32 %v3052, %v2564
    %v3054 = vand.u32 2147483647, %v2564
    %vm3055 = vcmp.lt.f32.partialorder %v3054, 0.0004427343
    %v3056 = vsel %vm3055, %v3053, %v3050
    %v3057 = vadd.f32 %v2566, 1.0
    %v3058 = vlog2.pop %v3057
    %v3059 = vmul.f32 %v3058, 0.6931472
    %v3060 = vmul.f32 -0.5, %v2566
    %v3061 = vadd.f32 %v3060, 1.0
    %v3062 = vmul.f32 %v3061, %v2566
    %v3063 = vand.u32 2147483647, %v2566
    %vm3064 = vcmp.lt.f32.partialorder %v3063, 0.0004427343
    %v3065 = vsel %vm3064, %v3062, %v3059
    %v3066 = vadd.f32 %v2568, 1.0
    %v3067 = vlog2.pop %v3066
    %v3068 = vmul.f32 %v3067, 0.6931472
    %v3069 = vmul.f32 -0.5, %v2568
    %v3070 = vadd.f32 %v3069, 1.0
    %v3071 = vmul.f32 %v3070, %v2568
    %v3072 = vand.u32 2147483647, %v2568
    %vm3073 = vcmp.lt.f32.partialorder %v3072, 0.0004427343
    %v3074 = vsel %vm3073, %v3071, %v3068
    %v3075 = vadd.f32 %v2570, 1.0
    %v3076 = vlog2.pop %v3075
    %v3077 = vmul.f32 %v3076, 0.6931472
    %v3078 = vmul.f32 -0.5, %v2570
    %v3079 = vadd.f32 %v3078, 1.0
    %v3080 = vmul.f32 %v3079, %v2570
    %v3081 = vand.u32 2147483647, %v2570
    %vm3082 = vcmp.lt.f32.partialorder %v3081, 0.0004427343
    %v3083 = vsel %vm3082, %v3080, %v3077
    %v3084 = vadd.f32 %v2572, 1.0
    %v3085 = vlog2.pop %v3084
    %v3086 = vmul.f32 %v3085, 0.6931472
    %v3087 = vmul.f32 -0.5, %v2572
    %v3088 = vadd.f32 %v3087, 1.0
    %v3089 = vmul.f32 %v3088, %v2572
    %v3090 = vand.u32 2147483647, %v2572
    %vm3091 = vcmp.lt.f32.partialorder %v3090, 0.0004427343
    %v3092 = vsel %vm3091, %v3089, %v3086
    %v3093 = vadd.f32 %v2574, 1.0
    %v3094 = vlog2.pop %v3093
    %v3095 = vmul.f32 %v3094, 0.6931472
    %v3096 = vmul.f32 -0.5, %v2574
    %v3097 = vadd.f32 %v3096, 1.0
    %v3098 = vmul.f32 %v3097, %v2574
    %v3099 = vand.u32 2147483647, %v2574
    %vm3100 = vcmp.lt.f32.partialorder %v3099, 0.0004427343
    %v3101 = vsel %vm3100, %v3098, %v3095
    %v3102 = vadd.f32 %v2576, 1.0
    %v3103 = vlog2.pop %v3102
    %v3104 = vmul.f32 %v3103, 0.6931472
    %v3105 = vmul.f32 -0.5, %v2576
    %v3106 = vadd.f32 %v3105, 1.0
    %v3107 = vmul.f32 %v3106, %v2576
    %v3108 = vand.u32 2147483647, %v2576
    %vm3109 = vcmp.lt.f32.partialorder %v3108, 0.0004427343
    %v3110 = vsel %vm3109, %v3107, %v3104
    %v3111 = vadd.f32 %v2578, 1.0
    %v3112 = vlog2.pop %v3111
    %v3113 = vmul.f32 %v3112, 0.6931472
    %v3114 = vmul.f32 -0.5, %v2578
    %v3115 = vadd.f32 %v3114, 1.0
    %v3116 = vmul.f32 %v3115, %v2578
    %v3117 = vand.u32 2147483647, %v2578
    %vm3118 = vcmp.lt.f32.partialorder %v3117, 0.0004427343
    %v3119 = vsel %vm3118, %v3116, %v3113
    %v3120 = vadd.f32 %v2580, 1.0
    %v3121 = vlog2.pop %v3120
    %v3122 = vmul.f32 %v3121, 0.6931472
    %v3123 = vmul.f32 -0.5, %v2580
    %v3124 = vadd.f32 %v3123, 1.0
    %v3125 = vmul.f32 %v3124, %v2580
    %v3126 = vand.u32 2147483647, %v2580
    %vm3127 = vcmp.lt.f32.partialorder %v3126, 0.0004427343
    %v3128 = vsel %vm3127, %v3125, %v3122
    %v3129 = vadd.f32 %v2582, 1.0
    %v3130 = vlog2.pop %v3129
    %v3131 = vmul.f32 %v3130, 0.6931472
    %v3132 = vmul.f32 -0.5, %v2582
    %v3133 = vadd.f32 %v3132, 1.0
    %v3134 = vmul.f32 %v3133, %v2582
    %v3135 = vand.u32 2147483647, %v2582
    %vm3136 = vcmp.lt.f32.partialorder %v3135, 0.0004427343
    %v3137 = vsel %vm3136, %v3134, %v3131
    %v3138 = vadd.f32 %v2584, 1.0
    %v3139 = vlog2.pop %v3138
    %v3140 = vmul.f32 %v3139, 0.6931472
    %v3141 = vmul.f32 -0.5, %v2584
    %v3142 = vadd.f32 %v3141, 1.0
    %v3143 = vmul.f32 %v3142, %v2584
    %v3144 = vand.u32 2147483647, %v2584
    %vm3145 = vcmp.lt.f32.partialorder %v3144, 0.0004427343
    %v3146 = vsel %vm3145, %v3143, %v3140
    %v3147 = vadd.f32 %v2586, 1.0
    %v3148 = vlog2.pop %v3147
    %v3149 = vmul.f32 %v3148, 0.6931472
    %v3150 = vmul.f32 -0.5, %v2586
    %v3151 = vadd.f32 %v3150, 1.0
    %v3152 = vmul.f32 %v3151, %v2586
    %v3153 = vand.u32 2147483647, %v2586
    %vm3154 = vcmp.lt.f32.partialorder %v3153, 0.0004427343
    %v3155 = vsel %vm3154, %v3152, %v3149
    %v3156 = vadd.f32 %v2588, 1.0
    %v3157 = vlog2.pop %v3156
    %v3158 = vmul.f32 %v3157, 0.6931472
    %v3159 = vmul.f32 -0.5, %v2588
    %v3160 = vadd.f32 %v3159, 1.0
    %v3161 = vmul.f32 %v3160, %v2588
    %v3162 = vand.u32 2147483647, %v2588
    %vm3163 = vcmp.lt.f32.partialorder %v3162, 0.0004427343
    %v3164 = vsel %vm3163, %v3161, %v3158
    %v3165 = vadd.f32 %v2141, %v2597
    %v3166 = vadd.f32 %v2142, %v2606
    %v3167 = vadd.f32 %v2143, %v2615
    %v3168 = vadd.f32 %v2144, %v2624
    %v3169 = vadd.f32 %v2145, %v2633
    %v3170 = vadd.f32 %v2146, %v2642
    %v3171 = vadd.f32 %v2147, %v2651
    %v3172 = vadd.f32 %v2148, %v2660
    %v3173 = vadd.f32 %v2149, %v2669
    %v3174 = vadd.f32 %v2150, %v2678
    %v3175 = vadd.f32 %v2151, %v2687
    %v3176 = vadd.f32 %v2152, %v2696
    %v3177 = vadd.f32 %v2153, %v2705
    %v3178 = vadd.f32 %v2154, %v2714
    %v3179 = vadd.f32 %v2155, %v2723
    %v3180 = vadd.f32 %v2156, %v2732
    %v3181 = vadd.f32 %v2157, %v2741
    %v3182 = vadd.f32 %v2158, %v2750
    %v3183 = vadd.f32 %v2159, %v2759
    %v3184 = vadd.f32 %v2160, %v2768
    %v3185 = vadd.f32 %v2161, %v2777
    %v3186 = vadd.f32 %v2162, %v2786
    %v3187 = vadd.f32 %v2163, %v2795
    %v3188 = vadd.f32 %v2164, %v2804
    %v3189 = vadd.f32 %v2165, %v2813
    %v3190 = vadd.f32 %v2166, %v2822
    %v3191 = vadd.f32 %v2167, %v2831
    %v3192 = vadd.f32 %v2168, %v2840
    %v3193 = vadd.f32 %v2169, %v2849
    %v3194 = vadd.f32 %v2170, %v2858
    %v3195 = vadd.f32 %v2171, %v2867
    %v3196 = vadd.f32 %v2172, %v2876
    %v3197 = vadd.f32 %v2173, %v2885
    %v3198 = vadd.f32 %v2174, %v2894
    %v3199 = vadd.f32 %v2175, %v2903
    %v3200 = vadd.f32 %v2176, %v2912
    %v3201 = vadd.f32 %v2177, %v2921
    %v3202 = vadd.f32 %v2178, %v2930
    %v3203 = vadd.f32 %v2179, %v2939
    %v3204 = vadd.f32 %v2180, %v2948
    %v3205 = vadd.f32 %v2181, %v2957
    %v3206 = vadd.f32 %v2182, %v2966
    %v3207 = vadd.f32 %v2183, %v2975
    %v3208 = vadd.f32 %v2184, %v2984
    %v3209 = vadd.f32 %v2185, %v2993
    %v3210 = vadd.f32 %v2186, %v3002
    %v3211 = vadd.f32 %v2187, %v3011
    %v3212 = vadd.f32 %v2188, %v3020
    %v3213 = vadd.f32 %v2189, %v3029
    %v3214 = vadd.f32 %v2190, %v3038
    %v3215 = vadd.f32 %v2191, %v3047
    %v3216 = vadd.f32 %v2192, %v3056
    %v3217 = vadd.f32 %v2193, %v3065
    %v3218 = vadd.f32 %v2194, %v3074
    %v3219 = vadd.f32 %v2195, %v3083
    %v3220 = vadd.f32 %v2196, %v3092
    %v3221 = vadd.f32 %v2197, %v3101
    %v3222 = vadd.f32 %v2198, %v3110
    %v3223 = vadd.f32 %v2199, %v3119
    %v3224 = vadd.f32 %v2200, %v3128
    %v3225 = vadd.f32 %v2201, %v3137
    %v3226 = vadd.f32 %v2202, %v3146
    %v3227 = vadd.f32 %v2203, %v3155
    %v3228 = vadd.f32 %v2204, %v3164
    %v3229 = vsel %vm2205, %v2269, %v3165
    %v3230 = vsel %vm2206, %v2270, %v3166
    %v3231 = vsel %vm2207, %v2271, %v3167
    %v3232 = vsel %vm2208, %v2272, %v3168
    %v3233 = vsel %vm2209, %v2273, %v3169
    %v3234 = vsel %vm2210, %v2274, %v3170
    %v3235 = vsel %vm2211, %v2275, %v3171
    %v3236 = vsel %vm2212, %v2276, %v3172
    %v3237 = vsel %vm2213, %v2277, %v3173
    %v3238 = vsel %vm2214, %v2278, %v3174
    %v3239 = vsel %vm2215, %v2279, %v3175
    %v3240 = vsel %vm2216, %v2280, %v3176
    %v3241 = vsel %vm2217, %v2281, %v3177
    %v3242 = vsel %vm2218, %v2282, %v3178
    %v3243 = vsel %vm2219, %v2283, %v3179
    %v3244 = vsel %vm2220, %v2284, %v3180
    %v3245 = vsel %vm2221, %v2285, %v3181
    %v3246 = vsel %vm2222, %v2286, %v3182
    %v3247 = vsel %vm2223, %v2287, %v3183
    %v3248 = vsel %vm2224, %v2288, %v3184
    %v3249 = vsel %vm2225, %v2289, %v3185
    %v3250 = vsel %vm2226, %v2290, %v3186
    %v3251 = vsel %vm2227, %v2291, %v3187
    %v3252 = vsel %vm2228, %v2292, %v3188
    %v3253 = vsel %vm2229, %v2293, %v3189
    %v3254 = vsel %vm2230, %v2294, %v3190
    %v3255 = vsel %vm2231, %v2295, %v3191
    %v3256 = vsel %vm2232, %v2296, %v3192
    %v3257 = vsel %vm2233, %v2297, %v3193
    %v3258 = vsel %vm2234, %v2298, %v3194
    %v3259 = vsel %vm2235, %v2299, %v3195
    %v3260 = vsel %vm2236, %v2300, %v3196
    %v3261 = vsel %vm2237, %v2301, %v3197
    %v3262 = vsel %vm2238, %v2302, %v3198
    %v3263 = vsel %vm2239, %v2303, %v3199
    %v3264 = vsel %vm2240, %v2304, %v3200
    %v3265 = vsel %vm2241, %v2305, %v3201
    %v3266 = vsel %vm2242, %v2306, %v3202
    %v3267 = vsel %vm2243, %v2307, %v3203
    %v3268 = vsel %vm2244, %v2308, %v3204
    %v3269 = vsel %vm2245, %v2309, %v3205
    %v3270 = vsel %vm2246, %v2310, %v3206
    %v3271 = vsel %vm2247, %v2311, %v3207
    %v3272 = vsel %vm2248, %v2312, %v3208
    %v3273 = vsel %vm2249, %v2313, %v3209
    %v3274 = vsel %vm2250, %v2314, %v3210
    %v3275 = vsel %vm2251, %v2315, %v3211
    %v3276 = vsel %vm2252, %v2316, %v3212
    %v3277 = vsel %vm2253, %v2317, %v3213
    %v3278 = vsel %vm2254, %v2318, %v3214
    %v3279 = vsel %vm2255, %v2319, %v3215
    %v3280 = vsel %vm2256, %v2320, %v3216
    %v3281 = vsel %vm2257, %v2321, %v3217
    %v3282 = vsel %vm2258, %v2322, %v3218
    %v3283 = vsel %vm2259, %v2323, %v3219
    %v3284 = vsel %vm2260, %v2324, %v3220
    %v3285 = vsel %vm2261, %v2325, %v3221
    %v3286 = vsel %vm2262, %v2326, %v3222
    %v3287 = vsel %vm2263, %v2327, %v3223
    %v3288 = vsel %vm2264, %v2328, %v3224
    %v3289 = vsel %vm2265, %v2329, %v3225
    %v3290 = vsel %vm2266, %v2330, %v3226
    %v3291 = vsel %vm2267, %v2331, %v3227
    %v3292 = vsel %vm2268, %v2332, %v3228
    %v3293 = vadd.f32 %v2077, %v3229
    %v3294 = vadd.f32 %v2078, %v3230
    %v3295 = vadd.f32 %v2079, %v3231
    %v3296 = vadd.f32 %v2080, %v3232
    %v3297 = vadd.f32 %v2081, %v3233
    %v3298 = vadd.f32 %v2082, %v3234
    %v3299 = vadd.f32 %v2083, %v3235
    %v3300 = vadd.f32 %v2084, %v3236
    %v3301 = vadd.f32 %v2085, %v3237
    %v3302 = vadd.f32 %v2086, %v3238
    %v3303 = vadd.f32 %v2087, %v3239
    %v3304 = vadd.f32 %v2088, %v3240
    %v3305 = vadd.f32 %v2089, %v3241
    %v3306 = vadd.f32 %v2090, %v3242
    %v3307 = vadd.f32 %v2091, %v3243
    %v3308 = vadd.f32 %v2092, %v3244
    %v3309 = vadd.f32 %v2093, %v3245
    %v3310 = vadd.f32 %v2094, %v3246
    %v3311 = vadd.f32 %v2095, %v3247
    %v3312 = vadd.f32 %v2096, %v3248
    %v3313 = vadd.f32 %v2097, %v3249
    %v3314 = vadd.f32 %v2098, %v3250
    %v3315 = vadd.f32 %v2099, %v3251
    %v3316 = vadd.f32 %v2100, %v3252
    %v3317 = vadd.f32 %v2101, %v3253
    %v3318 = vadd.f32 %v2102, %v3254
    %v3319 = vadd.f32 %v2103, %v3255
    %v3320 = vadd.f32 %v2104, %v3256
    %v3321 = vadd.f32 %v2105, %v3257
    %v3322 = vadd.f32 %v2106, %v3258
    %v3323 = vadd.f32 %v2107, %v3259
    %v3324 = vadd.f32 %v2108, %v3260
    %v3325 = vadd.f32 %v2109, %v3261
    %v3326 = vadd.f32 %v2110, %v3262
    %v3327 = vadd.f32 %v2111, %v3263
    %v3328 = vadd.f32 %v2112, %v3264
    %v3329 = vadd.f32 %v2113, %v3265
    %v3330 = vadd.f32 %v2114, %v3266
    %v3331 = vadd.f32 %v2115, %v3267
    %v3332 = vadd.f32 %v2116, %v3268
    %v3333 = vadd.f32 %v2117, %v3269
    %v3334 = vadd.f32 %v2118, %v3270
    %v3335 = vadd.f32 %v2119, %v3271
    %v3336 = vadd.f32 %v2120, %v3272
    %v3337 = vadd.f32 %v2121, %v3273
    %v3338 = vadd.f32 %v2122, %v3274
    %v3339 = vadd.f32 %v2123, %v3275
    %v3340 = vadd.f32 %v2124, %v3276
    %v3341 = vadd.f32 %v2125, %v3277
    %v3342 = vadd.f32 %v2126, %v3278
    %v3343 = vadd.f32 %v2127, %v3279
    %v3344 = vadd.f32 %v2128, %v3280
    %v3345 = vadd.f32 %v2129, %v3281
    %v3346 = vadd.f32 %v2130, %v3282
    %v3347 = vadd.f32 %v2131, %v3283
    %v3348 = vadd.f32 %v2132, %v3284
    %v3349 = vadd.f32 %v2133, %v3285
    %v3350 = vadd.f32 %v2134, %v3286
    %v3351 = vadd.f32 %v2135, %v3287
    %v3352 = vadd.f32 %v2136, %v3288
    %v3353 = vadd.f32 %v2137, %v3289
    %v3354 = vadd.f32 %v2138, %v3290
    %v3355 = vadd.f32 %v2139, %v3291
    %v3356 = vadd.f32 %v2140, %v3292
    %v3357 = vld [vmem:[#allocation2] sm:$0x1]
    %v3358 = vld [vmem:[%s2] sm:$0xf]
    %v3360 = vperm.slane %v3358, 0
    %v3361 = vperm.slane %v3358, 1
    %v3362 = vperm.slane %v3358, 2
    %v3363 = vperm.slane %v3358, 3
    %3368 = vmatpush.msra.mxu0 %v3308
    %3369 = vmatpush.msra.mxu0 %v3307
    %3370 = vmatpush.msra.mxu0 %v3306
    %3371 = vmatpush.msra.mxu0 %v3305
    %3372 = vmatpush.msra.mxu0 %v3304
    %3373 = vmatpush.msra.mxu0 %v3303
    %3374 = vmatpush.msra.mxu0 %v3302
    %3375 = vmatpush.msra.mxu0 %v3301
    %3376 = vmatpush.msra.mxu0 %v3300
    %3377 = vmatpush.msra.mxu0 %v3299
    %3378 = vmatpush.msra.mxu0 %v3298
    %3379 = vmatpush.msra.mxu0 %v3297
    %3380 = vmatpush.msra.mxu0 %v3296
    %3381 = vmatpush.msra.mxu0 %v3295
    %3382 = vmatpush.msra.mxu0 %v3294
    %3383 = vmatpush.msra.mxu0 %v3293
    %3384 = vmatmul.f32.gmra.mxu0 %v3360
    %v3385 = vpop.f32.mrf.mxu0
    %v3386 = vadd.f32 0.0, %v3385
    %3387 = vdwg.mxu0
    %3388 = vmatpush.msra.mxu0 %v3324
    %3389 = vmatpush.msra.mxu0 %v3323
    %3390 = vmatpush.msra.mxu0 %v3322
    %3391 = vmatpush.msra.mxu0 %v3321
    %3392 = vmatpush.msra.mxu0 %v3320
    %3393 = vmatpush.msra.mxu0 %v3319
    %3394 = vmatpush.msra.mxu0 %v3318
    %3395 = vmatpush.msra.mxu0 %v3317
    %3396 = vmatpush.msra.mxu0 %v3316
    %3397 = vmatpush.msra.mxu0 %v3315
    %3398 = vmatpush.msra.mxu0 %v3314
    %3399 = vmatpush.msra.mxu0 %v3313
    %3400 = vmatpush.msra.mxu0 %v3312
    %3401 = vmatpush.msra.mxu0 %v3311
    %3402 = vmatpush.msra.mxu0 %v3310
    %3403 = vmatpush.msra.mxu0 %v3309
    %3404 = vmatmul.f32.gmra.mxu0 %v3361
    %v3405 = vpop.f32.mrf.mxu0
    %v3406 = vadd.f32 %v3386, %v3405
    %3407 = vdwg.mxu0
    %3408 = vmatpush.msra.mxu0 %v3340
    %3409 = vmatpush.msra.mxu0 %v3339
    %3410 = vmatpush.msra.mxu0 %v3338
    %3411 = vmatpush.msra.mxu0 %v3337
    %3412 = vmatpush.msra.mxu0 %v3336
    %3413 = vmatpush.msra.mxu0 %v3335
    %3414 = vmatpush.msra.mxu0 %v3334
    %3415 = vmatpush.msra.mxu0 %v3333
    %3416 = vmatpush.msra.mxu0 %v3332
    %3417 = vmatpush.msra.mxu0 %v3331
    %3418 = vmatpush.msra.mxu0 %v3330
    %3419 = vmatpush.msra.mxu0 %v3329
    %3420 = vmatpush.msra.mxu0 %v3328
    %3421 = vmatpush.msra.mxu0 %v3327
    %3422 = vmatpush.msra.mxu0 %v3326
    %3423 = vmatpush.msra.mxu0 %v3325
    %3424 = vmatmul.f32.gmra.mxu0 %v3362
    %v3425 = vpop.f32.mrf.mxu0
    %v3426 = vadd.f32 %v3406, %v3425
    %3427 = vdwg.mxu0
    %3428 = vmatpush.msra.mxu0 %v3356
    %3429 = vmatpush.msra.mxu0 %v3355
    %3430 = vmatpush.msra.mxu0 %v3354
    %3431 = vmatpush.msra.mxu0 %v3353
    %3432 = vmatpush.msra.mxu0 %v3352
    %3433 = vmatpush.msra.mxu0 %v3351
    %3434 = vmatpush.msra.mxu0 %v3350
    %3435 = vmatpush.msra.mxu0 %v3349
    %3436 = vmatpush.msra.mxu0 %v3348
    %3437 = vmatpush.msra.mxu0 %v3347
    %3438 = vmatpush.msra.mxu0 %v3346
    %3439 = vmatpush.msra.mxu0 %v3345
    %3440 = vmatpush.msra.mxu0 %v3344
    %3441 = vmatpush.msra.mxu0 %v3343
    %3442 = vmatpush.msra.mxu0 %v3342
    %3443 = vmatpush.msra.mxu0 %v3341
    %3444 = vmatmul.f32.gmra.mxu0 %v3363
    %v3445 = vpop.f32.mrf.mxu0
    %v3446 = vadd.f32 %v3426, %v3445
    %3447 = vdwg.mxu0
    %v3448 = vadd.f32 %v3357, %v3446
    %vm3449 = vcmask 0
    %3450 = vst.msk [vmem:[#allocation2] sm:$0x1] %vm3449, %v3448
    // Predicated region
    $region18: #{dci_forward.7} parent=1 // pred_check
      %p3451 = pneg %p15
    $region19: #{dci_forward.7} parent=1 // pred_check_branch
      %3453 = sbr.rel (%p3451) target = $region21
    $region20: #{dci_forward.7} parent=1 // pred_region
      %v3454 = vld [vmem:[#allocation2] sm:$0x1]
      %3455 = vst.msk [vmem:[#allocation3] sm:$0x1] %vm3449, %v3454
    $region21: #{dci_forward.7} parent=1 // pred_fallthru
      _
    // Predicated region
    $region22: #{dci_forward.7} parent=1 // pred_check
      _
    $region23: #{dci_forward.7} parent=1 // pred_check_branch
      %3457 = sbr.rel (0) target = $region25
    $region24: #{dci_forward.7} parent=1 // pred_region
      %3459 = vsyncadd [#allocation4], 0
      %s3461 = sshll.u32 [#allocation3], 4
      %s3462 = int_to_ptr.vmem [resolvable:$true] %s3461
      %s3463 = sshll.u32 %s3, 4
      %s3464 = int_to_ptr.hbm [resolvable:$true] %s3463
      %3466 = dma.vmem_to_hbm [thread:$0]  %s3462, 16, %s3464, [#allocation4]
    $region25: #{dci_forward.7} parent=1 // pred_fallthru
      _
    // Predicated region
    $region26: #{dci_forward.7} parent=1 // pred_check
      _
    $region27: #{dci_forward.7} parent=1 // pred_check_branch
      %3468 = sbr.rel (0) target = $region29
    $region28: #{dci_forward.7} parent=1 // pred_region
      %3470 = dma.done [#allocation4], 16
    $region29: #{dci_forward.7} parent=1 // pred_fallthru
      _
    %3471 = vsyncpa [#allocation4], 1

</llo_original>
